<compile_context>
chip_gen: v7x
topology: tpu7x:2x2x1
jax: 0.10.0
libtpu: 0.0.40
codegen_flags: <defaults>
</compile_context>

<pallas_src>
import functools

import jax
import jax.numpy as jnp
from jax import lax
from jax.experimental import pallas as pl
from jax.experimental.pallas import tpu as pltpu

EPS = 1e-5  # nn.InstanceNorm2d default


def _instance_norm(a):
    # Per-channel stats over H*W; one-pass variance (clamped >= 0), rsqrt on EUP.
    mean = jnp.mean(a, axis=0, keepdims=True)
    var = jnp.maximum(jnp.mean(a * a, axis=0, keepdims=True) - mean * mean, 0.0)
    return (a - mean) * lax.rsqrt(var + EPS)


def _resblock_kernel(*refs, H, W, training, keep_prob):
    if training:
        seed_ref, x_ref, col_ref, w1_ref, w2_ref, o_ref = refs
    else:
        x_ref, col_ref, w1_ref, w2_ref, o_ref = refs
        seed_ref = None

    _, HW, Cp = x_ref.shape            # one image per grid step: (1, H*W, Cp) f32

    # Column-index map (precomputed in HBM, tiny) -> reflect-boundary masks for
    # the +-1 column shifts.
    col = col_ref[...]                 # ((H+2)*W, 1) int32
    mask_l = col == 0                  # x == 0    -> should read column 1
    mask_r = col == (W - 1)            # x == W-1  -> should read column W-2

    w1 = w1_ref[...]                   # (9, Cp, Cp) bf16, resident across grid
    w2 = w2_ref[...]

    def conv3x3(a, w_taps):
        # a: (HW, Cp) f32. 3x3 reflect-pad conv as 9 per-tap MXU matmuls.
        # Reflect pad in H (row -1 -> row 1, row H -> row H-2): row-aligned concat.
        p = jnp.concatenate(
            [a[W:2 * W], a, a[(H - 2) * W:(H - 1) * W]], axis=0)   # ((H+2)W, Cp)
        # +-1 column shifts on the flat row-major axis. The roll's wrap-around
        # happens exactly at the x==0 / x==W-1 positions, which are overwritten
        # by the reflect fixup select below.
        r_p = jnp.roll(p, 1, axis=0)    # p[row, x-1]   (wrap at x == 0)
        r_m = jnp.roll(p, -1, axis=0)   # p[row, x+1]   (wrap at x == W-1)
        bf = jnp.bfloat16
        px = (jnp.where(mask_l, r_m, r_p).astype(bf),   # dx = -1  (reflect -> col 1)
              p.astype(bf),                             # dx =  0
              jnp.where(mask_r, r_p, r_m).astype(bf))   # dx = +1  (reflect -> col W-2)
        acc = jnp.zeros((HW, Cp), jnp.float32)
        for ky in range(3):
            for kx in range(3):
                tap = px[kx][ky * W:ky * W + HW]         # (HW, Cp) bf16, aligned view
                acc = acc + jnp.dot(tap, w_taps[ky * 3 + kx],
                                    preferred_element_type=jnp.float32)
        return acc

    x = x_ref[0]                                         # (HW, Cp) f32
    h = _instance_norm(conv3x3(x, w1))
    h = jnp.maximum(h, 0.0)                              # ReLU (ConvModule default act)
    if training:
        pltpu.prng_seed(seed_ref[0] + pl.program_id(0))
        bits = pltpu.bitcast(pltpu.prng_random_bits((HW, Cp)), jnp.uint32)
        thresh = jnp.uint32(int(keep_prob * (2 ** 32)))
        h = jnp.where(bits < thresh, h * (1.0 / keep_prob), 0.0)
    h = _instance_norm(conv3x3(h, w2))                   # 2nd ConvModule: act_cfg=None
    o_ref[0] = x + h                                     # residual, lane-dense store


def residual_block_with_dropout(x_nchw, w1, w2, *, training=False, seed=0):
    """x_nchw: (N, C, H, W) f32.  w1, w2: (3, 3, Cin, Cout) HWIO f32.

    Conv biases are intentionally omitted: with norm_cfg=dict(type='IN') the
    affine-less InstanceNorm cancels them exactly (zero numerical change).
    """
    N, C, H, W = x_nchw.shape
    assert H >= 2 and W >= 2, "reflect padding needs H, W >= 2"
    HW = H * W
    R = (H + 2) * W
    Cp = ((C + 127) // 128) * 128      # compute lanes (== C for production C%128==0)

    # NCHW -> (N, H*W, Cp) channels-last. No channel padding when C % 128 == 0.
    x = jnp.transpose(x_nchw, (0, 2, 3, 1)).astype(jnp.float32)    # NHWC
    if Cp != C:
        x = jnp.pad(x, ((0, 0), (0, 0), (0, 0), (0, Cp - C)))
    x_flat = x.reshape(N, HW, Cp)

    # Column index of every row of the H-padded flat image (tiny constant).
    col_idx = (jnp.arange(R, dtype=jnp.int32) % W).reshape(R, 1)

    def prep_w(w):
        # HWIO (3,3,C,C) -> 9 per-tap (Cp_in, Cp_out) bf16 matrices, tap = ky*3+kx.
        wt = w.astype(jnp.float32).reshape(9, C, C)
        if Cp != C:
            wt = jnp.pad(wt, ((0, 0), (0, Cp - C), (0, Cp - C)))
        return wt.astype(jnp.bfloat16)

    w1m, w2m = prep_w(w1), prep_w(w2)

    kernel = functools.partial(_resblock_kernel, H=H, W=W,
                               training=training, keep_prob=0.5)

    in_specs = [
        pl.BlockSpec((1, HW, Cp), lambda n: (n, 0, 0)),
        pl.BlockSpec((R, 1), lambda n: (0, 0)),
        pl.BlockSpec((9, Cp, Cp), lambda n: (0, 0, 0)),
        pl.BlockSpec((9, Cp, Cp), lambda n: (0, 0, 0)),
    ]
    inputs = [x_flat, col_idx, w1m, w2m]
    if training:
        in_specs = [pl.BlockSpec(memory_space=pltpu.MemorySpace.SMEM)] + in_specs
        inputs = [jnp.asarray([seed], jnp.int32)] + inputs

    # Explicit VMEM budget: double-buffered I/O blocks + weights + in-kernel
    # conv intermediates, with headroom; clamped to stay within every chip.
    io_blk = HW * Cp * 4
    w_blk = 9 * Cp * Cp * 2
    scratch = 10 * R * Cp * 4
    vmem_bytes = int(min(max(4 * io_blk + 4 * w_blk + scratch, 32 << 20), 100 << 20))

    out = pl.pallas_call(
        kernel,
        out_shape=jax.ShapeDtypeStruct((N, HW, Cp), jnp.float32),
        grid=(N,),
        in_specs=in_specs,
        out_specs=pl.BlockSpec((1, HW, Cp), lambda n: (n, 0, 0)),
        compiler_params=pltpu.CompilerParams(
            dimension_semantics=("parallel",),
            vmem_limit_bytes=vmem_bytes),
    )(*inputs)

    out = out.reshape(N, H, W, Cp)[..., :C]               # drop channel padding
    return jnp.transpose(out, (0, 3, 1, 2))               # back to NCHW


def _reference(x_nchw, w1, w2):
    """Pure-JAX (XLA) reference of the eval-mode forward pass.

    Conv inputs/weights are rounded to bf16 (f32 accumulation) to mirror the
    kernel's MXU precision so the comparison is apples-to-apples.
    """
    x = jnp.transpose(x_nchw, (0, 2, 3, 1)).astype(jnp.float32)    # NHWC

    def conv(a, w):
        a_q = a.astype(jnp.bfloat16).astype(jnp.float32)
        w_q = w.astype(jnp.bfloat16).astype(jnp.float32)
        ap = jnp.pad(a_q, ((0, 0), (1, 1), (1, 1), (0, 0)), mode="reflect")
        return lax.conv_general_dilated(
            ap, w_q, (1, 1), "VALID",
            dimension_numbers=("NHWC", "HWIO", "NHWC"))

    def inorm(a):
        m = a.mean(axis=(1, 2), keepdims=True)
        v = jnp.maximum((a * a).mean(axis=(1, 2), keepdims=True) - m * m, 0.0)
        return (a - m) * lax.rsqrt(v + EPS)

    h = jnp.maximum(inorm(conv(x, w1)), 0.0)
    h = inorm(conv(h, w2))                     # dropout is identity in eval mode
    return jnp.transpose(x + h, (0, 3, 1, 2))


if __name__ == "__main__":
    key = jax.random.PRNGKey(0)
    N, C, H, W = 2, 4, 16, 16
    k_x, k_w1, k_w2 = jax.random.split(key, 3)

    x = jax.random.normal(k_x, (N, C, H, W), jnp.float32)
    # Conv weights in HWIO = (3, 3, Cin, Cout); kaiming-ish fan_in scaling.
    fan_in = 3 * 3 * C
    w1 = jax.random.normal(k_w1, (3, 3, C, C), jnp.float32) / jnp.sqrt(fan_in)
    w2 = jax.random.normal(k_w2, (3, 3, C, C), jnp.float32) / jnp.sqrt(fan_in)

    out = residual_block_with_dropout(x, w1, w2, training=False)
    out = jax.block_until_ready(out)

    ref = _reference(x, w1, w2)
    assert out.shape == (N, C, H, W)
    max_err = float(jnp.max(jnp.abs(out - ref)))
    assert max_err < 2e-2, f"max abs err {max_err}"

    print("KERNEL_OK")
</pallas_src>

<mosaic_0001>
module attributes {stable_mosaic.version = 11 : i64} {
  func.func @_resblock_kernel(%arg0: i32, %arg1: memref<1x256x128xf32, #tpu.memory_space<vmem>>, %arg2: memref<288x1xi32, #tpu.memory_space<vmem>>, %arg3: memref<9x128x128xbf16, #tpu.memory_space<vmem>>, %arg4: memref<9x128x128xbf16, #tpu.memory_space<vmem>>, %arg5: memref<1x256x128xf32, #tpu.memory_space<vmem>>) attributes {dimension_semantics = [#tpu.dimension_semantics<parallel>], iteration_bounds = array<i64: 2>, scalar_prefetch = 0 : i64, scratch_operands = 0 : i64, tpu.core_type = #tpu.core_type<tc>, window_params = [{transform_indices = @transform_0, window_bounds = array<i64: 1, 256, 128>}, {pipeline_mode = #tpu.pipeline_mode<synchronous>, transform_indices = @transform_1, window_bounds = array<i64: 288, 1>}, {pipeline_mode = #tpu.pipeline_mode<synchronous>, transform_indices = @transform_2, window_bounds = array<i64: 9, 128, 128>}, {pipeline_mode = #tpu.pipeline_mode<synchronous>, transform_indices = @transform_3, window_bounds = array<i64: 9, 128, 128>}, {transform_indices = @transform_4, window_bounds = array<i64: 1, 256, 128>}]} {
    %c0 = arith.constant 0 : index
    %c0_0 = arith.constant 0 : index
    %0 = vector.load %arg2[%c0, %c0_0] : memref<288x1xi32, #tpu.memory_space<vmem>>, vector<288x1xi32>
    %c0_i32 = arith.constant 0 : i32
    %1 = vector.broadcast %c0_i32 : i32 to vector<288x1xi32>
    %2 = arith.cmpi eq, %0, %1 : vector<288x1xi32>
    %c15_i32 = arith.constant 15 : i32
    %3 = vector.broadcast %c15_i32 : i32 to vector<288x1xi32>
    %4 = arith.cmpi eq, %0, %3 : vector<288x1xi32>
    %c0_1 = arith.constant 0 : index
    %c0_2 = arith.constant 0 : index
    %c0_3 = arith.constant 0 : index
    %5 = vector.load %arg3[%c0_1, %c0_2, %c0_3] : memref<9x128x128xbf16, #tpu.memory_space<vmem>>, vector<9x128x128xbf16>
    %c0_4 = arith.constant 0 : index
    %c0_5 = arith.constant 0 : index
    %c0_6 = arith.constant 0 : index
    %6 = vector.load %arg4[%c0_4, %c0_5, %c0_6] : memref<9x128x128xbf16, #tpu.memory_space<vmem>>, vector<9x128x128xbf16>
    %c0_7 = arith.constant 0 : index
    %c0_8 = arith.constant 0 : index
    %c0_9 = arith.constant 0 : index
    %7 = vector.load %arg1[%c0_7, %c0_8, %c0_9] : memref<1x256x128xf32, #tpu.memory_space<vmem>>, vector<1x256x128xf32>
    %8 = vector.shape_cast %7 : vector<1x256x128xf32> to vector<256x128xf32>
    %9 = vector.extract_strided_slice %8 {offsets = [16, 0], sizes = [16, 128], strides = [1, 1]} : vector<256x128xf32> to vector<16x128xf32>
    %10 = vector.extract_strided_slice %8 {offsets = [224, 0], sizes = [16, 128], strides = [1, 1]} : vector<256x128xf32> to vector<16x128xf32>
    %11 = tpu.concatenate %9, %8, %10 in 0 : vector<16x128xf32>, vector<256x128xf32>, vector<16x128xf32> -> vector<288x128xf32>
    %12 = vector.extract_strided_slice %11 {offsets = [287, 0], sizes = [1, 128], strides = [1, 1]} : vector<288x128xf32> to vector<1x128xf32>
    %13 = vector.extract_strided_slice %11 {offsets = [0, 0], sizes = [287, 128], strides = [1, 1]} : vector<288x128xf32> to vector<287x128xf32>
    %14 = tpu.concatenate %12, %13 in 0 : vector<1x128xf32>, vector<287x128xf32> -> vector<288x128xf32>
    %15 = vector.extract_strided_slice %11 {offsets = [1, 0], sizes = [287, 128], strides = [1, 1]} : vector<288x128xf32> to vector<287x128xf32>
    %16 = vector.extract_strided_slice %11 {offsets = [0, 0], sizes = [1, 128], strides = [1, 1]} : vector<288x128xf32> to vector<1x128xf32>
    %17 = tpu.concatenate %15, %16 in 0 : vector<287x128xf32>, vector<1x128xf32> -> vector<288x128xf32>
    %18 = vector.shape_cast %2 : vector<288x1xi1> to vector<288x1xi1>
    %19 = vector.broadcast %18 : vector<288x1xi1> to vector<288x128xi1>
    %20 = arith.select %19, %17, %14 : vector<288x128xi1>, vector<288x128xf32>
    %21 = arith.truncf %20 : vector<288x128xf32> to vector<288x128xbf16>
    %22 = arith.truncf %11 : vector<288x128xf32> to vector<288x128xbf16>
    %23 = vector.shape_cast %4 : vector<288x1xi1> to vector<288x1xi1>
    %24 = vector.broadcast %23 : vector<288x1xi1> to vector<288x128xi1>
    %25 = arith.select %24, %14, %17 : vector<288x128xi1>, vector<288x128xf32>
    %26 = arith.truncf %25 : vector<288x128xf32> to vector<288x128xbf16>
    %cst = arith.constant 0.000000e+00 : f32
    %27 = vector.broadcast %cst : f32 to vector<256x128xf32>
    %28 = vector.extract_strided_slice %21 {offsets = [0, 0], sizes = [256, 128], strides = [1, 1]} : vector<288x128xbf16> to vector<256x128xbf16>
    %29 = vector.extract_strided_slice %5 {offsets = [0, 0, 0], sizes = [1, 128, 128], strides = [1, 1, 1]} : vector<9x128x128xbf16> to vector<1x128x128xbf16>
    %30 = vector.shape_cast %29 : vector<1x128x128xbf16> to vector<128x128xbf16>
    %cst_10 = arith.constant dense<0.000000e+00> : vector<256x128xf32>
    %31 = tpu.matmul %28, %30, %cst_10 {dimension_numbers = #tpu.dot_dimension_numbers<[1], [0], [0], [1], [0, 0, 1, 1], [], []>} : vector<256x128xbf16>, vector<128x128xbf16>, vector<256x128xf32> -> vector<256x128xf32>
    %32 = arith.addf %27, %31 : vector<256x128xf32>
    %33 = vector.extract_strided_slice %22 {offsets = [0, 0], sizes = [256, 128], strides = [1, 1]} : vector<288x128xbf16> to vector<256x128xbf16>
    %34 = vector.extract_strided_slice %5 {offsets = [1, 0, 0], sizes = [1, 128, 128], strides = [1, 1, 1]} : vector<9x128x128xbf16> to vector<1x128x128xbf16>
    %35 = vector.shape_cast %34 : vector<1x128x128xbf16> to vector<128x128xbf16>
    %cst_11 = arith.constant dense<0.000000e+00> : vector<256x128xf32>
    %36 = tpu.matmul %33, %35, %cst_11 {dimension_numbers = #tpu.dot_dimension_numbers<[1], [0], [0], [1], [0, 0, 1, 1], [], []>} : vector<256x128xbf16>, vector<128x128xbf16>, vector<256x128xf32> -> vector<256x128xf32>
    %37 = arith.addf %32, %36 : vector<256x128xf32>
    %38 = vector.extract_strided_slice %26 {offsets = [0, 0], sizes = [256, 128], strides = [1, 1]} : vector<288x128xbf16> to vector<256x128xbf16>
    %39 = vector.extract_strided_slice %5 {offsets = [2, 0, 0], sizes = [1, 128, 128], strides = [1, 1, 1]} : vector<9x128x128xbf16> to vector<1x128x128xbf16>
    %40 = vector.shape_cast %39 : vector<1x128x128xbf16> to vector<128x128xbf16>
    %cst_12 = arith.constant dense<0.000000e+00> : vector<256x128xf32>
    %41 = tpu.matmul %38, %40, %cst_12 {dimension_numbers = #tpu.dot_dimension_numbers<[1], [0], [0], [1], [0, 0, 1, 1], [], []>} : vector<256x128xbf16>, vector<128x128xbf16>, vector<256x128xf32> -> vector<256x128xf32>
    %42 = arith.addf %37, %41 : vector<256x128xf32>
    %43 = vector.extract_strided_slice %21 {offsets = [16, 0], sizes = [256, 128], strides = [1, 1]} : vector<288x128xbf16> to vector<256x128xbf16>
    %44 = vector.extract_strided_slice %5 {offsets = [3, 0, 0], sizes = [1, 128, 128], strides = [1, 1, 1]} : vector<9x128x128xbf16> to vector<1x128x128xbf16>
    %45 = vector.shape_cast %44 : vector<1x128x128xbf16> to vector<128x128xbf16>
    %cst_13 = arith.constant dense<0.000000e+00> : vector<256x128xf32>
    %46 = tpu.matmul %43, %45, %cst_13 {dimension_numbers = #tpu.dot_dimension_numbers<[1], [0], [0], [1], [0, 0, 1, 1], [], []>} : vector<256x128xbf16>, vector<128x128xbf16>, vector<256x128xf32> -> vector<256x128xf32>
    %47 = arith.addf %42, %46 : vector<256x128xf32>
    %48 = vector.extract_strided_slice %22 {offsets = [16, 0], sizes = [256, 128], strides = [1, 1]} : vector<288x128xbf16> to vector<256x128xbf16>
    %49 = vector.extract_strided_slice %5 {offsets = [4, 0, 0], sizes = [1, 128, 128], strides = [1, 1, 1]} : vector<9x128x128xbf16> to vector<1x128x128xbf16>
    %50 = vector.shape_cast %49 : vector<1x128x128xbf16> to vector<128x128xbf16>
    %cst_14 = arith.constant dense<0.000000e+00> : vector<256x128xf32>
    %51 = tpu.matmul %48, %50, %cst_14 {dimension_numbers = #tpu.dot_dimension_numbers<[1], [0], [0], [1], [0, 0, 1, 1], [], []>} : vector<256x128xbf16>, vector<128x128xbf16>, vector<256x128xf32> -> vector<256x128xf32>
    %52 = arith.addf %47, %51 : vector<256x128xf32>
    %53 = vector.extract_strided_slice %26 {offsets = [16, 0], sizes = [256, 128], strides = [1, 1]} : vector<288x128xbf16> to vector<256x128xbf16>
    %54 = vector.extract_strided_slice %5 {offsets = [5, 0, 0], sizes = [1, 128, 128], strides = [1, 1, 1]} : vector<9x128x128xbf16> to vector<1x128x128xbf16>
    %55 = vector.shape_cast %54 : vector<1x128x128xbf16> to vector<128x128xbf16>
    %cst_15 = arith.constant dense<0.000000e+00> : vector<256x128xf32>
    %56 = tpu.matmul %53, %55, %cst_15 {dimension_numbers = #tpu.dot_dimension_numbers<[1], [0], [0], [1], [0, 0, 1, 1], [], []>} : vector<256x128xbf16>, vector<128x128xbf16>, vector<256x128xf32> -> vector<256x128xf32>
    %57 = arith.addf %52, %56 : vector<256x128xf32>
    %58 = vector.extract_strided_slice %21 {offsets = [32, 0], sizes = [256, 128], strides = [1, 1]} : vector<288x128xbf16> to vector<256x128xbf16>
    %59 = vector.extract_strided_slice %5 {offsets = [6, 0, 0], sizes = [1, 128, 128], strides = [1, 1, 1]} : vector<9x128x128xbf16> to vector<1x128x128xbf16>
    %60 = vector.shape_cast %59 : vector<1x128x128xbf16> to vector<128x128xbf16>
    %cst_16 = arith.constant dense<0.000000e+00> : vector<256x128xf32>
    %61 = tpu.matmul %58, %60, %cst_16 {dimension_numbers = #tpu.dot_dimension_numbers<[1], [0], [0], [1], [0, 0, 1, 1], [], []>} : vector<256x128xbf16>, vector<128x128xbf16>, vector<256x128xf32> -> vector<256x128xf32>
    %62 = arith.addf %57, %61 : vector<256x128xf32>
    %63 = vector.extract_strided_slice %22 {offsets = [32, 0], sizes = [256, 128], strides = [1, 1]} : vector<288x128xbf16> to vector<256x128xbf16>
    %64 = vector.extract_strided_slice %5 {offsets = [7, 0, 0], sizes = [1, 128, 128], strides = [1, 1, 1]} : vector<9x128x128xbf16> to vector<1x128x128xbf16>
    %65 = vector.shape_cast %64 : vector<1x128x128xbf16> to vector<128x128xbf16>
    %cst_17 = arith.constant dense<0.000000e+00> : vector<256x128xf32>
    %66 = tpu.matmul %63, %65, %cst_17 {dimension_numbers = #tpu.dot_dimension_numbers<[1], [0], [0], [1], [0, 0, 1, 1], [], []>} : vector<256x128xbf16>, vector<128x128xbf16>, vector<256x128xf32> -> vector<256x128xf32>
    %67 = arith.addf %62, %66 : vector<256x128xf32>
    %68 = vector.extract_strided_slice %26 {offsets = [32, 0], sizes = [256, 128], strides = [1, 1]} : vector<288x128xbf16> to vector<256x128xbf16>
    %69 = vector.extract_strided_slice %5 {offsets = [8, 0, 0], sizes = [1, 128, 128], strides = [1, 1, 1]} : vector<9x128x128xbf16> to vector<1x128x128xbf16>
    %70 = vector.shape_cast %69 : vector<1x128x128xbf16> to vector<128x128xbf16>
    %cst_18 = arith.constant dense<0.000000e+00> : vector<256x128xf32>
    %71 = tpu.matmul %68, %70, %cst_18 {dimension_numbers = #tpu.dot_dimension_numbers<[1], [0], [0], [1], [0, 0, 1, 1], [], []>} : vector<256x128xbf16>, vector<128x128xbf16>, vector<256x128xf32> -> vector<256x128xf32>
    %72 = arith.addf %67, %71 : vector<256x128xf32>
    %cst_19 = arith.constant dense<0.000000e+00> : vector<128xf32>
    %73 = vector.multi_reduction <add>, %72, %cst_19 [0] : vector<256x128xf32> to vector<128xf32>
    %74 = vector.shape_cast %73 : vector<128xf32> to vector<1x128xf32>
    %cst_20 = arith.constant 2.560000e+02 : f32
    %75 = vector.broadcast %cst_20 : f32 to vector<1x128xf32>
    %76 = arith.divf %74, %75 : vector<1x128xf32>
    %77 = arith.mulf %72, %72 : vector<256x128xf32>
    %cst_21 = arith.constant dense<0.000000e+00> : vector<128xf32>
    %78 = vector.multi_reduction <add>, %77, %cst_21 [0] : vector<256x128xf32> to vector<128xf32>
    %79 = vector.shape_cast %78 : vector<128xf32> to vector<1x128xf32>
    %cst_22 = arith.constant 2.560000e+02 : f32
    %80 = vector.broadcast %cst_22 : f32 to vector<1x128xf32>
    %81 = arith.divf %79, %80 : vector<1x128xf32>
    %82 = arith.mulf %76, %76 : vector<1x128xf32>
    %83 = arith.subf %81, %82 : vector<1x128xf32>
    %cst_23 = arith.constant 0.000000e+00 : f32
    %84 = vector.broadcast %cst_23 : f32 to vector<1x128xf32>
    %85 = arith.maximumf %83, %84 : vector<1x128xf32>
    %86 = vector.broadcast %76 : vector<1x128xf32> to vector<256x128xf32>
    %87 = arith.subf %72, %86 : vector<256x128xf32>
    %cst_24 = arith.constant 9.99999974E-6 : f32
    %88 = vector.broadcast %cst_24 : f32 to vector<1x128xf32>
    %89 = arith.addf %85, %88 : vector<1x128xf32>
    %90 = math.rsqrt %89 : vector<1x128xf32>
    %91 = vector.broadcast %90 : vector<1x128xf32> to vector<256x128xf32>
    %92 = arith.mulf %87, %91 : vector<256x128xf32>
    %cst_25 = arith.constant 0.000000e+00 : f32
    %93 = vector.broadcast %cst_25 : f32 to vector<256x128xf32>
    %94 = arith.maximumf %92, %93 : vector<256x128xf32>
    %95 = vector.extract_strided_slice %94 {offsets = [16, 0], sizes = [16, 128], strides = [1, 1]} : vector<256x128xf32> to vector<16x128xf32>
    %96 = vector.extract_strided_slice %94 {offsets = [224, 0], sizes = [16, 128], strides = [1, 1]} : vector<256x128xf32> to vector<16x128xf32>
    %97 = tpu.concatenate %95, %94, %96 in 0 : vector<16x128xf32>, vector<256x128xf32>, vector<16x128xf32> -> vector<288x128xf32>
    %98 = vector.extract_strided_slice %97 {offsets = [287, 0], sizes = [1, 128], strides = [1, 1]} : vector<288x128xf32> to vector<1x128xf32>
    %99 = vector.extract_strided_slice %97 {offsets = [0, 0], sizes = [287, 128], strides = [1, 1]} : vector<288x128xf32> to vector<287x128xf32>
    %100 = tpu.concatenate %98, %99 in 0 : vector<1x128xf32>, vector<287x128xf32> -> vector<288x128xf32>
    %101 = vector.extract_strided_slice %97 {offsets = [1, 0], sizes = [287, 128], strides = [1, 1]} : vector<288x128xf32> to vector<287x128xf32>
    %102 = vector.extract_strided_slice %97 {offsets = [0, 0], sizes = [1, 128], strides = [1, 1]} : vector<288x128xf32> to vector<1x128xf32>
    %103 = tpu.concatenate %101, %102 in 0 : vector<287x128xf32>, vector<1x128xf32> -> vector<288x128xf32>
    %104 = vector.shape_cast %2 : vector<288x1xi1> to vector<288x1xi1>
    %105 = vector.broadcast %104 : vector<288x1xi1> to vector<288x128xi1>
    %106 = arith.select %105, %103, %100 : vector<288x128xi1>, vector<288x128xf32>
    %107 = arith.truncf %106 : vector<288x128xf32> to vector<288x128xbf16>
    %108 = arith.truncf %97 : vector<288x128xf32> to vector<288x128xbf16>
    %109 = vector.shape_cast %4 : vector<288x1xi1> to vector<288x1xi1>
    %110 = vector.broadcast %109 : vector<288x1xi1> to vector<288x128xi1>
    %111 = arith.select %110, %100, %103 : vector<288x128xi1>, vector<288x128xf32>
    %112 = arith.truncf %111 : vector<288x128xf32> to vector<288x128xbf16>
    %cst_26 = arith.constant 0.000000e+00 : f32
    %113 = vector.broadcast %cst_26 : f32 to vector<256x128xf32>
    %114 = vector.extract_strided_slice %107 {offsets = [0, 0], sizes = [256, 128], strides = [1, 1]} : vector<288x128xbf16> to vector<256x128xbf16>
    %115 = vector.extract_strided_slice %6 {offsets = [0, 0, 0], sizes = [1, 128, 128], strides = [1, 1, 1]} : vector<9x128x128xbf16> to vector<1x128x128xbf16>
    %116 = vector.shape_cast %115 : vector<1x128x128xbf16> to vector<128x128xbf16>
    %cst_27 = arith.constant dense<0.000000e+00> : vector<256x128xf32>
    %117 = tpu.matmul %114, %116, %cst_27 {dimension_numbers = #tpu.dot_dimension_numbers<[1], [0], [0], [1], [0, 0, 1, 1], [], []>} : vector<256x128xbf16>, vector<128x128xbf16>, vector<256x128xf32> -> vector<256x128xf32>
    %118 = arith.addf %113, %117 : vector<256x128xf32>
    %119 = vector.extract_strided_slice %108 {offsets = [0, 0], sizes = [256, 128], strides = [1, 1]} : vector<288x128xbf16> to vector<256x128xbf16>
    %120 = vector.extract_strided_slice %6 {offsets = [1, 0, 0], sizes = [1, 128, 128], strides = [1, 1, 1]} : vector<9x128x128xbf16> to vector<1x128x128xbf16>
    %121 = vector.shape_cast %120 : vector<1x128x128xbf16> to vector<128x128xbf16>
    %cst_28 = arith.constant dense<0.000000e+00> : vector<256x128xf32>
    %122 = tpu.matmul %119, %121, %cst_28 {dimension_numbers = #tpu.dot_dimension_numbers<[1], [0], [0], [1], [0, 0, 1, 1], [], []>} : vector<256x128xbf16>, vector<128x128xbf16>, vector<256x128xf32> -> vector<256x128xf32>
    %123 = arith.addf %118, %122 : vector<256x128xf32>
    %124 = vector.extract_strided_slice %112 {offsets = [0, 0], sizes = [256, 128], strides = [1, 1]} : vector<288x128xbf16> to vector<256x128xbf16>
    %125 = vector.extract_strided_slice %6 {offsets = [2, 0, 0], sizes = [1, 128, 128], strides = [1, 1, 1]} : vector<9x128x128xbf16> to vector<1x128x128xbf16>
    %126 = vector.shape_cast %125 : vector<1x128x128xbf16> to vector<128x128xbf16>
    %cst_29 = arith.constant dense<0.000000e+00> : vector<256x128xf32>
    %127 = tpu.matmul %124, %126, %cst_29 {dimension_numbers = #tpu.dot_dimension_numbers<[1], [0], [0], [1], [0, 0, 1, 1], [], []>} : vector<256x128xbf16>, vector<128x128xbf16>, vector<256x128xf32> -> vector<256x128xf32>
    %128 = arith.addf %123, %127 : vector<256x128xf32>
    %129 = vector.extract_strided_slice %107 {offsets = [16, 0], sizes = [256, 128], strides = [1, 1]} : vector<288x128xbf16> to vector<256x128xbf16>
    %130 = vector.extract_strided_slice %6 {offsets = [3, 0, 0], sizes = [1, 128, 128], strides = [1, 1, 1]} : vector<9x128x128xbf16> to vector<1x128x128xbf16>
    %131 = vector.shape_cast %130 : vector<1x128x128xbf16> to vector<128x128xbf16>
    %cst_30 = arith.constant dense<0.000000e+00> : vector<256x128xf32>
    %132 = tpu.matmul %129, %131, %cst_30 {dimension_numbers = #tpu.dot_dimension_numbers<[1], [0], [0], [1], [0, 0, 1, 1], [], []>} : vector<256x128xbf16>, vector<128x128xbf16>, vector<256x128xf32> -> vector<256x128xf32>
    %133 = arith.addf %128, %132 : vector<256x128xf32>
    %134 = vector.extract_strided_slice %108 {offsets = [16, 0], sizes = [256, 128], strides = [1, 1]} : vector<288x128xbf16> to vector<256x128xbf16>
    %135 = vector.extract_strided_slice %6 {offsets = [4, 0, 0], sizes = [1, 128, 128], strides = [1, 1, 1]} : vector<9x128x128xbf16> to vector<1x128x128xbf16>
    %136 = vector.shape_cast %135 : vector<1x128x128xbf16> to vector<128x128xbf16>
    %cst_31 = arith.constant dense<0.000000e+00> : vector<256x128xf32>
    %137 = tpu.matmul %134, %136, %cst_31 {dimension_numbers = #tpu.dot_dimension_numbers<[1], [0], [0], [1], [0, 0, 1, 1], [], []>} : vector<256x128xbf16>, vector<128x128xbf16>, vector<256x128xf32> -> vector<256x128xf32>
    %138 = arith.addf %133, %137 : vector<256x128xf32>
    %139 = vector.extract_strided_slice %112 {offsets = [16, 0], sizes = [256, 128], strides = [1, 1]} : vector<288x128xbf16> to vector<256x128xbf16>
    %140 = vector.extract_strided_slice %6 {offsets = [5, 0, 0], sizes = [1, 128, 128], strides = [1, 1, 1]} : vector<9x128x128xbf16> to vector<1x128x128xbf16>
    %141 = vector.shape_cast %140 : vector<1x128x128xbf16> to vector<128x128xbf16>
    %cst_32 = arith.constant dense<0.000000e+00> : vector<256x128xf32>
    %142 = tpu.matmul %139, %141, %cst_32 {dimension_numbers = #tpu.dot_dimension_numbers<[1], [0], [0], [1], [0, 0, 1, 1], [], []>} : vector<256x128xbf16>, vector<128x128xbf16>, vector<256x128xf32> -> vector<256x128xf32>
    %143 = arith.addf %138, %142 : vector<256x128xf32>
    %144 = vector.extract_strided_slice %107 {offsets = [32, 0], sizes = [256, 128], strides = [1, 1]} : vector<288x128xbf16> to vector<256x128xbf16>
    %145 = vector.extract_strided_slice %6 {offsets = [6, 0, 0], sizes = [1, 128, 128], strides = [1, 1, 1]} : vector<9x128x128xbf16> to vector<1x128x128xbf16>
    %146 = vector.shape_cast %145 : vector<1x128x128xbf16> to vector<128x128xbf16>
    %cst_33 = arith.constant dense<0.000000e+00> : vector<256x128xf32>
    %147 = tpu.matmul %144, %146, %cst_33 {dimension_numbers = #tpu.dot_dimension_numbers<[1], [0], [0], [1], [0, 0, 1, 1], [], []>} : vector<256x128xbf16>, vector<128x128xbf16>, vector<256x128xf32> -> vector<256x128xf32>
    %148 = arith.addf %143, %147 : vector<256x128xf32>
    %149 = vector.extract_strided_slice %108 {offsets = [32, 0], sizes = [256, 128], strides = [1, 1]} : vector<288x128xbf16> to vector<256x128xbf16>
    %150 = vector.extract_strided_slice %6 {offsets = [7, 0, 0], sizes = [1, 128, 128], strides = [1, 1, 1]} : vector<9x128x128xbf16> to vector<1x128x128xbf16>
    %151 = vector.shape_cast %150 : vector<1x128x128xbf16> to vector<128x128xbf16>
    %cst_34 = arith.constant dense<0.000000e+00> : vector<256x128xf32>
    %152 = tpu.matmul %149, %151, %cst_34 {dimension_numbers = #tpu.dot_dimension_numbers<[1], [0], [0], [1], [0, 0, 1, 1], [], []>} : vector<256x128xbf16>, vector<128x128xbf16>, vector<256x128xf32> -> vector<256x128xf32>
    %153 = arith.addf %148, %152 : vector<256x128xf32>
    %154 = vector.extract_strided_slice %112 {offsets = [32, 0], sizes = [256, 128], strides = [1, 1]} : vector<288x128xbf16> to vector<256x128xbf16>
    %155 = vector.extract_strided_slice %6 {offsets = [8, 0, 0], sizes = [1, 128, 128], strides = [1, 1, 1]} : vector<9x128x128xbf16> to vector<1x128x128xbf16>
    %156 = vector.shape_cast %155 : vector<1x128x128xbf16> to vector<128x128xbf16>
    %cst_35 = arith.constant dense<0.000000e+00> : vector<256x128xf32>
    %157 = tpu.matmul %154, %156, %cst_35 {dimension_numbers = #tpu.dot_dimension_numbers<[1], [0], [0], [1], [0, 0, 1, 1], [], []>} : vector<256x128xbf16>, vector<128x128xbf16>, vector<256x128xf32> -> vector<256x128xf32>
    %158 = arith.addf %153, %157 : vector<256x128xf32>
    %cst_36 = arith.constant dense<0.000000e+00> : vector<128xf32>
    %159 = vector.multi_reduction <add>, %158, %cst_36 [0] : vector<256x128xf32> to vector<128xf32>
    %160 = vector.shape_cast %159 : vector<128xf32> to vector<1x128xf32>
    %cst_37 = arith.constant 2.560000e+02 : f32
    %161 = vector.broadcast %cst_37 : f32 to vector<1x128xf32>
    %162 = arith.divf %160, %161 : vector<1x128xf32>
    %163 = arith.mulf %158, %158 : vector<256x128xf32>
    %cst_38 = arith.constant dense<0.000000e+00> : vector<128xf32>
    %164 = vector.multi_reduction <add>, %163, %cst_38 [0] : vector<256x128xf32> to vector<128xf32>
    %165 = vector.shape_cast %164 : vector<128xf32> to vector<1x128xf32>
    %cst_39 = arith.constant 2.560000e+02 : f32
    %166 = vector.broadcast %cst_39 : f32 to vector<1x128xf32>
    %167 = arith.divf %165, %166 : vector<1x128xf32>
    %168 = arith.mulf %162, %162 : vector<1x128xf32>
    %169 = arith.subf %167, %168 : vector<1x128xf32>
    %cst_40 = arith.constant 0.000000e+00 : f32
    %170 = vector.broadcast %cst_40 : f32 to vector<1x128xf32>
    %171 = arith.maximumf %169, %170 : vector<1x128xf32>
    %172 = vector.broadcast %162 : vector<1x128xf32> to vector<256x128xf32>
    %173 = arith.subf %158, %172 : vector<256x128xf32>
    %cst_41 = arith.constant 9.99999974E-6 : f32
    %174 = vector.broadcast %cst_41 : f32 to vector<1x128xf32>
    %175 = arith.addf %171, %174 : vector<1x128xf32>
    %176 = math.rsqrt %175 : vector<1x128xf32>
    %177 = vector.broadcast %176 : vector<1x128xf32> to vector<256x128xf32>
    %178 = arith.mulf %173, %177 : vector<256x128xf32>
    %179 = arith.addf %8, %178 : vector<256x128xf32>
    %c0_42 = arith.constant 0 : index
    %c0_43 = arith.constant 0 : index
    %c0_44 = arith.constant 0 : index
    %180 = vector.load %arg5[%c0_42, %c0_43, %c0_44] : memref<1x256x128xf32, #tpu.memory_space<vmem>>, vector<1x256x128xf32>
    %181 = vector.shape_cast %180 : vector<1x256x128xf32> to vector<256x128xf32>
    %182 = vector.shape_cast %179 : vector<256x128xf32> to vector<1x256x128xf32>
    tpu.vector_store %arg5[%c0_42, %c0_43, %c0_44], %182 {strides = array<i32>} : memref<1x256x128xf32, #tpu.memory_space<vmem>>, vector<1x256x128xf32>,
    return
  }
  func.func @transform_0(%arg0: i32) -> (i32, i32, i32) {
    %c0_i32 = arith.constant 0 : i32
    %c0_i32_0 = arith.constant 0 : i32
    %c0_i32_1 = arith.constant 0 : i32
    return %arg0, %c0_i32, %c0_i32_0 : i32, i32, i32
  }
  func.func @transform_1(%arg0: i32) -> (i32, i32) {
    %c0_i32 = arith.constant 0 : i32
    %c0_i32_0 = arith.constant 0 : i32
    %c0_i32_1 = arith.constant 0 : i32
    return %c0_i32, %c0_i32_0 : i32, i32
  }
  func.func @transform_2(%arg0: i32) -> (i32, i32, i32) {
    %c0_i32 = arith.constant 0 : i32
    %c0_i32_0 = arith.constant 0 : i32
    %c0_i32_1 = arith.constant 0 : i32
    %c0_i32_2 = arith.constant 0 : i32
    return %c0_i32, %c0_i32_0, %c0_i32_1 : i32, i32, i32
  }
  func.func @transform_3(%arg0: i32) -> (i32, i32, i32) {
    %c0_i32 = arith.constant 0 : i32
    %c0_i32_0 = arith.constant 0 : i32
    %c0_i32_1 = arith.constant 0 : i32
    %c0_i32_2 = arith.constant 0 : i32
    return %c0_i32, %c0_i32_0, %c0_i32_1 : i32, i32, i32
  }
  func.func @transform_4(%arg0: i32) -> (i32, i32, i32) {
    %c0_i32 = arith.constant 0 : i32
    %c0_i32_0 = arith.constant 0 : i32
    %c0_i32_1 = arith.constant 0 : i32
    return %arg0, %c0_i32, %c0_i32_0 : i32, i32, i32
  }
}

</mosaic_0001>

<llo_original>
// kernel: tpu_custom_call.1
$region0: #{tpu_custom_call.1}
  #allocation0 [shape = 'u32[]', space=smem, size = 0x4, offset = 0x4, fixed_abs, tag = 'smem constant byte address 0x4 - core index']
  #allocation1 [shape = 'u32[144,128]{1,0:T(1,128)}', space=vmem, size = 0x12000, scoped, tag = 'internal scratch']
  %s0 = inlined_call_operand.hbm [shape: f32[2,256,128], index: 0, kind: input, shape index: {}]
  %s1 = inlined_call_operand.vmem [shape: s32[288,1], index: 1, kind: input, shape index: {}]
  %s2 = inlined_call_operand.hbm [shape: bf16[9,128,128], index: 2, kind: input, shape index: {}]
  %s3 = inlined_call_operand.hbm [shape: bf16[9,128,128], index: 3, kind: input, shape index: {}]
  %s4 = inlined_call_operand.hbm [shape: f32[2,256,128], index: 4, kind: output, shape index: {}]
  %s5 = sld [smem:[#allocation0]]
  $region61: #{tpu_custom_call.1} parent=0
    _
  %s7 = ssub.s32 1, %s5
  %s8 = scalar_select 0, %s7, %s5
  $region1: #{tpu_custom_call.1} parent=0
    #allocation2 [shape = 'u8[262144]{0}', space=vmem, size = 0x40000, scoped, tag = 'input window, operand 0']
    #allocation3 [shape = 's32[2]{0}', space=sflag, size = 0x8, scoped, tag = 'scoped memory for tpu_custom_call.1']
    #allocation4 [shape = 's32[2]{0}', space=sflag, size = 0x8, scoped, tag = 'scoped memory for tpu_custom_call.1']
    #allocation5 [shape = 'u8[294912]{0}', space=vmem, size = 0x48000, scoped, tag = 'input window, operand 2, single buffered']
    #allocation6 [shape = 's32[1]{0}', space=sflag, size = 0x4, scoped, tag = 'scoped memory for tpu_custom_call.1']
    #allocation7 [shape = 'u8[294912]{0}', space=vmem, size = 0x48000, scoped, tag = 'input window, operand 3, single buffered']
    #allocation8 [shape = 'u8[262144]{0}', space=vmem, size = 0x40000, scoped, tag = 'output window, operand 0']
    %9 = vsyncpa [#allocation3], 0
    %s10 = scalar_lea.sflag [#allocation3], 1
    %11 = vsyncpa %s10, 0
    %12 = vsyncpa [#allocation6], 0
    %13 = vsyncpa [#allocation4], 0
    %s14 = scalar_lea.sflag [#allocation4], 1
    %15 = vsyncpa %s14, 0
    loop: start=0, step=1, limit=4
    $region2: #{tpu_custom_call.1} parent=1 // loop_pre_header
      _
    $region3: #{tpu_custom_call.1} parent=1 // loop_header
      %s17 = sphi 0, %s21
      %p18 = scmp.ge.s32.totalorder %s17, 4
      %s27 = sphi 0, %s29
      %s30 = sphi 0, %s27
      %s31 = sphi 0, %s30
      %s47 = sphi 0, %s31
      %s51 = sphi 0, %s51
      %s53 = sphi 0, %s51
      %s54 = sphi 0, %s53
      %s68 = sphi 0, %s54
      %s72 = sphi 0, %s72
      %s74 = sphi 0, %s72
      %s75 = sphi 0, %s74
      %s89 = sphi 0, %s75
      %s93 = sphi 0, %s93
      %s95 = sphi 0, %s93
      %s96 = sphi 0, %s95
      %s110 = sphi 0, %s96
      %s116 = sphi 0, %s118
      %s119 = sphi 0, %s116
      %s120 = sphi 0, %s119
      %s136 = sphi 0, %s120
    $region4: #{tpu_custom_call.1} parent=1 // loop_header_branch
      %20 = sbr.rel (%p18) target = $region8
    $region5: #{tpu_custom_call.1} parent=1 // loop_body
      %s22 = ssub.s32 %s17, 1
      %s23 = ssub.s32 %s17, 2
      %s24 = sadd.s32 %s17, 1
      %s25 = ssub.s32 %s17, %s24
      %p26 = scmp.eq.s32.totalorder %s25, 0
      %s28 = sadd.s32 %s27, 1
      %s29 = scalar_select %p26, %s27, %s28
      %p32 = pneg %p26
      %p33 = scmp.eq.s32.totalorder %s17, 1
      %p34 = por %p32, %p33
      %p35 = scmp.ne.s32.totalorder %s27, %s30
      %p36 = scmp.eq.s32.totalorder %s17, 0
      %p37 = por %p35, %p36
      %p38 = scmp.ne.s32.totalorder %s27, %s30
      %p39 = scmp.eq.s32.totalorder %s22, 1
      %p40 = por %p38, %p39
      %p41 = scmp.ne.s32.totalorder %s30, %s31
      %p42 = scmp.eq.s32.totalorder %s22, 0
      %p43 = por %p41, %p42
      %p44 = scmp.ne.s32.totalorder %s30, %s31
      %p45 = scmp.eq.s32.totalorder %s23, 1
      %p46 = por %p44, %p45
      %p48 = scmp.ne.s32.totalorder %s31, %s47
      %p49 = scmp.eq.s32.totalorder %s23, 0
      %p50 = por %p48, %p49
      %s52 = sadd.s32 %s51, 1
      %p55 = scmp.eq.s32.totalorder %s17, 1
      %p56 = scmp.ne.s32.totalorder %s51, %s53
      %p57 = scmp.eq.s32.totalorder %s17, 0
      %p58 = por %p56, %p57
      %p59 = scmp.ne.s32.totalorder %s51, %s53
      %p60 = scmp.eq.s32.totalorder %s22, 1
      %p61 = por %p59, %p60
      %p62 = scmp.ne.s32.totalorder %s53, %s54
      %p63 = scmp.eq.s32.totalorder %s22, 0
      %p64 = por %p62, %p63
      %p65 = scmp.ne.s32.totalorder %s53, %s54
      %p66 = scmp.eq.s32.totalorder %s23, 1
      %p67 = por %p65, %p66
      %p69 = scmp.ne.s32.totalorder %s54, %s68
      %p70 = scmp.eq.s32.totalorder %s23, 0
      %p71 = por %p69, %p70
      %s73 = sadd.s32 %s72, 1
      %p76 = scmp.eq.s32.totalorder %s17, 1
      %p77 = scmp.ne.s32.totalorder %s72, %s74
      %p78 = scmp.eq.s32.totalorder %s17, 0
      %p79 = por %p77, %p78
      %p80 = scmp.ne.s32.totalorder %s72, %s74
      %p81 = scmp.eq.s32.totalorder %s22, 1
      %p82 = por %p80, %p81
      %p83 = scmp.ne.s32.totalorder %s74, %s75
      %p84 = scmp.eq.s32.totalorder %s22, 0
      %p85 = por %p83, %p84
      %p86 = scmp.ne.s32.totalorder %s74, %s75
      %p87 = scmp.eq.s32.totalorder %s23, 1
      %p88 = por %p86, %p87
      %p90 = scmp.ne.s32.totalorder %s75, %s89
      %p91 = scmp.eq.s32.totalorder %s23, 0
      %p92 = por %p90, %p91
      %s94 = sadd.s32 %s93, 1
      %p97 = scmp.eq.s32.totalorder %s17, 1
      %p98 = scmp.ne.s32.totalorder %s93, %s95
      %p99 = scmp.eq.s32.totalorder %s17, 0
      %p100 = por %p98, %p99
      %p101 = scmp.ne.s32.totalorder %s93, %s95
      %p102 = scmp.eq.s32.totalorder %s22, 1
      %p103 = por %p101, %p102
      %p104 = scmp.ne.s32.totalorder %s95, %s96
      %p105 = scmp.eq.s32.totalorder %s22, 0
      %p106 = por %p104, %p105
      %p107 = scmp.ne.s32.totalorder %s95, %s96
      %p108 = scmp.eq.s32.totalorder %s23, 1
      %p109 = por %p107, %p108
      %p111 = scmp.ne.s32.totalorder %s96, %s110
      %p112 = scmp.eq.s32.totalorder %s23, 0
      %p113 = por %p111, %p112
      %s114 = ssub.s32 %s17, %s24
      %p115 = scmp.eq.s32.totalorder %s114, 0
      %s117 = sadd.s32 %s116, 1
      %s118 = scalar_select %p115, %s116, %s117
      %p121 = pneg %p115
      %p122 = scmp.eq.s32.totalorder %s17, 1
      %p123 = por %p121, %p122
      %p124 = scmp.ne.s32.totalorder %s116, %s119
      %p125 = scmp.eq.s32.totalorder %s17, 0
      %p126 = por %p124, %p125
      %p127 = scmp.ne.s32.totalorder %s116, %s119
      %p128 = scmp.eq.s32.totalorder %s22, 1
      %p129 = por %p127, %p128
      %p130 = scmp.ne.s32.totalorder %s119, %s120
      %p131 = scmp.eq.s32.totalorder %s22, 0
      %p132 = por %p130, %p131
      %p133 = scmp.ne.s32.totalorder %s119, %s120
      %p134 = scmp.eq.s32.totalorder %s23, 1
      %p135 = por %p133, %p134
      %p137 = scmp.ne.s32.totalorder %s120, %s136
      %p138 = scmp.eq.s32.totalorder %s23, 0
      %p139 = por %p137, %p138
      %p140 = scmp.le.s32.totalorder 1, %s17
      %p141 = scmp.lt.s32.totalorder %s17, 3
      %p142 = pnand %p140, %p141
      %p143 = pneg %p142
      // Predicated region
      $region9: #{tpu_custom_call.1} parent=5 // pred_check
        _
      $region10: #{tpu_custom_call.1} parent=5 // pred_check_branch
        %145 = sbr.rel (%p142) target = $region12
      $region11: #{tpu_custom_call.1} parent=5 // pred_region
        %s146 = ssub.s32 %s17, 1
        // Predicated region
        $region13: #{tpu_custom_call.1} parent=11 // pred_check
          %p147 = pneg %p64
        $region14: #{tpu_custom_call.1} parent=11 // pred_check_branch
          %149 = sbr.rel (%p147) target = $region16
        $region15: #{tpu_custom_call.1} parent=11 // pred_region
          _
        $region16: #{tpu_custom_call.1} parent=11 // pred_fallthru
          _
        // Predicated region
        $region17: #{tpu_custom_call.1} parent=11 // pred_check
          %p150 = pneg %p85
        $region18: #{tpu_custom_call.1} parent=11 // pred_check_branch
          %152 = sbr.rel (%p150) target = $region20
        $region19: #{tpu_custom_call.1} parent=11 // pred_region
          %s154 = ssub.s32 9216, 9216
          %155 = vsyncadd [#allocation6], %s154
          %s156 = sshll.u32 [#allocation5], 4
          %s157 = int_to_ptr.vmem [resolvable:$true] %s156
          %162 = dma.hbm_to_vmem [thread:$0]  %s2, 9216, %s157, [#allocation6], 64, 64, 4
        $region20: #{tpu_custom_call.1} parent=11 // pred_fallthru
          _
        // Predicated region
        $region21: #{tpu_custom_call.1} parent=11 // pred_check
          %p163 = pneg %p106
        $region22: #{tpu_custom_call.1} parent=11 // pred_check_branch
          %165 = sbr.rel (%p163) target = $region24
        $region23: #{tpu_custom_call.1} parent=11 // pred_region
          %s167 = ssub.s32 9216, 9216
          %168 = vsyncadd [#allocation6], %s167
          %s169 = sshll.u32 [#allocation7], 4
          %s170 = int_to_ptr.vmem [resolvable:$true] %s169
          %175 = dma.hbm_to_vmem [thread:$0]  %s3, 9216, %s170, [#allocation6], 64, 64, 4
        $region24: #{tpu_custom_call.1} parent=11 // pred_fallthru
          _
      $region12: #{tpu_custom_call.1} parent=5 // pred_fallthru
        _
      %p176 = scmp.lt.s32.totalorder %s17, 2
      // Predicated region
      $region25: #{tpu_custom_call.1} parent=5 // pred_check
        %p177 = pneg %p176
      $region26: #{tpu_custom_call.1} parent=5 // pred_check_branch
        %179 = sbr.rel (%p177) target = $region28
      $region27: #{tpu_custom_call.1} parent=5 // pred_region
        // Predicated region
        $region29: #{tpu_custom_call.1} parent=27 // pred_check
          %p180 = pneg %p37
        $region30: #{tpu_custom_call.1} parent=27 // pred_check_branch
          %182 = sbr.rel (%p180) target = $region32
        $region31: #{tpu_custom_call.1} parent=27 // pred_region
          %s183 = sand.u32 %s27, 1
          %s184 = scalar_lea.sflag [#allocation3], %s183
          %s185 = sand.u32 %s27, 1
          %s186 = smul.addr %s185, 256
          %s187 = scalar_lea.vmem [#allocation2], %s186
          %s189 = ssub.s32 4096, 4096
          %190 = vsyncadd %s184, %s189
          %s191 = smul.addr %s17, 32
          %s192 = smul.addr %s191, 128
          %s193 = scalar_lea.hbm %s0, %s192
          %s194 = sshll.u32 %s187, 4
          %s195 = int_to_ptr.vmem [resolvable:$true] %s194
          %200 = dma.hbm_to_vmem [thread:$0]  %s193, 4096, %s195, %s184, 128, 128, 8
        $region32: #{tpu_custom_call.1} parent=27 // pred_fallthru
          _
      $region28: #{tpu_custom_call.1} parent=5 // pred_fallthru
        _
      %p201 = scmp.le.s32.totalorder 1, %s17
      %p202 = scmp.lt.s32.totalorder %s17, 3
      %p203 = pnand %p201, %p202
      %p204 = pneg %p203
      // Predicated region
      $region33: #{tpu_custom_call.1} parent=5 // pred_check
        _
      $region34: #{tpu_custom_call.1} parent=5 // pred_check_branch
        %206 = sbr.rel (%p203) target = $region36
      $region35: #{tpu_custom_call.1} parent=5 // pred_region
        %s207 = ssub.s32 %s17, 1
        %s208 = sand.u32 %s30, 1
        %s209 = scalar_lea.sflag [#allocation3], %s208
        %s210 = sand.u32 %s30, 1
        %s211 = smul.addr %s210, 256
        %s212 = scalar_lea.vmem [#allocation2], %s211
        // Predicated region
        $region37: #{tpu_custom_call.1} parent=35 // pred_check
          %p213 = pneg %p43
        $region38: #{tpu_custom_call.1} parent=35 // pred_check_branch
          %215 = sbr.rel (%p213) target = $region40
        $region39: #{tpu_custom_call.1} parent=35 // pred_region
          %216 = dma.done %s209, 4096
        $region40: #{tpu_custom_call.1} parent=35 // pred_fallthru
          _
        // Predicated region
        $region41: #{tpu_custom_call.1} parent=35 // pred_check
          %p217 = pneg %p85
        $region42: #{tpu_custom_call.1} parent=35 // pred_check_branch
          %219 = sbr.rel (%p217) target = $region44
        $region43: #{tpu_custom_call.1} parent=35 // pred_region
          %220 = dma.done [#allocation6], 9216
        $region44: #{tpu_custom_call.1} parent=35 // pred_fallthru
          _
        // Predicated region
        $region45: #{tpu_custom_call.1} parent=35 // pred_check
          %p221 = pneg %p106
        $region46: #{tpu_custom_call.1} parent=35 // pred_check_branch
          %223 = sbr.rel (%p221) target = $region48
        $region47: #{tpu_custom_call.1} parent=35 // pred_region
          %224 = dma.done [#allocation6], 9216
        $region48: #{tpu_custom_call.1} parent=35 // pred_fallthru
          _
        %s225 = sand.u32 %s30, 1
        %s226 = scalar_lea.sflag [#allocation3], %s225
        %s227 = sand.u32 %s30, 1
        %s228 = smul.addr %s227, 256
        %s229 = scalar_lea.vmem [#allocation2], %s228
        %p230 = pneg %p43
        %p231 = pneg %p40
        %p232 = pneg %p64
        %p233 = pneg %p61
        %p234 = pneg %p85
        %p235 = pneg %p82
        %p236 = pneg %p106
        %p237 = pneg %p103
        %p238 = pneg %p132
        %p239 = pneg %p129
        %s240 = sand.u32 %s119, 1
        %s241 = scalar_lea.sflag [#allocation4], %s240
        %s242 = sand.u32 %s119, 1
        %s243 = smul.addr %s242, 256
        %s244 = scalar_lea.vmem [#allocation8], %s243
        %v246 = vld [vmem:[%s1] sm:$0xff]
        %v247 = vld [vmem:[%s1 + $0x8] sm:$0xff]
        %v248 = vld [vmem:[%s1 + $0x10] sm:$0xff]
        %v249 = vld [vmem:[%s1 + $0x18] sm:$0xff]
        %v250 = vld [vmem:[%s1 + $0x20] sm:$0xff]
        %v251 = vld [vmem:[%s1 + $0x28] sm:$0xff]
        %v252 = vld [vmem:[%s1 + $0x30] sm:$0xff]
        %v253 = vld [vmem:[%s1 + $0x38] sm:$0xff]
        %v254 = vld [vmem:[%s1 + $0x40] sm:$0xff]
        %v255 = vld [vmem:[%s1 + $0x48] sm:$0xff]
        %v256 = vld [vmem:[%s1 + $0x50] sm:$0xff]
        %v257 = vld [vmem:[%s1 + $0x58] sm:$0xff]
        %v258 = vld [vmem:[%s1 + $0x60] sm:$0xff]
        %v259 = vld [vmem:[%s1 + $0x68] sm:$0xff]
        %v260 = vld [vmem:[%s1 + $0x70] sm:$0xff]
        %v261 = vld [vmem:[%s1 + $0x78] sm:$0xff]
        %v262 = vld [vmem:[%s1 + $0x80] sm:$0xff]
        %v263 = vld [vmem:[%s1 + $0x88] sm:$0xff]
        %v264 = vld [vmem:[%s1 + $0x90] sm:$0xff]
        %v265 = vld [vmem:[%s1 + $0x98] sm:$0xff]
        %v266 = vld [vmem:[%s1 + $0xa0] sm:$0xff]
        %v267 = vld [vmem:[%s1 + $0xa8] sm:$0xff]
        %v268 = vld [vmem:[%s1 + $0xb0] sm:$0xff]
        %v269 = vld [vmem:[%s1 + $0xb8] sm:$0xff]
        %v270 = vld [vmem:[%s1 + $0xc0] sm:$0xff]
        %v271 = vld [vmem:[%s1 + $0xc8] sm:$0xff]
        %v272 = vld [vmem:[%s1 + $0xd0] sm:$0xff]
        %v273 = vld [vmem:[%s1 + $0xd8] sm:$0xff]
        %v274 = vld [vmem:[%s1 + $0xe0] sm:$0xff]
        %v275 = vld [vmem:[%s1 + $0xe8] sm:$0xff]
        %v276 = vld [vmem:[%s1 + $0xf0] sm:$0xff]
        %v277 = vld [vmem:[%s1 + $0xf8] sm:$0xff]
        %v278 = vld [vmem:[%s1 + $0x100] sm:$0xff]
        %v279 = vld [vmem:[%s1 + $0x108] sm:$0xff]
        %v280 = vld [vmem:[%s1 + $0x110] sm:$0xff]
        %v281 = vld [vmem:[%s1 + $0x118] sm:$0xff]
        %vm282 = vcmp.eq.s32.totalorder %v246, 0
        %vm283 = vcmp.eq.s32.totalorder %v247, 0
        %vm284 = vcmp.eq.s32.totalorder %v248, 0
        %vm285 = vcmp.eq.s32.totalorder %v249, 0
        %vm286 = vcmp.eq.s32.totalorder %v250, 0
        %vm287 = vcmp.eq.s32.totalorder %v251, 0
        %vm288 = vcmp.eq.s32.totalorder %v252, 0
        %vm289 = vcmp.eq.s32.totalorder %v253, 0
        %vm290 = vcmp.eq.s32.totalorder %v254, 0
        %vm291 = vcmp.eq.s32.totalorder %v255, 0
        %vm292 = vcmp.eq.s32.totalorder %v256, 0
        %vm293 = vcmp.eq.s32.totalorder %v257, 0
        %vm294 = vcmp.eq.s32.totalorder %v258, 0
        %vm295 = vcmp.eq.s32.totalorder %v259, 0
        %vm296 = vcmp.eq.s32.totalorder %v260, 0
        %vm297 = vcmp.eq.s32.totalorder %v261, 0
        %vm298 = vcmp.eq.s32.totalorder %v262, 0
        %vm299 = vcmp.eq.s32.totalorder %v263, 0
        %vm300 = vcmp.eq.s32.totalorder %v264, 0
        %vm301 = vcmp.eq.s32.totalorder %v265, 0
        %vm302 = vcmp.eq.s32.totalorder %v266, 0
        %vm303 = vcmp.eq.s32.totalorder %v267, 0
        %vm304 = vcmp.eq.s32.totalorder %v268, 0
        %vm305 = vcmp.eq.s32.totalorder %v269, 0
        %vm306 = vcmp.eq.s32.totalorder %v270, 0
        %vm307 = vcmp.eq.s32.totalorder %v271, 0
        %vm308 = vcmp.eq.s32.totalorder %v272, 0
        %vm309 = vcmp.eq.s32.totalorder %v273, 0
        %vm310 = vcmp.eq.s32.totalorder %v274, 0
        %vm311 = vcmp.eq.s32.totalorder %v275, 0
        %vm312 = vcmp.eq.s32.totalorder %v276, 0
        %vm313 = vcmp.eq.s32.totalorder %v277, 0
        %vm314 = vcmp.eq.s32.totalorder %v278, 0
        %vm315 = vcmp.eq.s32.totalorder %v279, 0
        %vm316 = vcmp.eq.s32.totalorder %v280, 0
        %vm317 = vcmp.eq.s32.totalorder %v281, 0
        %vm318 = vcmp.eq.s32.totalorder %v246, 15
        %vm319 = vcmp.eq.s32.totalorder %v247, 15
        %vm320 = vcmp.eq.s32.totalorder %v248, 15
        %vm321 = vcmp.eq.s32.totalorder %v249, 15
        %vm322 = vcmp.eq.s32.totalorder %v250, 15
        %vm323 = vcmp.eq.s32.totalorder %v251, 15
        %vm324 = vcmp.eq.s32.totalorder %v252, 15
        %vm325 = vcmp.eq.s32.totalorder %v253, 15
        %vm326 = vcmp.eq.s32.totalorder %v254, 15
        %vm327 = vcmp.eq.s32.totalorder %v255, 15
        %vm328 = vcmp.eq.s32.totalorder %v256, 15
        %vm329 = vcmp.eq.s32.totalorder %v257, 15
        %vm330 = vcmp.eq.s32.totalorder %v258, 15
        %vm331 = vcmp.eq.s32.totalorder %v259, 15
        %vm332 = vcmp.eq.s32.totalorder %v260, 15
        %vm333 = vcmp.eq.s32.totalorder %v261, 15
        %vm334 = vcmp.eq.s32.totalorder %v262, 15
        %vm335 = vcmp.eq.s32.totalorder %v263, 15
        %vm336 = vcmp.eq.s32.totalorder %v264, 15
        %vm337 = vcmp.eq.s32.totalorder %v265, 15
        %vm338 = vcmp.eq.s32.totalorder %v266, 15
        %vm339 = vcmp.eq.s32.totalorder %v267, 15
        %vm340 = vcmp.eq.s32.totalorder %v268, 15
        %vm341 = vcmp.eq.s32.totalorder %v269, 15
        %vm342 = vcmp.eq.s32.totalorder %v270, 15
        %vm343 = vcmp.eq.s32.totalorder %v271, 15
        %vm344 = vcmp.eq.s32.totalorder %v272, 15
        %vm345 = vcmp.eq.s32.totalorder %v273, 15
        %vm346 = vcmp.eq.s32.totalorder %v274, 15
        %vm347 = vcmp.eq.s32.totalorder %v275, 15
        %vm348 = vcmp.eq.s32.totalorder %v276, 15
        %vm349 = vcmp.eq.s32.totalorder %v277, 15
        %vm350 = vcmp.eq.s32.totalorder %v278, 15
        %vm351 = vcmp.eq.s32.totalorder %v279, 15
        %vm352 = vcmp.eq.s32.totalorder %v280, 15
        %vm353 = vcmp.eq.s32.totalorder %v281, 15
        %v354 = vld [vmem:[#allocation5] sm:$0xf]
        %v355 = vld [vmem:[#allocation5 + $0x4] sm:$0xf]
        %v356 = vld [vmem:[#allocation5 + $0x8] sm:$0xf]
        %v357 = vld [vmem:[#allocation5 + $0xc] sm:$0xf]
        %v358 = vld [vmem:[#allocation5 + $0x10] sm:$0xf]
        %v359 = vld [vmem:[#allocation5 + $0x14] sm:$0xf]
        %v360 = vld [vmem:[#allocation5 + $0x18] sm:$0xf]
        %v361 = vld [vmem:[#allocation5 + $0x1c] sm:$0xf]
        %v362 = vld [vmem:[#allocation5 + $0x20] sm:$0xf]
        %v363 = vld [vmem:[#allocation5 + $0x24] sm:$0xf]
        %v364 = vld [vmem:[#allocation5 + $0x28] sm:$0xf]
        %v365 = vld [vmem:[#allocation5 + $0x2c] sm:$0xf]
        %v366 = vld [vmem:[#allocation5 + $0x30] sm:$0xf]
        %v367 = vld [vmem:[#allocation5 + $0x34] sm:$0xf]
        %v368 = vld [vmem:[#allocation5 + $0x38] sm:$0xf]
        %v369 = vld [vmem:[#allocation5 + $0x3c] sm:$0xf]
        %v370 = vld [vmem:[#allocation5 + $0x40] sm:$0xf]
        %v371 = vld [vmem:[#allocation5 + $0x44] sm:$0xf]
        %v372 = vld [vmem:[#allocation5 + $0x48] sm:$0xf]
        %v373 = vld [vmem:[#allocation5 + $0x4c] sm:$0xf]
        %v374 = vld [vmem:[#allocation5 + $0x50] sm:$0xf]
        %v375 = vld [vmem:[#allocation5 + $0x54] sm:$0xf]
        %v376 = vld [vmem:[#allocation5 + $0x58] sm:$0xf]
        %v377 = vld [vmem:[#allocation5 + $0x5c] sm:$0xf]
        %v378 = vld [vmem:[#allocation5 + $0x60] sm:$0xf]
        %v379 = vld [vmem:[#allocation5 + $0x64] sm:$0xf]
        %v380 = vld [vmem:[#allocation5 + $0x68] sm:$0xf]
        %v381 = vld [vmem:[#allocation5 + $0x6c] sm:$0xf]
        %v382 = vld [vmem:[#allocation5 + $0x70] sm:$0xf]
        %v383 = vld [vmem:[#allocation5 + $0x74] sm:$0xf]
        %v384 = vld [vmem:[#allocation5 + $0x78] sm:$0xf]
        %v385 = vld [vmem:[#allocation5 + $0x7c] sm:$0xf]
        %v386 = vld [vmem:[#allocation5 + $0x80] sm:$0xf]
        %v387 = vld [vmem:[#allocation5 + $0x84] sm:$0xf]
        %v388 = vld [vmem:[#allocation5 + $0x88] sm:$0xf]
        %v389 = vld [vmem:[#allocation5 + $0x8c] sm:$0xf]
        %v390 = vld [vmem:[#allocation5 + $0x90] sm:$0xf]
        %v391 = vld [vmem:[#allocation5 + $0x94] sm:$0xf]
        %v392 = vld [vmem:[#allocation5 + $0x98] sm:$0xf]
        %v393 = vld [vmem:[#allocation5 + $0x9c] sm:$0xf]
        %v394 = vld [vmem:[#allocation5 + $0xa0] sm:$0xf]
        %v395 = vld [vmem:[#allocation5 + $0xa4] sm:$0xf]
        %v396 = vld [vmem:[#allocation5 + $0xa8] sm:$0xf]
        %v397 = vld [vmem:[#allocation5 + $0xac] sm:$0xf]
        %v398 = vld [vmem:[#allocation5 + $0xb0] sm:$0xf]
        %v399 = vld [vmem:[#allocation5 + $0xb4] sm:$0xf]
        %v400 = vld [vmem:[#allocation5 + $0xb8] sm:$0xf]
        %v401 = vld [vmem:[#allocation5 + $0xbc] sm:$0xf]
        %v402 = vld [vmem:[#allocation5 + $0xc0] sm:$0xf]
        %v403 = vld [vmem:[#allocation5 + $0xc4] sm:$0xf]
        %v404 = vld [vmem:[#allocation5 + $0xc8] sm:$0xf]
        %v405 = vld [vmem:[#allocation5 + $0xcc] sm:$0xf]
        %v406 = vld [vmem:[#allocation5 + $0xd0] sm:$0xf]
        %v407 = vld [vmem:[#allocation5 + $0xd4] sm:$0xf]
        %v408 = vld [vmem:[#allocation5 + $0xd8] sm:$0xf]
        %v409 = vld [vmem:[#allocation5 + $0xdc] sm:$0xf]
        %v410 = vld [vmem:[#allocation5 + $0xe0] sm:$0xf]
        %v411 = vld [vmem:[#allocation5 + $0xe4] sm:$0xf]
        %v412 = vld [vmem:[#allocation5 + $0xe8] sm:$0xf]
        %v413 = vld [vmem:[#allocation5 + $0xec] sm:$0xf]
        %v414 = vld [vmem:[#allocation5 + $0xf0] sm:$0xf]
        %v415 = vld [vmem:[#allocation5 + $0xf4] sm:$0xf]
        %v416 = vld [vmem:[#allocation5 + $0xf8] sm:$0xf]
        %v417 = vld [vmem:[#allocation5 + $0xfc] sm:$0xf]
        %v418 = vld [vmem:[#allocation5 + $0x100] sm:$0xf]
        %v419 = vld [vmem:[#allocation5 + $0x104] sm:$0xf]
        %v420 = vld [vmem:[#allocation5 + $0x108] sm:$0xf]
        %v421 = vld [vmem:[#allocation5 + $0x10c] sm:$0xf]
        %v422 = vld [vmem:[#allocation5 + $0x110] sm:$0xf]
        %v423 = vld [vmem:[#allocation5 + $0x114] sm:$0xf]
        %v424 = vld [vmem:[#allocation5 + $0x118] sm:$0xf]
        %v425 = vld [vmem:[#allocation5 + $0x11c] sm:$0xf]
        %v426 = vld [vmem:[#allocation5 + $0x120] sm:$0xf]
        %v427 = vld [vmem:[#allocation5 + $0x124] sm:$0xf]
        %v428 = vld [vmem:[#allocation5 + $0x128] sm:$0xf]
        %v429 = vld [vmem:[#allocation5 + $0x12c] sm:$0xf]
        %v430 = vld [vmem:[#allocation5 + $0x130] sm:$0xf]
        %v431 = vld [vmem:[#allocation5 + $0x134] sm:$0xf]
        %v432 = vld [vmem:[#allocation5 + $0x138] sm:$0xf]
        %v433 = vld [vmem:[#allocation5 + $0x13c] sm:$0xf]
        %v434 = vld [vmem:[#allocation5 + $0x140] sm:$0xf]
        %v435 = vld [vmem:[#allocation5 + $0x144] sm:$0xf]
        %v436 = vld [vmem:[#allocation5 + $0x148] sm:$0xf]
        %v437 = vld [vmem:[#allocation5 + $0x14c] sm:$0xf]
        %v438 = vld [vmem:[#allocation5 + $0x150] sm:$0xf]
        %v439 = vld [vmem:[#allocation5 + $0x154] sm:$0xf]
        %v440 = vld [vmem:[#allocation5 + $0x158] sm:$0xf]
        %v441 = vld [vmem:[#allocation5 + $0x15c] sm:$0xf]
        %v442 = vld [vmem:[#allocation5 + $0x160] sm:$0xf]
        %v443 = vld [vmem:[#allocation5 + $0x164] sm:$0xf]
        %v444 = vld [vmem:[#allocation5 + $0x168] sm:$0xf]
        %v445 = vld [vmem:[#allocation5 + $0x16c] sm:$0xf]
        %v446 = vld [vmem:[#allocation5 + $0x170] sm:$0xf]
        %v447 = vld [vmem:[#allocation5 + $0x174] sm:$0xf]
        %v448 = vld [vmem:[#allocation5 + $0x178] sm:$0xf]
        %v449 = vld [vmem:[#allocation5 + $0x17c] sm:$0xf]
        %v450 = vld [vmem:[#allocation5 + $0x180] sm:$0xf]
        %v451 = vld [vmem:[#allocation5 + $0x184] sm:$0xf]
        %v452 = vld [vmem:[#allocation5 + $0x188] sm:$0xf]
        %v453 = vld [vmem:[#allocation5 + $0x18c] sm:$0xf]
        %v454 = vld [vmem:[#allocation5 + $0x190] sm:$0xf]
        %v455 = vld [vmem:[#allocation5 + $0x194] sm:$0xf]
        %v456 = vld [vmem:[#allocation5 + $0x198] sm:$0xf]
        %v457 = vld [vmem:[#allocation5 + $0x19c] sm:$0xf]
        %v458 = vld [vmem:[#allocation5 + $0x1a0] sm:$0xf]
        %v459 = vld [vmem:[#allocation5 + $0x1a4] sm:$0xf]
        %v460 = vld [vmem:[#allocation5 + $0x1a8] sm:$0xf]
        %v461 = vld [vmem:[#allocation5 + $0x1ac] sm:$0xf]
        %v462 = vld [vmem:[#allocation5 + $0x1b0] sm:$0xf]
        %v463 = vld [vmem:[#allocation5 + $0x1b4] sm:$0xf]
        %v464 = vld [vmem:[#allocation5 + $0x1b8] sm:$0xf]
        %v465 = vld [vmem:[#allocation5 + $0x1bc] sm:$0xf]
        %v466 = vld [vmem:[#allocation5 + $0x1c0] sm:$0xf]
        %v467 = vld [vmem:[#allocation5 + $0x1c4] sm:$0xf]
        %v468 = vld [vmem:[#allocation5 + $0x1c8] sm:$0xf]
        %v469 = vld [vmem:[#allocation5 + $0x1cc] sm:$0xf]
        %v470 = vld [vmem:[#allocation5 + $0x1d0] sm:$0xf]
        %v471 = vld [vmem:[#allocation5 + $0x1d4] sm:$0xf]
        %v472 = vld [vmem:[#allocation5 + $0x1d8] sm:$0xf]
        %v473 = vld [vmem:[#allocation5 + $0x1dc] sm:$0xf]
        %v474 = vld [vmem:[#allocation5 + $0x1e0] sm:$0xf]
        %v475 = vld [vmem:[#allocation5 + $0x1e4] sm:$0xf]
        %v476 = vld [vmem:[#allocation5 + $0x1e8] sm:$0xf]
        %v477 = vld [vmem:[#allocation5 + $0x1ec] sm:$0xf]
        %v478 = vld [vmem:[#allocation5 + $0x1f0] sm:$0xf]
        %v479 = vld [vmem:[#allocation5 + $0x1f4] sm:$0xf]
        %v480 = vld [vmem:[#allocation5 + $0x1f8] sm:$0xf]
        %v481 = vld [vmem:[#allocation5 + $0x1fc] sm:$0xf]
        %v482 = vld [vmem:[#allocation5 + $0x200] sm:$0xf]
        %v483 = vld [vmem:[#allocation5 + $0x204] sm:$0xf]
        %v484 = vld [vmem:[#allocation5 + $0x208] sm:$0xf]
        %v485 = vld [vmem:[#allocation5 + $0x20c] sm:$0xf]
        %v486 = vld [vmem:[#allocation5 + $0x210] sm:$0xf]
        %v487 = vld [vmem:[#allocation5 + $0x214] sm:$0xf]
        %v488 = vld [vmem:[#allocation5 + $0x218] sm:$0xf]
        %v489 = vld [vmem:[#allocation5 + $0x21c] sm:$0xf]
        %v490 = vld [vmem:[#allocation5 + $0x220] sm:$0xf]
        %v491 = vld [vmem:[#allocation5 + $0x224] sm:$0xf]
        %v492 = vld [vmem:[#allocation5 + $0x228] sm:$0xf]
        %v493 = vld [vmem:[#allocation5 + $0x22c] sm:$0xf]
        %v494 = vld [vmem:[#allocation5 + $0x230] sm:$0xf]
        %v495 = vld [vmem:[#allocation5 + $0x234] sm:$0xf]
        %v496 = vld [vmem:[#allocation5 + $0x238] sm:$0xf]
        %v497 = vld [vmem:[#allocation5 + $0x23c] sm:$0xf]
        %v498 = vld [vmem:[#allocation7] sm:$0xf]
        %v499 = vld [vmem:[#allocation7 + $0x4] sm:$0xf]
        %v500 = vld [vmem:[#allocation7 + $0x8] sm:$0xf]
        %v501 = vld [vmem:[#allocation7 + $0xc] sm:$0xf]
        %v502 = vld [vmem:[#allocation7 + $0x10] sm:$0xf]
        %v503 = vld [vmem:[#allocation7 + $0x14] sm:$0xf]
        %v504 = vld [vmem:[#allocation7 + $0x18] sm:$0xf]
        %v505 = vld [vmem:[#allocation7 + $0x1c] sm:$0xf]
        %v506 = vld [vmem:[#allocation7 + $0x20] sm:$0xf]
        %v507 = vld [vmem:[#allocation7 + $0x24] sm:$0xf]
        %v508 = vld [vmem:[#allocation7 + $0x28] sm:$0xf]
        %v509 = vld [vmem:[#allocation7 + $0x2c] sm:$0xf]
        %v510 = vld [vmem:[#allocation7 + $0x30] sm:$0xf]
        %v511 = vld [vmem:[#allocation7 + $0x34] sm:$0xf]
        %v512 = vld [vmem:[#allocation7 + $0x38] sm:$0xf]
        %v513 = vld [vmem:[#allocation7 + $0x3c] sm:$0xf]
        %v514 = vld [vmem:[#allocation7 + $0x40] sm:$0xf]
        %v515 = vld [vmem:[#allocation7 + $0x44] sm:$0xf]
        %v516 = vld [vmem:[#allocation7 + $0x48] sm:$0xf]
        %v517 = vld [vmem:[#allocation7 + $0x4c] sm:$0xf]
        %v518 = vld [vmem:[#allocation7 + $0x50] sm:$0xf]
        %v519 = vld [vmem:[#allocation7 + $0x54] sm:$0xf]
        %v520 = vld [vmem:[#allocation7 + $0x58] sm:$0xf]
        %v521 = vld [vmem:[#allocation7 + $0x5c] sm:$0xf]
        %v522 = vld [vmem:[#allocation7 + $0x60] sm:$0xf]
        %v523 = vld [vmem:[#allocation7 + $0x64] sm:$0xf]
        %v524 = vld [vmem:[#allocation7 + $0x68] sm:$0xf]
        %v525 = vld [vmem:[#allocation7 + $0x6c] sm:$0xf]
        %v526 = vld [vmem:[#allocation7 + $0x70] sm:$0xf]
        %v527 = vld [vmem:[#allocation7 + $0x74] sm:$0xf]
        %v528 = vld [vmem:[#allocation7 + $0x78] sm:$0xf]
        %v529 = vld [vmem:[#allocation7 + $0x7c] sm:$0xf]
        %v530 = vld [vmem:[#allocation7 + $0x80] sm:$0xf]
        %v531 = vld [vmem:[#allocation7 + $0x84] sm:$0xf]
        %v532 = vld [vmem:[#allocation7 + $0x88] sm:$0xf]
        %v533 = vld [vmem:[#allocation7 + $0x8c] sm:$0xf]
        %v534 = vld [vmem:[#allocation7 + $0x90] sm:$0xf]
        %v535 = vld [vmem:[#allocation7 + $0x94] sm:$0xf]
        %v536 = vld [vmem:[#allocation7 + $0x98] sm:$0xf]
        %v537 = vld [vmem:[#allocation7 + $0x9c] sm:$0xf]
        %v538 = vld [vmem:[#allocation7 + $0xa0] sm:$0xf]
        %v539 = vld [vmem:[#allocation7 + $0xa4] sm:$0xf]
        %v540 = vld [vmem:[#allocation7 + $0xa8] sm:$0xf]
        %v541 = vld [vmem:[#allocation7 + $0xac] sm:$0xf]
        %v542 = vld [vmem:[#allocation7 + $0xb0] sm:$0xf]
        %v543 = vld [vmem:[#allocation7 + $0xb4] sm:$0xf]
        %v544 = vld [vmem:[#allocation7 + $0xb8] sm:$0xf]
        %v545 = vld [vmem:[#allocation7 + $0xbc] sm:$0xf]
        %v546 = vld [vmem:[#allocation7 + $0xc0] sm:$0xf]
        %v547 = vld [vmem:[#allocation7 + $0xc4] sm:$0xf]
        %v548 = vld [vmem:[#allocation7 + $0xc8] sm:$0xf]
        %v549 = vld [vmem:[#allocation7 + $0xcc] sm:$0xf]
        %v550 = vld [vmem:[#allocation7 + $0xd0] sm:$0xf]
        %v551 = vld [vmem:[#allocation7 + $0xd4] sm:$0xf]
        %v552 = vld [vmem:[#allocation7 + $0xd8] sm:$0xf]
        %v553 = vld [vmem:[#allocation7 + $0xdc] sm:$0xf]
        %v554 = vld [vmem:[#allocation7 + $0xe0] sm:$0xf]
        %v555 = vld [vmem:[#allocation7 + $0xe4] sm:$0xf]
        %v556 = vld [vmem:[#allocation7 + $0xe8] sm:$0xf]
        %v557 = vld [vmem:[#allocation7 + $0xec] sm:$0xf]
        %v558 = vld [vmem:[#allocation7 + $0xf0] sm:$0xf]
        %v559 = vld [vmem:[#allocation7 + $0xf4] sm:$0xf]
        %v560 = vld [vmem:[#allocation7 + $0xf8] sm:$0xf]
        %v561 = vld [vmem:[#allocation7 + $0xfc] sm:$0xf]
        %v562 = vld [vmem:[#allocation7 + $0x100] sm:$0xf]
        %v563 = vld [vmem:[#allocation7 + $0x104] sm:$0xf]
        %v564 = vld [vmem:[#allocation7 + $0x108] sm:$0xf]
        %v565 = vld [vmem:[#allocation7 + $0x10c] sm:$0xf]
        %v566 = vld [vmem:[#allocation7 + $0x110] sm:$0xf]
        %v567 = vld [vmem:[#allocation7 + $0x114] sm:$0xf]
        %v568 = vld [vmem:[#allocation7 + $0x118] sm:$0xf]
        %v569 = vld [vmem:[#allocation7 + $0x11c] sm:$0xf]
        %v570 = vld [vmem:[#allocation7 + $0x120] sm:$0xf]
        %v571 = vld [vmem:[#allocation7 + $0x124] sm:$0xf]
        %v572 = vld [vmem:[#allocation7 + $0x128] sm:$0xf]
        %v573 = vld [vmem:[#allocation7 + $0x12c] sm:$0xf]
        %v574 = vld [vmem:[#allocation7 + $0x130] sm:$0xf]
        %v575 = vld [vmem:[#allocation7 + $0x134] sm:$0xf]
        %v576 = vld [vmem:[#allocation7 + $0x138] sm:$0xf]
        %v577 = vld [vmem:[#allocation7 + $0x13c] sm:$0xf]
        %v578 = vld [vmem:[#allocation7 + $0x140] sm:$0xf]
        %v579 = vld [vmem:[#allocation7 + $0x144] sm:$0xf]
        %v580 = vld [vmem:[#allocation7 + $0x148] sm:$0xf]
        %v581 = vld [vmem:[#allocation7 + $0x14c] sm:$0xf]
        %v582 = vld [vmem:[#allocation7 + $0x150] sm:$0xf]
        %v583 = vld [vmem:[#allocation7 + $0x154] sm:$0xf]
        %v584 = vld [vmem:[#allocation7 + $0x158] sm:$0xf]
        %v585 = vld [vmem:[#allocation7 + $0x15c] sm:$0xf]
        %v586 = vld [vmem:[#allocation7 + $0x160] sm:$0xf]
        %v587 = vld [vmem:[#allocation7 + $0x164] sm:$0xf]
        %v588 = vld [vmem:[#allocation7 + $0x168] sm:$0xf]
        %v589 = vld [vmem:[#allocation7 + $0x16c] sm:$0xf]
        %v590 = vld [vmem:[#allocation7 + $0x170] sm:$0xf]
        %v591 = vld [vmem:[#allocation7 + $0x174] sm:$0xf]
        %v592 = vld [vmem:[#allocation7 + $0x178] sm:$0xf]
        %v593 = vld [vmem:[#allocation7 + $0x17c] sm:$0xf]
        %v594 = vld [vmem:[#allocation7 + $0x180] sm:$0xf]
        %v595 = vld [vmem:[#allocation7 + $0x184] sm:$0xf]
        %v596 = vld [vmem:[#allocation7 + $0x188] sm:$0xf]
        %v597 = vld [vmem:[#allocation7 + $0x18c] sm:$0xf]
        %v598 = vld [vmem:[#allocation7 + $0x190] sm:$0xf]
        %v599 = vld [vmem:[#allocation7 + $0x194] sm:$0xf]
        %v600 = vld [vmem:[#allocation7 + $0x198] sm:$0xf]
        %v601 = vld [vmem:[#allocation7 + $0x19c] sm:$0xf]
        %v602 = vld [vmem:[#allocation7 + $0x1a0] sm:$0xf]
        %v603 = vld [vmem:[#allocation7 + $0x1a4] sm:$0xf]
        %v604 = vld [vmem:[#allocation7 + $0x1a8] sm:$0xf]
        %v605 = vld [vmem:[#allocation7 + $0x1ac] sm:$0xf]
        %v606 = vld [vmem:[#allocation7 + $0x1b0] sm:$0xf]
        %v607 = vld [vmem:[#allocation7 + $0x1b4] sm:$0xf]
        %v608 = vld [vmem:[#allocation7 + $0x1b8] sm:$0xf]
        %v609 = vld [vmem:[#allocation7 + $0x1bc] sm:$0xf]
        %v610 = vld [vmem:[#allocation7 + $0x1c0] sm:$0xf]
        %v611 = vld [vmem:[#allocation7 + $0x1c4] sm:$0xf]
        %v612 = vld [vmem:[#allocation7 + $0x1c8] sm:$0xf]
        %v613 = vld [vmem:[#allocation7 + $0x1cc] sm:$0xf]
        %v614 = vld [vmem:[#allocation7 + $0x1d0] sm:$0xf]
        %v615 = vld [vmem:[#allocation7 + $0x1d4] sm:$0xf]
        %v616 = vld [vmem:[#allocation7 + $0x1d8] sm:$0xf]
        %v617 = vld [vmem:[#allocation7 + $0x1dc] sm:$0xf]
        %v618 = vld [vmem:[#allocation7 + $0x1e0] sm:$0xf]
        %v619 = vld [vmem:[#allocation7 + $0x1e4] sm:$0xf]
        %v620 = vld [vmem:[#allocation7 + $0x1e8] sm:$0xf]
        %v621 = vld [vmem:[#allocation7 + $0x1ec] sm:$0xf]
        %v622 = vld [vmem:[#allocation7 + $0x1f0] sm:$0xf]
        %v623 = vld [vmem:[#allocation7 + $0x1f4] sm:$0xf]
        %v624 = vld [vmem:[#allocation7 + $0x1f8] sm:$0xf]
        %v625 = vld [vmem:[#allocation7 + $0x1fc] sm:$0xf]
        %v626 = vld [vmem:[#allocation7 + $0x200] sm:$0xf]
        %v627 = vld [vmem:[#allocation7 + $0x204] sm:$0xf]
        %v628 = vld [vmem:[#allocation7 + $0x208] sm:$0xf]
        %v629 = vld [vmem:[#allocation7 + $0x20c] sm:$0xf]
        %v630 = vld [vmem:[#allocation7 + $0x210] sm:$0xf]
        %v631 = vld [vmem:[#allocation7 + $0x214] sm:$0xf]
        %v632 = vld [vmem:[#allocation7 + $0x218] sm:$0xf]
        %v633 = vld [vmem:[#allocation7 + $0x21c] sm:$0xf]
        %v634 = vld [vmem:[#allocation7 + $0x220] sm:$0xf]
        %v635 = vld [vmem:[#allocation7 + $0x224] sm:$0xf]
        %v636 = vld [vmem:[#allocation7 + $0x228] sm:$0xf]
        %v637 = vld [vmem:[#allocation7 + $0x22c] sm:$0xf]
        %v638 = vld [vmem:[#allocation7 + $0x230] sm:$0xf]
        %v639 = vld [vmem:[#allocation7 + $0x234] sm:$0xf]
        %v640 = vld [vmem:[#allocation7 + $0x238] sm:$0xf]
        %v641 = vld [vmem:[#allocation7 + $0x23c] sm:$0xf]
        %v642 = vld [vmem:[%s212] sm:$0xff]
        %v643 = vld [vmem:[%s212 + $0x8] sm:$0xff]
        %v644 = vld [vmem:[%s212 + $0x10] sm:$0xff]
        %v645 = vld [vmem:[%s212 + $0x18] sm:$0xff]
        %v646 = vld [vmem:[%s212 + $0x20] sm:$0xff]
        %v647 = vld [vmem:[%s212 + $0x28] sm:$0xff]
        %v648 = vld [vmem:[%s212 + $0x30] sm:$0xff]
        %v649 = vld [vmem:[%s212 + $0x38] sm:$0xff]
        %v650 = vld [vmem:[%s212 + $0x40] sm:$0xff]
        %v651 = vld [vmem:[%s212 + $0x48] sm:$0xff]
        %v652 = vld [vmem:[%s212 + $0x50] sm:$0xff]
        %v653 = vld [vmem:[%s212 + $0x58] sm:$0xff]
        %v654 = vld [vmem:[%s212 + $0x60] sm:$0xff]
        %v655 = vld [vmem:[%s212 + $0x68] sm:$0xff]
        %v656 = vld [vmem:[%s212 + $0x70] sm:$0xff]
        %v657 = vld [vmem:[%s212 + $0x78] sm:$0xff]
        %v658 = vld [vmem:[%s212 + $0x80] sm:$0xff]
        %v659 = vld [vmem:[%s212 + $0x88] sm:$0xff]
        %v660 = vld [vmem:[%s212 + $0x90] sm:$0xff]
        %v661 = vld [vmem:[%s212 + $0x98] sm:$0xff]
        %v662 = vld [vmem:[%s212 + $0xa0] sm:$0xff]
        %v663 = vld [vmem:[%s212 + $0xa8] sm:$0xff]
        %v664 = vld [vmem:[%s212 + $0xb0] sm:$0xff]
        %v665 = vld [vmem:[%s212 + $0xb8] sm:$0xff]
        %v666 = vld [vmem:[%s212 + $0xc0] sm:$0xff]
        %v667 = vld [vmem:[%s212 + $0xc8] sm:$0xff]
        %v668 = vld [vmem:[%s212 + $0xd0] sm:$0xff]
        %v669 = vld [vmem:[%s212 + $0xd8] sm:$0xff]
        %v670 = vld [vmem:[%s212 + $0xe0] sm:$0xff]
        %v671 = vld [vmem:[%s212 + $0xe8] sm:$0xff]
        %v672 = vld [vmem:[%s212 + $0xf0] sm:$0xff]
        %v673 = vld [vmem:[%s212 + $0xf8] sm:$0xff]
        %v675 = vrot.slane %v671, 7
        %vm708 = vcmask 1040384
        %v709 = vrot.slane %v644, 7
        %v710 = vrot.slane %v645, 7
        %v711 = vsel %vm708, %v709, %v710
        %v712 = vrot.slane %v642, 7
        %v713 = vsel %vm708, %v710, %v712
        %v714 = vrot.slane %v643, 7
        %v715 = vsel %vm708, %v712, %v714
        %v716 = vsel %vm708, %v714, %v709
        %v717 = vrot.slane %v646, 7
        %v718 = vsel %vm708, %v710, %v717
        %v719 = vrot.slane %v647, 7
        %v720 = vsel %vm708, %v717, %v719
        %v721 = vrot.slane %v648, 7
        %v722 = vsel %vm708, %v719, %v721
        %v723 = vrot.slane %v649, 7
        %v724 = vsel %vm708, %v721, %v723
        %v725 = vrot.slane %v650, 7
        %v726 = vsel %vm708, %v723, %v725
        %v727 = vrot.slane %v651, 7
        %v728 = vsel %vm708, %v725, %v727
        %v729 = vrot.slane %v652, 7
        %v730 = vsel %vm708, %v727, %v729
        %v731 = vrot.slane %v653, 7
        %v732 = vsel %vm708, %v729, %v731
        %v733 = vrot.slane %v654, 7
        %v734 = vsel %vm708, %v731, %v733
        %v735 = vrot.slane %v655, 7
        %v736 = vsel %vm708, %v733, %v735
        %v737 = vrot.slane %v656, 7
        %v738 = vsel %vm708, %v735, %v737
        %v739 = vrot.slane %v657, 7
        %v740 = vsel %vm708, %v737, %v739
        %v741 = vrot.slane %v658, 7
        %v742 = vsel %vm708, %v739, %v741
        %v743 = vrot.slane %v659, 7
        %v744 = vsel %vm708, %v741, %v743
        %v745 = vrot.slane %v660, 7
        %v746 = vsel %vm708, %v743, %v745
        %v747 = vrot.slane %v661, 7
        %v748 = vsel %vm708, %v745, %v747
        %v749 = vrot.slane %v662, 7
        %v750 = vsel %vm708, %v747, %v749
        %v751 = vrot.slane %v663, 7
        %v752 = vsel %vm708, %v749, %v751
        %v753 = vrot.slane %v664, 7
        %v754 = vsel %vm708, %v751, %v753
        %v755 = vrot.slane %v665, 7
        %v756 = vsel %vm708, %v753, %v755
        %v757 = vrot.slane %v666, 7
        %v758 = vsel %vm708, %v755, %v757
        %v759 = vrot.slane %v667, 7
        %v760 = vsel %vm708, %v757, %v759
        %v761 = vrot.slane %v668, 7
        %v762 = vsel %vm708, %v759, %v761
        %v763 = vrot.slane %v669, 7
        %v764 = vsel %vm708, %v761, %v763
        %v765 = vrot.slane %v670, 7
        %v766 = vsel %vm708, %v763, %v765
        %v767 = vsel %vm708, %v765, %v675
        %v768 = vrot.slane %v672, 7
        %v769 = vsel %vm708, %v675, %v768
        %v770 = vrot.slane %v673, 7
        %v771 = vsel %vm708, %v768, %v770
        %v772 = vsel %vm708, %v770, %v765
        %v807 = vsel %vm708, %v675, %v709
        %vm808 = vcmask 1046528
        %v809 = vrot.slane %v644, 1
        %v810 = vrot.slane %v645, 1
        %v811 = vsel %vm808, %v809, %v810
        %v812 = vrot.slane %v642, 1
        %v813 = vsel %vm808, %v810, %v812
        %v814 = vrot.slane %v643, 1
        %v815 = vsel %vm808, %v812, %v814
        %v816 = vsel %vm808, %v814, %v809
        %v817 = vrot.slane %v646, 1
        %v818 = vsel %vm808, %v810, %v817
        %v819 = vrot.slane %v647, 1
        %v820 = vsel %vm808, %v817, %v819
        %v821 = vrot.slane %v648, 1
        %v822 = vsel %vm808, %v819, %v821
        %v823 = vrot.slane %v649, 1
        %v824 = vsel %vm808, %v821, %v823
        %v825 = vrot.slane %v650, 1
        %v826 = vsel %vm808, %v823, %v825
        %v827 = vrot.slane %v651, 1
        %v828 = vsel %vm808, %v825, %v827
        %v829 = vrot.slane %v652, 1
        %v830 = vsel %vm808, %v827, %v829
        %v831 = vrot.slane %v653, 1
        %v832 = vsel %vm808, %v829, %v831
        %v833 = vrot.slane %v654, 1
        %v834 = vsel %vm808, %v831, %v833
        %v835 = vrot.slane %v655, 1
        %v836 = vsel %vm808, %v833, %v835
        %v837 = vrot.slane %v656, 1
        %v838 = vsel %vm808, %v835, %v837
        %v839 = vrot.slane %v657, 1
        %v840 = vsel %vm808, %v837, %v839
        %v841 = vrot.slane %v658, 1
        %v842 = vsel %vm808, %v839, %v841
        %v843 = vrot.slane %v659, 1
        %v844 = vsel %vm808, %v841, %v843
        %v845 = vrot.slane %v660, 1
        %v846 = vsel %vm808, %v843, %v845
        %v847 = vrot.slane %v661, 1
        %v848 = vsel %vm808, %v845, %v847
        %v849 = vrot.slane %v662, 1
        %v850 = vsel %vm808, %v847, %v849
        %v851 = vrot.slane %v663, 1
        %v852 = vsel %vm808, %v849, %v851
        %v853 = vrot.slane %v664, 1
        %v854 = vsel %vm808, %v851, %v853
        %v855 = vrot.slane %v665, 1
        %v856 = vsel %vm808, %v853, %v855
        %v857 = vrot.slane %v666, 1
        %v858 = vsel %vm808, %v855, %v857
        %v859 = vrot.slane %v667, 1
        %v860 = vsel %vm808, %v857, %v859
        %v861 = vrot.slane %v668, 1
        %v862 = vsel %vm808, %v859, %v861
        %v863 = vrot.slane %v669, 1
        %v864 = vsel %vm808, %v861, %v863
        %v865 = vrot.slane %v670, 1
        %v866 = vsel %vm808, %v863, %v865
        %v867 = vrot.slane %v671, 1
        %v868 = vsel %vm808, %v865, %v867
        %v869 = vrot.slane %v672, 1
        %v870 = vsel %vm808, %v867, %v869
        %v871 = vrot.slane %v673, 1
        %v872 = vsel %vm808, %v869, %v871
        %v873 = vsel %vm808, %v871, %v865
        %v909 = vsel %vm808, %v867, %v809
        %v910 = vsel %vm282, 1, 0
        %v911 = vsel %vm283, 1, 0
        %v912 = vsel %vm284, 1, 0
        %v913 = vsel %vm285, 1, 0
        %v914 = vsel %vm286, 1, 0
        %v915 = vsel %vm287, 1, 0
        %v916 = vsel %vm288, 1, 0
        %v917 = vsel %vm289, 1, 0
        %v918 = vsel %vm290, 1, 0
        %v919 = vsel %vm291, 1, 0
        %v920 = vsel %vm292, 1, 0
        %v921 = vsel %vm293, 1, 0
        %v922 = vsel %vm294, 1, 0
        %v923 = vsel %vm295, 1, 0
        %v924 = vsel %vm296, 1, 0
        %v925 = vsel %vm297, 1, 0
        %v926 = vsel %vm298, 1, 0
        %v927 = vsel %vm299, 1, 0
        %v928 = vsel %vm300, 1, 0
        %v929 = vsel %vm301, 1, 0
        %v930 = vsel %vm302, 1, 0
        %v931 = vsel %vm303, 1, 0
        %v932 = vsel %vm304, 1, 0
        %v933 = vsel %vm305, 1, 0
        %v934 = vsel %vm306, 1, 0
        %v935 = vsel %vm307, 1, 0
        %v936 = vsel %vm308, 1, 0
        %v937 = vsel %vm309, 1, 0
        %v938 = vsel %vm310, 1, 0
        %v939 = vsel %vm311, 1, 0
        %v940 = vsel %vm312, 1, 0
        %v941 = vsel %vm313, 1, 0
        %v942 = vsel %vm314, 1, 0
        %v943 = vsel %vm315, 1, 0
        %v944 = vsel %vm316, 1, 0
        %v945 = vsel %vm317, 1, 0
        %946 = vset.pattern.permute.xlu0 0
        %947 = vperm.xlu0 %946, %v910
        %v948 = vpop.permute.xlu0 %947
        %949 = vset.pattern.permute.xlu0 0
        %950 = vperm.xlu0 %949, %v911
        %v951 = vpop.permute.xlu0 %950
        %952 = vset.pattern.permute.xlu0 0
        %953 = vperm.xlu0 %952, %v912
        %v954 = vpop.permute.xlu0 %953
        %955 = vset.pattern.permute.xlu0 0
        %956 = vperm.xlu0 %955, %v913
        %v957 = vpop.permute.xlu0 %956
        %958 = vset.pattern.permute.xlu0 0
        %959 = vperm.xlu0 %958, %v914
        %v960 = vpop.permute.xlu0 %959
        %961 = vset.pattern.permute.xlu0 0
        %962 = vperm.xlu0 %961, %v915
        %v963 = vpop.permute.xlu0 %962
        %964 = vset.pattern.permute.xlu0 0
        %965 = vperm.xlu0 %964, %v916
        %v966 = vpop.permute.xlu0 %965
        %967 = vset.pattern.permute.xlu0 0
        %968 = vperm.xlu0 %967, %v917
        %v969 = vpop.permute.xlu0 %968
        %970 = vset.pattern.permute.xlu0 0
        %971 = vperm.xlu0 %970, %v918
        %v972 = vpop.permute.xlu0 %971
        %973 = vset.pattern.permute.xlu0 0
        %974 = vperm.xlu0 %973, %v919
        %v975 = vpop.permute.xlu0 %974
        %976 = vset.pattern.permute.xlu0 0
        %977 = vperm.xlu0 %976, %v920
        %v978 = vpop.permute.xlu0 %977
        %979 = vset.pattern.permute.xlu0 0
        %980 = vperm.xlu0 %979, %v921
        %v981 = vpop.permute.xlu0 %980
        %982 = vset.pattern.permute.xlu0 0
        %983 = vperm.xlu0 %982, %v922
        %v984 = vpop.permute.xlu0 %983
        %985 = vset.pattern.permute.xlu0 0
        %986 = vperm.xlu0 %985, %v923
        %v987 = vpop.permute.xlu0 %986
        %988 = vset.pattern.permute.xlu0 0
        %989 = vperm.xlu0 %988, %v924
        %v990 = vpop.permute.xlu0 %989
        %991 = vset.pattern.permute.xlu0 0
        %992 = vperm.xlu0 %991, %v925
        %v993 = vpop.permute.xlu0 %992
        %994 = vset.pattern.permute.xlu0 0
        %995 = vperm.xlu0 %994, %v926
        %v996 = vpop.permute.xlu0 %995
        %997 = vset.pattern.permute.xlu0 0
        %998 = vperm.xlu0 %997, %v927
        %v999 = vpop.permute.xlu0 %998
        %1000 = vset.pattern.permute.xlu0 0
        %1001 = vperm.xlu0 %1000, %v928
        %v1002 = vpop.permute.xlu0 %1001
        %1003 = vset.pattern.permute.xlu0 0
        %1004 = vperm.xlu0 %1003, %v929
        %v1005 = vpop.permute.xlu0 %1004
        %1006 = vset.pattern.permute.xlu0 0
        %1007 = vperm.xlu0 %1006, %v930
        %v1008 = vpop.permute.xlu0 %1007
        %1009 = vset.pattern.permute.xlu0 0
        %1010 = vperm.xlu0 %1009, %v931
        %v1011 = vpop.permute.xlu0 %1010
        %1012 = vset.pattern.permute.xlu0 0
        %1013 = vperm.xlu0 %1012, %v932
        %v1014 = vpop.permute.xlu0 %1013
        %1015 = vset.pattern.permute.xlu0 0
        %1016 = vperm.xlu0 %1015, %v933
        %v1017 = vpop.permute.xlu0 %1016
        %1018 = vset.pattern.permute.xlu0 0
        %1019 = vperm.xlu0 %1018, %v934
        %v1020 = vpop.permute.xlu0 %1019
        %1021 = vset.pattern.permute.xlu0 0
        %1022 = vperm.xlu0 %1021, %v935
        %v1023 = vpop.permute.xlu0 %1022
        %1024 = vset.pattern.permute.xlu0 0
        %1025 = vperm.xlu0 %1024, %v936
        %v1026 = vpop.permute.xlu0 %1025
        %1027 = vset.pattern.permute.xlu0 0
        %1028 = vperm.xlu0 %1027, %v937
        %v1029 = vpop.permute.xlu0 %1028
        %1030 = vset.pattern.permute.xlu0 0
        %1031 = vperm.xlu0 %1030, %v938
        %v1032 = vpop.permute.xlu0 %1031
        %1033 = vset.pattern.permute.xlu0 0
        %1034 = vperm.xlu0 %1033, %v939
        %v1035 = vpop.permute.xlu0 %1034
        %1036 = vset.pattern.permute.xlu0 0
        %1037 = vperm.xlu0 %1036, %v940
        %v1038 = vpop.permute.xlu0 %1037
        %1039 = vset.pattern.permute.xlu0 0
        %1040 = vperm.xlu0 %1039, %v941
        %v1041 = vpop.permute.xlu0 %1040
        %1042 = vset.pattern.permute.xlu0 0
        %1043 = vperm.xlu0 %1042, %v942
        %v1044 = vpop.permute.xlu0 %1043
        %1045 = vset.pattern.permute.xlu0 0
        %1046 = vperm.xlu0 %1045, %v943
        %v1047 = vpop.permute.xlu0 %1046
        %1048 = vset.pattern.permute.xlu0 0
        %1049 = vperm.xlu0 %1048, %v944
        %v1050 = vpop.permute.xlu0 %1049
        %1051 = vset.pattern.permute.xlu0 0
        %1052 = vperm.xlu0 %1051, %v945
        %v1053 = vpop.permute.xlu0 %1052
        %vm1054 = vcmp.eq.s32.totalorder %v948, 1
        %vm1055 = vcmp.eq.s32.totalorder %v951, 1
        %vm1056 = vcmp.eq.s32.totalorder %v954, 1
        %vm1057 = vcmp.eq.s32.totalorder %v957, 1
        %vm1058 = vcmp.eq.s32.totalorder %v960, 1
        %vm1059 = vcmp.eq.s32.totalorder %v963, 1
        %vm1060 = vcmp.eq.s32.totalorder %v966, 1
        %vm1061 = vcmp.eq.s32.totalorder %v969, 1
        %vm1062 = vcmp.eq.s32.totalorder %v972, 1
        %vm1063 = vcmp.eq.s32.totalorder %v975, 1
        %vm1064 = vcmp.eq.s32.totalorder %v978, 1
        %vm1065 = vcmp.eq.s32.totalorder %v981, 1
        %vm1066 = vcmp.eq.s32.totalorder %v984, 1
        %vm1067 = vcmp.eq.s32.totalorder %v987, 1
        %vm1068 = vcmp.eq.s32.totalorder %v990, 1
        %vm1069 = vcmp.eq.s32.totalorder %v993, 1
        %vm1070 = vcmp.eq.s32.totalorder %v996, 1
        %vm1071 = vcmp.eq.s32.totalorder %v999, 1
        %vm1072 = vcmp.eq.s32.totalorder %v1002, 1
        %vm1073 = vcmp.eq.s32.totalorder %v1005, 1
        %vm1074 = vcmp.eq.s32.totalorder %v1008, 1
        %vm1075 = vcmp.eq.s32.totalorder %v1011, 1
        %vm1076 = vcmp.eq.s32.totalorder %v1014, 1
        %vm1077 = vcmp.eq.s32.totalorder %v1017, 1
        %vm1078 = vcmp.eq.s32.totalorder %v1020, 1
        %vm1079 = vcmp.eq.s32.totalorder %v1023, 1
        %vm1080 = vcmp.eq.s32.totalorder %v1026, 1
        %vm1081 = vcmp.eq.s32.totalorder %v1029, 1
        %vm1082 = vcmp.eq.s32.totalorder %v1032, 1
        %vm1083 = vcmp.eq.s32.totalorder %v1035, 1
        %vm1084 = vcmp.eq.s32.totalorder %v1038, 1
        %vm1085 = vcmp.eq.s32.totalorder %v1041, 1
        %vm1086 = vcmp.eq.s32.totalorder %v1044, 1
        %vm1087 = vcmp.eq.s32.totalorder %v1047, 1
        %vm1088 = vcmp.eq.s32.totalorder %v1050, 1
        %vm1089 = vcmp.eq.s32.totalorder %v1053, 1
        %v1090 = vsel %vm1054, %v811, %v807
        %v1091 = vsel %vm1055, %v813, %v711
        %v1092 = vsel %vm1056, %v815, %v713
        %v1093 = vsel %vm1057, %v816, %v715
        %v1094 = vsel %vm1058, %v811, %v716
        %v1095 = vsel %vm1059, %v818, %v711
        %v1096 = vsel %vm1060, %v820, %v718
        %v1097 = vsel %vm1061, %v822, %v720
        %v1098 = vsel %vm1062, %v824, %v722
        %v1099 = vsel %vm1063, %v826, %v724
        %v1100 = vsel %vm1064, %v828, %v726
        %v1101 = vsel %vm1065, %v830, %v728
        %v1102 = vsel %vm1066, %v832, %v730
        %v1103 = vsel %vm1067, %v834, %v732
        %v1104 = vsel %vm1068, %v836, %v734
        %v1105 = vsel %vm1069, %v838, %v736
        %v1106 = vsel %vm1070, %v840, %v738
        %v1107 = vsel %vm1071, %v842, %v740
        %v1108 = vsel %vm1072, %v844, %v742
        %v1109 = vsel %vm1073, %v846, %v744
        %v1110 = vsel %vm1074, %v848, %v746
        %v1111 = vsel %vm1075, %v850, %v748
        %v1112 = vsel %vm1076, %v852, %v750
        %v1113 = vsel %vm1077, %v854, %v752
        %v1114 = vsel %vm1078, %v856, %v754
        %v1115 = vsel %vm1079, %v858, %v756
        %v1116 = vsel %vm1080, %v860, %v758
        %v1117 = vsel %vm1081, %v862, %v760
        %v1118 = vsel %vm1082, %v864, %v762
        %v1119 = vsel %vm1083, %v866, %v764
        %v1120 = vsel %vm1084, %v868, %v766
        %v1121 = vsel %vm1085, %v870, %v767
        %v1122 = vsel %vm1086, %v872, %v769
        %v1123 = vsel %vm1087, %v873, %v771
        %v1124 = vsel %vm1088, %v868, %v772
        %v1125 = vsel %vm1089, %v909, %v767
        %v1126 = vpack.c.bf16 %v1091, %v1090
        %v1127 = vpack.c.bf16 %v1093, %v1092
        %v1128 = vpack.c.bf16 %v1095, %v1094
        %v1129 = vpack.c.bf16 %v1097, %v1096
        %v1130 = vpack.c.bf16 %v1099, %v1098
        %v1131 = vpack.c.bf16 %v1101, %v1100
        %v1132 = vpack.c.bf16 %v1103, %v1102
        %v1133 = vpack.c.bf16 %v1105, %v1104
        %v1134 = vpack.c.bf16 %v1107, %v1106
        %v1135 = vpack.c.bf16 %v1109, %v1108
        %v1136 = vpack.c.bf16 %v1111, %v1110
        %v1137 = vpack.c.bf16 %v1113, %v1112
        %v1138 = vpack.c.bf16 %v1115, %v1114
        %v1139 = vpack.c.bf16 %v1117, %v1116
        %v1140 = vpack.c.bf16 %v1119, %v1118
        %v1141 = vpack.c.bf16 %v1121, %v1120
        %v1142 = vpack.c.bf16 %v1123, %v1122
        %v1143 = vpack.c.bf16 %v1125, %v1124
        %v1144 = vpack.c.bf16 %v645, %v644
        %v1145 = vpack.c.bf16 %v643, %v642
        %v1146 = vpack.c.bf16 %v647, %v646
        %v1147 = vpack.c.bf16 %v649, %v648
        %v1148 = vpack.c.bf16 %v651, %v650
        %v1149 = vpack.c.bf16 %v653, %v652
        %v1150 = vpack.c.bf16 %v655, %v654
        %v1151 = vpack.c.bf16 %v657, %v656
        %v1152 = vpack.c.bf16 %v659, %v658
        %v1153 = vpack.c.bf16 %v661, %v660
        %v1154 = vpack.c.bf16 %v663, %v662
        %v1155 = vpack.c.bf16 %v665, %v664
        %v1156 = vpack.c.bf16 %v667, %v666
        %v1157 = vpack.c.bf16 %v669, %v668
        %v1158 = vpack.c.bf16 %v671, %v670
        %v1159 = vpack.c.bf16 %v673, %v672
        %v1160 = vsel %vm318, 1, 0
        %v1161 = vsel %vm319, 1, 0
        %v1162 = vsel %vm320, 1, 0
        %v1163 = vsel %vm321, 1, 0
        %v1164 = vsel %vm322, 1, 0
        %v1165 = vsel %vm323, 1, 0
        %v1166 = vsel %vm324, 1, 0
        %v1167 = vsel %vm325, 1, 0
        %v1168 = vsel %vm326, 1, 0
        %v1169 = vsel %vm327, 1, 0
        %v1170 = vsel %vm328, 1, 0
        %v1171 = vsel %vm329, 1, 0
        %v1172 = vsel %vm330, 1, 0
        %v1173 = vsel %vm331, 1, 0
        %v1174 = vsel %vm332, 1, 0
        %v1175 = vsel %vm333, 1, 0
        %v1176 = vsel %vm334, 1, 0
        %v1177 = vsel %vm335, 1, 0
        %v1178 = vsel %vm336, 1, 0
        %v1179 = vsel %vm337, 1, 0
        %v1180 = vsel %vm338, 1, 0
        %v1181 = vsel %vm339, 1, 0
        %v1182 = vsel %vm340, 1, 0
        %v1183 = vsel %vm341, 1, 0
        %v1184 = vsel %vm342, 1, 0
        %v1185 = vsel %vm343, 1, 0
        %v1186 = vsel %vm344, 1, 0
        %v1187 = vsel %vm345, 1, 0
        %v1188 = vsel %vm346, 1, 0
        %v1189 = vsel %vm347, 1, 0
        %v1190 = vsel %vm348, 1, 0
        %v1191 = vsel %vm349, 1, 0
        %v1192 = vsel %vm350, 1, 0
        %v1193 = vsel %vm351, 1, 0
        %v1194 = vsel %vm352, 1, 0
        %v1195 = vsel %vm353, 1, 0
        %1196 = vset.pattern.permute.xlu0 0
        %1197 = vperm.xlu0 %1196, %v1160
        %v1198 = vpop.permute.xlu0 %1197
        %1199 = vset.pattern.permute.xlu0 0
        %1200 = vperm.xlu0 %1199, %v1161
        %v1201 = vpop.permute.xlu0 %1200
        %1202 = vset.pattern.permute.xlu0 0
        %1203 = vperm.xlu0 %1202, %v1162
        %v1204 = vpop.permute.xlu0 %1203
        %1205 = vset.pattern.permute.xlu0 0
        %1206 = vperm.xlu0 %1205, %v1163
        %v1207 = vpop.permute.xlu0 %1206
        %1208 = vset.pattern.permute.xlu0 0
        %1209 = vperm.xlu0 %1208, %v1164
        %v1210 = vpop.permute.xlu0 %1209
        %1211 = vset.pattern.permute.xlu0 0
        %1212 = vperm.xlu0 %1211, %v1165
        %v1213 = vpop.permute.xlu0 %1212
        %1214 = vset.pattern.permute.xlu0 0
        %1215 = vperm.xlu0 %1214, %v1166
        %v1216 = vpop.permute.xlu0 %1215
        %1217 = vset.pattern.permute.xlu0 0
        %1218 = vperm.xlu0 %1217, %v1167
        %v1219 = vpop.permute.xlu0 %1218
        %1220 = vset.pattern.permute.xlu0 0
        %1221 = vperm.xlu0 %1220, %v1168
        %v1222 = vpop.permute.xlu0 %1221
        %1223 = vset.pattern.permute.xlu0 0
        %1224 = vperm.xlu0 %1223, %v1169
        %v1225 = vpop.permute.xlu0 %1224
        %1226 = vset.pattern.permute.xlu0 0
        %1227 = vperm.xlu0 %1226, %v1170
        %v1228 = vpop.permute.xlu0 %1227
        %1229 = vset.pattern.permute.xlu0 0
        %1230 = vperm.xlu0 %1229, %v1171
        %v1231 = vpop.permute.xlu0 %1230
        %1232 = vset.pattern.permute.xlu0 0
        %1233 = vperm.xlu0 %1232, %v1172
        %v1234 = vpop.permute.xlu0 %1233
        %1235 = vset.pattern.permute.xlu0 0
        %1236 = vperm.xlu0 %1235, %v1173
        %v1237 = vpop.permute.xlu0 %1236
        %1238 = vset.pattern.permute.xlu0 0
        %1239 = vperm.xlu0 %1238, %v1174
        %v1240 = vpop.permute.xlu0 %1239
        %1241 = vset.pattern.permute.xlu0 0
        %1242 = vperm.xlu0 %1241, %v1175
        %v1243 = vpop.permute.xlu0 %1242
        %1244 = vset.pattern.permute.xlu0 0
        %1245 = vperm.xlu0 %1244, %v1176
        %v1246 = vpop.permute.xlu0 %1245
        %1247 = vset.pattern.permute.xlu0 0
        %1248 = vperm.xlu0 %1247, %v1177
        %v1249 = vpop.permute.xlu0 %1248
        %1250 = vset.pattern.permute.xlu0 0
        %1251 = vperm.xlu0 %1250, %v1178
        %v1252 = vpop.permute.xlu0 %1251
        %1253 = vset.pattern.permute.xlu0 0
        %1254 = vperm.xlu0 %1253, %v1179
        %v1255 = vpop.permute.xlu0 %1254
        %1256 = vset.pattern.permute.xlu0 0
        %1257 = vperm.xlu0 %1256, %v1180
        %v1258 = vpop.permute.xlu0 %1257
        %1259 = vset.pattern.permute.xlu0 0
        %1260 = vperm.xlu0 %1259, %v1181
        %v1261 = vpop.permute.xlu0 %1260
        %1262 = vset.pattern.permute.xlu0 0
        %1263 = vperm.xlu0 %1262, %v1182
        %v1264 = vpop.permute.xlu0 %1263
        %1265 = vset.pattern.permute.xlu0 0
        %1266 = vperm.xlu0 %1265, %v1183
        %v1267 = vpop.permute.xlu0 %1266
        %1268 = vset.pattern.permute.xlu0 0
        %1269 = vperm.xlu0 %1268, %v1184
        %v1270 = vpop.permute.xlu0 %1269
        %1271 = vset.pattern.permute.xlu0 0
        %1272 = vperm.xlu0 %1271, %v1185
        %v1273 = vpop.permute.xlu0 %1272
        %1274 = vset.pattern.permute.xlu0 0
        %1275 = vperm.xlu0 %1274, %v1186
        %v1276 = vpop.permute.xlu0 %1275
        %1277 = vset.pattern.permute.xlu0 0
        %1278 = vperm.xlu0 %1277, %v1187
        %v1279 = vpop.permute.xlu0 %1278
        %1280 = vset.pattern.permute.xlu0 0
        %1281 = vperm.xlu0 %1280, %v1188
        %v1282 = vpop.permute.xlu0 %1281
        %1283 = vset.pattern.permute.xlu0 0
        %1284 = vperm.xlu0 %1283, %v1189
        %v1285 = vpop.permute.xlu0 %1284
        %1286 = vset.pattern.permute.xlu0 0
        %1287 = vperm.xlu0 %1286, %v1190
        %v1288 = vpop.permute.xlu0 %1287
        %1289 = vset.pattern.permute.xlu0 0
        %1290 = vperm.xlu0 %1289, %v1191
        %v1291 = vpop.permute.xlu0 %1290
        %1292 = vset.pattern.permute.xlu0 0
        %1293 = vperm.xlu0 %1292, %v1192
        %v1294 = vpop.permute.xlu0 %1293
        %1295 = vset.pattern.permute.xlu0 0
        %1296 = vperm.xlu0 %1295, %v1193
        %v1297 = vpop.permute.xlu0 %1296
        %1298 = vset.pattern.permute.xlu0 0
        %1299 = vperm.xlu0 %1298, %v1194
        %v1300 = vpop.permute.xlu0 %1299
        %1301 = vset.pattern.permute.xlu0 0
        %1302 = vperm.xlu0 %1301, %v1195
        %v1303 = vpop.permute.xlu0 %1302
        %vm1304 = vcmp.eq.s32.totalorder %v1198, 1
        %vm1305 = vcmp.eq.s32.totalorder %v1201, 1
        %vm1306 = vcmp.eq.s32.totalorder %v1204, 1
        %vm1307 = vcmp.eq.s32.totalorder %v1207, 1
        %vm1308 = vcmp.eq.s32.totalorder %v1210, 1
        %vm1309 = vcmp.eq.s32.totalorder %v1213, 1
        %vm1310 = vcmp.eq.s32.totalorder %v1216, 1
        %vm1311 = vcmp.eq.s32.totalorder %v1219, 1
        %vm1312 = vcmp.eq.s32.totalorder %v1222, 1
        %vm1313 = vcmp.eq.s32.totalorder %v1225, 1
        %vm1314 = vcmp.eq.s32.totalorder %v1228, 1
        %vm1315 = vcmp.eq.s32.totalorder %v1231, 1
        %vm1316 = vcmp.eq.s32.totalorder %v1234, 1
        %vm1317 = vcmp.eq.s32.totalorder %v1237, 1
        %vm1318 = vcmp.eq.s32.totalorder %v1240, 1
        %vm1319 = vcmp.eq.s32.totalorder %v1243, 1
        %vm1320 = vcmp.eq.s32.totalorder %v1246, 1
        %vm1321 = vcmp.eq.s32.totalorder %v1249, 1
        %vm1322 = vcmp.eq.s32.totalorder %v1252, 1
        %vm1323 = vcmp.eq.s32.totalorder %v1255, 1
        %vm1324 = vcmp.eq.s32.totalorder %v1258, 1
        %vm1325 = vcmp.eq.s32.totalorder %v1261, 1
        %vm1326 = vcmp.eq.s32.totalorder %v1264, 1
        %vm1327 = vcmp.eq.s32.totalorder %v1267, 1
        %vm1328 = vcmp.eq.s32.totalorder %v1270, 1
        %vm1329 = vcmp.eq.s32.totalorder %v1273, 1
        %vm1330 = vcmp.eq.s32.totalorder %v1276, 1
        %vm1331 = vcmp.eq.s32.totalorder %v1279, 1
        %vm1332 = vcmp.eq.s32.totalorder %v1282, 1
        %vm1333 = vcmp.eq.s32.totalorder %v1285, 1
        %vm1334 = vcmp.eq.s32.totalorder %v1288, 1
        %vm1335 = vcmp.eq.s32.totalorder %v1291, 1
        %vm1336 = vcmp.eq.s32.totalorder %v1294, 1
        %vm1337 = vcmp.eq.s32.totalorder %v1297, 1
        %vm1338 = vcmp.eq.s32.totalorder %v1300, 1
        %vm1339 = vcmp.eq.s32.totalorder %v1303, 1
        %v1340 = vsel %vm1304, %v807, %v811
        %v1341 = vsel %vm1305, %v711, %v813
        %v1342 = vsel %vm1306, %v713, %v815
        %v1343 = vsel %vm1307, %v715, %v816
        %v1344 = vsel %vm1308, %v716, %v811
        %v1345 = vsel %vm1309, %v711, %v818
        %v1346 = vsel %vm1310, %v718, %v820
        %v1347 = vsel %vm1311, %v720, %v822
        %v1348 = vsel %vm1312, %v722, %v824
        %v1349 = vsel %vm1313, %v724, %v826
        %v1350 = vsel %vm1314, %v726, %v828
        %v1351 = vsel %vm1315, %v728, %v830
        %v1352 = vsel %vm1316, %v730, %v832
        %v1353 = vsel %vm1317, %v732, %v834
        %v1354 = vsel %vm1318, %v734, %v836
        %v1355 = vsel %vm1319, %v736, %v838
        %v1356 = vsel %vm1320, %v738, %v840
        %v1357 = vsel %vm1321, %v740, %v842
        %v1358 = vsel %vm1322, %v742, %v844
        %v1359 = vsel %vm1323, %v744, %v846
        %v1360 = vsel %vm1324, %v746, %v848
        %v1361 = vsel %vm1325, %v748, %v850
        %v1362 = vsel %vm1326, %v750, %v852
        %v1363 = vsel %vm1327, %v752, %v854
        %v1364 = vsel %vm1328, %v754, %v856
        %v1365 = vsel %vm1329, %v756, %v858
        %v1366 = vsel %vm1330, %v758, %v860
        %v1367 = vsel %vm1331, %v760, %v862
        %v1368 = vsel %vm1332, %v762, %v864
        %v1369 = vsel %vm1333, %v764, %v866
        %v1370 = vsel %vm1334, %v766, %v868
        %v1371 = vsel %vm1335, %v767, %v870
        %v1372 = vsel %vm1336, %v769, %v872
        %v1373 = vsel %vm1337, %v771, %v873
        %v1374 = vsel %vm1338, %v772, %v868
        %v1375 = vsel %vm1339, %v767, %v909
        %v1376 = vpack.c.bf16 %v1341, %v1340
        %v1377 = vpack.c.bf16 %v1343, %v1342
        %v1378 = vpack.c.bf16 %v1345, %v1344
        %v1379 = vpack.c.bf16 %v1347, %v1346
        %v1380 = vpack.c.bf16 %v1349, %v1348
        %v1381 = vpack.c.bf16 %v1351, %v1350
        %v1382 = vpack.c.bf16 %v1353, %v1352
        %v1383 = vpack.c.bf16 %v1355, %v1354
        %v1384 = vpack.c.bf16 %v1357, %v1356
        %v1385 = vpack.c.bf16 %v1359, %v1358
        %v1386 = vpack.c.bf16 %v1361, %v1360
        %v1387 = vpack.c.bf16 %v1363, %v1362
        %v1388 = vpack.c.bf16 %v1365, %v1364
        %v1389 = vpack.c.bf16 %v1367, %v1366
        %v1390 = vpack.c.bf16 %v1369, %v1368
        %v1391 = vpack.c.bf16 %v1371, %v1370
        %v1392 = vpack.c.bf16 %v1373, %v1372
        %v1393 = vpack.c.bf16 %v1375, %v1374
        %v1410 = vunpack.c.l.b16 %v370
        %v1411 = vunpack.c.l.b16 %v371
        %v1412 = vunpack.c.l.b16 %v372
        %v1413 = vunpack.c.l.b16 %v373
        %v1414 = vunpack.c.l.b16 %v374
        %v1415 = vunpack.c.l.b16 %v375
        %v1416 = vunpack.c.l.b16 %v376
        %v1417 = vunpack.c.l.b16 %v377
        %v1418 = vunpack.c.l.b16 %v378
        %v1419 = vunpack.c.l.b16 %v379
        %v1420 = vunpack.c.l.b16 %v380
        %v1421 = vunpack.c.l.b16 %v381
        %v1422 = vunpack.c.l.b16 %v382
        %v1423 = vunpack.c.l.b16 %v383
        %v1424 = vunpack.c.l.b16 %v384
        %v1425 = vunpack.c.l.b16 %v385
        %v1426 = vpack.c.b16 %v1411, %v1410
        %v1427 = vpack.c.b16 %v1413, %v1412
        %v1428 = vpack.c.b16 %v1415, %v1414
        %v1429 = vpack.c.b16 %v1417, %v1416
        %v1430 = vpack.c.b16 %v1419, %v1418
        %v1431 = vpack.c.b16 %v1421, %v1420
        %v1432 = vpack.c.b16 %v1423, %v1422
        %v1433 = vpack.c.b16 %v1425, %v1424
        %1442 = vmatprep.subr.bf16.mxu0 0
        %1443 = vmatpush1.bf16.msra.mxu0 %v1426
        %1444 = vmatprep.subr.bf16.mxu0 0
        %1445 = vmatpush1.bf16.msra.mxu0 %v1427
        %1446 = vmatprep.subr.bf16.mxu0 0
        %1447 = vmatpush1.bf16.msra.mxu0 %v1428
        %1448 = vmatprep.subr.bf16.mxu0 0
        %1449 = vmatpush1.bf16.msra.mxu0 %v1429
        %1450 = vmatprep.subr.bf16.mxu0 0
        %1451 = vmatpush1.bf16.msra.mxu0 %v1430
        %1452 = vmatprep.subr.bf16.mxu0 0
        %1453 = vmatpush1.bf16.msra.mxu0 %v1431
        %1454 = vmatprep.subr.bf16.mxu0 0
        %1455 = vmatpush1.bf16.msra.mxu0 %v1432
        %1456 = vmatprep.subr.bf16.mxu0 0
        %1457 = vmatpush1.bf16.msra.mxu0 %v1433
        %1458 = vmatprep.subr.bf16.mxu0 0
        %1459 = vmatpush1.bf16.msra.mxu0 0
        %1460 = vmatprep.subr.bf16.mxu0 0
        %1461 = vmatpush1.bf16.msra.mxu0 0
        %1462 = vmatprep.subr.bf16.mxu0 0
        %1463 = vmatpush1.bf16.msra.mxu0 0
        %1464 = vmatprep.subr.bf16.mxu0 0
        %1465 = vmatpush1.bf16.msra.mxu0 0
        %1466 = vmatprep.subr.bf16.mxu0 0
        %1467 = vmatpush1.bf16.msra.mxu0 0
        %1468 = vmatprep.subr.bf16.mxu0 0
        %1469 = vmatpush1.bf16.msra.mxu0 0
        %1470 = vmatprep.subr.bf16.mxu0 0
        %1471 = vmatpush1.bf16.msra.mxu0 0
        %1472 = vmatprep.subr.bf16.mxu0 0
        %1473 = vmatpush1.bf16.msra.mxu0 0
        %1474 = vmatprep.mubr.bf16.mxu0 0
        %1475 = vmatmul.mubr.bf16.gmra.mrb[0].mxu0 %v1144
        %v1476 = vpop.f32.mrb[0].mxu0
        %v1477 = vadd.f32 0.0, %v1476
        %v1478 = vpop.f32.mrb[0].mxu0
        %v1479 = vpop.f32.mrb[0].mxu0
        %v1480 = vadd.f32 0.0, %v1479
        %v1481 = vpop.f32.mrb[0].mxu0
        %1482 = vmatprep.mubr.bf16.mxu0 0
        %1483 = vmatmul.mubr.bf16.gmra.mrb[0].mxu0 %v1145
        %v1484 = vpop.f32.mrb[0].mxu0
        %v1485 = vadd.f32 0.0, %v1484
        %v1486 = vpop.f32.mrb[0].mxu0
        %v1487 = vpop.f32.mrb[0].mxu0
        %v1488 = vadd.f32 0.0, %v1487
        %v1489 = vpop.f32.mrb[0].mxu0
        %1490 = vmatprep.mubr.bf16.mxu0 0
        %1491 = vmatmul.mubr.bf16.gmra.mrb[0].mxu0 %v1144
        %v1492 = vpop.f32.mrb[0].mxu0
        %v1493 = vadd.f32 0.0, %v1492
        %v1494 = vpop.f32.mrb[0].mxu0
        %v1495 = vpop.f32.mrb[0].mxu0
        %v1496 = vadd.f32 0.0, %v1495
        %v1497 = vpop.f32.mrb[0].mxu0
        %1498 = vmatprep.mubr.bf16.mxu0 0
        %1499 = vmatmul.mubr.bf16.gmra.mrb[0].mxu0 %v1146
        %v1500 = vpop.f32.mrb[0].mxu0
        %v1501 = vadd.f32 0.0, %v1500
        %v1502 = vpop.f32.mrb[0].mxu0
        %v1503 = vpop.f32.mrb[0].mxu0
        %v1504 = vadd.f32 0.0, %v1503
        %v1505 = vpop.f32.mrb[0].mxu0
        %1506 = vmatprep.mubr.bf16.mxu0 0
        %1507 = vmatmul.mubr.bf16.gmra.mrb[0].mxu0 %v1147
        %v1508 = vpop.f32.mrb[0].mxu0
        %v1509 = vadd.f32 0.0, %v1508
        %v1510 = vpop.f32.mrb[0].mxu0
        %v1511 = vpop.f32.mrb[0].mxu0
        %v1512 = vadd.f32 0.0, %v1511
        %v1513 = vpop.f32.mrb[0].mxu0
        %1514 = vmatprep.mubr.bf16.mxu0 0
        %1515 = vmatmul.mubr.bf16.gmra.mrb[0].mxu0 %v1148
        %v1516 = vpop.f32.mrb[0].mxu0
        %v1517 = vadd.f32 0.0, %v1516
        %v1518 = vpop.f32.mrb[0].mxu0
        %v1519 = vpop.f32.mrb[0].mxu0
        %v1520 = vadd.f32 0.0, %v1519
        %v1521 = vpop.f32.mrb[0].mxu0
        %1522 = vmatprep.mubr.bf16.mxu0 0
        %1523 = vmatmul.mubr.bf16.gmra.mrb[0].mxu0 %v1149
        %v1524 = vpop.f32.mrb[0].mxu0
        %v1525 = vadd.f32 0.0, %v1524
        %v1526 = vpop.f32.mrb[0].mxu0
        %v1527 = vpop.f32.mrb[0].mxu0
        %v1528 = vadd.f32 0.0, %v1527
        %v1529 = vpop.f32.mrb[0].mxu0
        %1530 = vmatprep.mubr.bf16.mxu0 0
        %1531 = vmatmul.mubr.bf16.gmra.mrb[0].mxu0 %v1150
        %v1532 = vpop.f32.mrb[0].mxu0
        %v1533 = vadd.f32 0.0, %v1532
        %v1534 = vpop.f32.mrb[0].mxu0
        %v1535 = vpop.f32.mrb[0].mxu0
        %v1536 = vadd.f32 0.0, %v1535
        %v1537 = vpop.f32.mrb[0].mxu0
        %1538 = vmatprep.mubr.bf16.mxu0 0
        %1539 = vmatmul.mubr.bf16.gmra.mrb[0].mxu0 %v1151
        %v1540 = vpop.f32.mrb[0].mxu0
        %v1541 = vadd.f32 0.0, %v1540
        %v1542 = vpop.f32.mrb[0].mxu0
        %v1543 = vpop.f32.mrb[0].mxu0
        %v1544 = vadd.f32 0.0, %v1543
        %v1545 = vpop.f32.mrb[0].mxu0
        %1546 = vmatprep.mubr.bf16.mxu0 0
        %1547 = vmatmul.mubr.bf16.gmra.mrb[0].mxu0 %v1152
        %v1548 = vpop.f32.mrb[0].mxu0
        %v1549 = vadd.f32 0.0, %v1548
        %v1550 = vpop.f32.mrb[0].mxu0
        %v1551 = vpop.f32.mrb[0].mxu0
        %v1552 = vadd.f32 0.0, %v1551
        %v1553 = vpop.f32.mrb[0].mxu0
        %1554 = vmatprep.mubr.bf16.mxu0 0
        %1555 = vmatmul.mubr.bf16.gmra.mrb[0].mxu0 %v1153
        %v1556 = vpop.f32.mrb[0].mxu0
        %v1557 = vadd.f32 0.0, %v1556
        %v1558 = vpop.f32.mrb[0].mxu0
        %v1559 = vpop.f32.mrb[0].mxu0
        %v1560 = vadd.f32 0.0, %v1559
        %v1561 = vpop.f32.mrb[0].mxu0
        %1562 = vmatprep.mubr.bf16.mxu0 0
        %1563 = vmatmul.mubr.bf16.gmra.mrb[0].mxu0 %v1154
        %v1564 = vpop.f32.mrb[0].mxu0
        %v1565 = vadd.f32 0.0, %v1564
        %v1566 = vpop.f32.mrb[0].mxu0
        %v1567 = vpop.f32.mrb[0].mxu0
        %v1568 = vadd.f32 0.0, %v1567
        %v1569 = vpop.f32.mrb[0].mxu0
        %1570 = vmatprep.mubr.bf16.mxu0 0
        %1571 = vmatmul.mubr.bf16.gmra.mrb[0].mxu0 %v1155
        %v1572 = vpop.f32.mrb[0].mxu0
        %v1573 = vadd.f32 0.0, %v1572
        %v1574 = vpop.f32.mrb[0].mxu0
        %v1575 = vpop.f32.mrb[0].mxu0
        %v1576 = vadd.f32 0.0, %v1575
        %v1577 = vpop.f32.mrb[0].mxu0
        %1578 = vmatprep.mubr.bf16.mxu0 0
        %1579 = vmatmul.mubr.bf16.gmra.mrb[0].mxu0 %v1156
        %v1580 = vpop.f32.mrb[0].mxu0
        %v1581 = vadd.f32 0.0, %v1580
        %v1582 = vpop.f32.mrb[0].mxu0
        %v1583 = vpop.f32.mrb[0].mxu0
        %v1584 = vadd.f32 0.0, %v1583
        %v1585 = vpop.f32.mrb[0].mxu0
        %1586 = vmatprep.mubr.bf16.mxu0 0
        %1587 = vmatmul.mubr.bf16.gmra.mrb[0].mxu0 %v1157
        %v1588 = vpop.f32.mrb[0].mxu0
        %v1589 = vadd.f32 0.0, %v1588
        %v1590 = vpop.f32.mrb[0].mxu0
        %v1591 = vpop.f32.mrb[0].mxu0
        %v1592 = vadd.f32 0.0, %v1591
        %v1593 = vpop.f32.mrb[0].mxu0
        %1594 = vmatprep.mubr.bf16.mxu0 0
        %1595 = vmatmul.mubr.bf16.gmra.mrb[0].mxu0 %v1158
        %v1596 = vpop.f32.mrb[0].mxu0
        %v1597 = vadd.f32 0.0, %v1596
        %v1598 = vpop.f32.mrb[0].mxu0
        %v1599 = vpop.f32.mrb[0].mxu0
        %v1600 = vadd.f32 0.0, %v1599
        %v1601 = vpop.f32.mrb[0].mxu0
        %1602 = vdwg.mxu0
        %v1619 = vunpack.c.l.b16 %v354
        %v1620 = vunpack.c.l.b16 %v355
        %v1621 = vunpack.c.l.b16 %v356
        %v1622 = vunpack.c.l.b16 %v357
        %v1623 = vunpack.c.l.b16 %v358
        %v1624 = vunpack.c.l.b16 %v359
        %v1625 = vunpack.c.l.b16 %v360
        %v1626 = vunpack.c.l.b16 %v361
        %v1627 = vunpack.c.l.b16 %v362
        %v1628 = vunpack.c.l.b16 %v363
        %v1629 = vunpack.c.l.b16 %v364
        %v1630 = vunpack.c.l.b16 %v365
        %v1631 = vunpack.c.l.b16 %v366
        %v1632 = vunpack.c.l.b16 %v367
        %v1633 = vunpack.c.l.b16 %v368
        %v1634 = vunpack.c.l.b16 %v369
        %v1635 = vpack.c.b16 %v1620, %v1619
        %v1636 = vpack.c.b16 %v1622, %v1621
        %v1637 = vpack.c.b16 %v1624, %v1623
        %v1638 = vpack.c.b16 %v1626, %v1625
        %v1639 = vpack.c.b16 %v1628, %v1627
        %v1640 = vpack.c.b16 %v1630, %v1629
        %v1641 = vpack.c.b16 %v1632, %v1631
        %v1642 = vpack.c.b16 %v1634, %v1633
        %1651 = vmatprep.subr.bf16.mxu0 0
        %1652 = vmatpush1.bf16.msra.mxu0 %v1635
        %1653 = vmatprep.subr.bf16.mxu0 0
        %1654 = vmatpush1.bf16.msra.mxu0 %v1636
        %1655 = vmatprep.subr.bf16.mxu0 0
        %1656 = vmatpush1.bf16.msra.mxu0 %v1637
        %1657 = vmatprep.subr.bf16.mxu0 0
        %1658 = vmatpush1.bf16.msra.mxu0 %v1638
        %1659 = vmatprep.subr.bf16.mxu0 0
        %1660 = vmatpush1.bf16.msra.mxu0 %v1639
        %1661 = vmatprep.subr.bf16.mxu0 0
        %1662 = vmatpush1.bf16.msra.mxu0 %v1640
        %1663 = vmatprep.subr.bf16.mxu0 0
        %1664 = vmatpush1.bf16.msra.mxu0 %v1641
        %1665 = vmatprep.subr.bf16.mxu0 0
        %1666 = vmatpush1.bf16.msra.mxu0 %v1642
        %1667 = vmatprep.subr.bf16.mxu0 0
        %1668 = vmatpush1.bf16.msra.mxu0 0
        %1669 = vmatprep.subr.bf16.mxu0 0
        %1670 = vmatpush1.bf16.msra.mxu0 0
        %1671 = vmatprep.subr.bf16.mxu0 0
        %1672 = vmatpush1.bf16.msra.mxu0 0
        %1673 = vmatprep.subr.bf16.mxu0 0
        %1674 = vmatpush1.bf16.msra.mxu0 0
        %1675 = vmatprep.subr.bf16.mxu0 0
        %1676 = vmatpush1.bf16.msra.mxu0 0
        %1677 = vmatprep.subr.bf16.mxu0 0
        %1678 = vmatpush1.bf16.msra.mxu0 0
        %1679 = vmatprep.subr.bf16.mxu0 0
        %1680 = vmatpush1.bf16.msra.mxu0 0
        %1681 = vmatprep.subr.bf16.mxu0 0
        %1682 = vmatpush1.bf16.msra.mxu0 0
        %1683 = vmatprep.mubr.bf16.mxu0 0
        %1684 = vmatmul.mubr.bf16.gmra.mrb[0].mxu0 %v1126
        %v1685 = vpop.f32.mrb[0].mxu0
        %v1686 = vadd.f32 %v1477, %v1685
        %v1687 = vpop.f32.mrb[0].mxu0
        %v1688 = vpop.f32.mrb[0].mxu0
        %v1689 = vadd.f32 %v1480, %v1688
        %v1690 = vpop.f32.mrb[0].mxu0
        %1691 = vmatprep.mubr.bf16.mxu0 0
        %1692 = vmatmul.mubr.bf16.gmra.mrb[0].mxu0 %v1127
        %v1693 = vpop.f32.mrb[0].mxu0
        %v1694 = vadd.f32 %v1485, %v1693
        %v1695 = vpop.f32.mrb[0].mxu0
        %v1696 = vpop.f32.mrb[0].mxu0
        %v1697 = vadd.f32 %v1488, %v1696
        %v1698 = vpop.f32.mrb[0].mxu0
        %1699 = vmatprep.mubr.bf16.mxu0 0
        %1700 = vmatmul.mubr.bf16.gmra.mrb[0].mxu0 %v1128
        %v1701 = vpop.f32.mrb[0].mxu0
        %v1702 = vadd.f32 %v1493, %v1701
        %v1703 = vpop.f32.mrb[0].mxu0
        %v1704 = vpop.f32.mrb[0].mxu0
        %v1705 = vadd.f32 %v1496, %v1704
        %v1706 = vpop.f32.mrb[0].mxu0
        %1707 = vmatprep.mubr.bf16.mxu0 0
        %1708 = vmatmul.mubr.bf16.gmra.mrb[0].mxu0 %v1129
        %v1709 = vpop.f32.mrb[0].mxu0
        %v1710 = vadd.f32 %v1501, %v1709
        %v1711 = vpop.f32.mrb[0].mxu0
        %v1712 = vpop.f32.mrb[0].mxu0
        %v1713 = vadd.f32 %v1504, %v1712
        %v1714 = vpop.f32.mrb[0].mxu0
        %1715 = vmatprep.mubr.bf16.mxu0 0
        %1716 = vmatmul.mubr.bf16.gmra.mrb[0].mxu0 %v1130
        %v1717 = vpop.f32.mrb[0].mxu0
        %v1718 = vadd.f32 %v1509, %v1717
        %v1719 = vpop.f32.mrb[0].mxu0
        %v1720 = vpop.f32.mrb[0].mxu0
        %v1721 = vadd.f32 %v1512, %v1720
        %v1722 = vpop.f32.mrb[0].mxu0
        %1723 = vmatprep.mubr.bf16.mxu0 0
        %1724 = vmatmul.mubr.bf16.gmra.mrb[0].mxu0 %v1131
        %v1725 = vpop.f32.mrb[0].mxu0
        %v1726 = vadd.f32 %v1517, %v1725
        %v1727 = vpop.f32.mrb[0].mxu0
        %v1728 = vpop.f32.mrb[0].mxu0
        %v1729 = vadd.f32 %v1520, %v1728
        %v1730 = vpop.f32.mrb[0].mxu0
        %1731 = vmatprep.mubr.bf16.mxu0 0
        %1732 = vmatmul.mubr.bf16.gmra.mrb[0].mxu0 %v1132
        %v1733 = vpop.f32.mrb[0].mxu0
        %v1734 = vadd.f32 %v1525, %v1733
        %v1735 = vpop.f32.mrb[0].mxu0
        %v1736 = vpop.f32.mrb[0].mxu0
        %v1737 = vadd.f32 %v1528, %v1736
        %v1738 = vpop.f32.mrb[0].mxu0
        %1739 = vmatprep.mubr.bf16.mxu0 0
        %1740 = vmatmul.mubr.bf16.gmra.mrb[0].mxu0 %v1133
        %v1741 = vpop.f32.mrb[0].mxu0
        %v1742 = vadd.f32 %v1533, %v1741
        %v1743 = vpop.f32.mrb[0].mxu0
        %v1744 = vpop.f32.mrb[0].mxu0
        %v1745 = vadd.f32 %v1536, %v1744
        %v1746 = vpop.f32.mrb[0].mxu0
        %1747 = vmatprep.mubr.bf16.mxu0 0
        %1748 = vmatmul.mubr.bf16.gmra.mrb[0].mxu0 %v1134
        %v1749 = vpop.f32.mrb[0].mxu0
        %v1750 = vadd.f32 %v1541, %v1749
        %v1751 = vpop.f32.mrb[0].mxu0
        %v1752 = vpop.f32.mrb[0].mxu0
        %v1753 = vadd.f32 %v1544, %v1752
        %v1754 = vpop.f32.mrb[0].mxu0
        %1755 = vmatprep.mubr.bf16.mxu0 0
        %1756 = vmatmul.mubr.bf16.gmra.mrb[0].mxu0 %v1135
        %v1757 = vpop.f32.mrb[0].mxu0
        %v1758 = vadd.f32 %v1549, %v1757
        %v1759 = vpop.f32.mrb[0].mxu0
        %v1760 = vpop.f32.mrb[0].mxu0
        %v1761 = vadd.f32 %v1552, %v1760
        %v1762 = vpop.f32.mrb[0].mxu0
        %1763 = vmatprep.mubr.bf16.mxu0 0
        %1764 = vmatmul.mubr.bf16.gmra.mrb[0].mxu0 %v1136
        %v1765 = vpop.f32.mrb[0].mxu0
        %v1766 = vadd.f32 %v1557, %v1765
        %v1767 = vpop.f32.mrb[0].mxu0
        %v1768 = vpop.f32.mrb[0].mxu0
        %v1769 = vadd.f32 %v1560, %v1768
        %v1770 = vpop.f32.mrb[0].mxu0
        %1771 = vmatprep.mubr.bf16.mxu0 0
        %1772 = vmatmul.mubr.bf16.gmra.mrb[0].mxu0 %v1137
        %v1773 = vpop.f32.mrb[0].mxu0
        %v1774 = vadd.f32 %v1565, %v1773
        %v1775 = vpop.f32.mrb[0].mxu0
        %v1776 = vpop.f32.mrb[0].mxu0
        %v1777 = vadd.f32 %v1568, %v1776
        %v1778 = vpop.f32.mrb[0].mxu0
        %1779 = vmatprep.mubr.bf16.mxu0 0
        %1780 = vmatmul.mubr.bf16.gmra.mrb[0].mxu0 %v1138
        %v1781 = vpop.f32.mrb[0].mxu0
        %v1782 = vadd.f32 %v1573, %v1781
        %v1783 = vpop.f32.mrb[0].mxu0
        %v1784 = vpop.f32.mrb[0].mxu0
        %v1785 = vadd.f32 %v1576, %v1784
        %v1786 = vpop.f32.mrb[0].mxu0
        %1787 = vmatprep.mubr.bf16.mxu0 0
        %1788 = vmatmul.mubr.bf16.gmra.mrb[0].mxu0 %v1139
        %v1789 = vpop.f32.mrb[0].mxu0
        %v1790 = vadd.f32 %v1581, %v1789
        %v1791 = vpop.f32.mrb[0].mxu0
        %v1792 = vpop.f32.mrb[0].mxu0
        %v1793 = vadd.f32 %v1584, %v1792
        %v1794 = vpop.f32.mrb[0].mxu0
        %1795 = vmatprep.mubr.bf16.mxu0 0
        %1796 = vmatmul.mubr.bf16.gmra.mrb[0].mxu0 %v1140
        %v1797 = vpop.f32.mrb[0].mxu0
        %v1798 = vadd.f32 %v1589, %v1797
        %v1799 = vpop.f32.mrb[0].mxu0
        %v1800 = vpop.f32.mrb[0].mxu0
        %v1801 = vadd.f32 %v1592, %v1800
        %v1802 = vpop.f32.mrb[0].mxu0
        %1803 = vmatprep.mubr.bf16.mxu0 0
        %1804 = vmatmul.mubr.bf16.gmra.mrb[0].mxu0 %v1141
        %v1805 = vpop.f32.mrb[0].mxu0
        %v1806 = vadd.f32 %v1597, %v1805
        %v1807 = vpop.f32.mrb[0].mxu0
        %v1808 = vpop.f32.mrb[0].mxu0
        %v1809 = vadd.f32 %v1600, %v1808
        %v1810 = vpop.f32.mrb[0].mxu0
        %1811 = vdwg.mxu0
        %v1828 = vunpack.c.l.b16 %v386
        %v1829 = vunpack.c.l.b16 %v387
        %v1830 = vunpack.c.l.b16 %v388
        %v1831 = vunpack.c.l.b16 %v389
        %v1832 = vunpack.c.l.b16 %v390
        %v1833 = vunpack.c.l.b16 %v391
        %v1834 = vunpack.c.l.b16 %v392
        %v1835 = vunpack.c.l.b16 %v393
        %v1836 = vunpack.c.l.b16 %v394
        %v1837 = vunpack.c.l.b16 %v395
        %v1838 = vunpack.c.l.b16 %v396
        %v1839 = vunpack.c.l.b16 %v397
        %v1840 = vunpack.c.l.b16 %v398
        %v1841 = vunpack.c.l.b16 %v399
        %v1842 = vunpack.c.l.b16 %v400
        %v1843 = vunpack.c.l.b16 %v401
        %v1844 = vpack.c.b16 %v1829, %v1828
        %v1845 = vpack.c.b16 %v1831, %v1830
        %v1846 = vpack.c.b16 %v1833, %v1832
        %v1847 = vpack.c.b16 %v1835, %v1834
        %v1848 = vpack.c.b16 %v1837, %v1836
        %v1849 = vpack.c.b16 %v1839, %v1838
        %v1850 = vpack.c.b16 %v1841, %v1840
        %v1851 = vpack.c.b16 %v1843, %v1842
        %1860 = vmatprep.subr.bf16.mxu0 0
        %1861 = vmatpush1.bf16.msra.mxu0 %v1844
        %1862 = vmatprep.subr.bf16.mxu0 0
        %1863 = vmatpush1.bf16.msra.mxu0 %v1845
        %1864 = vmatprep.subr.bf16.mxu0 0
        %1865 = vmatpush1.bf16.msra.mxu0 %v1846
        %1866 = vmatprep.subr.bf16.mxu0 0
        %1867 = vmatpush1.bf16.msra.mxu0 %v1847
        %1868 = vmatprep.subr.bf16.mxu0 0
        %1869 = vmatpush1.bf16.msra.mxu0 %v1848
        %1870 = vmatprep.subr.bf16.mxu0 0
        %1871 = vmatpush1.bf16.msra.mxu0 %v1849
        %1872 = vmatprep.subr.bf16.mxu0 0
        %1873 = vmatpush1.bf16.msra.mxu0 %v1850
        %1874 = vmatprep.subr.bf16.mxu0 0
        %1875 = vmatpush1.bf16.msra.mxu0 %v1851
        %1876 = vmatprep.subr.bf16.mxu0 0
        %1877 = vmatpush1.bf16.msra.mxu0 0
        %1878 = vmatprep.subr.bf16.mxu0 0
        %1879 = vmatpush1.bf16.msra.mxu0 0
        %1880 = vmatprep.subr.bf16.mxu0 0
        %1881 = vmatpush1.bf16.msra.mxu0 0
        %1882 = vmatprep.subr.bf16.mxu0 0
        %1883 = vmatpush1.bf16.msra.mxu0 0
        %1884 = vmatprep.subr.bf16.mxu0 0
        %1885 = vmatpush1.bf16.msra.mxu0 0
        %1886 = vmatprep.subr.bf16.mxu0 0
        %1887 = vmatpush1.bf16.msra.mxu0 0
        %1888 = vmatprep.subr.bf16.mxu0 0
        %1889 = vmatpush1.bf16.msra.mxu0 0
        %1890 = vmatprep.subr.bf16.mxu0 0
        %1891 = vmatpush1.bf16.msra.mxu0 0
        %1892 = vmatprep.mubr.bf16.mxu0 0
        %1893 = vmatmul.mubr.bf16.gmra.mrb[0].mxu0 %v1376
        %v1894 = vpop.f32.mrb[0].mxu0
        %v1895 = vadd.f32 0.0, %v1894
        %v1896 = vpop.f32.mrb[0].mxu0
        %v1897 = vpop.f32.mrb[0].mxu0
        %v1898 = vadd.f32 0.0, %v1897
        %v1899 = vpop.f32.mrb[0].mxu0
        %1900 = vmatprep.mubr.bf16.mxu0 0
        %1901 = vmatmul.mubr.bf16.gmra.mrb[0].mxu0 %v1377
        %v1902 = vpop.f32.mrb[0].mxu0
        %v1903 = vadd.f32 0.0, %v1902
        %v1904 = vpop.f32.mrb[0].mxu0
        %v1905 = vpop.f32.mrb[0].mxu0
        %v1906 = vadd.f32 0.0, %v1905
        %v1907 = vpop.f32.mrb[0].mxu0
        %1908 = vmatprep.mubr.bf16.mxu0 0
        %1909 = vmatmul.mubr.bf16.gmra.mrb[0].mxu0 %v1378
        %v1910 = vpop.f32.mrb[0].mxu0
        %v1911 = vadd.f32 0.0, %v1910
        %v1912 = vpop.f32.mrb[0].mxu0
        %v1913 = vpop.f32.mrb[0].mxu0
        %v1914 = vadd.f32 0.0, %v1913
        %v1915 = vpop.f32.mrb[0].mxu0
        %1916 = vmatprep.mubr.bf16.mxu0 0
        %1917 = vmatmul.mubr.bf16.gmra.mrb[0].mxu0 %v1379
        %v1918 = vpop.f32.mrb[0].mxu0
        %v1919 = vadd.f32 0.0, %v1918
        %v1920 = vpop.f32.mrb[0].mxu0
        %v1921 = vpop.f32.mrb[0].mxu0
        %v1922 = vadd.f32 0.0, %v1921
        %v1923 = vpop.f32.mrb[0].mxu0
        %1924 = vmatprep.mubr.bf16.mxu0 0
        %1925 = vmatmul.mubr.bf16.gmra.mrb[0].mxu0 %v1380
        %v1926 = vpop.f32.mrb[0].mxu0
        %v1927 = vadd.f32 0.0, %v1926
        %v1928 = vpop.f32.mrb[0].mxu0
        %v1929 = vpop.f32.mrb[0].mxu0
        %v1930 = vadd.f32 0.0, %v1929
        %v1931 = vpop.f32.mrb[0].mxu0
        %1932 = vmatprep.mubr.bf16.mxu0 0
        %1933 = vmatmul.mubr.bf16.gmra.mrb[0].mxu0 %v1381
        %v1934 = vpop.f32.mrb[0].mxu0
        %v1935 = vadd.f32 0.0, %v1934
        %v1936 = vpop.f32.mrb[0].mxu0
        %v1937 = vpop.f32.mrb[0].mxu0
        %v1938 = vadd.f32 0.0, %v1937
        %v1939 = vpop.f32.mrb[0].mxu0
        %1940 = vmatprep.mubr.bf16.mxu0 0
        %1941 = vmatmul.mubr.bf16.gmra.mrb[0].mxu0 %v1382
        %v1942 = vpop.f32.mrb[0].mxu0
        %v1943 = vadd.f32 0.0, %v1942
        %v1944 = vpop.f32.mrb[0].mxu0
        %v1945 = vpop.f32.mrb[0].mxu0
        %v1946 = vadd.f32 0.0, %v1945
        %v1947 = vpop.f32.mrb[0].mxu0
        %1948 = vmatprep.mubr.bf16.mxu0 0
        %1949 = vmatmul.mubr.bf16.gmra.mrb[0].mxu0 %v1383
        %v1950 = vpop.f32.mrb[0].mxu0
        %v1951 = vadd.f32 0.0, %v1950
        %v1952 = vpop.f32.mrb[0].mxu0
        %v1953 = vpop.f32.mrb[0].mxu0
        %v1954 = vadd.f32 0.0, %v1953
        %v1955 = vpop.f32.mrb[0].mxu0
        %1956 = vmatprep.mubr.bf16.mxu0 0
        %1957 = vmatmul.mubr.bf16.gmra.mrb[0].mxu0 %v1384
        %v1958 = vpop.f32.mrb[0].mxu0
        %v1959 = vadd.f32 0.0, %v1958
        %v1960 = vpop.f32.mrb[0].mxu0
        %v1961 = vpop.f32.mrb[0].mxu0
        %v1962 = vadd.f32 0.0, %v1961
        %v1963 = vpop.f32.mrb[0].mxu0
        %1964 = vmatprep.mubr.bf16.mxu0 0
        %1965 = vmatmul.mubr.bf16.gmra.mrb[0].mxu0 %v1385
        %v1966 = vpop.f32.mrb[0].mxu0
        %v1967 = vadd.f32 0.0, %v1966
        %v1968 = vpop.f32.mrb[0].mxu0
        %v1969 = vpop.f32.mrb[0].mxu0
        %v1970 = vadd.f32 0.0, %v1969
        %v1971 = vpop.f32.mrb[0].mxu0
        %1972 = vmatprep.mubr.bf16.mxu0 0
        %1973 = vmatmul.mubr.bf16.gmra.mrb[0].mxu0 %v1386
        %v1974 = vpop.f32.mrb[0].mxu0
        %v1975 = vadd.f32 0.0, %v1974
        %v1976 = vpop.f32.mrb[0].mxu0
        %v1977 = vpop.f32.mrb[0].mxu0
        %v1978 = vadd.f32 0.0, %v1977
        %v1979 = vpop.f32.mrb[0].mxu0
        %1980 = vmatprep.mubr.bf16.mxu0 0
        %1981 = vmatmul.mubr.bf16.gmra.mrb[0].mxu0 %v1387
        %v1982 = vpop.f32.mrb[0].mxu0
        %v1983 = vadd.f32 0.0, %v1982
        %v1984 = vpop.f32.mrb[0].mxu0
        %v1985 = vpop.f32.mrb[0].mxu0
        %v1986 = vadd.f32 0.0, %v1985
        %v1987 = vpop.f32.mrb[0].mxu0
        %1988 = vmatprep.mubr.bf16.mxu0 0
        %1989 = vmatmul.mubr.bf16.gmra.mrb[0].mxu0 %v1388
        %v1990 = vpop.f32.mrb[0].mxu0
        %v1991 = vadd.f32 0.0, %v1990
        %v1992 = vpop.f32.mrb[0].mxu0
        %v1993 = vpop.f32.mrb[0].mxu0
        %v1994 = vadd.f32 0.0, %v1993
        %v1995 = vpop.f32.mrb[0].mxu0
        %1996 = vmatprep.mubr.bf16.mxu0 0
        %1997 = vmatmul.mubr.bf16.gmra.mrb[0].mxu0 %v1389
        %v1998 = vpop.f32.mrb[0].mxu0
        %v1999 = vadd.f32 0.0, %v1998
        %v2000 = vpop.f32.mrb[0].mxu0
        %v2001 = vpop.f32.mrb[0].mxu0
        %v2002 = vadd.f32 0.0, %v2001
        %v2003 = vpop.f32.mrb[0].mxu0
        %2004 = vmatprep.mubr.bf16.mxu0 0
        %2005 = vmatmul.mubr.bf16.gmra.mrb[0].mxu0 %v1390
        %v2006 = vpop.f32.mrb[0].mxu0
        %v2007 = vadd.f32 0.0, %v2006
        %v2008 = vpop.f32.mrb[0].mxu0
        %v2009 = vpop.f32.mrb[0].mxu0
        %v2010 = vadd.f32 0.0, %v2009
        %v2011 = vpop.f32.mrb[0].mxu0
        %2012 = vmatprep.mubr.bf16.mxu0 0
        %2013 = vmatmul.mubr.bf16.gmra.mrb[0].mxu0 %v1391
        %v2014 = vpop.f32.mrb[0].mxu0
        %v2015 = vadd.f32 0.0, %v2014
        %v2016 = vpop.f32.mrb[0].mxu0
        %v2017 = vpop.f32.mrb[0].mxu0
        %v2018 = vadd.f32 0.0, %v2017
        %v2019 = vpop.f32.mrb[0].mxu0
        %2020 = vdwg.mxu0
        %v2021 = vadd.f32 %v1686, %v1895
        %v2022 = vadd.f32 %v1689, %v1898
        %v2023 = vadd.f32 %v1694, %v1903
        %v2024 = vadd.f32 %v1697, %v1906
        %v2025 = vadd.f32 %v1702, %v1911
        %v2026 = vadd.f32 %v1705, %v1914
        %v2027 = vadd.f32 %v1710, %v1919
        %v2028 = vadd.f32 %v1713, %v1922
        %v2029 = vadd.f32 %v1718, %v1927
        %v2030 = vadd.f32 %v1721, %v1930
        %v2031 = vadd.f32 %v1726, %v1935
        %v2032 = vadd.f32 %v1729, %v1938
        %v2033 = vadd.f32 %v1734, %v1943
        %v2034 = vadd.f32 %v1737, %v1946
        %v2035 = vadd.f32 %v1742, %v1951
        %v2036 = vadd.f32 %v1745, %v1954
        %v2037 = vadd.f32 %v1750, %v1959
        %v2038 = vadd.f32 %v1753, %v1962
        %v2039 = vadd.f32 %v1758, %v1967
        %v2040 = vadd.f32 %v1761, %v1970
        %v2041 = vadd.f32 %v1766, %v1975
        %v2042 = vadd.f32 %v1769, %v1978
        %v2043 = vadd.f32 %v1774, %v1983
        %v2044 = vadd.f32 %v1777, %v1986
        %v2045 = vadd.f32 %v1782, %v1991
        %v2046 = vadd.f32 %v1785, %v1994
        %v2047 = vadd.f32 %v1790, %v1999
        %v2048 = vadd.f32 %v1793, %v2002
        %v2049 = vadd.f32 %v1798, %v2007
        %v2050 = vadd.f32 %v1801, %v2010
        %v2051 = vadd.f32 %v1806, %v2015
        %v2052 = vadd.f32 %v1809, %v2018
        %v2069 = vunpack.c.l.b16 %v402
        %v2070 = vunpack.c.l.b16 %v403
        %v2071 = vunpack.c.l.b16 %v404
        %v2072 = vunpack.c.l.b16 %v405
        %v2073 = vunpack.c.l.b16 %v406
        %v2074 = vunpack.c.l.b16 %v407
        %v2075 = vunpack.c.l.b16 %v408
        %v2076 = vunpack.c.l.b16 %v409
        %v2077 = vunpack.c.l.b16 %v410
        %v2078 = vunpack.c.l.b16 %v411
        %v2079 = vunpack.c.l.b16 %v412
        %v2080 = vunpack.c.l.b16 %v413
        %v2081 = vunpack.c.l.b16 %v414
        %v2082 = vunpack.c.l.b16 %v415
        %v2083 = vunpack.c.l.b16 %v416
        %v2084 = vunpack.c.l.b16 %v417
        %v2085 = vpack.c.b16 %v2070, %v2069
        %v2086 = vpack.c.b16 %v2072, %v2071
        %v2087 = vpack.c.b16 %v2074, %v2073
        %v2088 = vpack.c.b16 %v2076, %v2075
        %v2089 = vpack.c.b16 %v2078, %v2077
        %v2090 = vpack.c.b16 %v2080, %v2079
        %v2091 = vpack.c.b16 %v2082, %v2081
        %v2092 = vpack.c.b16 %v2084, %v2083
        %2101 = vmatprep.subr.bf16.mxu0 0
        %2102 = vmatpush1.bf16.msra.mxu0 %v2085
        %2103 = vmatprep.subr.bf16.mxu0 0
        %2104 = vmatpush1.bf16.msra.mxu0 %v2086
        %2105 = vmatprep.subr.bf16.mxu0 0
        %2106 = vmatpush1.bf16.msra.mxu0 %v2087
        %2107 = vmatprep.subr.bf16.mxu0 0
        %2108 = vmatpush1.bf16.msra.mxu0 %v2088
        %2109 = vmatprep.subr.bf16.mxu0 0
        %2110 = vmatpush1.bf16.msra.mxu0 %v2089
        %2111 = vmatprep.subr.bf16.mxu0 0
        %2112 = vmatpush1.bf16.msra.mxu0 %v2090
        %2113 = vmatprep.subr.bf16.mxu0 0
        %2114 = vmatpush1.bf16.msra.mxu0 %v2091
        %2115 = vmatprep.subr.bf16.mxu0 0
        %2116 = vmatpush1.bf16.msra.mxu0 %v2092
        %2117 = vmatprep.subr.bf16.mxu0 0
        %2118 = vmatpush1.bf16.msra.mxu0 0
        %2119 = vmatprep.subr.bf16.mxu0 0
        %2120 = vmatpush1.bf16.msra.mxu0 0
        %2121 = vmatprep.subr.bf16.mxu0 0
        %2122 = vmatpush1.bf16.msra.mxu0 0
        %2123 = vmatprep.subr.bf16.mxu0 0
        %2124 = vmatpush1.bf16.msra.mxu0 0
        %2125 = vmatprep.subr.bf16.mxu0 0
        %2126 = vmatpush1.bf16.msra.mxu0 0
        %2127 = vmatprep.subr.bf16.mxu0 0
        %2128 = vmatpush1.bf16.msra.mxu0 0
        %2129 = vmatprep.subr.bf16.mxu0 0
        %2130 = vmatpush1.bf16.msra.mxu0 0
        %2131 = vmatprep.subr.bf16.mxu0 0
        %2132 = vmatpush1.bf16.msra.mxu0 0
        %2133 = vmatprep.mubr.bf16.mxu0 0
        %2134 = vmatmul.mubr.bf16.gmra.mrb[0].mxu0 %v1127
        %v2135 = vpop.f32.mrb[0].mxu0
        %v2136 = vadd.f32 0.0, %v2135
        %v2137 = vpop.f32.mrb[0].mxu0
        %v2138 = vpop.f32.mrb[0].mxu0
        %v2139 = vadd.f32 0.0, %v2138
        %v2140 = vpop.f32.mrb[0].mxu0
        %2141 = vmatprep.mubr.bf16.mxu0 0
        %2142 = vmatmul.mubr.bf16.gmra.mrb[0].mxu0 %v1128
        %v2143 = vpop.f32.mrb[0].mxu0
        %v2144 = vadd.f32 0.0, %v2143
        %v2145 = vpop.f32.mrb[0].mxu0
        %v2146 = vpop.f32.mrb[0].mxu0
        %v2147 = vadd.f32 0.0, %v2146
        %v2148 = vpop.f32.mrb[0].mxu0
        %2149 = vmatprep.mubr.bf16.mxu0 0
        %2150 = vmatmul.mubr.bf16.gmra.mrb[0].mxu0 %v1129
        %v2151 = vpop.f32.mrb[0].mxu0
        %v2152 = vadd.f32 0.0, %v2151
        %v2153 = vpop.f32.mrb[0].mxu0
        %v2154 = vpop.f32.mrb[0].mxu0
        %v2155 = vadd.f32 0.0, %v2154
        %v2156 = vpop.f32.mrb[0].mxu0
        %2157 = vmatprep.mubr.bf16.mxu0 0
        %2158 = vmatmul.mubr.bf16.gmra.mrb[0].mxu0 %v1130
        %v2159 = vpop.f32.mrb[0].mxu0
        %v2160 = vadd.f32 0.0, %v2159
        %v2161 = vpop.f32.mrb[0].mxu0
        %v2162 = vpop.f32.mrb[0].mxu0
        %v2163 = vadd.f32 0.0, %v2162
        %v2164 = vpop.f32.mrb[0].mxu0
        %2165 = vmatprep.mubr.bf16.mxu0 0
        %2166 = vmatmul.mubr.bf16.gmra.mrb[0].mxu0 %v1131
        %v2167 = vpop.f32.mrb[0].mxu0
        %v2168 = vadd.f32 0.0, %v2167
        %v2169 = vpop.f32.mrb[0].mxu0
        %v2170 = vpop.f32.mrb[0].mxu0
        %v2171 = vadd.f32 0.0, %v2170
        %v2172 = vpop.f32.mrb[0].mxu0
        %2173 = vmatprep.mubr.bf16.mxu0 0
        %2174 = vmatmul.mubr.bf16.gmra.mrb[0].mxu0 %v1132
        %v2175 = vpop.f32.mrb[0].mxu0
        %v2176 = vadd.f32 0.0, %v2175
        %v2177 = vpop.f32.mrb[0].mxu0
        %v2178 = vpop.f32.mrb[0].mxu0
        %v2179 = vadd.f32 0.0, %v2178
        %v2180 = vpop.f32.mrb[0].mxu0
        %2181 = vmatprep.mubr.bf16.mxu0 0
        %2182 = vmatmul.mubr.bf16.gmra.mrb[0].mxu0 %v1133
        %v2183 = vpop.f32.mrb[0].mxu0
        %v2184 = vadd.f32 0.0, %v2183
        %v2185 = vpop.f32.mrb[0].mxu0
        %v2186 = vpop.f32.mrb[0].mxu0
        %v2187 = vadd.f32 0.0, %v2186
        %v2188 = vpop.f32.mrb[0].mxu0
        %2189 = vmatprep.mubr.bf16.mxu0 0
        %2190 = vmatmul.mubr.bf16.gmra.mrb[0].mxu0 %v1134
        %v2191 = vpop.f32.mrb[0].mxu0
        %v2192 = vadd.f32 0.0, %v2191
        %v2193 = vpop.f32.mrb[0].mxu0
        %v2194 = vpop.f32.mrb[0].mxu0
        %v2195 = vadd.f32 0.0, %v2194
        %v2196 = vpop.f32.mrb[0].mxu0
        %2197 = vmatprep.mubr.bf16.mxu0 0
        %2198 = vmatmul.mubr.bf16.gmra.mrb[0].mxu0 %v1135
        %v2199 = vpop.f32.mrb[0].mxu0
        %v2200 = vadd.f32 0.0, %v2199
        %v2201 = vpop.f32.mrb[0].mxu0
        %v2202 = vpop.f32.mrb[0].mxu0
        %v2203 = vadd.f32 0.0, %v2202
        %v2204 = vpop.f32.mrb[0].mxu0
        %2205 = vmatprep.mubr.bf16.mxu0 0
        %2206 = vmatmul.mubr.bf16.gmra.mrb[0].mxu0 %v1136
        %v2207 = vpop.f32.mrb[0].mxu0
        %v2208 = vadd.f32 0.0, %v2207
        %v2209 = vpop.f32.mrb[0].mxu0
        %v2210 = vpop.f32.mrb[0].mxu0
        %v2211 = vadd.f32 0.0, %v2210
        %v2212 = vpop.f32.mrb[0].mxu0
        %2213 = vmatprep.mubr.bf16.mxu0 0
        %2214 = vmatmul.mubr.bf16.gmra.mrb[0].mxu0 %v1137
        %v2215 = vpop.f32.mrb[0].mxu0
        %v2216 = vadd.f32 0.0, %v2215
        %v2217 = vpop.f32.mrb[0].mxu0
        %v2218 = vpop.f32.mrb[0].mxu0
        %v2219 = vadd.f32 0.0, %v2218
        %v2220 = vpop.f32.mrb[0].mxu0
        %2221 = vmatprep.mubr.bf16.mxu0 0
        %2222 = vmatmul.mubr.bf16.gmra.mrb[0].mxu0 %v1138
        %v2223 = vpop.f32.mrb[0].mxu0
        %v2224 = vadd.f32 0.0, %v2223
        %v2225 = vpop.f32.mrb[0].mxu0
        %v2226 = vpop.f32.mrb[0].mxu0
        %v2227 = vadd.f32 0.0, %v2226
        %v2228 = vpop.f32.mrb[0].mxu0
        %2229 = vmatprep.mubr.bf16.mxu0 0
        %2230 = vmatmul.mubr.bf16.gmra.mrb[0].mxu0 %v1139
        %v2231 = vpop.f32.mrb[0].mxu0
        %v2232 = vadd.f32 0.0, %v2231
        %v2233 = vpop.f32.mrb[0].mxu0
        %v2234 = vpop.f32.mrb[0].mxu0
        %v2235 = vadd.f32 0.0, %v2234
        %v2236 = vpop.f32.mrb[0].mxu0
        %2237 = vmatprep.mubr.bf16.mxu0 0
        %2238 = vmatmul.mubr.bf16.gmra.mrb[0].mxu0 %v1140
        %v2239 = vpop.f32.mrb[0].mxu0
        %v2240 = vadd.f32 0.0, %v2239
        %v2241 = vpop.f32.mrb[0].mxu0
        %v2242 = vpop.f32.mrb[0].mxu0
        %v2243 = vadd.f32 0.0, %v2242
        %v2244 = vpop.f32.mrb[0].mxu0
        %2245 = vmatprep.mubr.bf16.mxu0 0
        %2246 = vmatmul.mubr.bf16.gmra.mrb[0].mxu0 %v1141
        %v2247 = vpop.f32.mrb[0].mxu0
        %v2248 = vadd.f32 0.0, %v2247
        %v2249 = vpop.f32.mrb[0].mxu0
        %v2250 = vpop.f32.mrb[0].mxu0
        %v2251 = vadd.f32 0.0, %v2250
        %v2252 = vpop.f32.mrb[0].mxu0
        %2253 = vmatprep.mubr.bf16.mxu0 0
        %2254 = vmatmul.mubr.bf16.gmra.mrb[0].mxu0 %v1142
        %v2255 = vpop.f32.mrb[0].mxu0
        %v2256 = vadd.f32 0.0, %v2255
        %v2257 = vpop.f32.mrb[0].mxu0
        %v2258 = vpop.f32.mrb[0].mxu0
        %v2259 = vadd.f32 0.0, %v2258
        %v2260 = vpop.f32.mrb[0].mxu0
        %2261 = vdwg.mxu0
        %v2262 = vadd.f32 %v2021, %v2136
        %v2263 = vadd.f32 %v2022, %v2139
        %v2264 = vadd.f32 %v2023, %v2144
        %v2265 = vadd.f32 %v2024, %v2147
        %v2266 = vadd.f32 %v2025, %v2152
        %v2267 = vadd.f32 %v2026, %v2155
        %v2268 = vadd.f32 %v2027, %v2160
        %v2269 = vadd.f32 %v2028, %v2163
        %v2270 = vadd.f32 %v2029, %v2168
        %v2271 = vadd.f32 %v2030, %v2171
        %v2272 = vadd.f32 %v2031, %v2176
        %v2273 = vadd.f32 %v2032, %v2179
        %v2274 = vadd.f32 %v2033, %v2184
        %v2275 = vadd.f32 %v2034, %v2187
        %v2276 = vadd.f32 %v2035, %v2192
        %v2277 = vadd.f32 %v2036, %v2195
        %v2278 = vadd.f32 %v2037, %v2200
        %v2279 = vadd.f32 %v2038, %v2203
        %v2280 = vadd.f32 %v2039, %v2208
        %v2281 = vadd.f32 %v2040, %v2211
        %v2282 = vadd.f32 %v2041, %v2216
        %v2283 = vadd.f32 %v2042, %v2219
        %v2284 = vadd.f32 %v2043, %v2224
        %v2285 = vadd.f32 %v2044, %v2227
        %v2286 = vadd.f32 %v2045, %v2232
        %v2287 = vadd.f32 %v2046, %v2235
        %v2288 = vadd.f32 %v2047, %v2240
        %v2289 = vadd.f32 %v2048, %v2243
        %v2290 = vadd.f32 %v2049, %v2248
        %v2291 = vadd.f32 %v2050, %v2251
        %v2292 = vadd.f32 %v2051, %v2256
        %v2293 = vadd.f32 %v2052, %v2259
        %v2310 = vunpack.c.l.b16 %v418
        %v2311 = vunpack.c.l.b16 %v419
        %v2312 = vunpack.c.l.b16 %v420
        %v2313 = vunpack.c.l.b16 %v421
        %v2314 = vunpack.c.l.b16 %v422
        %v2315 = vunpack.c.l.b16 %v423
        %v2316 = vunpack.c.l.b16 %v424
        %v2317 = vunpack.c.l.b16 %v425
        %v2318 = vunpack.c.l.b16 %v426
        %v2319 = vunpack.c.l.b16 %v427
        %v2320 = vunpack.c.l.b16 %v428
        %v2321 = vunpack.c.l.b16 %v429
        %v2322 = vunpack.c.l.b16 %v430
        %v2323 = vunpack.c.l.b16 %v431
        %v2324 = vunpack.c.l.b16 %v432
        %v2325 = vunpack.c.l.b16 %v433
        %v2326 = vpack.c.b16 %v2311, %v2310
        %v2327 = vpack.c.b16 %v2313, %v2312
        %v2328 = vpack.c.b16 %v2315, %v2314
        %v2329 = vpack.c.b16 %v2317, %v2316
        %v2330 = vpack.c.b16 %v2319, %v2318
        %v2331 = vpack.c.b16 %v2321, %v2320
        %v2332 = vpack.c.b16 %v2323, %v2322
        %v2333 = vpack.c.b16 %v2325, %v2324
        %2342 = vmatprep.subr.bf16.mxu0 0
        %2343 = vmatpush1.bf16.msra.mxu0 %v2326
        %2344 = vmatprep.subr.bf16.mxu0 0
        %2345 = vmatpush1.bf16.msra.mxu0 %v2327
        %2346 = vmatprep.subr.bf16.mxu0 0
        %2347 = vmatpush1.bf16.msra.mxu0 %v2328
        %2348 = vmatprep.subr.bf16.mxu0 0
        %2349 = vmatpush1.bf16.msra.mxu0 %v2329
        %2350 = vmatprep.subr.bf16.mxu0 0
        %2351 = vmatpush1.bf16.msra.mxu0 %v2330
        %2352 = vmatprep.subr.bf16.mxu0 0
        %2353 = vmatpush1.bf16.msra.mxu0 %v2331
        %2354 = vmatprep.subr.bf16.mxu0 0
        %2355 = vmatpush1.bf16.msra.mxu0 %v2332
        %2356 = vmatprep.subr.bf16.mxu0 0
        %2357 = vmatpush1.bf16.msra.mxu0 %v2333
        %2358 = vmatprep.subr.bf16.mxu0 0
        %2359 = vmatpush1.bf16.msra.mxu0 0
        %2360 = vmatprep.subr.bf16.mxu0 0
        %2361 = vmatpush1.bf16.msra.mxu0 0
        %2362 = vmatprep.subr.bf16.mxu0 0
        %2363 = vmatpush1.bf16.msra.mxu0 0
        %2364 = vmatprep.subr.bf16.mxu0 0
        %2365 = vmatpush1.bf16.msra.mxu0 0
        %2366 = vmatprep.subr.bf16.mxu0 0
        %2367 = vmatpush1.bf16.msra.mxu0 0
        %2368 = vmatprep.subr.bf16.mxu0 0
        %2369 = vmatpush1.bf16.msra.mxu0 0
        %2370 = vmatprep.subr.bf16.mxu0 0
        %2371 = vmatpush1.bf16.msra.mxu0 0
        %2372 = vmatprep.subr.bf16.mxu0 0
        %2373 = vmatpush1.bf16.msra.mxu0 0
        %2374 = vmatprep.mubr.bf16.mxu0 0
        %2375 = vmatmul.mubr.bf16.gmra.mrb[0].mxu0 %v1145
        %v2376 = vpop.f32.mrb[0].mxu0
        %v2377 = vadd.f32 0.0, %v2376
        %v2378 = vpop.f32.mrb[0].mxu0
        %v2379 = vpop.f32.mrb[0].mxu0
        %v2380 = vadd.f32 0.0, %v2379
        %v2381 = vpop.f32.mrb[0].mxu0
        %2382 = vmatprep.mubr.bf16.mxu0 0
        %2383 = vmatmul.mubr.bf16.gmra.mrb[0].mxu0 %v1144
        %v2384 = vpop.f32.mrb[0].mxu0
        %v2385 = vadd.f32 0.0, %v2384
        %v2386 = vpop.f32.mrb[0].mxu0
        %v2387 = vpop.f32.mrb[0].mxu0
        %v2388 = vadd.f32 0.0, %v2387
        %v2389 = vpop.f32.mrb[0].mxu0
        %2390 = vmatprep.mubr.bf16.mxu0 0
        %2391 = vmatmul.mubr.bf16.gmra.mrb[0].mxu0 %v1146
        %v2392 = vpop.f32.mrb[0].mxu0
        %v2393 = vadd.f32 0.0, %v2392
        %v2394 = vpop.f32.mrb[0].mxu0
        %v2395 = vpop.f32.mrb[0].mxu0
        %v2396 = vadd.f32 0.0, %v2395
        %v2397 = vpop.f32.mrb[0].mxu0
        %2398 = vmatprep.mubr.bf16.mxu0 0
        %2399 = vmatmul.mubr.bf16.gmra.mrb[0].mxu0 %v1147
        %v2400 = vpop.f32.mrb[0].mxu0
        %v2401 = vadd.f32 0.0, %v2400
        %v2402 = vpop.f32.mrb[0].mxu0
        %v2403 = vpop.f32.mrb[0].mxu0
        %v2404 = vadd.f32 0.0, %v2403
        %v2405 = vpop.f32.mrb[0].mxu0
        %2406 = vmatprep.mubr.bf16.mxu0 0
        %2407 = vmatmul.mubr.bf16.gmra.mrb[0].mxu0 %v1148
        %v2408 = vpop.f32.mrb[0].mxu0
        %v2409 = vadd.f32 0.0, %v2408
        %v2410 = vpop.f32.mrb[0].mxu0
        %v2411 = vpop.f32.mrb[0].mxu0
        %v2412 = vadd.f32 0.0, %v2411
        %v2413 = vpop.f32.mrb[0].mxu0
        %2414 = vmatprep.mubr.bf16.mxu0 0
        %2415 = vmatmul.mubr.bf16.gmra.mrb[0].mxu0 %v1149
        %v2416 = vpop.f32.mrb[0].mxu0
        %v2417 = vadd.f32 0.0, %v2416
        %v2418 = vpop.f32.mrb[0].mxu0
        %v2419 = vpop.f32.mrb[0].mxu0
        %v2420 = vadd.f32 0.0, %v2419
        %v2421 = vpop.f32.mrb[0].mxu0
        %2422 = vmatprep.mubr.bf16.mxu0 0
        %2423 = vmatmul.mubr.bf16.gmra.mrb[0].mxu0 %v1150
        %v2424 = vpop.f32.mrb[0].mxu0
        %v2425 = vadd.f32 0.0, %v2424
        %v2426 = vpop.f32.mrb[0].mxu0
        %v2427 = vpop.f32.mrb[0].mxu0
        %v2428 = vadd.f32 0.0, %v2427
        %v2429 = vpop.f32.mrb[0].mxu0
        %2430 = vmatprep.mubr.bf16.mxu0 0
        %2431 = vmatmul.mubr.bf16.gmra.mrb[0].mxu0 %v1151
        %v2432 = vpop.f32.mrb[0].mxu0
        %v2433 = vadd.f32 0.0, %v2432
        %v2434 = vpop.f32.mrb[0].mxu0
        %v2435 = vpop.f32.mrb[0].mxu0
        %v2436 = vadd.f32 0.0, %v2435
        %v2437 = vpop.f32.mrb[0].mxu0
        %2438 = vmatprep.mubr.bf16.mxu0 0
        %2439 = vmatmul.mubr.bf16.gmra.mrb[0].mxu0 %v1152
        %v2440 = vpop.f32.mrb[0].mxu0
        %v2441 = vadd.f32 0.0, %v2440
        %v2442 = vpop.f32.mrb[0].mxu0
        %v2443 = vpop.f32.mrb[0].mxu0
        %v2444 = vadd.f32 0.0, %v2443
        %v2445 = vpop.f32.mrb[0].mxu0
        %2446 = vmatprep.mubr.bf16.mxu0 0
        %2447 = vmatmul.mubr.bf16.gmra.mrb[0].mxu0 %v1153
        %v2448 = vpop.f32.mrb[0].mxu0
        %v2449 = vadd.f32 0.0, %v2448
        %v2450 = vpop.f32.mrb[0].mxu0
        %v2451 = vpop.f32.mrb[0].mxu0
        %v2452 = vadd.f32 0.0, %v2451
        %v2453 = vpop.f32.mrb[0].mxu0
        %2454 = vmatprep.mubr.bf16.mxu0 0
        %2455 = vmatmul.mubr.bf16.gmra.mrb[0].mxu0 %v1154
        %v2456 = vpop.f32.mrb[0].mxu0
        %v2457 = vadd.f32 0.0, %v2456
        %v2458 = vpop.f32.mrb[0].mxu0
        %v2459 = vpop.f32.mrb[0].mxu0
        %v2460 = vadd.f32 0.0, %v2459
        %v2461 = vpop.f32.mrb[0].mxu0
        %2462 = vmatprep.mubr.bf16.mxu0 0
        %2463 = vmatmul.mubr.bf16.gmra.mrb[0].mxu0 %v1155
        %v2464 = vpop.f32.mrb[0].mxu0
        %v2465 = vadd.f32 0.0, %v2464
        %v2466 = vpop.f32.mrb[0].mxu0
        %v2467 = vpop.f32.mrb[0].mxu0
        %v2468 = vadd.f32 0.0, %v2467
        %v2469 = vpop.f32.mrb[0].mxu0
        %2470 = vmatprep.mubr.bf16.mxu0 0
        %2471 = vmatmul.mubr.bf16.gmra.mrb[0].mxu0 %v1156
        %v2472 = vpop.f32.mrb[0].mxu0
        %v2473 = vadd.f32 0.0, %v2472
        %v2474 = vpop.f32.mrb[0].mxu0
        %v2475 = vpop.f32.mrb[0].mxu0
        %v2476 = vadd.f32 0.0, %v2475
        %v2477 = vpop.f32.mrb[0].mxu0
        %2478 = vmatprep.mubr.bf16.mxu0 0
        %2479 = vmatmul.mubr.bf16.gmra.mrb[0].mxu0 %v1157
        %v2480 = vpop.f32.mrb[0].mxu0
        %v2481 = vadd.f32 0.0, %v2480
        %v2482 = vpop.f32.mrb[0].mxu0
        %v2483 = vpop.f32.mrb[0].mxu0
        %v2484 = vadd.f32 0.0, %v2483
        %v2485 = vpop.f32.mrb[0].mxu0
        %2486 = vmatprep.mubr.bf16.mxu0 0
        %2487 = vmatmul.mubr.bf16.gmra.mrb[0].mxu0 %v1158
        %v2488 = vpop.f32.mrb[0].mxu0
        %v2489 = vadd.f32 0.0, %v2488
        %v2490 = vpop.f32.mrb[0].mxu0
        %v2491 = vpop.f32.mrb[0].mxu0
        %v2492 = vadd.f32 0.0, %v2491
        %v2493 = vpop.f32.mrb[0].mxu0
        %2494 = vmatprep.mubr.bf16.mxu0 0
        %2495 = vmatmul.mubr.bf16.gmra.mrb[0].mxu0 %v1159
        %v2496 = vpop.f32.mrb[0].mxu0
        %v2497 = vadd.f32 0.0, %v2496
        %v2498 = vpop.f32.mrb[0].mxu0
        %v2499 = vpop.f32.mrb[0].mxu0
        %v2500 = vadd.f32 0.0, %v2499
        %v2501 = vpop.f32.mrb[0].mxu0
        %2502 = vdwg.mxu0
        %v2503 = vadd.f32 %v2262, %v2377
        %v2504 = vadd.f32 %v2263, %v2380
        %v2505 = vadd.f32 %v2264, %v2385
        %v2506 = vadd.f32 %v2265, %v2388
        %v2507 = vadd.f32 %v2266, %v2393
        %v2508 = vadd.f32 %v2267, %v2396
        %v2509 = vadd.f32 %v2268, %v2401
        %v2510 = vadd.f32 %v2269, %v2404
        %v2511 = vadd.f32 %v2270, %v2409
        %v2512 = vadd.f32 %v2271, %v2412
        %v2513 = vadd.f32 %v2272, %v2417
        %v2514 = vadd.f32 %v2273, %v2420
        %v2515 = vadd.f32 %v2274, %v2425
        %v2516 = vadd.f32 %v2275, %v2428
        %v2517 = vadd.f32 %v2276, %v2433
        %v2518 = vadd.f32 %v2277, %v2436
        %v2519 = vadd.f32 %v2278, %v2441
        %v2520 = vadd.f32 %v2279, %v2444
        %v2521 = vadd.f32 %v2280, %v2449
        %v2522 = vadd.f32 %v2281, %v2452
        %v2523 = vadd.f32 %v2282, %v2457
        %v2524 = vadd.f32 %v2283, %v2460
        %v2525 = vadd.f32 %v2284, %v2465
        %v2526 = vadd.f32 %v2285, %v2468
        %v2527 = vadd.f32 %v2286, %v2473
        %v2528 = vadd.f32 %v2287, %v2476
        %v2529 = vadd.f32 %v2288, %v2481
        %v2530 = vadd.f32 %v2289, %v2484
        %v2531 = vadd.f32 %v2290, %v2489
        %v2532 = vadd.f32 %v2291, %v2492
        %v2533 = vadd.f32 %v2292, %v2497
        %v2534 = vadd.f32 %v2293, %v2500
        %v2551 = vunpack.c.l.b16 %v434
        %v2552 = vunpack.c.l.b16 %v435
        %v2553 = vunpack.c.l.b16 %v436
        %v2554 = vunpack.c.l.b16 %v437
        %v2555 = vunpack.c.l.b16 %v438
        %v2556 = vunpack.c.l.b16 %v439
        %v2557 = vunpack.c.l.b16 %v440
        %v2558 = vunpack.c.l.b16 %v441
        %v2559 = vunpack.c.l.b16 %v442
        %v2560 = vunpack.c.l.b16 %v443
        %v2561 = vunpack.c.l.b16 %v444
        %v2562 = vunpack.c.l.b16 %v445
        %v2563 = vunpack.c.l.b16 %v446
        %v2564 = vunpack.c.l.b16 %v447
        %v2565 = vunpack.c.l.b16 %v448
        %v2566 = vunpack.c.l.b16 %v449
        %v2567 = vpack.c.b16 %v2552, %v2551
        %v2568 = vpack.c.b16 %v2554, %v2553
        %v2569 = vpack.c.b16 %v2556, %v2555
        %v2570 = vpack.c.b16 %v2558, %v2557
        %v2571 = vpack.c.b16 %v2560, %v2559
        %v2572 = vpack.c.b16 %v2562, %v2561
        %v2573 = vpack.c.b16 %v2564, %v2563
        %v2574 = vpack.c.b16 %v2566, %v2565
        %2583 = vmatprep.subr.bf16.mxu0 0
        %2584 = vmatpush1.bf16.msra.mxu0 %v2567
        %2585 = vmatprep.subr.bf16.mxu0 0
        %2586 = vmatpush1.bf16.msra.mxu0 %v2568
        %2587 = vmatprep.subr.bf16.mxu0 0
        %2588 = vmatpush1.bf16.msra.mxu0 %v2569
        %2589 = vmatprep.subr.bf16.mxu0 0
        %2590 = vmatpush1.bf16.msra.mxu0 %v2570
        %2591 = vmatprep.subr.bf16.mxu0 0
        %2592 = vmatpush1.bf16.msra.mxu0 %v2571
        %2593 = vmatprep.subr.bf16.mxu0 0
        %2594 = vmatpush1.bf16.msra.mxu0 %v2572
        %2595 = vmatprep.subr.bf16.mxu0 0
        %2596 = vmatpush1.bf16.msra.mxu0 %v2573
        %2597 = vmatprep.subr.bf16.mxu0 0
        %2598 = vmatpush1.bf16.msra.mxu0 %v2574
        %2599 = vmatprep.subr.bf16.mxu0 0
        %2600 = vmatpush1.bf16.msra.mxu0 0
        %2601 = vmatprep.subr.bf16.mxu0 0
        %2602 = vmatpush1.bf16.msra.mxu0 0
        %2603 = vmatprep.subr.bf16.mxu0 0
        %2604 = vmatpush1.bf16.msra.mxu0 0
        %2605 = vmatprep.subr.bf16.mxu0 0
        %2606 = vmatpush1.bf16.msra.mxu0 0
        %2607 = vmatprep.subr.bf16.mxu0 0
        %2608 = vmatpush1.bf16.msra.mxu0 0
        %2609 = vmatprep.subr.bf16.mxu0 0
        %2610 = vmatpush1.bf16.msra.mxu0 0
        %2611 = vmatprep.subr.bf16.mxu0 0
        %2612 = vmatpush1.bf16.msra.mxu0 0
        %2613 = vmatprep.subr.bf16.mxu0 0
        %2614 = vmatpush1.bf16.msra.mxu0 0
        %2615 = vmatprep.mubr.bf16.mxu0 0
        %2616 = vmatmul.mubr.bf16.gmra.mrb[0].mxu0 %v1377
        %v2617 = vpop.f32.mrb[0].mxu0
        %v2618 = vadd.f32 0.0, %v2617
        %v2619 = vpop.f32.mrb[0].mxu0
        %v2620 = vpop.f32.mrb[0].mxu0
        %v2621 = vadd.f32 0.0, %v2620
        %v2622 = vpop.f32.mrb[0].mxu0
        %2623 = vmatprep.mubr.bf16.mxu0 0
        %2624 = vmatmul.mubr.bf16.gmra.mrb[0].mxu0 %v1378
        %v2625 = vpop.f32.mrb[0].mxu0
        %v2626 = vadd.f32 0.0, %v2625
        %v2627 = vpop.f32.mrb[0].mxu0
        %v2628 = vpop.f32.mrb[0].mxu0
        %v2629 = vadd.f32 0.0, %v2628
        %v2630 = vpop.f32.mrb[0].mxu0
        %2631 = vmatprep.mubr.bf16.mxu0 0
        %2632 = vmatmul.mubr.bf16.gmra.mrb[0].mxu0 %v1379
        %v2633 = vpop.f32.mrb[0].mxu0
        %v2634 = vadd.f32 0.0, %v2633
        %v2635 = vpop.f32.mrb[0].mxu0
        %v2636 = vpop.f32.mrb[0].mxu0
        %v2637 = vadd.f32 0.0, %v2636
        %v2638 = vpop.f32.mrb[0].mxu0
        %2639 = vmatprep.mubr.bf16.mxu0 0
        %2640 = vmatmul.mubr.bf16.gmra.mrb[0].mxu0 %v1380
        %v2641 = vpop.f32.mrb[0].mxu0
        %v2642 = vadd.f32 0.0, %v2641
        %v2643 = vpop.f32.mrb[0].mxu0
        %v2644 = vpop.f32.mrb[0].mxu0
        %v2645 = vadd.f32 0.0, %v2644
        %v2646 = vpop.f32.mrb[0].mxu0
        %2647 = vmatprep.mubr.bf16.mxu0 0
        %2648 = vmatmul.mubr.bf16.gmra.mrb[0].mxu0 %v1381
        %v2649 = vpop.f32.mrb[0].mxu0
        %v2650 = vadd.f32 0.0, %v2649
        %v2651 = vpop.f32.mrb[0].mxu0
        %v2652 = vpop.f32.mrb[0].mxu0
        %v2653 = vadd.f32 0.0, %v2652
        %v2654 = vpop.f32.mrb[0].mxu0
        %2655 = vmatprep.mubr.bf16.mxu0 0
        %2656 = vmatmul.mubr.bf16.gmra.mrb[0].mxu0 %v1382
        %v2657 = vpop.f32.mrb[0].mxu0
        %v2658 = vadd.f32 0.0, %v2657
        %v2659 = vpop.f32.mrb[0].mxu0
        %v2660 = vpop.f32.mrb[0].mxu0
        %v2661 = vadd.f32 0.0, %v2660
        %v2662 = vpop.f32.mrb[0].mxu0
        %2663 = vmatprep.mubr.bf16.mxu0 0
        %2664 = vmatmul.mubr.bf16.gmra.mrb[0].mxu0 %v1383
        %v2665 = vpop.f32.mrb[0].mxu0
        %v2666 = vadd.f32 0.0, %v2665
        %v2667 = vpop.f32.mrb[0].mxu0
        %v2668 = vpop.f32.mrb[0].mxu0
        %v2669 = vadd.f32 0.0, %v2668
        %v2670 = vpop.f32.mrb[0].mxu0
        %2671 = vmatprep.mubr.bf16.mxu0 0
        %2672 = vmatmul.mubr.bf16.gmra.mrb[0].mxu0 %v1384
        %v2673 = vpop.f32.mrb[0].mxu0
        %v2674 = vadd.f32 0.0, %v2673
        %v2675 = vpop.f32.mrb[0].mxu0
        %v2676 = vpop.f32.mrb[0].mxu0
        %v2677 = vadd.f32 0.0, %v2676
        %v2678 = vpop.f32.mrb[0].mxu0
        %2679 = vmatprep.mubr.bf16.mxu0 0
        %2680 = vmatmul.mubr.bf16.gmra.mrb[0].mxu0 %v1385
        %v2681 = vpop.f32.mrb[0].mxu0
        %v2682 = vadd.f32 0.0, %v2681
        %v2683 = vpop.f32.mrb[0].mxu0
        %v2684 = vpop.f32.mrb[0].mxu0
        %v2685 = vadd.f32 0.0, %v2684
        %v2686 = vpop.f32.mrb[0].mxu0
        %2687 = vmatprep.mubr.bf16.mxu0 0
        %2688 = vmatmul.mubr.bf16.gmra.mrb[0].mxu0 %v1386
        %v2689 = vpop.f32.mrb[0].mxu0
        %v2690 = vadd.f32 0.0, %v2689
        %v2691 = vpop.f32.mrb[0].mxu0
        %v2692 = vpop.f32.mrb[0].mxu0
        %v2693 = vadd.f32 0.0, %v2692
        %v2694 = vpop.f32.mrb[0].mxu0
        %2695 = vmatprep.mubr.bf16.mxu0 0
        %2696 = vmatmul.mubr.bf16.gmra.mrb[0].mxu0 %v1387
        %v2697 = vpop.f32.mrb[0].mxu0
        %v2698 = vadd.f32 0.0, %v2697
        %v2699 = vpop.f32.mrb[0].mxu0
        %v2700 = vpop.f32.mrb[0].mxu0
        %v2701 = vadd.f32 0.0, %v2700
        %v2702 = vpop.f32.mrb[0].mxu0
        %2703 = vmatprep.mubr.bf16.mxu0 0
        %2704 = vmatmul.mubr.bf16.gmra.mrb[0].mxu0 %v1388
        %v2705 = vpop.f32.mrb[0].mxu0
        %v2706 = vadd.f32 0.0, %v2705
        %v2707 = vpop.f32.mrb[0].mxu0
        %v2708 = vpop.f32.mrb[0].mxu0
        %v2709 = vadd.f32 0.0, %v2708
        %v2710 = vpop.f32.mrb[0].mxu0
        %2711 = vmatprep.mubr.bf16.mxu0 0
        %2712 = vmatmul.mubr.bf16.gmra.mrb[0].mxu0 %v1389
        %v2713 = vpop.f32.mrb[0].mxu0
        %v2714 = vadd.f32 0.0, %v2713
        %v2715 = vpop.f32.mrb[0].mxu0
        %v2716 = vpop.f32.mrb[0].mxu0
        %v2717 = vadd.f32 0.0, %v2716
        %v2718 = vpop.f32.mrb[0].mxu0
        %2719 = vmatprep.mubr.bf16.mxu0 0
        %2720 = vmatmul.mubr.bf16.gmra.mrb[0].mxu0 %v1390
        %v2721 = vpop.f32.mrb[0].mxu0
        %v2722 = vadd.f32 0.0, %v2721
        %v2723 = vpop.f32.mrb[0].mxu0
        %v2724 = vpop.f32.mrb[0].mxu0
        %v2725 = vadd.f32 0.0, %v2724
        %v2726 = vpop.f32.mrb[0].mxu0
        %2727 = vmatprep.mubr.bf16.mxu0 0
        %2728 = vmatmul.mubr.bf16.gmra.mrb[0].mxu0 %v1391
        %v2729 = vpop.f32.mrb[0].mxu0
        %v2730 = vadd.f32 0.0, %v2729
        %v2731 = vpop.f32.mrb[0].mxu0
        %v2732 = vpop.f32.mrb[0].mxu0
        %v2733 = vadd.f32 0.0, %v2732
        %v2734 = vpop.f32.mrb[0].mxu0
        %2735 = vmatprep.mubr.bf16.mxu0 0
        %2736 = vmatmul.mubr.bf16.gmra.mrb[0].mxu0 %v1392
        %v2737 = vpop.f32.mrb[0].mxu0
        %v2738 = vadd.f32 0.0, %v2737
        %v2739 = vpop.f32.mrb[0].mxu0
        %v2740 = vpop.f32.mrb[0].mxu0
        %v2741 = vadd.f32 0.0, %v2740
        %v2742 = vpop.f32.mrb[0].mxu0
        %2743 = vdwg.mxu0
        %v2744 = vadd.f32 %v2503, %v2618
        %v2745 = vadd.f32 %v2504, %v2621
        %v2746 = vadd.f32 %v2505, %v2626
        %v2747 = vadd.f32 %v2506, %v2629
        %v2748 = vadd.f32 %v2507, %v2634
        %v2749 = vadd.f32 %v2508, %v2637
        %v2750 = vadd.f32 %v2509, %v2642
        %v2751 = vadd.f32 %v2510, %v2645
        %v2752 = vadd.f32 %v2511, %v2650
        %v2753 = vadd.f32 %v2512, %v2653
        %v2754 = vadd.f32 %v2513, %v2658
        %v2755 = vadd.f32 %v2514, %v2661
        %v2756 = vadd.f32 %v2515, %v2666
        %v2757 = vadd.f32 %v2516, %v2669
        %v2758 = vadd.f32 %v2517, %v2674
        %v2759 = vadd.f32 %v2518, %v2677
        %v2760 = vadd.f32 %v2519, %v2682
        %v2761 = vadd.f32 %v2520, %v2685
        %v2762 = vadd.f32 %v2521, %v2690
        %v2763 = vadd.f32 %v2522, %v2693
        %v2764 = vadd.f32 %v2523, %v2698
        %v2765 = vadd.f32 %v2524, %v2701
        %v2766 = vadd.f32 %v2525, %v2706
        %v2767 = vadd.f32 %v2526, %v2709
        %v2768 = vadd.f32 %v2527, %v2714
        %v2769 = vadd.f32 %v2528, %v2717
        %v2770 = vadd.f32 %v2529, %v2722
        %v2771 = vadd.f32 %v2530, %v2725
        %v2772 = vadd.f32 %v2531, %v2730
        %v2773 = vadd.f32 %v2532, %v2733
        %v2774 = vadd.f32 %v2533, %v2738
        %v2775 = vadd.f32 %v2534, %v2741
        %v2792 = vunpack.c.l.b16 %v450
        %v2793 = vunpack.c.l.b16 %v451
        %v2794 = vunpack.c.l.b16 %v452
        %v2795 = vunpack.c.l.b16 %v453
        %v2796 = vunpack.c.l.b16 %v454
        %v2797 = vunpack.c.l.b16 %v455
        %v2798 = vunpack.c.l.b16 %v456
        %v2799 = vunpack.c.l.b16 %v457
        %v2800 = vunpack.c.l.b16 %v458
        %v2801 = vunpack.c.l.b16 %v459
        %v2802 = vunpack.c.l.b16 %v460
        %v2803 = vunpack.c.l.b16 %v461
        %v2804 = vunpack.c.l.b16 %v462
        %v2805 = vunpack.c.l.b16 %v463
        %v2806 = vunpack.c.l.b16 %v464
        %v2807 = vunpack.c.l.b16 %v465
        %v2808 = vpack.c.b16 %v2793, %v2792
        %v2809 = vpack.c.b16 %v2795, %v2794
        %v2810 = vpack.c.b16 %v2797, %v2796
        %v2811 = vpack.c.b16 %v2799, %v2798
        %v2812 = vpack.c.b16 %v2801, %v2800
        %v2813 = vpack.c.b16 %v2803, %v2802
        %v2814 = vpack.c.b16 %v2805, %v2804
        %v2815 = vpack.c.b16 %v2807, %v2806
        %2824 = vmatprep.subr.bf16.mxu0 0
        %2825 = vmatpush1.bf16.msra.mxu0 %v2808
        %2826 = vmatprep.subr.bf16.mxu0 0
        %2827 = vmatpush1.bf16.msra.mxu0 %v2809
        %2828 = vmatprep.subr.bf16.mxu0 0
        %2829 = vmatpush1.bf16.msra.mxu0 %v2810
        %2830 = vmatprep.subr.bf16.mxu0 0
        %2831 = vmatpush1.bf16.msra.mxu0 %v2811
        %2832 = vmatprep.subr.bf16.mxu0 0
        %2833 = vmatpush1.bf16.msra.mxu0 %v2812
        %2834 = vmatprep.subr.bf16.mxu0 0
        %2835 = vmatpush1.bf16.msra.mxu0 %v2813
        %2836 = vmatprep.subr.bf16.mxu0 0
        %2837 = vmatpush1.bf16.msra.mxu0 %v2814
        %2838 = vmatprep.subr.bf16.mxu0 0
        %2839 = vmatpush1.bf16.msra.mxu0 %v2815
        %2840 = vmatprep.subr.bf16.mxu0 0
        %2841 = vmatpush1.bf16.msra.mxu0 0
        %2842 = vmatprep.subr.bf16.mxu0 0
        %2843 = vmatpush1.bf16.msra.mxu0 0
        %2844 = vmatprep.subr.bf16.mxu0 0
        %2845 = vmatpush1.bf16.msra.mxu0 0
        %2846 = vmatprep.subr.bf16.mxu0 0
        %2847 = vmatpush1.bf16.msra.mxu0 0
        %2848 = vmatprep.subr.bf16.mxu0 0
        %2849 = vmatpush1.bf16.msra.mxu0 0
        %2850 = vmatprep.subr.bf16.mxu0 0
        %2851 = vmatpush1.bf16.msra.mxu0 0
        %2852 = vmatprep.subr.bf16.mxu0 0
        %2853 = vmatpush1.bf16.msra.mxu0 0
        %2854 = vmatprep.subr.bf16.mxu0 0
        %2855 = vmatpush1.bf16.msra.mxu0 0
        %2856 = vmatprep.mubr.bf16.mxu0 0
        %2857 = vmatmul.mubr.bf16.gmra.mrb[0].mxu0 %v1128
        %v2858 = vpop.f32.mrb[0].mxu0
        %v2859 = vadd.f32 0.0, %v2858
        %v2860 = vpop.f32.mrb[0].mxu0
        %v2861 = vpop.f32.mrb[0].mxu0
        %v2862 = vadd.f32 0.0, %v2861
        %v2863 = vpop.f32.mrb[0].mxu0
        %2864 = vmatprep.mubr.bf16.mxu0 0
        %2865 = vmatmul.mubr.bf16.gmra.mrb[0].mxu0 %v1129
        %v2866 = vpop.f32.mrb[0].mxu0
        %v2867 = vadd.f32 0.0, %v2866
        %v2868 = vpop.f32.mrb[0].mxu0
        %v2869 = vpop.f32.mrb[0].mxu0
        %v2870 = vadd.f32 0.0, %v2869
        %v2871 = vpop.f32.mrb[0].mxu0
        %2872 = vmatprep.mubr.bf16.mxu0 0
        %2873 = vmatmul.mubr.bf16.gmra.mrb[0].mxu0 %v1130
        %v2874 = vpop.f32.mrb[0].mxu0
        %v2875 = vadd.f32 0.0, %v2874
        %v2876 = vpop.f32.mrb[0].mxu0
        %v2877 = vpop.f32.mrb[0].mxu0
        %v2878 = vadd.f32 0.0, %v2877
        %v2879 = vpop.f32.mrb[0].mxu0
        %2880 = vmatprep.mubr.bf16.mxu0 0
        %2881 = vmatmul.mubr.bf16.gmra.mrb[0].mxu0 %v1131
        %v2882 = vpop.f32.mrb[0].mxu0
        %v2883 = vadd.f32 0.0, %v2882
        %v2884 = vpop.f32.mrb[0].mxu0
        %v2885 = vpop.f32.mrb[0].mxu0
        %v2886 = vadd.f32 0.0, %v2885
        %v2887 = vpop.f32.mrb[0].mxu0
        %2888 = vmatprep.mubr.bf16.mxu0 0
        %2889 = vmatmul.mubr.bf16.gmra.mrb[0].mxu0 %v1132
        %v2890 = vpop.f32.mrb[0].mxu0
        %v2891 = vadd.f32 0.0, %v2890
        %v2892 = vpop.f32.mrb[0].mxu0
        %v2893 = vpop.f32.mrb[0].mxu0
        %v2894 = vadd.f32 0.0, %v2893
        %v2895 = vpop.f32.mrb[0].mxu0
        %2896 = vmatprep.mubr.bf16.mxu0 0
        %2897 = vmatmul.mubr.bf16.gmra.mrb[0].mxu0 %v1133
        %v2898 = vpop.f32.mrb[0].mxu0
        %v2899 = vadd.f32 0.0, %v2898
        %v2900 = vpop.f32.mrb[0].mxu0
        %v2901 = vpop.f32.mrb[0].mxu0
        %v2902 = vadd.f32 0.0, %v2901
        %v2903 = vpop.f32.mrb[0].mxu0
        %2904 = vmatprep.mubr.bf16.mxu0 0
        %2905 = vmatmul.mubr.bf16.gmra.mrb[0].mxu0 %v1134
        %v2906 = vpop.f32.mrb[0].mxu0
        %v2907 = vadd.f32 0.0, %v2906
        %v2908 = vpop.f32.mrb[0].mxu0
        %v2909 = vpop.f32.mrb[0].mxu0
        %v2910 = vadd.f32 0.0, %v2909
        %v2911 = vpop.f32.mrb[0].mxu0
        %2912 = vmatprep.mubr.bf16.mxu0 0
        %2913 = vmatmul.mubr.bf16.gmra.mrb[0].mxu0 %v1135
        %v2914 = vpop.f32.mrb[0].mxu0
        %v2915 = vadd.f32 0.0, %v2914
        %v2916 = vpop.f32.mrb[0].mxu0
        %v2917 = vpop.f32.mrb[0].mxu0
        %v2918 = vadd.f32 0.0, %v2917
        %v2919 = vpop.f32.mrb[0].mxu0
        %2920 = vmatprep.mubr.bf16.mxu0 0
        %2921 = vmatmul.mubr.bf16.gmra.mrb[0].mxu0 %v1136
        %v2922 = vpop.f32.mrb[0].mxu0
        %v2923 = vadd.f32 0.0, %v2922
        %v2924 = vpop.f32.mrb[0].mxu0
        %v2925 = vpop.f32.mrb[0].mxu0
        %v2926 = vadd.f32 0.0, %v2925
        %v2927 = vpop.f32.mrb[0].mxu0
        %2928 = vmatprep.mubr.bf16.mxu0 0
        %2929 = vmatmul.mubr.bf16.gmra.mrb[0].mxu0 %v1137
        %v2930 = vpop.f32.mrb[0].mxu0
        %v2931 = vadd.f32 0.0, %v2930
        %v2932 = vpop.f32.mrb[0].mxu0
        %v2933 = vpop.f32.mrb[0].mxu0
        %v2934 = vadd.f32 0.0, %v2933
        %v2935 = vpop.f32.mrb[0].mxu0
        %2936 = vmatprep.mubr.bf16.mxu0 0
        %2937 = vmatmul.mubr.bf16.gmra.mrb[0].mxu0 %v1138
        %v2938 = vpop.f32.mrb[0].mxu0
        %v2939 = vadd.f32 0.0, %v2938
        %v2940 = vpop.f32.mrb[0].mxu0
        %v2941 = vpop.f32.mrb[0].mxu0
        %v2942 = vadd.f32 0.0, %v2941
        %v2943 = vpop.f32.mrb[0].mxu0
        %2944 = vmatprep.mubr.bf16.mxu0 0
        %2945 = vmatmul.mubr.bf16.gmra.mrb[0].mxu0 %v1139
        %v2946 = vpop.f32.mrb[0].mxu0
        %v2947 = vadd.f32 0.0, %v2946
        %v2948 = vpop.f32.mrb[0].mxu0
        %v2949 = vpop.f32.mrb[0].mxu0
        %v2950 = vadd.f32 0.0, %v2949
        %v2951 = vpop.f32.mrb[0].mxu0
        %2952 = vmatprep.mubr.bf16.mxu0 0
        %2953 = vmatmul.mubr.bf16.gmra.mrb[0].mxu0 %v1140
        %v2954 = vpop.f32.mrb[0].mxu0
        %v2955 = vadd.f32 0.0, %v2954
        %v2956 = vpop.f32.mrb[0].mxu0
        %v2957 = vpop.f32.mrb[0].mxu0
        %v2958 = vadd.f32 0.0, %v2957
        %v2959 = vpop.f32.mrb[0].mxu0
        %2960 = vmatprep.mubr.bf16.mxu0 0
        %2961 = vmatmul.mubr.bf16.gmra.mrb[0].mxu0 %v1141
        %v2962 = vpop.f32.mrb[0].mxu0
        %v2963 = vadd.f32 0.0, %v2962
        %v2964 = vpop.f32.mrb[0].mxu0
        %v2965 = vpop.f32.mrb[0].mxu0
        %v2966 = vadd.f32 0.0, %v2965
        %v2967 = vpop.f32.mrb[0].mxu0
        %2968 = vmatprep.mubr.bf16.mxu0 0
        %2969 = vmatmul.mubr.bf16.gmra.mrb[0].mxu0 %v1142
        %v2970 = vpop.f32.mrb[0].mxu0
        %v2971 = vadd.f32 0.0, %v2970
        %v2972 = vpop.f32.mrb[0].mxu0
        %v2973 = vpop.f32.mrb[0].mxu0
        %v2974 = vadd.f32 0.0, %v2973
        %v2975 = vpop.f32.mrb[0].mxu0
        %2976 = vmatprep.mubr.bf16.mxu0 0
        %2977 = vmatmul.mubr.bf16.gmra.mrb[0].mxu0 %v1143
        %v2978 = vpop.f32.mrb[0].mxu0
        %v2979 = vadd.f32 0.0, %v2978
        %v2980 = vpop.f32.mrb[0].mxu0
        %v2981 = vpop.f32.mrb[0].mxu0
        %v2982 = vadd.f32 0.0, %v2981
        %v2983 = vpop.f32.mrb[0].mxu0
        %2984 = vdwg.mxu0
        %v2985 = vadd.f32 %v2744, %v2859
        %v2986 = vadd.f32 %v2745, %v2862
        %v2987 = vadd.f32 %v2746, %v2867
        %v2988 = vadd.f32 %v2747, %v2870
        %v2989 = vadd.f32 %v2748, %v2875
        %v2990 = vadd.f32 %v2749, %v2878
        %v2991 = vadd.f32 %v2750, %v2883
        %v2992 = vadd.f32 %v2751, %v2886
        %v2993 = vadd.f32 %v2752, %v2891
        %v2994 = vadd.f32 %v2753, %v2894
        %v2995 = vadd.f32 %v2754, %v2899
        %v2996 = vadd.f32 %v2755, %v2902
        %v2997 = vadd.f32 %v2756, %v2907
        %v2998 = vadd.f32 %v2757, %v2910
        %v2999 = vadd.f32 %v2758, %v2915
        %v3000 = vadd.f32 %v2759, %v2918
        %v3001 = vadd.f32 %v2760, %v2923
        %v3002 = vadd.f32 %v2761, %v2926
        %v3003 = vadd.f32 %v2762, %v2931
        %v3004 = vadd.f32 %v2763, %v2934
        %v3005 = vadd.f32 %v2764, %v2939
        %v3006 = vadd.f32 %v2765, %v2942
        %v3007 = vadd.f32 %v2766, %v2947
        %v3008 = vadd.f32 %v2767, %v2950
        %v3009 = vadd.f32 %v2768, %v2955
        %v3010 = vadd.f32 %v2769, %v2958
        %v3011 = vadd.f32 %v2770, %v2963
        %v3012 = vadd.f32 %v2771, %v2966
        %v3013 = vadd.f32 %v2772, %v2971
        %v3014 = vadd.f32 %v2773, %v2974
        %v3015 = vadd.f32 %v2774, %v2979
        %v3016 = vadd.f32 %v2775, %v2982
        %v3033 = vunpack.c.l.b16 %v466
        %v3034 = vunpack.c.l.b16 %v467
        %v3035 = vunpack.c.l.b16 %v468
        %v3036 = vunpack.c.l.b16 %v469
        %v3037 = vunpack.c.l.b16 %v470
        %v3038 = vunpack.c.l.b16 %v471
        %v3039 = vunpack.c.l.b16 %v472
        %v3040 = vunpack.c.l.b16 %v473
        %v3041 = vunpack.c.l.b16 %v474
        %v3042 = vunpack.c.l.b16 %v475
        %v3043 = vunpack.c.l.b16 %v476
        %v3044 = vunpack.c.l.b16 %v477
        %v3045 = vunpack.c.l.b16 %v478
        %v3046 = vunpack.c.l.b16 %v479
        %v3047 = vunpack.c.l.b16 %v480
        %v3048 = vunpack.c.l.b16 %v481
        %v3049 = vpack.c.b16 %v3034, %v3033
        %v3050 = vpack.c.b16 %v3036, %v3035
        %v3051 = vpack.c.b16 %v3038, %v3037
        %v3052 = vpack.c.b16 %v3040, %v3039
        %v3053 = vpack.c.b16 %v3042, %v3041
        %v3054 = vpack.c.b16 %v3044, %v3043
        %v3055 = vpack.c.b16 %v3046, %v3045
        %v3056 = vpack.c.b16 %v3048, %v3047
        %3065 = vmatprep.subr.bf16.mxu0 0
        %3066 = vmatpush1.bf16.msra.mxu0 %v3049
        %3067 = vmatprep.subr.bf16.mxu0 0
        %3068 = vmatpush1.bf16.msra.mxu0 %v3050
        %3069 = vmatprep.subr.bf16.mxu0 0
        %3070 = vmatpush1.bf16.msra.mxu0 %v3051
        %3071 = vmatprep.subr.bf16.mxu0 0
        %3072 = vmatpush1.bf16.msra.mxu0 %v3052
        %3073 = vmatprep.subr.bf16.mxu0 0
        %3074 = vmatpush1.bf16.msra.mxu0 %v3053
        %3075 = vmatprep.subr.bf16.mxu0 0
        %3076 = vmatpush1.bf16.msra.mxu0 %v3054
        %3077 = vmatprep.subr.bf16.mxu0 0
        %3078 = vmatpush1.bf16.msra.mxu0 %v3055
        %3079 = vmatprep.subr.bf16.mxu0 0
        %3080 = vmatpush1.bf16.msra.mxu0 %v3056
        %3081 = vmatprep.subr.bf16.mxu0 0
        %3082 = vmatpush1.bf16.msra.mxu0 0
        %3083 = vmatprep.subr.bf16.mxu0 0
        %3084 = vmatpush1.bf16.msra.mxu0 0
        %3085 = vmatprep.subr.bf16.mxu0 0
        %3086 = vmatpush1.bf16.msra.mxu0 0
        %3087 = vmatprep.subr.bf16.mxu0 0
        %3088 = vmatpush1.bf16.msra.mxu0 0
        %3089 = vmatprep.subr.bf16.mxu0 0
        %3090 = vmatpush1.bf16.msra.mxu0 0
        %3091 = vmatprep.subr.bf16.mxu0 0
        %3092 = vmatpush1.bf16.msra.mxu0 0
        %3093 = vmatprep.subr.bf16.mxu0 0
        %3094 = vmatpush1.bf16.msra.mxu0 0
        %3095 = vmatprep.subr.bf16.mxu0 0
        %3096 = vmatpush1.bf16.msra.mxu0 0
        %3097 = vmatprep.mubr.bf16.mxu0 0
        %3098 = vmatmul.mubr.bf16.gmra.mrb[0].mxu0 %v1144
        %v3099 = vpop.f32.mrb[0].mxu0
        %v3100 = vadd.f32 0.0, %v3099
        %v3101 = vpop.f32.mrb[0].mxu0
        %v3102 = vpop.f32.mrb[0].mxu0
        %v3103 = vadd.f32 0.0, %v3102
        %v3104 = vpop.f32.mrb[0].mxu0
        %3105 = vmatprep.mubr.bf16.mxu0 0
        %3106 = vmatmul.mubr.bf16.gmra.mrb[0].mxu0 %v1146
        %v3107 = vpop.f32.mrb[0].mxu0
        %v3108 = vadd.f32 0.0, %v3107
        %v3109 = vpop.f32.mrb[0].mxu0
        %v3110 = vpop.f32.mrb[0].mxu0
        %v3111 = vadd.f32 0.0, %v3110
        %v3112 = vpop.f32.mrb[0].mxu0
        %3113 = vmatprep.mubr.bf16.mxu0 0
        %3114 = vmatmul.mubr.bf16.gmra.mrb[0].mxu0 %v1147
        %v3115 = vpop.f32.mrb[0].mxu0
        %v3116 = vadd.f32 0.0, %v3115
        %v3117 = vpop.f32.mrb[0].mxu0
        %v3118 = vpop.f32.mrb[0].mxu0
        %v3119 = vadd.f32 0.0, %v3118
        %v3120 = vpop.f32.mrb[0].mxu0
        %3121 = vmatprep.mubr.bf16.mxu0 0
        %3122 = vmatmul.mubr.bf16.gmra.mrb[0].mxu0 %v1148
        %v3123 = vpop.f32.mrb[0].mxu0
        %v3124 = vadd.f32 0.0, %v3123
        %v3125 = vpop.f32.mrb[0].mxu0
        %v3126 = vpop.f32.mrb[0].mxu0
        %v3127 = vadd.f32 0.0, %v3126
        %v3128 = vpop.f32.mrb[0].mxu0
        %3129 = vmatprep.mubr.bf16.mxu0 0
        %3130 = vmatmul.mubr.bf16.gmra.mrb[0].mxu0 %v1149
        %v3131 = vpop.f32.mrb[0].mxu0
        %v3132 = vadd.f32 0.0, %v3131
        %v3133 = vpop.f32.mrb[0].mxu0
        %v3134 = vpop.f32.mrb[0].mxu0
        %v3135 = vadd.f32 0.0, %v3134
        %v3136 = vpop.f32.mrb[0].mxu0
        %3137 = vmatprep.mubr.bf16.mxu0 0
        %3138 = vmatmul.mubr.bf16.gmra.mrb[0].mxu0 %v1150
        %v3139 = vpop.f32.mrb[0].mxu0
        %v3140 = vadd.f32 0.0, %v3139
        %v3141 = vpop.f32.mrb[0].mxu0
        %v3142 = vpop.f32.mrb[0].mxu0
        %v3143 = vadd.f32 0.0, %v3142
        %v3144 = vpop.f32.mrb[0].mxu0
        %3145 = vmatprep.mubr.bf16.mxu0 0
        %3146 = vmatmul.mubr.bf16.gmra.mrb[0].mxu0 %v1151
        %v3147 = vpop.f32.mrb[0].mxu0
        %v3148 = vadd.f32 0.0, %v3147
        %v3149 = vpop.f32.mrb[0].mxu0
        %v3150 = vpop.f32.mrb[0].mxu0
        %v3151 = vadd.f32 0.0, %v3150
        %v3152 = vpop.f32.mrb[0].mxu0
        %3153 = vmatprep.mubr.bf16.mxu0 0
        %3154 = vmatmul.mubr.bf16.gmra.mrb[0].mxu0 %v1152
        %v3155 = vpop.f32.mrb[0].mxu0
        %v3156 = vadd.f32 0.0, %v3155
        %v3157 = vpop.f32.mrb[0].mxu0
        %v3158 = vpop.f32.mrb[0].mxu0
        %v3159 = vadd.f32 0.0, %v3158
        %v3160 = vpop.f32.mrb[0].mxu0
        %3161 = vmatprep.mubr.bf16.mxu0 0
        %3162 = vmatmul.mubr.bf16.gmra.mrb[0].mxu0 %v1153
        %v3163 = vpop.f32.mrb[0].mxu0
        %v3164 = vadd.f32 0.0, %v3163
        %v3165 = vpop.f32.mrb[0].mxu0
        %v3166 = vpop.f32.mrb[0].mxu0
        %v3167 = vadd.f32 0.0, %v3166
        %v3168 = vpop.f32.mrb[0].mxu0
        %3169 = vmatprep.mubr.bf16.mxu0 0
        %3170 = vmatmul.mubr.bf16.gmra.mrb[0].mxu0 %v1154
        %v3171 = vpop.f32.mrb[0].mxu0
        %v3172 = vadd.f32 0.0, %v3171
        %v3173 = vpop.f32.mrb[0].mxu0
        %v3174 = vpop.f32.mrb[0].mxu0
        %v3175 = vadd.f32 0.0, %v3174
        %v3176 = vpop.f32.mrb[0].mxu0
        %3177 = vmatprep.mubr.bf16.mxu0 0
        %3178 = vmatmul.mubr.bf16.gmra.mrb[0].mxu0 %v1155
        %v3179 = vpop.f32.mrb[0].mxu0
        %v3180 = vadd.f32 0.0, %v3179
        %v3181 = vpop.f32.mrb[0].mxu0
        %v3182 = vpop.f32.mrb[0].mxu0
        %v3183 = vadd.f32 0.0, %v3182
        %v3184 = vpop.f32.mrb[0].mxu0
        %3185 = vmatprep.mubr.bf16.mxu0 0
        %3186 = vmatmul.mubr.bf16.gmra.mrb[0].mxu0 %v1156
        %v3187 = vpop.f32.mrb[0].mxu0
        %v3188 = vadd.f32 0.0, %v3187
        %v3189 = vpop.f32.mrb[0].mxu0
        %v3190 = vpop.f32.mrb[0].mxu0
        %v3191 = vadd.f32 0.0, %v3190
        %v3192 = vpop.f32.mrb[0].mxu0
        %3193 = vmatprep.mubr.bf16.mxu0 0
        %3194 = vmatmul.mubr.bf16.gmra.mrb[0].mxu0 %v1157
        %v3195 = vpop.f32.mrb[0].mxu0
        %v3196 = vadd.f32 0.0, %v3195
        %v3197 = vpop.f32.mrb[0].mxu0
        %v3198 = vpop.f32.mrb[0].mxu0
        %v3199 = vadd.f32 0.0, %v3198
        %v3200 = vpop.f32.mrb[0].mxu0
        %3201 = vmatprep.mubr.bf16.mxu0 0
        %3202 = vmatmul.mubr.bf16.gmra.mrb[0].mxu0 %v1158
        %v3203 = vpop.f32.mrb[0].mxu0
        %v3204 = vadd.f32 0.0, %v3203
        %v3205 = vpop.f32.mrb[0].mxu0
        %v3206 = vpop.f32.mrb[0].mxu0
        %v3207 = vadd.f32 0.0, %v3206
        %v3208 = vpop.f32.mrb[0].mxu0
        %3209 = vmatprep.mubr.bf16.mxu0 0
        %3210 = vmatmul.mubr.bf16.gmra.mrb[0].mxu0 %v1159
        %v3211 = vpop.f32.mrb[0].mxu0
        %v3212 = vadd.f32 0.0, %v3211
        %v3213 = vpop.f32.mrb[0].mxu0
        %v3214 = vpop.f32.mrb[0].mxu0
        %v3215 = vadd.f32 0.0, %v3214
        %v3216 = vpop.f32.mrb[0].mxu0
        %3217 = vmatprep.mubr.bf16.mxu0 0
        %3218 = vmatmul.mubr.bf16.gmra.mrb[0].mxu0 %v1158
        %v3219 = vpop.f32.mrb[0].mxu0
        %v3220 = vadd.f32 0.0, %v3219
        %v3221 = vpop.f32.mrb[0].mxu0
        %v3222 = vpop.f32.mrb[0].mxu0
        %v3223 = vadd.f32 0.0, %v3222
        %v3224 = vpop.f32.mrb[0].mxu0
        %3225 = vdwg.mxu0
        %v3226 = vadd.f32 %v2985, %v3100
        %v3227 = vadd.f32 %v2986, %v3103
        %v3228 = vadd.f32 %v2987, %v3108
        %v3229 = vadd.f32 %v2988, %v3111
        %v3230 = vadd.f32 %v2989, %v3116
        %v3231 = vadd.f32 %v2990, %v3119
        %v3232 = vadd.f32 %v2991, %v3124
        %v3233 = vadd.f32 %v2992, %v3127
        %v3234 = vadd.f32 %v2993, %v3132
        %v3235 = vadd.f32 %v2994, %v3135
        %v3236 = vadd.f32 %v2995, %v3140
        %v3237 = vadd.f32 %v2996, %v3143
        %v3238 = vadd.f32 %v2997, %v3148
        %v3239 = vadd.f32 %v2998, %v3151
        %v3240 = vadd.f32 %v2999, %v3156
        %v3241 = vadd.f32 %v3000, %v3159
        %v3242 = vadd.f32 %v3001, %v3164
        %v3243 = vadd.f32 %v3002, %v3167
        %v3244 = vadd.f32 %v3003, %v3172
        %v3245 = vadd.f32 %v3004, %v3175
        %v3246 = vadd.f32 %v3005, %v3180
        %v3247 = vadd.f32 %v3006, %v3183
        %v3248 = vadd.f32 %v3007, %v3188
        %v3249 = vadd.f32 %v3008, %v3191
        %v3250 = vadd.f32 %v3009, %v3196
        %v3251 = vadd.f32 %v3010, %v3199
        %v3252 = vadd.f32 %v3011, %v3204
        %v3253 = vadd.f32 %v3012, %v3207
        %v3254 = vadd.f32 %v3013, %v3212
        %v3255 = vadd.f32 %v3014, %v3215
        %v3256 = vadd.f32 %v3015, %v3220
        %v3257 = vadd.f32 %v3016, %v3223
        %v3274 = vunpack.c.l.b16 %v482
        %v3275 = vunpack.c.l.b16 %v483
        %v3276 = vunpack.c.l.b16 %v484
        %v3277 = vunpack.c.l.b16 %v485
        %v3278 = vunpack.c.l.b16 %v486
        %v3279 = vunpack.c.l.b16 %v487
        %v3280 = vunpack.c.l.b16 %v488
        %v3281 = vunpack.c.l.b16 %v489
        %v3282 = vunpack.c.l.b16 %v490
        %v3283 = vunpack.c.l.b16 %v491
        %v3284 = vunpack.c.l.b16 %v492
        %v3285 = vunpack.c.l.b16 %v493
        %v3286 = vunpack.c.l.b16 %v494
        %v3287 = vunpack.c.l.b16 %v495
        %v3288 = vunpack.c.l.b16 %v496
        %v3289 = vunpack.c.l.b16 %v497
        %v3290 = vpack.c.b16 %v3275, %v3274
        %v3291 = vpack.c.b16 %v3277, %v3276
        %v3292 = vpack.c.b16 %v3279, %v3278
        %v3293 = vpack.c.b16 %v3281, %v3280
        %v3294 = vpack.c.b16 %v3283, %v3282
        %v3295 = vpack.c.b16 %v3285, %v3284
        %v3296 = vpack.c.b16 %v3287, %v3286
        %v3297 = vpack.c.b16 %v3289, %v3288
        %3306 = vmatprep.subr.bf16.mxu0 0
        %3307 = vmatpush1.bf16.msra.mxu0 %v3290
        %3308 = vmatprep.subr.bf16.mxu0 0
        %3309 = vmatpush1.bf16.msra.mxu0 %v3291
        %3310 = vmatprep.subr.bf16.mxu0 0
        %3311 = vmatpush1.bf16.msra.mxu0 %v3292
        %3312 = vmatprep.subr.bf16.mxu0 0
        %3313 = vmatpush1.bf16.msra.mxu0 %v3293
        %3314 = vmatprep.subr.bf16.mxu0 0
        %3315 = vmatpush1.bf16.msra.mxu0 %v3294
        %3316 = vmatprep.subr.bf16.mxu0 0
        %3317 = vmatpush1.bf16.msra.mxu0 %v3295
        %3318 = vmatprep.subr.bf16.mxu0 0
        %3319 = vmatpush1.bf16.msra.mxu0 %v3296
        %3320 = vmatprep.subr.bf16.mxu0 0
        %3321 = vmatpush1.bf16.msra.mxu0 %v3297
        %3322 = vmatprep.subr.bf16.mxu0 0
        %3323 = vmatpush1.bf16.msra.mxu0 0
        %3324 = vmatprep.subr.bf16.mxu0 0
        %3325 = vmatpush1.bf16.msra.mxu0 0
        %3326 = vmatprep.subr.bf16.mxu0 0
        %3327 = vmatpush1.bf16.msra.mxu0 0
        %3328 = vmatprep.subr.bf16.mxu0 0
        %3329 = vmatpush1.bf16.msra.mxu0 0
        %3330 = vmatprep.subr.bf16.mxu0 0
        %3331 = vmatpush1.bf16.msra.mxu0 0
        %3332 = vmatprep.subr.bf16.mxu0 0
        %3333 = vmatpush1.bf16.msra.mxu0 0
        %3334 = vmatprep.subr.bf16.mxu0 0
        %3335 = vmatpush1.bf16.msra.mxu0 0
        %3336 = vmatprep.subr.bf16.mxu0 0
        %3337 = vmatpush1.bf16.msra.mxu0 0
        %3338 = vmatprep.mubr.bf16.mxu0 0
        %3339 = vmatmul.mubr.bf16.gmra.mrb[0].mxu0 %v1378
        %v3340 = vpop.f32.mrb[0].mxu0
        %v3341 = vadd.f32 0.0, %v3340
        %v3342 = vpop.f32.mrb[0].mxu0
        %v3343 = vpop.f32.mrb[0].mxu0
        %v3344 = vadd.f32 0.0, %v3343
        %v3345 = vpop.f32.mrb[0].mxu0
        %3346 = vmatprep.mubr.bf16.mxu0 0
        %3347 = vmatmul.mubr.bf16.gmra.mrb[0].mxu0 %v1379
        %v3348 = vpop.f32.mrb[0].mxu0
        %v3349 = vadd.f32 0.0, %v3348
        %v3350 = vpop.f32.mrb[0].mxu0
        %v3351 = vpop.f32.mrb[0].mxu0
        %v3352 = vadd.f32 0.0, %v3351
        %v3353 = vpop.f32.mrb[0].mxu0
        %3354 = vmatprep.mubr.bf16.mxu0 0
        %3355 = vmatmul.mubr.bf16.gmra.mrb[0].mxu0 %v1380
        %v3356 = vpop.f32.mrb[0].mxu0
        %v3357 = vadd.f32 0.0, %v3356
        %v3358 = vpop.f32.mrb[0].mxu0
        %v3359 = vpop.f32.mrb[0].mxu0
        %v3360 = vadd.f32 0.0, %v3359
        %v3361 = vpop.f32.mrb[0].mxu0
        %3362 = vmatprep.mubr.bf16.mxu0 0
        %3363 = vmatmul.mubr.bf16.gmra.mrb[0].mxu0 %v1381
        %v3364 = vpop.f32.mrb[0].mxu0
        %v3365 = vadd.f32 0.0, %v3364
        %v3366 = vpop.f32.mrb[0].mxu0
        %v3367 = vpop.f32.mrb[0].mxu0
        %v3368 = vadd.f32 0.0, %v3367
        %v3369 = vpop.f32.mrb[0].mxu0
        %3370 = vmatprep.mubr.bf16.mxu0 0
        %3371 = vmatmul.mubr.bf16.gmra.mrb[0].mxu0 %v1382
        %v3372 = vpop.f32.mrb[0].mxu0
        %v3373 = vadd.f32 0.0, %v3372
        %v3374 = vpop.f32.mrb[0].mxu0
        %v3375 = vpop.f32.mrb[0].mxu0
        %v3376 = vadd.f32 0.0, %v3375
        %v3377 = vpop.f32.mrb[0].mxu0
        %3378 = vmatprep.mubr.bf16.mxu0 0
        %3379 = vmatmul.mubr.bf16.gmra.mrb[0].mxu0 %v1383
        %v3380 = vpop.f32.mrb[0].mxu0
        %v3381 = vadd.f32 0.0, %v3380
        %v3382 = vpop.f32.mrb[0].mxu0
        %v3383 = vpop.f32.mrb[0].mxu0
        %v3384 = vadd.f32 0.0, %v3383
        %v3385 = vpop.f32.mrb[0].mxu0
        %3386 = vmatprep.mubr.bf16.mxu0 0
        %3387 = vmatmul.mubr.bf16.gmra.mrb[0].mxu0 %v1384
        %v3388 = vpop.f32.mrb[0].mxu0
        %v3389 = vadd.f32 0.0, %v3388
        %v3390 = vpop.f32.mrb[0].mxu0
        %v3391 = vpop.f32.mrb[0].mxu0
        %v3392 = vadd.f32 0.0, %v3391
        %v3393 = vpop.f32.mrb[0].mxu0
        %3394 = vmatprep.mubr.bf16.mxu0 0
        %3395 = vmatmul.mubr.bf16.gmra.mrb[0].mxu0 %v1385
        %v3396 = vpop.f32.mrb[0].mxu0
        %v3397 = vadd.f32 0.0, %v3396
        %v3398 = vpop.f32.mrb[0].mxu0
        %v3399 = vpop.f32.mrb[0].mxu0
        %v3400 = vadd.f32 0.0, %v3399
        %v3401 = vpop.f32.mrb[0].mxu0
        %3402 = vmatprep.mubr.bf16.mxu0 0
        %3403 = vmatmul.mubr.bf16.gmra.mrb[0].mxu0 %v1386
        %v3404 = vpop.f32.mrb[0].mxu0
        %v3405 = vadd.f32 0.0, %v3404
        %v3406 = vpop.f32.mrb[0].mxu0
        %v3407 = vpop.f32.mrb[0].mxu0
        %v3408 = vadd.f32 0.0, %v3407
        %v3409 = vpop.f32.mrb[0].mxu0
        %3410 = vmatprep.mubr.bf16.mxu0 0
        %3411 = vmatmul.mubr.bf16.gmra.mrb[0].mxu0 %v1387
        %v3412 = vpop.f32.mrb[0].mxu0
        %v3413 = vadd.f32 0.0, %v3412
        %v3414 = vpop.f32.mrb[0].mxu0
        %v3415 = vpop.f32.mrb[0].mxu0
        %v3416 = vadd.f32 0.0, %v3415
        %v3417 = vpop.f32.mrb[0].mxu0
        %3418 = vmatprep.mubr.bf16.mxu0 0
        %3419 = vmatmul.mubr.bf16.gmra.mrb[0].mxu0 %v1388
        %v3420 = vpop.f32.mrb[0].mxu0
        %v3421 = vadd.f32 0.0, %v3420
        %v3422 = vpop.f32.mrb[0].mxu0
        %v3423 = vpop.f32.mrb[0].mxu0
        %v3424 = vadd.f32 0.0, %v3423
        %v3425 = vpop.f32.mrb[0].mxu0
        %3426 = vmatprep.mubr.bf16.mxu0 0
        %3427 = vmatmul.mubr.bf16.gmra.mrb[0].mxu0 %v1389
        %v3428 = vpop.f32.mrb[0].mxu0
        %v3429 = vadd.f32 0.0, %v3428
        %v3430 = vpop.f32.mrb[0].mxu0
        %v3431 = vpop.f32.mrb[0].mxu0
        %v3432 = vadd.f32 0.0, %v3431
        %v3433 = vpop.f32.mrb[0].mxu0
        %3434 = vmatprep.mubr.bf16.mxu0 0
        %3435 = vmatmul.mubr.bf16.gmra.mrb[0].mxu0 %v1390
        %v3436 = vpop.f32.mrb[0].mxu0
        %v3437 = vadd.f32 0.0, %v3436
        %v3438 = vpop.f32.mrb[0].mxu0
        %v3439 = vpop.f32.mrb[0].mxu0
        %v3440 = vadd.f32 0.0, %v3439
        %v3441 = vpop.f32.mrb[0].mxu0
        %3442 = vmatprep.mubr.bf16.mxu0 0
        %3443 = vmatmul.mubr.bf16.gmra.mrb[0].mxu0 %v1391
        %v3444 = vpop.f32.mrb[0].mxu0
        %v3445 = vadd.f32 0.0, %v3444
        %v3446 = vpop.f32.mrb[0].mxu0
        %v3447 = vpop.f32.mrb[0].mxu0
        %v3448 = vadd.f32 0.0, %v3447
        %v3449 = vpop.f32.mrb[0].mxu0
        %3450 = vmatprep.mubr.bf16.mxu0 0
        %3451 = vmatmul.mubr.bf16.gmra.mrb[0].mxu0 %v1392
        %v3452 = vpop.f32.mrb[0].mxu0
        %v3453 = vadd.f32 0.0, %v3452
        %v3454 = vpop.f32.mrb[0].mxu0
        %v3455 = vpop.f32.mrb[0].mxu0
        %v3456 = vadd.f32 0.0, %v3455
        %v3457 = vpop.f32.mrb[0].mxu0
        %3458 = vmatprep.mubr.bf16.mxu0 0
        %3459 = vmatmul.mubr.bf16.gmra.mrb[0].mxu0 %v1393
        %v3460 = vpop.f32.mrb[0].mxu0
        %v3461 = vadd.f32 0.0, %v3460
        %v3462 = vpop.f32.mrb[0].mxu0
        %v3463 = vpop.f32.mrb[0].mxu0
        %v3464 = vadd.f32 0.0, %v3463
        %v3465 = vpop.f32.mrb[0].mxu0
        %3466 = vdwg.mxu0
        %v3467 = vadd.f32 %v3226, %v3341
        %v3468 = vadd.f32 %v3227, %v3344
        %v3469 = vadd.f32 %v3228, %v3349
        %v3470 = vadd.f32 %v3229, %v3352
        %v3471 = vadd.f32 %v3230, %v3357
        %v3472 = vadd.f32 %v3231, %v3360
        %v3473 = vadd.f32 %v3232, %v3365
        %v3474 = vadd.f32 %v3233, %v3368
        %v3475 = vadd.f32 %v3234, %v3373
        %v3476 = vadd.f32 %v3235, %v3376
        %v3477 = vadd.f32 %v3236, %v3381
        %v3478 = vadd.f32 %v3237, %v3384
        %v3479 = vadd.f32 %v3238, %v3389
        %v3480 = vadd.f32 %v3239, %v3392
        %v3481 = vadd.f32 %v3240, %v3397
        %v3482 = vadd.f32 %v3241, %v3400
        %v3483 = vadd.f32 %v3242, %v3405
        %v3484 = vadd.f32 %v3243, %v3408
        %v3485 = vadd.f32 %v3244, %v3413
        %v3486 = vadd.f32 %v3245, %v3416
        %v3487 = vadd.f32 %v3246, %v3421
        %v3488 = vadd.f32 %v3247, %v3424
        %v3489 = vadd.f32 %v3248, %v3429
        %v3490 = vadd.f32 %v3249, %v3432
        %v3491 = vadd.f32 %v3250, %v3437
        %v3492 = vadd.f32 %v3251, %v3440
        %v3493 = vadd.f32 %v3252, %v3445
        %v3494 = vadd.f32 %v3253, %v3448
        %v3495 = vadd.f32 %v3254, %v3453
        %v3496 = vadd.f32 %v3255, %v3456
        %v3497 = vadd.f32 %v3256, %v3461
        %v3498 = vadd.f32 %v3257, %v3464
        %v3499 = vadd.f32 %v3467, %v3468
        %v3500 = vadd.f32 %v3499, %v3469
        %v3501 = vadd.f32 %v3500, %v3470
        %v3502 = vadd.f32 %v3501, %v3471
        %v3503 = vadd.f32 %v3502, %v3472
        %v3504 = vadd.f32 %v3503, %v3473
        %v3505 = vadd.f32 %v3504, %v3474
        %v3506 = vadd.f32 %v3505, %v3475
        %v3507 = vadd.f32 %v3506, %v3476
        %v3508 = vadd.f32 %v3507, %v3477
        %v3509 = vadd.f32 %v3508, %v3478
        %v3510 = vadd.f32 %v3509, %v3479
        %v3511 = vadd.f32 %v3510, %v3480
        %v3512 = vadd.f32 %v3511, %v3481
        %v3513 = vadd.f32 %v3512, %v3482
        %v3514 = vadd.f32 %v3513, %v3483
        %v3515 = vadd.f32 %v3514, %v3484
        %v3516 = vadd.f32 %v3515, %v3485
        %v3517 = vadd.f32 %v3516, %v3486
        %v3518 = vadd.f32 %v3517, %v3487
        %v3519 = vadd.f32 %v3518, %v3488
        %v3520 = vadd.f32 %v3519, %v3489
        %v3521 = vadd.f32 %v3520, %v3490
        %v3522 = vadd.f32 %v3521, %v3491
        %v3523 = vadd.f32 %v3522, %v3492
        %v3524 = vadd.f32 %v3523, %v3493
        %v3525 = vadd.f32 %v3524, %v3494
        %v3526 = vadd.f32 %v3525, %v3495
        %v3527 = vadd.f32 %v3526, %v3496
        %v3528 = vadd.f32 %v3527, %v3497
        %v3529 = vadd.f32 %v3528, %v3498
        %v3530 = vrot.slane %v3529, 4
        %v3531 = vadd.f32 %v3529, %v3530
        %v3532 = vrot.slane %v3531, 2
        %v3533 = vadd.f32 %v3531, %v3532
        %v3534 = vrot.slane %v3533, 1
        %v3535 = vadd.f32 %v3533, %v3534
        %v3536 = vrcp.pop 256.0
        %v3537 = vmul.f32 %v3535, %v3536
        %v3538 = vmul.f32 %v3467, %v3467
        %v3539 = vmul.f32 %v3468, %v3468
        %v3540 = vmul.f32 %v3469, %v3469
        %v3541 = vmul.f32 %v3470, %v3470
        %v3542 = vmul.f32 %v3471, %v3471
        %v3543 = vmul.f32 %v3472, %v3472
        %v3544 = vmul.f32 %v3473, %v3473
        %v3545 = vmul.f32 %v3474, %v3474
        %v3546 = vmul.f32 %v3475, %v3475
        %v3547 = vmul.f32 %v3476, %v3476
        %v3548 = vmul.f32 %v3477, %v3477
        %v3549 = vmul.f32 %v3478, %v3478
        %v3550 = vmul.f32 %v3479, %v3479
        %v3551 = vmul.f32 %v3480, %v3480
        %v3552 = vmul.f32 %v3481, %v3481
        %v3553 = vmul.f32 %v3482, %v3482
        %v3554 = vmul.f32 %v3483, %v3483
        %v3555 = vmul.f32 %v3484, %v3484
        %v3556 = vmul.f32 %v3485, %v3485
        %v3557 = vmul.f32 %v3486, %v3486
        %v3558 = vmul.f32 %v3487, %v3487
        %v3559 = vmul.f32 %v3488, %v3488
        %v3560 = vmul.f32 %v3489, %v3489
        %v3561 = vmul.f32 %v3490, %v3490
        %v3562 = vmul.f32 %v3491, %v3491
        %v3563 = vmul.f32 %v3492, %v3492
        %v3564 = vmul.f32 %v3493, %v3493
        %v3565 = vmul.f32 %v3494, %v3494
        %v3566 = vmul.f32 %v3495, %v3495
        %v3567 = vmul.f32 %v3496, %v3496
        %v3568 = vmul.f32 %v3497, %v3497
        %v3569 = vmul.f32 %v3498, %v3498
        %v3570 = vadd.f32 %v3538, %v3539
        %v3571 = vadd.f32 %v3570, %v3540
        %v3572 = vadd.f32 %v3571, %v3541
        %v3573 = vadd.f32 %v3572, %v3542
        %v3574 = vadd.f32 %v3573, %v3543
        %v3575 = vadd.f32 %v3574, %v3544
        %v3576 = vadd.f32 %v3575, %v3545
        %v3577 = vadd.f32 %v3576, %v3546
        %v3578 = vadd.f32 %v3577, %v3547
        %v3579 = vadd.f32 %v3578, %v3548
        %v3580 = vadd.f32 %v3579, %v3549
        %v3581 = vadd.f32 %v3580, %v3550
        %v3582 = vadd.f32 %v3581, %v3551
        %v3583 = vadd.f32 %v3582, %v3552
        %v3584 = vadd.f32 %v3583, %v3553
        %v3585 = vadd.f32 %v3584, %v3554
        %v3586 = vadd.f32 %v3585, %v3555
        %v3587 = vadd.f32 %v3586, %v3556
        %v3588 = vadd.f32 %v3587, %v3557
        %v3589 = vadd.f32 %v3588, %v3558
        %v3590 = vadd.f32 %v3589, %v3559
        %v3591 = vadd.f32 %v3590, %v3560
        %v3592 = vadd.f32 %v3591, %v3561
        %v3593 = vadd.f32 %v3592, %v3562
        %v3594 = vadd.f32 %v3593, %v3563
        %v3595 = vadd.f32 %v3594, %v3564
        %v3596 = vadd.f32 %v3595, %v3565
        %v3597 = vadd.f32 %v3596, %v3566
        %v3598 = vadd.f32 %v3597, %v3567
        %v3599 = vadd.f32 %v3598, %v3568
        %v3600 = vadd.f32 %v3599, %v3569
        %v3601 = vrot.slane %v3600, 4
        %v3602 = vadd.f32 %v3600, %v3601
        %v3603 = vrot.slane %v3602, 2
        %v3604 = vadd.f32 %v3602, %v3603
        %v3605 = vrot.slane %v3604, 1
        %v3606 = vadd.f32 %v3604, %v3605
        %v3607 = vmul.f32 %v3606, %v3536
        %v3608 = vmul.f32 %v3537, %v3537
        %v3609 = vsub.f32 %v3607, %v3608
        %v3610 = vmax.f32 %v3609, 0.0
        %v3611 = vsub.f32 %v3467, %v3537
        %v3612 = vsub.f32 %v3468, %v3537
        %v3613 = vsub.f32 %v3469, %v3537
        %v3614 = vsub.f32 %v3470, %v3537
        %v3615 = vsub.f32 %v3471, %v3537
        %v3616 = vsub.f32 %v3472, %v3537
        %v3617 = vsub.f32 %v3473, %v3537
        %v3618 = vsub.f32 %v3474, %v3537
        %v3619 = vsub.f32 %v3475, %v3537
        %v3620 = vsub.f32 %v3476, %v3537
        %v3621 = vsub.f32 %v3477, %v3537
        %v3622 = vsub.f32 %v3478, %v3537
        %v3623 = vsub.f32 %v3479, %v3537
        %v3624 = vsub.f32 %v3480, %v3537
        %v3625 = vsub.f32 %v3481, %v3537
        %v3626 = vsub.f32 %v3482, %v3537
        %v3627 = vsub.f32 %v3483, %v3537
        %v3628 = vsub.f32 %v3484, %v3537
        %v3629 = vsub.f32 %v3485, %v3537
        %v3630 = vsub.f32 %v3486, %v3537
        %v3631 = vsub.f32 %v3487, %v3537
        %v3632 = vsub.f32 %v3488, %v3537
        %v3633 = vsub.f32 %v3489, %v3537
        %v3634 = vsub.f32 %v3490, %v3537
        %v3635 = vsub.f32 %v3491, %v3537
        %v3636 = vsub.f32 %v3492, %v3537
        %v3637 = vsub.f32 %v3493, %v3537
        %v3638 = vsub.f32 %v3494, %v3537
        %v3639 = vsub.f32 %v3495, %v3537
        %v3640 = vsub.f32 %v3496, %v3537
        %v3641 = vsub.f32 %v3497, %v3537
        %v3642 = vsub.f32 %v3498, %v3537
        %v3643 = vadd.f32 %v3610, 1e-05
        %v3644 = vrsqrt.pop %v3643
        %v3645 = vmul.f32 %v3611, %v3644
        %v3646 = vmul.f32 %v3612, %v3644
        %v3647 = vmul.f32 %v3613, %v3644
        %v3648 = vmul.f32 %v3614, %v3644
        %v3649 = vmul.f32 %v3615, %v3644
        %v3650 = vmul.f32 %v3616, %v3644
        %v3651 = vmul.f32 %v3617, %v3644
        %v3652 = vmul.f32 %v3618, %v3644
        %v3653 = vmul.f32 %v3619, %v3644
        %v3654 = vmul.f32 %v3620, %v3644
        %v3655 = vmul.f32 %v3621, %v3644
        %v3656 = vmul.f32 %v3622, %v3644
        %v3657 = vmul.f32 %v3623, %v3644
        %v3658 = vmul.f32 %v3624, %v3644
        %v3659 = vmul.f32 %v3625, %v3644
        %v3660 = vmul.f32 %v3626, %v3644
        %v3661 = vmul.f32 %v3627, %v3644
        %v3662 = vmul.f32 %v3628, %v3644
        %v3663 = vmul.f32 %v3629, %v3644
        %v3664 = vmul.f32 %v3630, %v3644
        %v3665 = vmul.f32 %v3631, %v3644
        %v3666 = vmul.f32 %v3632, %v3644
        %v3667 = vmul.f32 %v3633, %v3644
        %v3668 = vmul.f32 %v3634, %v3644
        %v3669 = vmul.f32 %v3635, %v3644
        %v3670 = vmul.f32 %v3636, %v3644
        %v3671 = vmul.f32 %v3637, %v3644
        %v3672 = vmul.f32 %v3638, %v3644
        %v3673 = vmul.f32 %v3639, %v3644
        %v3674 = vmul.f32 %v3640, %v3644
        %v3675 = vmul.f32 %v3641, %v3644
        %v3676 = vmul.f32 %v3642, %v3644
        %v3677 = vmax.f32 %v3645, 0.0
        %v3678 = vmax.f32 %v3646, 0.0
        %v3679 = vmax.f32 %v3647, 0.0
        %v3680 = vmax.f32 %v3648, 0.0
        %v3681 = vmax.f32 %v3649, 0.0
        %v3682 = vmax.f32 %v3650, 0.0
        %v3683 = vmax.f32 %v3651, 0.0
        %v3684 = vmax.f32 %v3652, 0.0
        %v3685 = vmax.f32 %v3653, 0.0
        %v3686 = vmax.f32 %v3654, 0.0
        %v3687 = vmax.f32 %v3655, 0.0
        %v3688 = vmax.f32 %v3656, 0.0
        %v3689 = vmax.f32 %v3657, 0.0
        %v3690 = vmax.f32 %v3658, 0.0
        %v3691 = vmax.f32 %v3659, 0.0
        %v3692 = vmax.f32 %v3660, 0.0
        %v3693 = vmax.f32 %v3661, 0.0
        %v3694 = vmax.f32 %v3662, 0.0
        %v3695 = vmax.f32 %v3663, 0.0
        %v3696 = vmax.f32 %v3664, 0.0
        %v3697 = vmax.f32 %v3665, 0.0
        %v3698 = vmax.f32 %v3666, 0.0
        %v3699 = vmax.f32 %v3667, 0.0
        %v3700 = vmax.f32 %v3668, 0.0
        %v3701 = vmax.f32 %v3669, 0.0
        %v3702 = vmax.f32 %v3670, 0.0
        %v3703 = vmax.f32 %v3671, 0.0
        %v3704 = vmax.f32 %v3672, 0.0
        %v3705 = vmax.f32 %v3673, 0.0
        %v3706 = vmax.f32 %v3674, 0.0
        %v3707 = vmax.f32 %v3675, 0.0
        %v3708 = vmax.f32 %v3676, 0.0
        %v3710 = vrot.slane %v3706, 7
        %v3743 = vrot.slane %v3679, 7
        %v3744 = vrot.slane %v3680, 7
        %v3745 = vsel %vm708, %v3743, %v3744
        %v3746 = vrot.slane %v3677, 7
        %v3747 = vsel %vm708, %v3744, %v3746
        %v3748 = vrot.slane %v3678, 7
        %v3749 = vsel %vm708, %v3746, %v3748
        %v3750 = vsel %vm708, %v3748, %v3743
        %v3751 = vrot.slane %v3681, 7
        %v3752 = vsel %vm708, %v3744, %v3751
        %v3753 = vrot.slane %v3682, 7
        %v3754 = vsel %vm708, %v3751, %v3753
        %v3755 = vrot.slane %v3683, 7
        %v3756 = vsel %vm708, %v3753, %v3755
        %v3757 = vrot.slane %v3684, 7
        %v3758 = vsel %vm708, %v3755, %v3757
        %v3759 = vrot.slane %v3685, 7
        %v3760 = vsel %vm708, %v3757, %v3759
        %v3761 = vrot.slane %v3686, 7
        %v3762 = vsel %vm708, %v3759, %v3761
        %v3763 = vrot.slane %v3687, 7
        %v3764 = vsel %vm708, %v3761, %v3763
        %v3765 = vrot.slane %v3688, 7
        %v3766 = vsel %vm708, %v3763, %v3765
        %v3767 = vrot.slane %v3689, 7
        %v3768 = vsel %vm708, %v3765, %v3767
        %v3769 = vrot.slane %v3690, 7
        %v3770 = vsel %vm708, %v3767, %v3769
        %v3771 = vrot.slane %v3691, 7
        %v3772 = vsel %vm708, %v3769, %v3771
        %v3773 = vrot.slane %v3692, 7
        %v3774 = vsel %vm708, %v3771, %v3773
        %v3775 = vrot.slane %v3693, 7
        %v3776 = vsel %vm708, %v3773, %v3775
        %v3777 = vrot.slane %v3694, 7
        %v3778 = vsel %vm708, %v3775, %v3777
        %v3779 = vrot.slane %v3695, 7
        %v3780 = vsel %vm708, %v3777, %v3779
        %v3781 = vrot.slane %v3696, 7
        %v3782 = vsel %vm708, %v3779, %v3781
        %v3783 = vrot.slane %v3697, 7
        %v3784 = vsel %vm708, %v3781, %v3783
        %v3785 = vrot.slane %v3698, 7
        %v3786 = vsel %vm708, %v3783, %v3785
        %v3787 = vrot.slane %v3699, 7
        %v3788 = vsel %vm708, %v3785, %v3787
        %v3789 = vrot.slane %v3700, 7
        %v3790 = vsel %vm708, %v3787, %v3789
        %v3791 = vrot.slane %v3701, 7
        %v3792 = vsel %vm708, %v3789, %v3791
        %v3793 = vrot.slane %v3702, 7
        %v3794 = vsel %vm708, %v3791, %v3793
        %v3795 = vrot.slane %v3703, 7
        %v3796 = vsel %vm708, %v3793, %v3795
        %v3797 = vrot.slane %v3704, 7
        %v3798 = vsel %vm708, %v3795, %v3797
        %v3799 = vrot.slane %v3705, 7
        %v3800 = vsel %vm708, %v3797, %v3799
        %v3801 = vsel %vm708, %v3799, %v3710
        %v3802 = vrot.slane %v3707, 7
        %v3803 = vsel %vm708, %v3710, %v3802
        %v3804 = vrot.slane %v3708, 7
        %v3805 = vsel %vm708, %v3802, %v3804
        %v3806 = vsel %vm708, %v3804, %v3799
        %v3841 = vsel %vm708, %v3710, %v3743
        %v3842 = vrot.slane %v3679, 1
        %v3843 = vrot.slane %v3680, 1
        %v3844 = vsel %vm808, %v3842, %v3843
        %v3845 = vrot.slane %v3677, 1
        %v3846 = vsel %vm808, %v3843, %v3845
        %v3847 = vrot.slane %v3678, 1
        %v3848 = vsel %vm808, %v3845, %v3847
        %v3849 = vsel %vm808, %v3847, %v3842
        %v3850 = vrot.slane %v3681, 1
        %v3851 = vsel %vm808, %v3843, %v3850
        %v3852 = vrot.slane %v3682, 1
        %v3853 = vsel %vm808, %v3850, %v3852
        %v3854 = vrot.slane %v3683, 1
        %v3855 = vsel %vm808, %v3852, %v3854
        %v3856 = vrot.slane %v3684, 1
        %v3857 = vsel %vm808, %v3854, %v3856
        %v3858 = vrot.slane %v3685, 1
        %v3859 = vsel %vm808, %v3856, %v3858
        %v3860 = vrot.slane %v3686, 1
        %v3861 = vsel %vm808, %v3858, %v3860
        %v3862 = vrot.slane %v3687, 1
        %v3863 = vsel %vm808, %v3860, %v3862
        %v3864 = vrot.slane %v3688, 1
        %v3865 = vsel %vm808, %v3862, %v3864
        %v3866 = vrot.slane %v3689, 1
        %v3867 = vsel %vm808, %v3864, %v3866
        %v3868 = vrot.slane %v3690, 1
        %v3869 = vsel %vm808, %v3866, %v3868
        %v3870 = vrot.slane %v3691, 1
        %v3871 = vsel %vm808, %v3868, %v3870
        %v3872 = vrot.slane %v3692, 1
        %v3873 = vsel %vm808, %v3870, %v3872
        %v3874 = vrot.slane %v3693, 1
        %v3875 = vsel %vm808, %v3872, %v3874
        %v3876 = vrot.slane %v3694, 1
        %v3877 = vsel %vm808, %v3874, %v3876
        %v3878 = vrot.slane %v3695, 1
        %v3879 = vsel %vm808, %v3876, %v3878
        %v3880 = vrot.slane %v3696, 1
        %v3881 = vsel %vm808, %v3878, %v3880
        %v3882 = vrot.slane %v3697, 1
        %v3883 = vsel %vm808, %v3880, %v3882
        %v3884 = vrot.slane %v3698, 1
        %v3885 = vsel %vm808, %v3882, %v3884
        %v3886 = vrot.slane %v3699, 1
        %v3887 = vsel %vm808, %v3884, %v3886
        %v3888 = vrot.slane %v3700, 1
        %v3889 = vsel %vm808, %v3886, %v3888
        %v3890 = vrot.slane %v3701, 1
        %v3891 = vsel %vm808, %v3888, %v3890
        %v3892 = vrot.slane %v3702, 1
        %v3893 = vsel %vm808, %v3890, %v3892
        %v3894 = vrot.slane %v3703, 1
        %v3895 = vsel %vm808, %v3892, %v3894
        %v3896 = vrot.slane %v3704, 1
        %v3897 = vsel %vm808, %v3894, %v3896
        %v3898 = vrot.slane %v3705, 1
        %v3899 = vsel %vm808, %v3896, %v3898
        %v3900 = vrot.slane %v3706, 1
        %v3901 = vsel %vm808, %v3898, %v3900
        %v3902 = vrot.slane %v3707, 1
        %v3903 = vsel %vm808, %v3900, %v3902
        %v3904 = vrot.slane %v3708, 1
        %v3905 = vsel %vm808, %v3902, %v3904
        %v3906 = vsel %vm808, %v3904, %v3898
        %v3942 = vsel %vm808, %v3900, %v3842
        %v3943 = vsel %vm1054, %v3844, %v3841
        %v3944 = vsel %vm1055, %v3846, %v3745
        %v3945 = vsel %vm1056, %v3848, %v3747
        %v3946 = vsel %vm1057, %v3849, %v3749
        %v3947 = vsel %vm1058, %v3844, %v3750
        %v3948 = vsel %vm1059, %v3851, %v3745
        %v3949 = vsel %vm1060, %v3853, %v3752
        %v3950 = vsel %vm1061, %v3855, %v3754
        %v3951 = vsel %vm1062, %v3857, %v3756
        %v3952 = vsel %vm1063, %v3859, %v3758
        %v3953 = vsel %vm1064, %v3861, %v3760
        %v3954 = vsel %vm1065, %v3863, %v3762
        %v3955 = vsel %vm1066, %v3865, %v3764
        %v3956 = vsel %vm1067, %v3867, %v3766
        %v3957 = vsel %vm1068, %v3869, %v3768
        %v3958 = vsel %vm1069, %v3871, %v3770
        %v3959 = vsel %vm1070, %v3873, %v3772
        %v3960 = vsel %vm1071, %v3875, %v3774
        %v3961 = vsel %vm1072, %v3877, %v3776
        %v3962 = vsel %vm1073, %v3879, %v3778
        %v3963 = vsel %vm1074, %v3881, %v3780
        %v3964 = vsel %vm1075, %v3883, %v3782
        %v3965 = vsel %vm1076, %v3885, %v3784
        %v3966 = vsel %vm1077, %v3887, %v3786
        %v3967 = vsel %vm1078, %v3889, %v3788
        %v3968 = vsel %vm1079, %v3891, %v3790
        %v3969 = vsel %vm1080, %v3893, %v3792
        %v3970 = vsel %vm1081, %v3895, %v3794
        %v3971 = vsel %vm1082, %v3897, %v3796
        %v3972 = vsel %vm1083, %v3899, %v3798
        %v3973 = vsel %vm1084, %v3901, %v3800
        %v3974 = vsel %vm1085, %v3903, %v3801
        %v3975 = vsel %vm1086, %v3905, %v3803
        %v3976 = vsel %vm1087, %v3906, %v3805
        %v3977 = vsel %vm1088, %v3901, %v3806
        %v3978 = vsel %vm1089, %v3942, %v3801
        %v3979 = vpack.c.bf16 %v3944, %v3943
        %v3980 = vpack.c.bf16 %v3946, %v3945
        %v3981 = vpack.c.bf16 %v3948, %v3947
        %v3982 = vpack.c.bf16 %v3950, %v3949
        %v3983 = vpack.c.bf16 %v3952, %v3951
        %v3984 = vpack.c.bf16 %v3954, %v3953
        %v3985 = vpack.c.bf16 %v3956, %v3955
        %v3986 = vpack.c.bf16 %v3958, %v3957
        %v3987 = vpack.c.bf16 %v3960, %v3959
        %v3988 = vpack.c.bf16 %v3962, %v3961
        %v3989 = vpack.c.bf16 %v3964, %v3963
        %v3990 = vpack.c.bf16 %v3966, %v3965
        %v3991 = vpack.c.bf16 %v3968, %v3967
        %v3992 = vpack.c.bf16 %v3970, %v3969
        %v3993 = vpack.c.bf16 %v3972, %v3971
        %v3994 = vpack.c.bf16 %v3974, %v3973
        %v3995 = vpack.c.bf16 %v3976, %v3975
        %v3996 = vpack.c.bf16 %v3978, %v3977
        %v3997 = vpack.c.bf16 %v3680, %v3679
        %v3998 = vpack.c.bf16 %v3678, %v3677
        %v3999 = vpack.c.bf16 %v3682, %v3681
        %v4000 = vpack.c.bf16 %v3684, %v3683
        %v4001 = vpack.c.bf16 %v3686, %v3685
        %v4002 = vpack.c.bf16 %v3688, %v3687
        %v4003 = vpack.c.bf16 %v3690, %v3689
        %v4004 = vpack.c.bf16 %v3692, %v3691
        %v4005 = vpack.c.bf16 %v3694, %v3693
        %v4006 = vpack.c.bf16 %v3696, %v3695
        %v4007 = vpack.c.bf16 %v3698, %v3697
        %v4008 = vpack.c.bf16 %v3700, %v3699
        %v4009 = vpack.c.bf16 %v3702, %v3701
        %v4010 = vpack.c.bf16 %v3704, %v3703
        %v4011 = vpack.c.bf16 %v3706, %v3705
        %v4012 = vpack.c.bf16 %v3708, %v3707
        %v4013 = vsel %vm1304, %v3841, %v3844
        %v4014 = vsel %vm1305, %v3745, %v3846
        %v4015 = vsel %vm1306, %v3747, %v3848
        %v4016 = vsel %vm1307, %v3749, %v3849
        %v4017 = vsel %vm1308, %v3750, %v3844
        %v4018 = vsel %vm1309, %v3745, %v3851
        %v4019 = vsel %vm1310, %v3752, %v3853
        %v4020 = vsel %vm1311, %v3754, %v3855
        %v4021 = vsel %vm1312, %v3756, %v3857
        %v4022 = vsel %vm1313, %v3758, %v3859
        %v4023 = vsel %vm1314, %v3760, %v3861
        %v4024 = vsel %vm1315, %v3762, %v3863
        %v4025 = vsel %vm1316, %v3764, %v3865
        %v4026 = vsel %vm1317, %v3766, %v3867
        %v4027 = vsel %vm1318, %v3768, %v3869
        %v4028 = vsel %vm1319, %v3770, %v3871
        %v4029 = vsel %vm1320, %v3772, %v3873
        %v4030 = vsel %vm1321, %v3774, %v3875
        %v4031 = vsel %vm1322, %v3776, %v3877
        %v4032 = vsel %vm1323, %v3778, %v3879
        %v4033 = vsel %vm1324, %v3780, %v3881
        %v4034 = vsel %vm1325, %v3782, %v3883
        %v4035 = vsel %vm1326, %v3784, %v3885
        %v4036 = vsel %vm1327, %v3786, %v3887
        %v4037 = vsel %vm1328, %v3788, %v3889
        %v4038 = vsel %vm1329, %v3790, %v3891
        %v4039 = vsel %vm1330, %v3792, %v3893
        %v4040 = vsel %vm1331, %v3794, %v3895
        %v4041 = vsel %vm1332, %v3796, %v3897
        %v4042 = vsel %vm1333, %v3798, %v3899
        %v4043 = vsel %vm1334, %v3800, %v3901
        %v4044 = vsel %vm1335, %v3801, %v3903
        %v4045 = vsel %vm1336, %v3803, %v3905
        %v4046 = vsel %vm1337, %v3805, %v3906
        %v4047 = vsel %vm1338, %v3806, %v3901
        %v4048 = vsel %vm1339, %v3801, %v3942
        %v4049 = vpack.c.bf16 %v4014, %v4013
        %v4050 = vpack.c.bf16 %v4016, %v4015
        %v4051 = vpack.c.bf16 %v4018, %v4017
        %v4052 = vpack.c.bf16 %v4020, %v4019
        %v4053 = vpack.c.bf16 %v4022, %v4021
        %v4054 = vpack.c.bf16 %v4024, %v4023
        %v4055 = vpack.c.bf16 %v4026, %v4025
        %v4056 = vpack.c.bf16 %v4028, %v4027
        %v4057 = vpack.c.bf16 %v4030, %v4029
        %v4058 = vpack.c.bf16 %v4032, %v4031
        %v4059 = vpack.c.bf16 %v4034, %v4033
        %v4060 = vpack.c.bf16 %v4036, %v4035
        %v4061 = vpack.c.bf16 %v4038, %v4037
        %v4062 = vpack.c.bf16 %v4040, %v4039
        %v4063 = vpack.c.bf16 %v4042, %v4041
        %v4064 = vpack.c.bf16 %v4044, %v4043
        %v4065 = vpack.c.bf16 %v4046, %v4045
        %v4066 = vpack.c.bf16 %v4048, %v4047
        %v4083 = vunpack.c.l.b16 %v514
        %v4084 = vunpack.c.l.b16 %v515
        %v4085 = vunpack.c.l.b16 %v516
        %v4086 = vunpack.c.l.b16 %v517
        %v4087 = vunpack.c.l.b16 %v518
        %v4088 = vunpack.c.l.b16 %v519
        %v4089 = vunpack.c.l.b16 %v520
        %v4090 = vunpack.c.l.b16 %v521
        %v4091 = vunpack.c.l.b16 %v522
        %v4092 = vunpack.c.l.b16 %v523
        %v4093 = vunpack.c.l.b16 %v524
        %v4094 = vunpack.c.l.b16 %v525
        %v4095 = vunpack.c.l.b16 %v526
        %v4096 = vunpack.c.l.b16 %v527
        %v4097 = vunpack.c.l.b16 %v528
        %v4098 = vunpack.c.l.b16 %v529
        %v4099 = vpack.c.b16 %v4084, %v4083
        %v4100 = vpack.c.b16 %v4086, %v4085
        %v4101 = vpack.c.b16 %v4088, %v4087
        %v4102 = vpack.c.b16 %v4090, %v4089
        %v4103 = vpack.c.b16 %v4092, %v4091
        %v4104 = vpack.c.b16 %v4094, %v4093
        %v4105 = vpack.c.b16 %v4096, %v4095
        %v4106 = vpack.c.b16 %v4098, %v4097
        %4115 = vmatprep.subr.bf16.mxu0 0
        %4116 = vmatpush1.bf16.msra.mxu0 %v4099
        %4117 = vmatprep.subr.bf16.mxu0 0
        %4118 = vmatpush1.bf16.msra.mxu0 %v4100
        %4119 = vmatprep.subr.bf16.mxu0 0
        %4120 = vmatpush1.bf16.msra.mxu0 %v4101
        %4121 = vmatprep.subr.bf16.mxu0 0
        %4122 = vmatpush1.bf16.msra.mxu0 %v4102
        %4123 = vmatprep.subr.bf16.mxu0 0
        %4124 = vmatpush1.bf16.msra.mxu0 %v4103
        %4125 = vmatprep.subr.bf16.mxu0 0
        %4126 = vmatpush1.bf16.msra.mxu0 %v4104
        %4127 = vmatprep.subr.bf16.mxu0 0
        %4128 = vmatpush1.bf16.msra.mxu0 %v4105
        %4129 = vmatprep.subr.bf16.mxu0 0
        %4130 = vmatpush1.bf16.msra.mxu0 %v4106
        %4131 = vmatprep.subr.bf16.mxu0 0
        %4132 = vmatpush1.bf16.msra.mxu0 0
        %4133 = vmatprep.subr.bf16.mxu0 0
        %4134 = vmatpush1.bf16.msra.mxu0 0
        %4135 = vmatprep.subr.bf16.mxu0 0
        %4136 = vmatpush1.bf16.msra.mxu0 0
        %4137 = vmatprep.subr.bf16.mxu0 0
        %4138 = vmatpush1.bf16.msra.mxu0 0
        %4139 = vmatprep.subr.bf16.mxu0 0
        %4140 = vmatpush1.bf16.msra.mxu0 0
        %4141 = vmatprep.subr.bf16.mxu0 0
        %4142 = vmatpush1.bf16.msra.mxu0 0
        %4143 = vmatprep.subr.bf16.mxu0 0
        %4144 = vmatpush1.bf16.msra.mxu0 0
        %4145 = vmatprep.subr.bf16.mxu0 0
        %4146 = vmatpush1.bf16.msra.mxu0 0
        %4147 = vmatprep.mubr.bf16.mxu0 0
        %4148 = vmatmul.mubr.bf16.gmra.mrb[0].mxu0 %v3997
        %v4149 = vpop.f32.mrb[0].mxu0
        %v4150 = vadd.f32 0.0, %v4149
        %v4151 = vpop.f32.mrb[0].mxu0
        %v4152 = vpop.f32.mrb[0].mxu0
        %v4153 = vadd.f32 0.0, %v4152
        %v4154 = vpop.f32.mrb[0].mxu0
        %4155 = vmatprep.mubr.bf16.mxu0 0
        %4156 = vmatmul.mubr.bf16.gmra.mrb[0].mxu0 %v3998
        %v4157 = vpop.f32.mrb[0].mxu0
        %v4158 = vadd.f32 0.0, %v4157
        %v4159 = vpop.f32.mrb[0].mxu0
        %v4160 = vpop.f32.mrb[0].mxu0
        %v4161 = vadd.f32 0.0, %v4160
        %v4162 = vpop.f32.mrb[0].mxu0
        %4163 = vmatprep.mubr.bf16.mxu0 0
        %4164 = vmatmul.mubr.bf16.gmra.mrb[0].mxu0 %v3997
        %v4165 = vpop.f32.mrb[0].mxu0
        %v4166 = vadd.f32 0.0, %v4165
        %v4167 = vpop.f32.mrb[0].mxu0
        %v4168 = vpop.f32.mrb[0].mxu0
        %v4169 = vadd.f32 0.0, %v4168
        %v4170 = vpop.f32.mrb[0].mxu0
        %4171 = vmatprep.mubr.bf16.mxu0 0
        %4172 = vmatmul.mubr.bf16.gmra.mrb[0].mxu0 %v3999
        %v4173 = vpop.f32.mrb[0].mxu0
        %v4174 = vadd.f32 0.0, %v4173
        %v4175 = vpop.f32.mrb[0].mxu0
        %v4176 = vpop.f32.mrb[0].mxu0
        %v4177 = vadd.f32 0.0, %v4176
        %v4178 = vpop.f32.mrb[0].mxu0
        %4179 = vmatprep.mubr.bf16.mxu0 0
        %4180 = vmatmul.mubr.bf16.gmra.mrb[0].mxu0 %v4000
        %v4181 = vpop.f32.mrb[0].mxu0
        %v4182 = vadd.f32 0.0, %v4181
        %v4183 = vpop.f32.mrb[0].mxu0
        %v4184 = vpop.f32.mrb[0].mxu0
        %v4185 = vadd.f32 0.0, %v4184
        %v4186 = vpop.f32.mrb[0].mxu0
        %4187 = vmatprep.mubr.bf16.mxu0 0
        %4188 = vmatmul.mubr.bf16.gmra.mrb[0].mxu0 %v4001
        %v4189 = vpop.f32.mrb[0].mxu0
        %v4190 = vadd.f32 0.0, %v4189
        %v4191 = vpop.f32.mrb[0].mxu0
        %v4192 = vpop.f32.mrb[0].mxu0
        %v4193 = vadd.f32 0.0, %v4192
        %v4194 = vpop.f32.mrb[0].mxu0
        %4195 = vmatprep.mubr.bf16.mxu0 0
        %4196 = vmatmul.mubr.bf16.gmra.mrb[0].mxu0 %v4002
        %v4197 = vpop.f32.mrb[0].mxu0
        %v4198 = vadd.f32 0.0, %v4197
        %v4199 = vpop.f32.mrb[0].mxu0
        %v4200 = vpop.f32.mrb[0].mxu0
        %v4201 = vadd.f32 0.0, %v4200
        %v4202 = vpop.f32.mrb[0].mxu0
        %4203 = vmatprep.mubr.bf16.mxu0 0
        %4204 = vmatmul.mubr.bf16.gmra.mrb[0].mxu0 %v4003
        %v4205 = vpop.f32.mrb[0].mxu0
        %v4206 = vadd.f32 0.0, %v4205
        %v4207 = vpop.f32.mrb[0].mxu0
        %v4208 = vpop.f32.mrb[0].mxu0
        %v4209 = vadd.f32 0.0, %v4208
        %v4210 = vpop.f32.mrb[0].mxu0
        %4211 = vmatprep.mubr.bf16.mxu0 0
        %4212 = vmatmul.mubr.bf16.gmra.mrb[0].mxu0 %v4004
        %v4213 = vpop.f32.mrb[0].mxu0
        %v4214 = vadd.f32 0.0, %v4213
        %v4215 = vpop.f32.mrb[0].mxu0
        %v4216 = vpop.f32.mrb[0].mxu0
        %v4217 = vadd.f32 0.0, %v4216
        %v4218 = vpop.f32.mrb[0].mxu0
        %4219 = vmatprep.mubr.bf16.mxu0 0
        %4220 = vmatmul.mubr.bf16.gmra.mrb[0].mxu0 %v4005
        %v4221 = vpop.f32.mrb[0].mxu0
        %v4222 = vadd.f32 0.0, %v4221
        %v4223 = vpop.f32.mrb[0].mxu0
        %v4224 = vpop.f32.mrb[0].mxu0
        %v4225 = vadd.f32 0.0, %v4224
        %v4226 = vpop.f32.mrb[0].mxu0
        %4227 = vmatprep.mubr.bf16.mxu0 0
        %4228 = vmatmul.mubr.bf16.gmra.mrb[0].mxu0 %v4006
        %v4229 = vpop.f32.mrb[0].mxu0
        %v4230 = vadd.f32 0.0, %v4229
        %v4231 = vpop.f32.mrb[0].mxu0
        %v4232 = vpop.f32.mrb[0].mxu0
        %v4233 = vadd.f32 0.0, %v4232
        %v4234 = vpop.f32.mrb[0].mxu0
        %4235 = vmatprep.mubr.bf16.mxu0 0
        %4236 = vmatmul.mubr.bf16.gmra.mrb[0].mxu0 %v4007
        %v4237 = vpop.f32.mrb[0].mxu0
        %v4238 = vadd.f32 0.0, %v4237
        %v4239 = vpop.f32.mrb[0].mxu0
        %v4240 = vpop.f32.mrb[0].mxu0
        %v4241 = vadd.f32 0.0, %v4240
        %v4242 = vpop.f32.mrb[0].mxu0
        %4243 = vmatprep.mubr.bf16.mxu0 0
        %4244 = vmatmul.mubr.bf16.gmra.mrb[0].mxu0 %v4008
        %v4245 = vpop.f32.mrb[0].mxu0
        %v4246 = vadd.f32 0.0, %v4245
        %v4247 = vpop.f32.mrb[0].mxu0
        %v4248 = vpop.f32.mrb[0].mxu0
        %v4249 = vadd.f32 0.0, %v4248
        %v4250 = vpop.f32.mrb[0].mxu0
        %4251 = vmatprep.mubr.bf16.mxu0 0
        %4252 = vmatmul.mubr.bf16.gmra.mrb[0].mxu0 %v4009
        %v4253 = vpop.f32.mrb[0].mxu0
        %v4254 = vadd.f32 0.0, %v4253
        %v4255 = vpop.f32.mrb[0].mxu0
        %v4256 = vpop.f32.mrb[0].mxu0
        %v4257 = vadd.f32 0.0, %v4256
        %v4258 = vpop.f32.mrb[0].mxu0
        %4259 = vmatprep.mubr.bf16.mxu0 0
        %4260 = vmatmul.mubr.bf16.gmra.mrb[0].mxu0 %v4010
        %v4261 = vpop.f32.mrb[0].mxu0
        %v4262 = vadd.f32 0.0, %v4261
        %v4263 = vpop.f32.mrb[0].mxu0
        %v4264 = vpop.f32.mrb[0].mxu0
        %v4265 = vadd.f32 0.0, %v4264
        %v4266 = vpop.f32.mrb[0].mxu0
        %4267 = vmatprep.mubr.bf16.mxu0 0
        %4268 = vmatmul.mubr.bf16.gmra.mrb[0].mxu0 %v4011
        %v4269 = vpop.f32.mrb[0].mxu0
        %v4270 = vadd.f32 0.0, %v4269
        %v4271 = vpop.f32.mrb[0].mxu0
        %v4272 = vpop.f32.mrb[0].mxu0
        %v4273 = vadd.f32 0.0, %v4272
        %v4274 = vpop.f32.mrb[0].mxu0
        %4275 = vdwg.mxu0
        %v4292 = vunpack.c.l.b16 %v498
        %v4293 = vunpack.c.l.b16 %v499
        %v4294 = vunpack.c.l.b16 %v500
        %v4295 = vunpack.c.l.b16 %v501
        %v4296 = vunpack.c.l.b16 %v502
        %v4297 = vunpack.c.l.b16 %v503
        %v4298 = vunpack.c.l.b16 %v504
        %v4299 = vunpack.c.l.b16 %v505
        %v4300 = vunpack.c.l.b16 %v506
        %v4301 = vunpack.c.l.b16 %v507
        %v4302 = vunpack.c.l.b16 %v508
        %v4303 = vunpack.c.l.b16 %v509
        %v4304 = vunpack.c.l.b16 %v510
        %v4305 = vunpack.c.l.b16 %v511
        %v4306 = vunpack.c.l.b16 %v512
        %v4307 = vunpack.c.l.b16 %v513
        %v4308 = vpack.c.b16 %v4293, %v4292
        %v4309 = vpack.c.b16 %v4295, %v4294
        %v4310 = vpack.c.b16 %v4297, %v4296
        %v4311 = vpack.c.b16 %v4299, %v4298
        %v4312 = vpack.c.b16 %v4301, %v4300
        %v4313 = vpack.c.b16 %v4303, %v4302
        %v4314 = vpack.c.b16 %v4305, %v4304
        %v4315 = vpack.c.b16 %v4307, %v4306
        %4324 = vmatprep.subr.bf16.mxu0 0
        %4325 = vmatpush1.bf16.msra.mxu0 %v4308
        %4326 = vmatprep.subr.bf16.mxu0 0
        %4327 = vmatpush1.bf16.msra.mxu0 %v4309
        %4328 = vmatprep.subr.bf16.mxu0 0
        %4329 = vmatpush1.bf16.msra.mxu0 %v4310
        %4330 = vmatprep.subr.bf16.mxu0 0
        %4331 = vmatpush1.bf16.msra.mxu0 %v4311
        %4332 = vmatprep.subr.bf16.mxu0 0
        %4333 = vmatpush1.bf16.msra.mxu0 %v4312
        %4334 = vmatprep.subr.bf16.mxu0 0
        %4335 = vmatpush1.bf16.msra.mxu0 %v4313
        %4336 = vmatprep.subr.bf16.mxu0 0
        %4337 = vmatpush1.bf16.msra.mxu0 %v4314
        %4338 = vmatprep.subr.bf16.mxu0 0
        %4339 = vmatpush1.bf16.msra.mxu0 %v4315
        %4340 = vmatprep.subr.bf16.mxu0 0
        %4341 = vmatpush1.bf16.msra.mxu0 0
        %4342 = vmatprep.subr.bf16.mxu0 0
        %4343 = vmatpush1.bf16.msra.mxu0 0
        %4344 = vmatprep.subr.bf16.mxu0 0
        %4345 = vmatpush1.bf16.msra.mxu0 0
        %4346 = vmatprep.subr.bf16.mxu0 0
        %4347 = vmatpush1.bf16.msra.mxu0 0
        %4348 = vmatprep.subr.bf16.mxu0 0
        %4349 = vmatpush1.bf16.msra.mxu0 0
        %4350 = vmatprep.subr.bf16.mxu0 0
        %4351 = vmatpush1.bf16.msra.mxu0 0
        %4352 = vmatprep.subr.bf16.mxu0 0
        %4353 = vmatpush1.bf16.msra.mxu0 0
        %4354 = vmatprep.subr.bf16.mxu0 0
        %4355 = vmatpush1.bf16.msra.mxu0 0
        %4356 = vmatprep.mubr.bf16.mxu0 0
        %4357 = vmatmul.mubr.bf16.gmra.mrb[0].mxu0 %v3979
        %v4358 = vpop.f32.mrb[0].mxu0
        %v4359 = vadd.f32 %v4150, %v4358
        %v4360 = vpop.f32.mrb[0].mxu0
        %v4361 = vpop.f32.mrb[0].mxu0
        %v4362 = vadd.f32 %v4153, %v4361
        %v4363 = vpop.f32.mrb[0].mxu0
        %4364 = vmatprep.mubr.bf16.mxu0 0
        %4365 = vmatmul.mubr.bf16.gmra.mrb[0].mxu0 %v3980
        %v4366 = vpop.f32.mrb[0].mxu0
        %v4367 = vadd.f32 %v4158, %v4366
        %v4368 = vpop.f32.mrb[0].mxu0
        %v4369 = vpop.f32.mrb[0].mxu0
        %v4370 = vadd.f32 %v4161, %v4369
        %v4371 = vpop.f32.mrb[0].mxu0
        %4372 = vmatprep.mubr.bf16.mxu0 0
        %4373 = vmatmul.mubr.bf16.gmra.mrb[0].mxu0 %v3981
        %v4374 = vpop.f32.mrb[0].mxu0
        %v4375 = vadd.f32 %v4166, %v4374
        %v4376 = vpop.f32.mrb[0].mxu0
        %v4377 = vpop.f32.mrb[0].mxu0
        %v4378 = vadd.f32 %v4169, %v4377
        %v4379 = vpop.f32.mrb[0].mxu0
        %4380 = vmatprep.mubr.bf16.mxu0 0
        %4381 = vmatmul.mubr.bf16.gmra.mrb[0].mxu0 %v3982
        %v4382 = vpop.f32.mrb[0].mxu0
        %v4383 = vadd.f32 %v4174, %v4382
        %v4384 = vpop.f32.mrb[0].mxu0
        %v4385 = vpop.f32.mrb[0].mxu0
        %v4386 = vadd.f32 %v4177, %v4385
        %v4387 = vpop.f32.mrb[0].mxu0
        %4388 = vmatprep.mubr.bf16.mxu0 0
        %4389 = vmatmul.mubr.bf16.gmra.mrb[0].mxu0 %v3983
        %v4390 = vpop.f32.mrb[0].mxu0
        %v4391 = vadd.f32 %v4182, %v4390
        %v4392 = vpop.f32.mrb[0].mxu0
        %v4393 = vpop.f32.mrb[0].mxu0
        %v4394 = vadd.f32 %v4185, %v4393
        %v4395 = vpop.f32.mrb[0].mxu0
        %4396 = vmatprep.mubr.bf16.mxu0 0
        %4397 = vmatmul.mubr.bf16.gmra.mrb[0].mxu0 %v3984
        %v4398 = vpop.f32.mrb[0].mxu0
        %v4399 = vadd.f32 %v4190, %v4398
        %v4400 = vpop.f32.mrb[0].mxu0
        %v4401 = vpop.f32.mrb[0].mxu0
        %v4402 = vadd.f32 %v4193, %v4401
        %v4403 = vpop.f32.mrb[0].mxu0
        %4404 = vmatprep.mubr.bf16.mxu0 0
        %4405 = vmatmul.mubr.bf16.gmra.mrb[0].mxu0 %v3985
        %v4406 = vpop.f32.mrb[0].mxu0
        %v4407 = vadd.f32 %v4198, %v4406
        %v4408 = vpop.f32.mrb[0].mxu0
        %v4409 = vpop.f32.mrb[0].mxu0
        %v4410 = vadd.f32 %v4201, %v4409
        %v4411 = vpop.f32.mrb[0].mxu0
        %4412 = vmatprep.mubr.bf16.mxu0 0
        %4413 = vmatmul.mubr.bf16.gmra.mrb[0].mxu0 %v3986
        %v4414 = vpop.f32.mrb[0].mxu0
        %v4415 = vadd.f32 %v4206, %v4414
        %v4416 = vpop.f32.mrb[0].mxu0
        %v4417 = vpop.f32.mrb[0].mxu0
        %v4418 = vadd.f32 %v4209, %v4417
        %v4419 = vpop.f32.mrb[0].mxu0
        %4420 = vmatprep.mubr.bf16.mxu0 0
        %4421 = vmatmul.mubr.bf16.gmra.mrb[0].mxu0 %v3987
        %v4422 = vpop.f32.mrb[0].mxu0
        %v4423 = vadd.f32 %v4214, %v4422
        %v4424 = vpop.f32.mrb[0].mxu0
        %v4425 = vpop.f32.mrb[0].mxu0
        %v4426 = vadd.f32 %v4217, %v4425
        %v4427 = vpop.f32.mrb[0].mxu0
        %4428 = vmatprep.mubr.bf16.mxu0 0
        %4429 = vmatmul.mubr.bf16.gmra.mrb[0].mxu0 %v3988
        %v4430 = vpop.f32.mrb[0].mxu0
        %v4431 = vadd.f32 %v4222, %v4430
        %v4432 = vpop.f32.mrb[0].mxu0
        %v4433 = vpop.f32.mrb[0].mxu0
        %v4434 = vadd.f32 %v4225, %v4433
        %v4435 = vpop.f32.mrb[0].mxu0
        %4436 = vmatprep.mubr.bf16.mxu0 0
        %4437 = vmatmul.mubr.bf16.gmra.mrb[0].mxu0 %v3989
        %v4438 = vpop.f32.mrb[0].mxu0
        %v4439 = vadd.f32 %v4230, %v4438
        %v4440 = vpop.f32.mrb[0].mxu0
        %v4441 = vpop.f32.mrb[0].mxu0
        %v4442 = vadd.f32 %v4233, %v4441
        %v4443 = vpop.f32.mrb[0].mxu0
        %4444 = vmatprep.mubr.bf16.mxu0 0
        %4445 = vmatmul.mubr.bf16.gmra.mrb[0].mxu0 %v3990
        %v4446 = vpop.f32.mrb[0].mxu0
        %v4447 = vadd.f32 %v4238, %v4446
        %v4448 = vpop.f32.mrb[0].mxu0
        %v4449 = vpop.f32.mrb[0].mxu0
        %v4450 = vadd.f32 %v4241, %v4449
        %v4451 = vpop.f32.mrb[0].mxu0
        %4452 = vmatprep.mubr.bf16.mxu0 0
        %4453 = vmatmul.mubr.bf16.gmra.mrb[0].mxu0 %v3991
        %v4454 = vpop.f32.mrb[0].mxu0
        %v4455 = vadd.f32 %v4246, %v4454
        %v4456 = vpop.f32.mrb[0].mxu0
        %v4457 = vpop.f32.mrb[0].mxu0
        %v4458 = vadd.f32 %v4249, %v4457
        %v4459 = vpop.f32.mrb[0].mxu0
        %4460 = vmatprep.mubr.bf16.mxu0 0
        %4461 = vmatmul.mubr.bf16.gmra.mrb[0].mxu0 %v3992
        %v4462 = vpop.f32.mrb[0].mxu0
        %v4463 = vadd.f32 %v4254, %v4462
        %v4464 = vpop.f32.mrb[0].mxu0
        %v4465 = vpop.f32.mrb[0].mxu0
        %v4466 = vadd.f32 %v4257, %v4465
        %v4467 = vpop.f32.mrb[0].mxu0
        %4468 = vmatprep.mubr.bf16.mxu0 0
        %4469 = vmatmul.mubr.bf16.gmra.mrb[0].mxu0 %v3993
        %v4470 = vpop.f32.mrb[0].mxu0
        %v4471 = vadd.f32 %v4262, %v4470
        %v4472 = vpop.f32.mrb[0].mxu0
        %v4473 = vpop.f32.mrb[0].mxu0
        %v4474 = vadd.f32 %v4265, %v4473
        %v4475 = vpop.f32.mrb[0].mxu0
        %4476 = vmatprep.mubr.bf16.mxu0 0
        %4477 = vmatmul.mubr.bf16.gmra.mrb[0].mxu0 %v3994
        %v4478 = vpop.f32.mrb[0].mxu0
        %v4479 = vadd.f32 %v4270, %v4478
        %v4480 = vpop.f32.mrb[0].mxu0
        %v4481 = vpop.f32.mrb[0].mxu0
        %v4482 = vadd.f32 %v4273, %v4481
        %v4483 = vpop.f32.mrb[0].mxu0
        %4484 = vdwg.mxu0
        %v4501 = vunpack.c.l.b16 %v530
        %v4502 = vunpack.c.l.b16 %v531
        %v4503 = vunpack.c.l.b16 %v532
        %v4504 = vunpack.c.l.b16 %v533
        %v4505 = vunpack.c.l.b16 %v534
        %v4506 = vunpack.c.l.b16 %v535
        %v4507 = vunpack.c.l.b16 %v536
        %v4508 = vunpack.c.l.b16 %v537
        %v4509 = vunpack.c.l.b16 %v538
        %v4510 = vunpack.c.l.b16 %v539
        %v4511 = vunpack.c.l.b16 %v540
        %v4512 = vunpack.c.l.b16 %v541
        %v4513 = vunpack.c.l.b16 %v542
        %v4514 = vunpack.c.l.b16 %v543
        %v4515 = vunpack.c.l.b16 %v544
        %v4516 = vunpack.c.l.b16 %v545
        %v4517 = vpack.c.b16 %v4502, %v4501
        %v4518 = vpack.c.b16 %v4504, %v4503
        %v4519 = vpack.c.b16 %v4506, %v4505
        %v4520 = vpack.c.b16 %v4508, %v4507
        %v4521 = vpack.c.b16 %v4510, %v4509
        %v4522 = vpack.c.b16 %v4512, %v4511
        %v4523 = vpack.c.b16 %v4514, %v4513
        %v4524 = vpack.c.b16 %v4516, %v4515
        %4533 = vmatprep.subr.bf16.mxu0 0
        %4534 = vmatpush1.bf16.msra.mxu0 %v4517
        %4535 = vmatprep.subr.bf16.mxu0 0
        %4536 = vmatpush1.bf16.msra.mxu0 %v4518
        %4537 = vmatprep.subr.bf16.mxu0 0
        %4538 = vmatpush1.bf16.msra.mxu0 %v4519
        %4539 = vmatprep.subr.bf16.mxu0 0
        %4540 = vmatpush1.bf16.msra.mxu0 %v4520
        %4541 = vmatprep.subr.bf16.mxu0 0
        %4542 = vmatpush1.bf16.msra.mxu0 %v4521
        %4543 = vmatprep.subr.bf16.mxu0 0
        %4544 = vmatpush1.bf16.msra.mxu0 %v4522
        %4545 = vmatprep.subr.bf16.mxu0 0
        %4546 = vmatpush1.bf16.msra.mxu0 %v4523
        %4547 = vmatprep.subr.bf16.mxu0 0
        %4548 = vmatpush1.bf16.msra.mxu0 %v4524
        %4549 = vmatprep.subr.bf16.mxu0 0
        %4550 = vmatpush1.bf16.msra.mxu0 0
        %4551 = vmatprep.subr.bf16.mxu0 0
        %4552 = vmatpush1.bf16.msra.mxu0 0
        %4553 = vmatprep.subr.bf16.mxu0 0
        %4554 = vmatpush1.bf16.msra.mxu0 0
        %4555 = vmatprep.subr.bf16.mxu0 0
        %4556 = vmatpush1.bf16.msra.mxu0 0
        %4557 = vmatprep.subr.bf16.mxu0 0
        %4558 = vmatpush1.bf16.msra.mxu0 0
        %4559 = vmatprep.subr.bf16.mxu0 0
        %4560 = vmatpush1.bf16.msra.mxu0 0
        %4561 = vmatprep.subr.bf16.mxu0 0
        %4562 = vmatpush1.bf16.msra.mxu0 0
        %4563 = vmatprep.subr.bf16.mxu0 0
        %4564 = vmatpush1.bf16.msra.mxu0 0
        %4565 = vmatprep.mubr.bf16.mxu0 0
        %4566 = vmatmul.mubr.bf16.gmra.mrb[0].mxu0 %v4049
        %v4567 = vpop.f32.mrb[0].mxu0
        %v4568 = vadd.f32 0.0, %v4567
        %v4569 = vpop.f32.mrb[0].mxu0
        %v4570 = vpop.f32.mrb[0].mxu0
        %v4571 = vadd.f32 0.0, %v4570
        %v4572 = vpop.f32.mrb[0].mxu0
        %4573 = vmatprep.mubr.bf16.mxu0 0
        %4574 = vmatmul.mubr.bf16.gmra.mrb[0].mxu0 %v4050
        %v4575 = vpop.f32.mrb[0].mxu0
        %v4576 = vadd.f32 0.0, %v4575
        %v4577 = vpop.f32.mrb[0].mxu0
        %v4578 = vpop.f32.mrb[0].mxu0
        %v4579 = vadd.f32 0.0, %v4578
        %v4580 = vpop.f32.mrb[0].mxu0
        %4581 = vmatprep.mubr.bf16.mxu0 0
        %4582 = vmatmul.mubr.bf16.gmra.mrb[0].mxu0 %v4051
        %v4583 = vpop.f32.mrb[0].mxu0
        %v4584 = vadd.f32 0.0, %v4583
        %v4585 = vpop.f32.mrb[0].mxu0
        %v4586 = vpop.f32.mrb[0].mxu0
        %v4587 = vadd.f32 0.0, %v4586
        %v4588 = vpop.f32.mrb[0].mxu0
        %4589 = vmatprep.mubr.bf16.mxu0 0
        %4590 = vmatmul.mubr.bf16.gmra.mrb[0].mxu0 %v4052
        %v4591 = vpop.f32.mrb[0].mxu0
        %v4592 = vadd.f32 0.0, %v4591
        %v4593 = vpop.f32.mrb[0].mxu0
        %v4594 = vpop.f32.mrb[0].mxu0
        %v4595 = vadd.f32 0.0, %v4594
        %v4596 = vpop.f32.mrb[0].mxu0
        %4597 = vmatprep.mubr.bf16.mxu0 0
        %4598 = vmatmul.mubr.bf16.gmra.mrb[0].mxu0 %v4053
        %v4599 = vpop.f32.mrb[0].mxu0
        %v4600 = vadd.f32 0.0, %v4599
        %v4601 = vpop.f32.mrb[0].mxu0
        %v4602 = vpop.f32.mrb[0].mxu0
        %v4603 = vadd.f32 0.0, %v4602
        %v4604 = vpop.f32.mrb[0].mxu0
        %4605 = vmatprep.mubr.bf16.mxu0 0
        %4606 = vmatmul.mubr.bf16.gmra.mrb[0].mxu0 %v4054
        %v4607 = vpop.f32.mrb[0].mxu0
        %v4608 = vadd.f32 0.0, %v4607
        %v4609 = vpop.f32.mrb[0].mxu0
        %v4610 = vpop.f32.mrb[0].mxu0
        %v4611 = vadd.f32 0.0, %v4610
        %v4612 = vpop.f32.mrb[0].mxu0
        %4613 = vmatprep.mubr.bf16.mxu0 0
        %4614 = vmatmul.mubr.bf16.gmra.mrb[0].mxu0 %v4055
        %v4615 = vpop.f32.mrb[0].mxu0
        %v4616 = vadd.f32 0.0, %v4615
        %v4617 = vpop.f32.mrb[0].mxu0
        %v4618 = vpop.f32.mrb[0].mxu0
        %v4619 = vadd.f32 0.0, %v4618
        %v4620 = vpop.f32.mrb[0].mxu0
        %4621 = vmatprep.mubr.bf16.mxu0 0
        %4622 = vmatmul.mubr.bf16.gmra.mrb[0].mxu0 %v4056
        %v4623 = vpop.f32.mrb[0].mxu0
        %v4624 = vadd.f32 0.0, %v4623
        %v4625 = vpop.f32.mrb[0].mxu0
        %v4626 = vpop.f32.mrb[0].mxu0
        %v4627 = vadd.f32 0.0, %v4626
        %v4628 = vpop.f32.mrb[0].mxu0
        %4629 = vmatprep.mubr.bf16.mxu0 0
        %4630 = vmatmul.mubr.bf16.gmra.mrb[0].mxu0 %v4057
        %v4631 = vpop.f32.mrb[0].mxu0
        %v4632 = vadd.f32 0.0, %v4631
        %v4633 = vpop.f32.mrb[0].mxu0
        %v4634 = vpop.f32.mrb[0].mxu0
        %v4635 = vadd.f32 0.0, %v4634
        %v4636 = vpop.f32.mrb[0].mxu0
        %4637 = vmatprep.mubr.bf16.mxu0 0
        %4638 = vmatmul.mubr.bf16.gmra.mrb[0].mxu0 %v4058
        %v4639 = vpop.f32.mrb[0].mxu0
        %v4640 = vadd.f32 0.0, %v4639
        %v4641 = vpop.f32.mrb[0].mxu0
        %v4642 = vpop.f32.mrb[0].mxu0
        %v4643 = vadd.f32 0.0, %v4642
        %v4644 = vpop.f32.mrb[0].mxu0
        %4645 = vmatprep.mubr.bf16.mxu0 0
        %4646 = vmatmul.mubr.bf16.gmra.mrb[0].mxu0 %v4059
        %v4647 = vpop.f32.mrb[0].mxu0
        %v4648 = vadd.f32 0.0, %v4647
        %v4649 = vpop.f32.mrb[0].mxu0
        %v4650 = vpop.f32.mrb[0].mxu0
        %v4651 = vadd.f32 0.0, %v4650
        %v4652 = vpop.f32.mrb[0].mxu0
        %4653 = vmatprep.mubr.bf16.mxu0 0
        %4654 = vmatmul.mubr.bf16.gmra.mrb[0].mxu0 %v4060
        %v4655 = vpop.f32.mrb[0].mxu0
        %v4656 = vadd.f32 0.0, %v4655
        %v4657 = vpop.f32.mrb[0].mxu0
        %v4658 = vpop.f32.mrb[0].mxu0
        %v4659 = vadd.f32 0.0, %v4658
        %v4660 = vpop.f32.mrb[0].mxu0
        %4661 = vmatprep.mubr.bf16.mxu0 0
        %4662 = vmatmul.mubr.bf16.gmra.mrb[0].mxu0 %v4061
        %v4663 = vpop.f32.mrb[0].mxu0
        %v4664 = vadd.f32 0.0, %v4663
        %v4665 = vpop.f32.mrb[0].mxu0
        %v4666 = vpop.f32.mrb[0].mxu0
        %v4667 = vadd.f32 0.0, %v4666
        %v4668 = vpop.f32.mrb[0].mxu0
        %4669 = vmatprep.mubr.bf16.mxu0 0
        %4670 = vmatmul.mubr.bf16.gmra.mrb[0].mxu0 %v4062
        %v4671 = vpop.f32.mrb[0].mxu0
        %v4672 = vadd.f32 0.0, %v4671
        %v4673 = vpop.f32.mrb[0].mxu0
        %v4674 = vpop.f32.mrb[0].mxu0
        %v4675 = vadd.f32 0.0, %v4674
        %v4676 = vpop.f32.mrb[0].mxu0
        %4677 = vmatprep.mubr.bf16.mxu0 0
        %4678 = vmatmul.mubr.bf16.gmra.mrb[0].mxu0 %v4063
        %v4679 = vpop.f32.mrb[0].mxu0
        %v4680 = vadd.f32 0.0, %v4679
        %v4681 = vpop.f32.mrb[0].mxu0
        %v4682 = vpop.f32.mrb[0].mxu0
        %v4683 = vadd.f32 0.0, %v4682
        %v4684 = vpop.f32.mrb[0].mxu0
        %4685 = vmatprep.mubr.bf16.mxu0 0
        %4686 = vmatmul.mubr.bf16.gmra.mrb[0].mxu0 %v4064
        %v4687 = vpop.f32.mrb[0].mxu0
        %v4688 = vadd.f32 0.0, %v4687
        %v4689 = vpop.f32.mrb[0].mxu0
        %v4690 = vpop.f32.mrb[0].mxu0
        %v4691 = vadd.f32 0.0, %v4690
        %v4692 = vpop.f32.mrb[0].mxu0
        %4693 = vdwg.mxu0
        %v4694 = vadd.f32 %v4359, %v4568
        %v4695 = vadd.f32 %v4362, %v4571
        %v4696 = vadd.f32 %v4367, %v4576
        %v4697 = vadd.f32 %v4370, %v4579
        %v4698 = vadd.f32 %v4375, %v4584
        %v4699 = vadd.f32 %v4378, %v4587
        %v4700 = vadd.f32 %v4383, %v4592
        %v4701 = vadd.f32 %v4386, %v4595
        %v4702 = vadd.f32 %v4391, %v4600
        %v4703 = vadd.f32 %v4394, %v4603
        %v4704 = vadd.f32 %v4399, %v4608
        %v4705 = vadd.f32 %v4402, %v4611
        %v4706 = vadd.f32 %v4407, %v4616
        %v4707 = vadd.f32 %v4410, %v4619
        %v4708 = vadd.f32 %v4415, %v4624
        %v4709 = vadd.f32 %v4418, %v4627
        %v4710 = vadd.f32 %v4423, %v4632
        %v4711 = vadd.f32 %v4426, %v4635
        %v4712 = vadd.f32 %v4431, %v4640
        %v4713 = vadd.f32 %v4434, %v4643
        %v4714 = vadd.f32 %v4439, %v4648
        %v4715 = vadd.f32 %v4442, %v4651
        %v4716 = vadd.f32 %v4447, %v4656
        %v4717 = vadd.f32 %v4450, %v4659
        %v4718 = vadd.f32 %v4455, %v4664
        %v4719 = vadd.f32 %v4458, %v4667
        %v4720 = vadd.f32 %v4463, %v4672
        %v4721 = vadd.f32 %v4466, %v4675
        %v4722 = vadd.f32 %v4471, %v4680
        %v4723 = vadd.f32 %v4474, %v4683
        %v4724 = vadd.f32 %v4479, %v4688
        %v4725 = vadd.f32 %v4482, %v4691
        %v4742 = vunpack.c.l.b16 %v546
        %v4743 = vunpack.c.l.b16 %v547
        %v4744 = vunpack.c.l.b16 %v548
        %v4745 = vunpack.c.l.b16 %v549
        %v4746 = vunpack.c.l.b16 %v550
        %v4747 = vunpack.c.l.b16 %v551
        %v4748 = vunpack.c.l.b16 %v552
        %v4749 = vunpack.c.l.b16 %v553
        %v4750 = vunpack.c.l.b16 %v554
        %v4751 = vunpack.c.l.b16 %v555
        %v4752 = vunpack.c.l.b16 %v556
        %v4753 = vunpack.c.l.b16 %v557
        %v4754 = vunpack.c.l.b16 %v558
        %v4755 = vunpack.c.l.b16 %v559
        %v4756 = vunpack.c.l.b16 %v560
        %v4757 = vunpack.c.l.b16 %v561
        %v4758 = vpack.c.b16 %v4743, %v4742
        %v4759 = vpack.c.b16 %v4745, %v4744
        %v4760 = vpack.c.b16 %v4747, %v4746
        %v4761 = vpack.c.b16 %v4749, %v4748
        %v4762 = vpack.c.b16 %v4751, %v4750
        %v4763 = vpack.c.b16 %v4753, %v4752
        %v4764 = vpack.c.b16 %v4755, %v4754
        %v4765 = vpack.c.b16 %v4757, %v4756
        %4774 = vmatprep.subr.bf16.mxu0 0
        %4775 = vmatpush1.bf16.msra.mxu0 %v4758
        %4776 = vmatprep.subr.bf16.mxu0 0
        %4777 = vmatpush1.bf16.msra.mxu0 %v4759
        %4778 = vmatprep.subr.bf16.mxu0 0
        %4779 = vmatpush1.bf16.msra.mxu0 %v4760
        %4780 = vmatprep.subr.bf16.mxu0 0
        %4781 = vmatpush1.bf16.msra.mxu0 %v4761
        %4782 = vmatprep.subr.bf16.mxu0 0
        %4783 = vmatpush1.bf16.msra.mxu0 %v4762
        %4784 = vmatprep.subr.bf16.mxu0 0
        %4785 = vmatpush1.bf16.msra.mxu0 %v4763
        %4786 = vmatprep.subr.bf16.mxu0 0
        %4787 = vmatpush1.bf16.msra.mxu0 %v4764
        %4788 = vmatprep.subr.bf16.mxu0 0
        %4789 = vmatpush1.bf16.msra.mxu0 %v4765
        %4790 = vmatprep.subr.bf16.mxu0 0
        %4791 = vmatpush1.bf16.msra.mxu0 0
        %4792 = vmatprep.subr.bf16.mxu0 0
        %4793 = vmatpush1.bf16.msra.mxu0 0
        %4794 = vmatprep.subr.bf16.mxu0 0
        %4795 = vmatpush1.bf16.msra.mxu0 0
        %4796 = vmatprep.subr.bf16.mxu0 0
        %4797 = vmatpush1.bf16.msra.mxu0 0
        %4798 = vmatprep.subr.bf16.mxu0 0
        %4799 = vmatpush1.bf16.msra.mxu0 0
        %4800 = vmatprep.subr.bf16.mxu0 0
        %4801 = vmatpush1.bf16.msra.mxu0 0
        %4802 = vmatprep.subr.bf16.mxu0 0
        %4803 = vmatpush1.bf16.msra.mxu0 0
        %4804 = vmatprep.subr.bf16.mxu0 0
        %4805 = vmatpush1.bf16.msra.mxu0 0
        %4806 = vmatprep.mubr.bf16.mxu0 0
        %4807 = vmatmul.mubr.bf16.gmra.mrb[0].mxu0 %v3980
        %v4808 = vpop.f32.mrb[0].mxu0
        %v4809 = vadd.f32 0.0, %v4808
        %v4810 = vpop.f32.mrb[0].mxu0
        %v4811 = vpop.f32.mrb[0].mxu0
        %v4812 = vadd.f32 0.0, %v4811
        %v4813 = vpop.f32.mrb[0].mxu0
        %4814 = vmatprep.mubr.bf16.mxu0 0
        %4815 = vmatmul.mubr.bf16.gmra.mrb[0].mxu0 %v3981
        %v4816 = vpop.f32.mrb[0].mxu0
        %v4817 = vadd.f32 0.0, %v4816
        %v4818 = vpop.f32.mrb[0].mxu0
        %v4819 = vpop.f32.mrb[0].mxu0
        %v4820 = vadd.f32 0.0, %v4819
        %v4821 = vpop.f32.mrb[0].mxu0
        %4822 = vmatprep.mubr.bf16.mxu0 0
        %4823 = vmatmul.mubr.bf16.gmra.mrb[0].mxu0 %v3982
        %v4824 = vpop.f32.mrb[0].mxu0
        %v4825 = vadd.f32 0.0, %v4824
        %v4826 = vpop.f32.mrb[0].mxu0
        %v4827 = vpop.f32.mrb[0].mxu0
        %v4828 = vadd.f32 0.0, %v4827
        %v4829 = vpop.f32.mrb[0].mxu0
        %4830 = vmatprep.mubr.bf16.mxu0 0
        %4831 = vmatmul.mubr.bf16.gmra.mrb[0].mxu0 %v3983
        %v4832 = vpop.f32.mrb[0].mxu0
        %v4833 = vadd.f32 0.0, %v4832
        %v4834 = vpop.f32.mrb[0].mxu0
        %v4835 = vpop.f32.mrb[0].mxu0
        %v4836 = vadd.f32 0.0, %v4835
        %v4837 = vpop.f32.mrb[0].mxu0
        %4838 = vmatprep.mubr.bf16.mxu0 0
        %4839 = vmatmul.mubr.bf16.gmra.mrb[0].mxu0 %v3984
        %v4840 = vpop.f32.mrb[0].mxu0
        %v4841 = vadd.f32 0.0, %v4840
        %v4842 = vpop.f32.mrb[0].mxu0
        %v4843 = vpop.f32.mrb[0].mxu0
        %v4844 = vadd.f32 0.0, %v4843
        %v4845 = vpop.f32.mrb[0].mxu0
        %4846 = vmatprep.mubr.bf16.mxu0 0
        %4847 = vmatmul.mubr.bf16.gmra.mrb[0].mxu0 %v3985
        %v4848 = vpop.f32.mrb[0].mxu0
        %v4849 = vadd.f32 0.0, %v4848
        %v4850 = vpop.f32.mrb[0].mxu0
        %v4851 = vpop.f32.mrb[0].mxu0
        %v4852 = vadd.f32 0.0, %v4851
        %v4853 = vpop.f32.mrb[0].mxu0
        %4854 = vmatprep.mubr.bf16.mxu0 0
        %4855 = vmatmul.mubr.bf16.gmra.mrb[0].mxu0 %v3986
        %v4856 = vpop.f32.mrb[0].mxu0
        %v4857 = vadd.f32 0.0, %v4856
        %v4858 = vpop.f32.mrb[0].mxu0
        %v4859 = vpop.f32.mrb[0].mxu0
        %v4860 = vadd.f32 0.0, %v4859
        %v4861 = vpop.f32.mrb[0].mxu0
        %4862 = vmatprep.mubr.bf16.mxu0 0
        %4863 = vmatmul.mubr.bf16.gmra.mrb[0].mxu0 %v3987
        %v4864 = vpop.f32.mrb[0].mxu0
        %v4865 = vadd.f32 0.0, %v4864
        %v4866 = vpop.f32.mrb[0].mxu0
        %v4867 = vpop.f32.mrb[0].mxu0
        %v4868 = vadd.f32 0.0, %v4867
        %v4869 = vpop.f32.mrb[0].mxu0
        %4870 = vmatprep.mubr.bf16.mxu0 0
        %4871 = vmatmul.mubr.bf16.gmra.mrb[0].mxu0 %v3988
        %v4872 = vpop.f32.mrb[0].mxu0
        %v4873 = vadd.f32 0.0, %v4872
        %v4874 = vpop.f32.mrb[0].mxu0
        %v4875 = vpop.f32.mrb[0].mxu0
        %v4876 = vadd.f32 0.0, %v4875
        %v4877 = vpop.f32.mrb[0].mxu0
        %4878 = vmatprep.mubr.bf16.mxu0 0
        %4879 = vmatmul.mubr.bf16.gmra.mrb[0].mxu0 %v3989
        %v4880 = vpop.f32.mrb[0].mxu0
        %v4881 = vadd.f32 0.0, %v4880
        %v4882 = vpop.f32.mrb[0].mxu0
        %v4883 = vpop.f32.mrb[0].mxu0
        %v4884 = vadd.f32 0.0, %v4883
        %v4885 = vpop.f32.mrb[0].mxu0
        %4886 = vmatprep.mubr.bf16.mxu0 0
        %4887 = vmatmul.mubr.bf16.gmra.mrb[0].mxu0 %v3990
        %v4888 = vpop.f32.mrb[0].mxu0
        %v4889 = vadd.f32 0.0, %v4888
        %v4890 = vpop.f32.mrb[0].mxu0
        %v4891 = vpop.f32.mrb[0].mxu0
        %v4892 = vadd.f32 0.0, %v4891
        %v4893 = vpop.f32.mrb[0].mxu0
        %4894 = vmatprep.mubr.bf16.mxu0 0
        %4895 = vmatmul.mubr.bf16.gmra.mrb[0].mxu0 %v3991
        %v4896 = vpop.f32.mrb[0].mxu0
        %v4897 = vadd.f32 0.0, %v4896
        %v4898 = vpop.f32.mrb[0].mxu0
        %v4899 = vpop.f32.mrb[0].mxu0
        %v4900 = vadd.f32 0.0, %v4899
        %v4901 = vpop.f32.mrb[0].mxu0
        %4902 = vmatprep.mubr.bf16.mxu0 0
        %4903 = vmatmul.mubr.bf16.gmra.mrb[0].mxu0 %v3992
        %v4904 = vpop.f32.mrb[0].mxu0
        %v4905 = vadd.f32 0.0, %v4904
        %v4906 = vpop.f32.mrb[0].mxu0
        %v4907 = vpop.f32.mrb[0].mxu0
        %v4908 = vadd.f32 0.0, %v4907
        %v4909 = vpop.f32.mrb[0].mxu0
        %4910 = vmatprep.mubr.bf16.mxu0 0
        %4911 = vmatmul.mubr.bf16.gmra.mrb[0].mxu0 %v3993
        %v4912 = vpop.f32.mrb[0].mxu0
        %v4913 = vadd.f32 0.0, %v4912
        %v4914 = vpop.f32.mrb[0].mxu0
        %v4915 = vpop.f32.mrb[0].mxu0
        %v4916 = vadd.f32 0.0, %v4915
        %v4917 = vpop.f32.mrb[0].mxu0
        %4918 = vmatprep.mubr.bf16.mxu0 0
        %4919 = vmatmul.mubr.bf16.gmra.mrb[0].mxu0 %v3994
        %v4920 = vpop.f32.mrb[0].mxu0
        %v4921 = vadd.f32 0.0, %v4920
        %v4922 = vpop.f32.mrb[0].mxu0
        %v4923 = vpop.f32.mrb[0].mxu0
        %v4924 = vadd.f32 0.0, %v4923
        %v4925 = vpop.f32.mrb[0].mxu0
        %4926 = vmatprep.mubr.bf16.mxu0 0
        %4927 = vmatmul.mubr.bf16.gmra.mrb[0].mxu0 %v3995
        %v4928 = vpop.f32.mrb[0].mxu0
        %v4929 = vadd.f32 0.0, %v4928
        %v4930 = vpop.f32.mrb[0].mxu0
        %v4931 = vpop.f32.mrb[0].mxu0
        %v4932 = vadd.f32 0.0, %v4931
        %v4933 = vpop.f32.mrb[0].mxu0
        %4934 = vdwg.mxu0
        %v4935 = vadd.f32 %v4694, %v4809
        %v4936 = vadd.f32 %v4695, %v4812
        %v4937 = vadd.f32 %v4696, %v4817
        %v4938 = vadd.f32 %v4697, %v4820
        %v4939 = vadd.f32 %v4698, %v4825
        %v4940 = vadd.f32 %v4699, %v4828
        %v4941 = vadd.f32 %v4700, %v4833
        %v4942 = vadd.f32 %v4701, %v4836
        %v4943 = vadd.f32 %v4702, %v4841
        %v4944 = vadd.f32 %v4703, %v4844
        %v4945 = vadd.f32 %v4704, %v4849
        %v4946 = vadd.f32 %v4705, %v4852
        %v4947 = vadd.f32 %v4706, %v4857
        %v4948 = vadd.f32 %v4707, %v4860
        %v4949 = vadd.f32 %v4708, %v4865
        %v4950 = vadd.f32 %v4709, %v4868
        %v4951 = vadd.f32 %v4710, %v4873
        %v4952 = vadd.f32 %v4711, %v4876
        %v4953 = vadd.f32 %v4712, %v4881
        %v4954 = vadd.f32 %v4713, %v4884
        %v4955 = vadd.f32 %v4714, %v4889
        %v4956 = vadd.f32 %v4715, %v4892
        %v4957 = vadd.f32 %v4716, %v4897
        %v4958 = vadd.f32 %v4717, %v4900
        %v4959 = vadd.f32 %v4718, %v4905
        %v4960 = vadd.f32 %v4719, %v4908
        %v4961 = vadd.f32 %v4720, %v4913
        %v4962 = vadd.f32 %v4721, %v4916
        %v4963 = vadd.f32 %v4722, %v4921
        %v4964 = vadd.f32 %v4723, %v4924
        %v4965 = vadd.f32 %v4724, %v4929
        %v4966 = vadd.f32 %v4725, %v4932
        %v4983 = vunpack.c.l.b16 %v562
        %v4984 = vunpack.c.l.b16 %v563
        %v4985 = vunpack.c.l.b16 %v564
        %v4986 = vunpack.c.l.b16 %v565
        %v4987 = vunpack.c.l.b16 %v566
        %v4988 = vunpack.c.l.b16 %v567
        %v4989 = vunpack.c.l.b16 %v568
        %v4990 = vunpack.c.l.b16 %v569
        %v4991 = vunpack.c.l.b16 %v570
        %v4992 = vunpack.c.l.b16 %v571
        %v4993 = vunpack.c.l.b16 %v572
        %v4994 = vunpack.c.l.b16 %v573
        %v4995 = vunpack.c.l.b16 %v574
        %v4996 = vunpack.c.l.b16 %v575
        %v4997 = vunpack.c.l.b16 %v576
        %v4998 = vunpack.c.l.b16 %v577
        %v4999 = vpack.c.b16 %v4984, %v4983
        %v5000 = vpack.c.b16 %v4986, %v4985
        %v5001 = vpack.c.b16 %v4988, %v4987
        %v5002 = vpack.c.b16 %v4990, %v4989
        %v5003 = vpack.c.b16 %v4992, %v4991
        %v5004 = vpack.c.b16 %v4994, %v4993
        %v5005 = vpack.c.b16 %v4996, %v4995
        %v5006 = vpack.c.b16 %v4998, %v4997
        %5015 = vmatprep.subr.bf16.mxu0 0
        %5016 = vmatpush1.bf16.msra.mxu0 %v4999
        %5017 = vmatprep.subr.bf16.mxu0 0
        %5018 = vmatpush1.bf16.msra.mxu0 %v5000
        %5019 = vmatprep.subr.bf16.mxu0 0
        %5020 = vmatpush1.bf16.msra.mxu0 %v5001
        %5021 = vmatprep.subr.bf16.mxu0 0
        %5022 = vmatpush1.bf16.msra.mxu0 %v5002
        %5023 = vmatprep.subr.bf16.mxu0 0
        %5024 = vmatpush1.bf16.msra.mxu0 %v5003
        %5025 = vmatprep.subr.bf16.mxu0 0
        %5026 = vmatpush1.bf16.msra.mxu0 %v5004
        %5027 = vmatprep.subr.bf16.mxu0 0
        %5028 = vmatpush1.bf16.msra.mxu0 %v5005
        %5029 = vmatprep.subr.bf16.mxu0 0
        %5030 = vmatpush1.bf16.msra.mxu0 %v5006
        %5031 = vmatprep.subr.bf16.mxu0 0
        %5032 = vmatpush1.bf16.msra.mxu0 0
        %5033 = vmatprep.subr.bf16.mxu0 0
        %5034 = vmatpush1.bf16.msra.mxu0 0
        %5035 = vmatprep.subr.bf16.mxu0 0
        %5036 = vmatpush1.bf16.msra.mxu0 0
        %5037 = vmatprep.subr.bf16.mxu0 0
        %5038 = vmatpush1.bf16.msra.mxu0 0
        %5039 = vmatprep.subr.bf16.mxu0 0
        %5040 = vmatpush1.bf16.msra.mxu0 0
        %5041 = vmatprep.subr.bf16.mxu0 0
        %5042 = vmatpush1.bf16.msra.mxu0 0
        %5043 = vmatprep.subr.bf16.mxu0 0
        %5044 = vmatpush1.bf16.msra.mxu0 0
        %5045 = vmatprep.subr.bf16.mxu0 0
        %5046 = vmatpush1.bf16.msra.mxu0 0
        %5047 = vmatprep.mubr.bf16.mxu0 0
        %5048 = vmatmul.mubr.bf16.gmra.mrb[0].mxu0 %v3998
        %v5049 = vpop.f32.mrb[0].mxu0
        %v5050 = vadd.f32 0.0, %v5049
        %v5051 = vpop.f32.mrb[0].mxu0
        %v5052 = vpop.f32.mrb[0].mxu0
        %v5053 = vadd.f32 0.0, %v5052
        %v5054 = vpop.f32.mrb[0].mxu0
        %5055 = vmatprep.mubr.bf16.mxu0 0
        %5056 = vmatmul.mubr.bf16.gmra.mrb[0].mxu0 %v3997
        %v5057 = vpop.f32.mrb[0].mxu0
        %v5058 = vadd.f32 0.0, %v5057
        %v5059 = vpop.f32.mrb[0].mxu0
        %v5060 = vpop.f32.mrb[0].mxu0
        %v5061 = vadd.f32 0.0, %v5060
        %v5062 = vpop.f32.mrb[0].mxu0
        %5063 = vmatprep.mubr.bf16.mxu0 0
        %5064 = vmatmul.mubr.bf16.gmra.mrb[0].mxu0 %v3999
        %v5065 = vpop.f32.mrb[0].mxu0
        %v5066 = vadd.f32 0.0, %v5065
        %v5067 = vpop.f32.mrb[0].mxu0
        %v5068 = vpop.f32.mrb[0].mxu0
        %v5069 = vadd.f32 0.0, %v5068
        %v5070 = vpop.f32.mrb[0].mxu0
        %5071 = vmatprep.mubr.bf16.mxu0 0
        %5072 = vmatmul.mubr.bf16.gmra.mrb[0].mxu0 %v4000
        %v5073 = vpop.f32.mrb[0].mxu0
        %v5074 = vadd.f32 0.0, %v5073
        %v5075 = vpop.f32.mrb[0].mxu0
        %v5076 = vpop.f32.mrb[0].mxu0
        %v5077 = vadd.f32 0.0, %v5076
        %v5078 = vpop.f32.mrb[0].mxu0
        %5079 = vmatprep.mubr.bf16.mxu0 0
        %5080 = vmatmul.mubr.bf16.gmra.mrb[0].mxu0 %v4001
        %v5081 = vpop.f32.mrb[0].mxu0
        %v5082 = vadd.f32 0.0, %v5081
        %v5083 = vpop.f32.mrb[0].mxu0
        %v5084 = vpop.f32.mrb[0].mxu0
        %v5085 = vadd.f32 0.0, %v5084
        %v5086 = vpop.f32.mrb[0].mxu0
        %5087 = vmatprep.mubr.bf16.mxu0 0
        %5088 = vmatmul.mubr.bf16.gmra.mrb[0].mxu0 %v4002
        %v5089 = vpop.f32.mrb[0].mxu0
        %v5090 = vadd.f32 0.0, %v5089
        %v5091 = vpop.f32.mrb[0].mxu0
        %v5092 = vpop.f32.mrb[0].mxu0
        %v5093 = vadd.f32 0.0, %v5092
        %v5094 = vpop.f32.mrb[0].mxu0
        %5095 = vmatprep.mubr.bf16.mxu0 0
        %5096 = vmatmul.mubr.bf16.gmra.mrb[0].mxu0 %v4003
        %v5097 = vpop.f32.mrb[0].mxu0
        %v5098 = vadd.f32 0.0, %v5097
        %v5099 = vpop.f32.mrb[0].mxu0
        %v5100 = vpop.f32.mrb[0].mxu0
        %v5101 = vadd.f32 0.0, %v5100
        %v5102 = vpop.f32.mrb[0].mxu0
        %5103 = vmatprep.mubr.bf16.mxu0 0
        %5104 = vmatmul.mubr.bf16.gmra.mrb[0].mxu0 %v4004
        %v5105 = vpop.f32.mrb[0].mxu0
        %v5106 = vadd.f32 0.0, %v5105
        %v5107 = vpop.f32.mrb[0].mxu0
        %v5108 = vpop.f32.mrb[0].mxu0
        %v5109 = vadd.f32 0.0, %v5108
        %v5110 = vpop.f32.mrb[0].mxu0
        %5111 = vmatprep.mubr.bf16.mxu0 0
        %5112 = vmatmul.mubr.bf16.gmra.mrb[0].mxu0 %v4005
        %v5113 = vpop.f32.mrb[0].mxu0
        %v5114 = vadd.f32 0.0, %v5113
        %v5115 = vpop.f32.mrb[0].mxu0
        %v5116 = vpop.f32.mrb[0].mxu0
        %v5117 = vadd.f32 0.0, %v5116
        %v5118 = vpop.f32.mrb[0].mxu0
        %5119 = vmatprep.mubr.bf16.mxu0 0
        %5120 = vmatmul.mubr.bf16.gmra.mrb[0].mxu0 %v4006
        %v5121 = vpop.f32.mrb[0].mxu0
        %v5122 = vadd.f32 0.0, %v5121
        %v5123 = vpop.f32.mrb[0].mxu0
        %v5124 = vpop.f32.mrb[0].mxu0
        %v5125 = vadd.f32 0.0, %v5124
        %v5126 = vpop.f32.mrb[0].mxu0
        %5127 = vmatprep.mubr.bf16.mxu0 0
        %5128 = vmatmul.mubr.bf16.gmra.mrb[0].mxu0 %v4007
        %v5129 = vpop.f32.mrb[0].mxu0
        %v5130 = vadd.f32 0.0, %v5129
        %v5131 = vpop.f32.mrb[0].mxu0
        %v5132 = vpop.f32.mrb[0].mxu0
        %v5133 = vadd.f32 0.0, %v5132
        %v5134 = vpop.f32.mrb[0].mxu0
        %5135 = vmatprep.mubr.bf16.mxu0 0
        %5136 = vmatmul.mubr.bf16.gmra.mrb[0].mxu0 %v4008
        %v5137 = vpop.f32.mrb[0].mxu0
        %v5138 = vadd.f32 0.0, %v5137
        %v5139 = vpop.f32.mrb[0].mxu0
        %v5140 = vpop.f32.mrb[0].mxu0
        %v5141 = vadd.f32 0.0, %v5140
        %v5142 = vpop.f32.mrb[0].mxu0
        %5143 = vmatprep.mubr.bf16.mxu0 0
        %5144 = vmatmul.mubr.bf16.gmra.mrb[0].mxu0 %v4009
        %v5145 = vpop.f32.mrb[0].mxu0
        %v5146 = vadd.f32 0.0, %v5145
        %v5147 = vpop.f32.mrb[0].mxu0
        %v5148 = vpop.f32.mrb[0].mxu0
        %v5149 = vadd.f32 0.0, %v5148
        %v5150 = vpop.f32.mrb[0].mxu0
        %5151 = vmatprep.mubr.bf16.mxu0 0
        %5152 = vmatmul.mubr.bf16.gmra.mrb[0].mxu0 %v4010
        %v5153 = vpop.f32.mrb[0].mxu0
        %v5154 = vadd.f32 0.0, %v5153
        %v5155 = vpop.f32.mrb[0].mxu0
        %v5156 = vpop.f32.mrb[0].mxu0
        %v5157 = vadd.f32 0.0, %v5156
        %v5158 = vpop.f32.mrb[0].mxu0
        %5159 = vmatprep.mubr.bf16.mxu0 0
        %5160 = vmatmul.mubr.bf16.gmra.mrb[0].mxu0 %v4011
        %v5161 = vpop.f32.mrb[0].mxu0
        %v5162 = vadd.f32 0.0, %v5161
        %v5163 = vpop.f32.mrb[0].mxu0
        %v5164 = vpop.f32.mrb[0].mxu0
        %v5165 = vadd.f32 0.0, %v5164
        %v5166 = vpop.f32.mrb[0].mxu0
        %5167 = vmatprep.mubr.bf16.mxu0 0
        %5168 = vmatmul.mubr.bf16.gmra.mrb[0].mxu0 %v4012
        %v5169 = vpop.f32.mrb[0].mxu0
        %v5170 = vadd.f32 0.0, %v5169
        %v5171 = vpop.f32.mrb[0].mxu0
        %v5172 = vpop.f32.mrb[0].mxu0
        %v5173 = vadd.f32 0.0, %v5172
        %v5174 = vpop.f32.mrb[0].mxu0
        %5175 = vdwg.mxu0
        %v5176 = vadd.f32 %v4935, %v5050
        %v5177 = vadd.f32 %v4936, %v5053
        %v5178 = vadd.f32 %v4937, %v5058
        %v5179 = vadd.f32 %v4938, %v5061
        %v5180 = vadd.f32 %v4939, %v5066
        %v5181 = vadd.f32 %v4940, %v5069
        %v5182 = vadd.f32 %v4941, %v5074
        %v5183 = vadd.f32 %v4942, %v5077
        %v5184 = vadd.f32 %v4943, %v5082
        %v5185 = vadd.f32 %v4944, %v5085
        %v5186 = vadd.f32 %v4945, %v5090
        %v5187 = vadd.f32 %v4946, %v5093
        %v5188 = vadd.f32 %v4947, %v5098
        %v5189 = vadd.f32 %v4948, %v5101
        %v5190 = vadd.f32 %v4949, %v5106
        %v5191 = vadd.f32 %v4950, %v5109
        %v5192 = vadd.f32 %v4951, %v5114
        %v5193 = vadd.f32 %v4952, %v5117
        %v5194 = vadd.f32 %v4953, %v5122
        %v5195 = vadd.f32 %v4954, %v5125
        %v5196 = vadd.f32 %v4955, %v5130
        %v5197 = vadd.f32 %v4956, %v5133
        %v5198 = vadd.f32 %v4957, %v5138
        %v5199 = vadd.f32 %v4958, %v5141
        %v5200 = vadd.f32 %v4959, %v5146
        %v5201 = vadd.f32 %v4960, %v5149
        %v5202 = vadd.f32 %v4961, %v5154
        %v5203 = vadd.f32 %v4962, %v5157
        %v5204 = vadd.f32 %v4963, %v5162
        %v5205 = vadd.f32 %v4964, %v5165
        %v5206 = vadd.f32 %v4965, %v5170
        %v5207 = vadd.f32 %v4966, %v5173
        %v5224 = vunpack.c.l.b16 %v578
        %v5225 = vunpack.c.l.b16 %v579
        %v5226 = vunpack.c.l.b16 %v580
        %v5227 = vunpack.c.l.b16 %v581
        %v5228 = vunpack.c.l.b16 %v582
        %v5229 = vunpack.c.l.b16 %v583
        %v5230 = vunpack.c.l.b16 %v584
        %v5231 = vunpack.c.l.b16 %v585
        %v5232 = vunpack.c.l.b16 %v586
        %v5233 = vunpack.c.l.b16 %v587
        %v5234 = vunpack.c.l.b16 %v588
        %v5235 = vunpack.c.l.b16 %v589
        %v5236 = vunpack.c.l.b16 %v590
        %v5237 = vunpack.c.l.b16 %v591
        %v5238 = vunpack.c.l.b16 %v592
        %v5239 = vunpack.c.l.b16 %v593
        %v5240 = vpack.c.b16 %v5225, %v5224
        %v5241 = vpack.c.b16 %v5227, %v5226
        %v5242 = vpack.c.b16 %v5229, %v5228
        %v5243 = vpack.c.b16 %v5231, %v5230
        %v5244 = vpack.c.b16 %v5233, %v5232
        %v5245 = vpack.c.b16 %v5235, %v5234
        %v5246 = vpack.c.b16 %v5237, %v5236
        %v5247 = vpack.c.b16 %v5239, %v5238
        %5256 = vmatprep.subr.bf16.mxu0 0
        %5257 = vmatpush1.bf16.msra.mxu0 %v5240
        %5258 = vmatprep.subr.bf16.mxu0 0
        %5259 = vmatpush1.bf16.msra.mxu0 %v5241
        %5260 = vmatprep.subr.bf16.mxu0 0
        %5261 = vmatpush1.bf16.msra.mxu0 %v5242
        %5262 = vmatprep.subr.bf16.mxu0 0
        %5263 = vmatpush1.bf16.msra.mxu0 %v5243
        %5264 = vmatprep.subr.bf16.mxu0 0
        %5265 = vmatpush1.bf16.msra.mxu0 %v5244
        %5266 = vmatprep.subr.bf16.mxu0 0
        %5267 = vmatpush1.bf16.msra.mxu0 %v5245
        %5268 = vmatprep.subr.bf16.mxu0 0
        %5269 = vmatpush1.bf16.msra.mxu0 %v5246
        %5270 = vmatprep.subr.bf16.mxu0 0
        %5271 = vmatpush1.bf16.msra.mxu0 %v5247
        %5272 = vmatprep.subr.bf16.mxu0 0
        %5273 = vmatpush1.bf16.msra.mxu0 0
        %5274 = vmatprep.subr.bf16.mxu0 0
        %5275 = vmatpush1.bf16.msra.mxu0 0
        %5276 = vmatprep.subr.bf16.mxu0 0
        %5277 = vmatpush1.bf16.msra.mxu0 0
        %5278 = vmatprep.subr.bf16.mxu0 0
        %5279 = vmatpush1.bf16.msra.mxu0 0
        %5280 = vmatprep.subr.bf16.mxu0 0
        %5281 = vmatpush1.bf16.msra.mxu0 0
        %5282 = vmatprep.subr.bf16.mxu0 0
        %5283 = vmatpush1.bf16.msra.mxu0 0
        %5284 = vmatprep.subr.bf16.mxu0 0
        %5285 = vmatpush1.bf16.msra.mxu0 0
        %5286 = vmatprep.subr.bf16.mxu0 0
        %5287 = vmatpush1.bf16.msra.mxu0 0
        %5288 = vmatprep.mubr.bf16.mxu0 0
        %5289 = vmatmul.mubr.bf16.gmra.mrb[0].mxu0 %v4050
        %v5290 = vpop.f32.mrb[0].mxu0
        %v5291 = vadd.f32 0.0, %v5290
        %v5292 = vpop.f32.mrb[0].mxu0
        %v5293 = vpop.f32.mrb[0].mxu0
        %v5294 = vadd.f32 0.0, %v5293
        %v5295 = vpop.f32.mrb[0].mxu0
        %5296 = vmatprep.mubr.bf16.mxu0 0
        %5297 = vmatmul.mubr.bf16.gmra.mrb[0].mxu0 %v4051
        %v5298 = vpop.f32.mrb[0].mxu0
        %v5299 = vadd.f32 0.0, %v5298
        %v5300 = vpop.f32.mrb[0].mxu0
        %v5301 = vpop.f32.mrb[0].mxu0
        %v5302 = vadd.f32 0.0, %v5301
        %v5303 = vpop.f32.mrb[0].mxu0
        %5304 = vmatprep.mubr.bf16.mxu0 0
        %5305 = vmatmul.mubr.bf16.gmra.mrb[0].mxu0 %v4052
        %v5306 = vpop.f32.mrb[0].mxu0
        %v5307 = vadd.f32 0.0, %v5306
        %v5308 = vpop.f32.mrb[0].mxu0
        %v5309 = vpop.f32.mrb[0].mxu0
        %v5310 = vadd.f32 0.0, %v5309
        %v5311 = vpop.f32.mrb[0].mxu0
        %5312 = vmatprep.mubr.bf16.mxu0 0
        %5313 = vmatmul.mubr.bf16.gmra.mrb[0].mxu0 %v4053
        %v5314 = vpop.f32.mrb[0].mxu0
        %v5315 = vadd.f32 0.0, %v5314
        %v5316 = vpop.f32.mrb[0].mxu0
        %v5317 = vpop.f32.mrb[0].mxu0
        %v5318 = vadd.f32 0.0, %v5317
        %v5319 = vpop.f32.mrb[0].mxu0
        %5320 = vmatprep.mubr.bf16.mxu0 0
        %5321 = vmatmul.mubr.bf16.gmra.mrb[0].mxu0 %v4054
        %v5322 = vpop.f32.mrb[0].mxu0
        %v5323 = vadd.f32 0.0, %v5322
        %v5324 = vpop.f32.mrb[0].mxu0
        %v5325 = vpop.f32.mrb[0].mxu0
        %v5326 = vadd.f32 0.0, %v5325
        %v5327 = vpop.f32.mrb[0].mxu0
        %5328 = vmatprep.mubr.bf16.mxu0 0
        %5329 = vmatmul.mubr.bf16.gmra.mrb[0].mxu0 %v4055
        %v5330 = vpop.f32.mrb[0].mxu0
        %v5331 = vadd.f32 0.0, %v5330
        %v5332 = vpop.f32.mrb[0].mxu0
        %v5333 = vpop.f32.mrb[0].mxu0
        %v5334 = vadd.f32 0.0, %v5333
        %v5335 = vpop.f32.mrb[0].mxu0
        %5336 = vmatprep.mubr.bf16.mxu0 0
        %5337 = vmatmul.mubr.bf16.gmra.mrb[0].mxu0 %v4056
        %v5338 = vpop.f32.mrb[0].mxu0
        %v5339 = vadd.f32 0.0, %v5338
        %v5340 = vpop.f32.mrb[0].mxu0
        %v5341 = vpop.f32.mrb[0].mxu0
        %v5342 = vadd.f32 0.0, %v5341
        %v5343 = vpop.f32.mrb[0].mxu0
        %5344 = vmatprep.mubr.bf16.mxu0 0
        %5345 = vmatmul.mubr.bf16.gmra.mrb[0].mxu0 %v4057
        %v5346 = vpop.f32.mrb[0].mxu0
        %v5347 = vadd.f32 0.0, %v5346
        %v5348 = vpop.f32.mrb[0].mxu0
        %v5349 = vpop.f32.mrb[0].mxu0
        %v5350 = vadd.f32 0.0, %v5349
        %v5351 = vpop.f32.mrb[0].mxu0
        %5352 = vmatprep.mubr.bf16.mxu0 0
        %5353 = vmatmul.mubr.bf16.gmra.mrb[0].mxu0 %v4058
        %v5354 = vpop.f32.mrb[0].mxu0
        %v5355 = vadd.f32 0.0, %v5354
        %v5356 = vpop.f32.mrb[0].mxu0
        %v5357 = vpop.f32.mrb[0].mxu0
        %v5358 = vadd.f32 0.0, %v5357
        %v5359 = vpop.f32.mrb[0].mxu0
        %5360 = vmatprep.mubr.bf16.mxu0 0
        %5361 = vmatmul.mubr.bf16.gmra.mrb[0].mxu0 %v4059
        %v5362 = vpop.f32.mrb[0].mxu0
        %v5363 = vadd.f32 0.0, %v5362
        %v5364 = vpop.f32.mrb[0].mxu0
        %v5365 = vpop.f32.mrb[0].mxu0
        %v5366 = vadd.f32 0.0, %v5365
        %v5367 = vpop.f32.mrb[0].mxu0
        %5368 = vmatprep.mubr.bf16.mxu0 0
        %5369 = vmatmul.mubr.bf16.gmra.mrb[0].mxu0 %v4060
        %v5370 = vpop.f32.mrb[0].mxu0
        %v5371 = vadd.f32 0.0, %v5370
        %v5372 = vpop.f32.mrb[0].mxu0
        %v5373 = vpop.f32.mrb[0].mxu0
        %v5374 = vadd.f32 0.0, %v5373
        %v5375 = vpop.f32.mrb[0].mxu0
        %5376 = vmatprep.mubr.bf16.mxu0 0
        %5377 = vmatmul.mubr.bf16.gmra.mrb[0].mxu0 %v4061
        %v5378 = vpop.f32.mrb[0].mxu0
        %v5379 = vadd.f32 0.0, %v5378
        %v5380 = vpop.f32.mrb[0].mxu0
        %v5381 = vpop.f32.mrb[0].mxu0
        %v5382 = vadd.f32 0.0, %v5381
        %v5383 = vpop.f32.mrb[0].mxu0
        %5384 = vmatprep.mubr.bf16.mxu0 0
        %5385 = vmatmul.mubr.bf16.gmra.mrb[0].mxu0 %v4062
        %v5386 = vpop.f32.mrb[0].mxu0
        %v5387 = vadd.f32 0.0, %v5386
        %v5388 = vpop.f32.mrb[0].mxu0
        %v5389 = vpop.f32.mrb[0].mxu0
        %v5390 = vadd.f32 0.0, %v5389
        %v5391 = vpop.f32.mrb[0].mxu0
        %5392 = vmatprep.mubr.bf16.mxu0 0
        %5393 = vmatmul.mubr.bf16.gmra.mrb[0].mxu0 %v4063
        %v5394 = vpop.f32.mrb[0].mxu0
        %v5395 = vadd.f32 0.0, %v5394
        %v5396 = vpop.f32.mrb[0].mxu0
        %v5397 = vpop.f32.mrb[0].mxu0
        %v5398 = vadd.f32 0.0, %v5397
        %v5399 = vpop.f32.mrb[0].mxu0
        %5400 = vmatprep.mubr.bf16.mxu0 0
        %5401 = vmatmul.mubr.bf16.gmra.mrb[0].mxu0 %v4064
        %v5402 = vpop.f32.mrb[0].mxu0
        %v5403 = vadd.f32 0.0, %v5402
        %v5404 = vpop.f32.mrb[0].mxu0
        %v5405 = vpop.f32.mrb[0].mxu0
        %v5406 = vadd.f32 0.0, %v5405
        %v5407 = vpop.f32.mrb[0].mxu0
        %5408 = vmatprep.mubr.bf16.mxu0 0
        %5409 = vmatmul.mubr.bf16.gmra.mrb[0].mxu0 %v4065
        %v5410 = vpop.f32.mrb[0].mxu0
        %v5411 = vadd.f32 0.0, %v5410
        %v5412 = vpop.f32.mrb[0].mxu0
        %v5413 = vpop.f32.mrb[0].mxu0
        %v5414 = vadd.f32 0.0, %v5413
        %v5415 = vpop.f32.mrb[0].mxu0
        %5416 = vdwg.mxu0
        %v5417 = vadd.f32 %v5176, %v5291
        %v5418 = vadd.f32 %v5177, %v5294
        %v5419 = vadd.f32 %v5178, %v5299
        %v5420 = vadd.f32 %v5179, %v5302
        %v5421 = vadd.f32 %v5180, %v5307
        %v5422 = vadd.f32 %v5181, %v5310
        %v5423 = vadd.f32 %v5182, %v5315
        %v5424 = vadd.f32 %v5183, %v5318
        %v5425 = vadd.f32 %v5184, %v5323
        %v5426 = vadd.f32 %v5185, %v5326
        %v5427 = vadd.f32 %v5186, %v5331
        %v5428 = vadd.f32 %v5187, %v5334
        %v5429 = vadd.f32 %v5188, %v5339
        %v5430 = vadd.f32 %v5189, %v5342
        %v5431 = vadd.f32 %v5190, %v5347
        %v5432 = vadd.f32 %v5191, %v5350
        %v5433 = vadd.f32 %v5192, %v5355
        %v5434 = vadd.f32 %v5193, %v5358
        %v5435 = vadd.f32 %v5194, %v5363
        %v5436 = vadd.f32 %v5195, %v5366
        %v5437 = vadd.f32 %v5196, %v5371
        %v5438 = vadd.f32 %v5197, %v5374
        %v5439 = vadd.f32 %v5198, %v5379
        %v5440 = vadd.f32 %v5199, %v5382
        %v5441 = vadd.f32 %v5200, %v5387
        %v5442 = vadd.f32 %v5201, %v5390
        %v5443 = vadd.f32 %v5202, %v5395
        %v5444 = vadd.f32 %v5203, %v5398
        %v5445 = vadd.f32 %v5204, %v5403
        %v5446 = vadd.f32 %v5205, %v5406
        %v5447 = vadd.f32 %v5206, %v5411
        %v5448 = vadd.f32 %v5207, %v5414
        %v5465 = vunpack.c.l.b16 %v594
        %v5466 = vunpack.c.l.b16 %v595
        %v5467 = vunpack.c.l.b16 %v596
        %v5468 = vunpack.c.l.b16 %v597
        %v5469 = vunpack.c.l.b16 %v598
        %v5470 = vunpack.c.l.b16 %v599
        %v5471 = vunpack.c.l.b16 %v600
        %v5472 = vunpack.c.l.b16 %v601
        %v5473 = vunpack.c.l.b16 %v602
        %v5474 = vunpack.c.l.b16 %v603
        %v5475 = vunpack.c.l.b16 %v604
        %v5476 = vunpack.c.l.b16 %v605
        %v5477 = vunpack.c.l.b16 %v606
        %v5478 = vunpack.c.l.b16 %v607
        %v5479 = vunpack.c.l.b16 %v608
        %v5480 = vunpack.c.l.b16 %v609
        %v5481 = vpack.c.b16 %v5466, %v5465
        %v5482 = vpack.c.b16 %v5468, %v5467
        %v5483 = vpack.c.b16 %v5470, %v5469
        %v5484 = vpack.c.b16 %v5472, %v5471
        %v5485 = vpack.c.b16 %v5474, %v5473
        %v5486 = vpack.c.b16 %v5476, %v5475
        %v5487 = vpack.c.b16 %v5478, %v5477
        %v5488 = vpack.c.b16 %v5480, %v5479
        %5497 = vmatprep.subr.bf16.mxu0 0
        %5498 = vmatpush1.bf16.msra.mxu0 %v5481
        %5499 = vmatprep.subr.bf16.mxu0 0
        %5500 = vmatpush1.bf16.msra.mxu0 %v5482
        %5501 = vmatprep.subr.bf16.mxu0 0
        %5502 = vmatpush1.bf16.msra.mxu0 %v5483
        %5503 = vmatprep.subr.bf16.mxu0 0
        %5504 = vmatpush1.bf16.msra.mxu0 %v5484
        %5505 = vmatprep.subr.bf16.mxu0 0
        %5506 = vmatpush1.bf16.msra.mxu0 %v5485
        %5507 = vmatprep.subr.bf16.mxu0 0
        %5508 = vmatpush1.bf16.msra.mxu0 %v5486
        %5509 = vmatprep.subr.bf16.mxu0 0
        %5510 = vmatpush1.bf16.msra.mxu0 %v5487
        %5511 = vmatprep.subr.bf16.mxu0 0
        %5512 = vmatpush1.bf16.msra.mxu0 %v5488
        %5513 = vmatprep.subr.bf16.mxu0 0
        %5514 = vmatpush1.bf16.msra.mxu0 0
        %5515 = vmatprep.subr.bf16.mxu0 0
        %5516 = vmatpush1.bf16.msra.mxu0 0
        %5517 = vmatprep.subr.bf16.mxu0 0
        %5518 = vmatpush1.bf16.msra.mxu0 0
        %5519 = vmatprep.subr.bf16.mxu0 0
        %5520 = vmatpush1.bf16.msra.mxu0 0
        %5521 = vmatprep.subr.bf16.mxu0 0
        %5522 = vmatpush1.bf16.msra.mxu0 0
        %5523 = vmatprep.subr.bf16.mxu0 0
        %5524 = vmatpush1.bf16.msra.mxu0 0
        %5525 = vmatprep.subr.bf16.mxu0 0
        %5526 = vmatpush1.bf16.msra.mxu0 0
        %5527 = vmatprep.subr.bf16.mxu0 0
        %5528 = vmatpush1.bf16.msra.mxu0 0
        %5529 = vmatprep.mubr.bf16.mxu0 0
        %5530 = vmatmul.mubr.bf16.gmra.mrb[0].mxu0 %v3981
        %v5531 = vpop.f32.mrb[0].mxu0
        %v5532 = vadd.f32 0.0, %v5531
        %v5533 = vpop.f32.mrb[0].mxu0
        %v5534 = vpop.f32.mrb[0].mxu0
        %v5535 = vadd.f32 0.0, %v5534
        %v5536 = vpop.f32.mrb[0].mxu0
        %5537 = vmatprep.mubr.bf16.mxu0 0
        %5538 = vmatmul.mubr.bf16.gmra.mrb[0].mxu0 %v3982
        %v5539 = vpop.f32.mrb[0].mxu0
        %v5540 = vadd.f32 0.0, %v5539
        %v5541 = vpop.f32.mrb[0].mxu0
        %v5542 = vpop.f32.mrb[0].mxu0
        %v5543 = vadd.f32 0.0, %v5542
        %v5544 = vpop.f32.mrb[0].mxu0
        %5545 = vmatprep.mubr.bf16.mxu0 0
        %5546 = vmatmul.mubr.bf16.gmra.mrb[0].mxu0 %v3983
        %v5547 = vpop.f32.mrb[0].mxu0
        %v5548 = vadd.f32 0.0, %v5547
        %v5549 = vpop.f32.mrb[0].mxu0
        %v5550 = vpop.f32.mrb[0].mxu0
        %v5551 = vadd.f32 0.0, %v5550
        %v5552 = vpop.f32.mrb[0].mxu0
        %5553 = vmatprep.mubr.bf16.mxu0 0
        %5554 = vmatmul.mubr.bf16.gmra.mrb[0].mxu0 %v3984
        %v5555 = vpop.f32.mrb[0].mxu0
        %v5556 = vadd.f32 0.0, %v5555
        %v5557 = vpop.f32.mrb[0].mxu0
        %v5558 = vpop.f32.mrb[0].mxu0
        %v5559 = vadd.f32 0.0, %v5558
        %v5560 = vpop.f32.mrb[0].mxu0
        %5561 = vmatprep.mubr.bf16.mxu0 0
        %5562 = vmatmul.mubr.bf16.gmra.mrb[0].mxu0 %v3985
        %v5563 = vpop.f32.mrb[0].mxu0
        %v5564 = vadd.f32 0.0, %v5563
        %v5565 = vpop.f32.mrb[0].mxu0
        %v5566 = vpop.f32.mrb[0].mxu0
        %v5567 = vadd.f32 0.0, %v5566
        %v5568 = vpop.f32.mrb[0].mxu0
        %5569 = vmatprep.mubr.bf16.mxu0 0
        %5570 = vmatmul.mubr.bf16.gmra.mrb[0].mxu0 %v3986
        %v5571 = vpop.f32.mrb[0].mxu0
        %v5572 = vadd.f32 0.0, %v5571
        %v5573 = vpop.f32.mrb[0].mxu0
        %v5574 = vpop.f32.mrb[0].mxu0
        %v5575 = vadd.f32 0.0, %v5574
        %v5576 = vpop.f32.mrb[0].mxu0
        %5577 = vmatprep.mubr.bf16.mxu0 0
        %5578 = vmatmul.mubr.bf16.gmra.mrb[0].mxu0 %v3987
        %v5579 = vpop.f32.mrb[0].mxu0
        %v5580 = vadd.f32 0.0, %v5579
        %v5581 = vpop.f32.mrb[0].mxu0
        %v5582 = vpop.f32.mrb[0].mxu0
        %v5583 = vadd.f32 0.0, %v5582
        %v5584 = vpop.f32.mrb[0].mxu0
        %5585 = vmatprep.mubr.bf16.mxu0 0
        %5586 = vmatmul.mubr.bf16.gmra.mrb[0].mxu0 %v3988
        %v5587 = vpop.f32.mrb[0].mxu0
        %v5588 = vadd.f32 0.0, %v5587
        %v5589 = vpop.f32.mrb[0].mxu0
        %v5590 = vpop.f32.mrb[0].mxu0
        %v5591 = vadd.f32 0.0, %v5590
        %v5592 = vpop.f32.mrb[0].mxu0
        %5593 = vmatprep.mubr.bf16.mxu0 0
        %5594 = vmatmul.mubr.bf16.gmra.mrb[0].mxu0 %v3989
        %v5595 = vpop.f32.mrb[0].mxu0
        %v5596 = vadd.f32 0.0, %v5595
        %v5597 = vpop.f32.mrb[0].mxu0
        %v5598 = vpop.f32.mrb[0].mxu0
        %v5599 = vadd.f32 0.0, %v5598
        %v5600 = vpop.f32.mrb[0].mxu0
        %5601 = vmatprep.mubr.bf16.mxu0 0
        %5602 = vmatmul.mubr.bf16.gmra.mrb[0].mxu0 %v3990
        %v5603 = vpop.f32.mrb[0].mxu0
        %v5604 = vadd.f32 0.0, %v5603
        %v5605 = vpop.f32.mrb[0].mxu0
        %v5606 = vpop.f32.mrb[0].mxu0
        %v5607 = vadd.f32 0.0, %v5606
        %v5608 = vpop.f32.mrb[0].mxu0
        %5609 = vmatprep.mubr.bf16.mxu0 0
        %5610 = vmatmul.mubr.bf16.gmra.mrb[0].mxu0 %v3991
        %v5611 = vpop.f32.mrb[0].mxu0
        %v5612 = vadd.f32 0.0, %v5611
        %v5613 = vpop.f32.mrb[0].mxu0
        %v5614 = vpop.f32.mrb[0].mxu0
        %v5615 = vadd.f32 0.0, %v5614
        %v5616 = vpop.f32.mrb[0].mxu0
        %5617 = vmatprep.mubr.bf16.mxu0 0
        %5618 = vmatmul.mubr.bf16.gmra.mrb[0].mxu0 %v3992
        %v5619 = vpop.f32.mrb[0].mxu0
        %v5620 = vadd.f32 0.0, %v5619
        %v5621 = vpop.f32.mrb[0].mxu0
        %v5622 = vpop.f32.mrb[0].mxu0
        %v5623 = vadd.f32 0.0, %v5622
        %v5624 = vpop.f32.mrb[0].mxu0
        %5625 = vmatprep.mubr.bf16.mxu0 0
        %5626 = vmatmul.mubr.bf16.gmra.mrb[0].mxu0 %v3993
        %v5627 = vpop.f32.mrb[0].mxu0
        %v5628 = vadd.f32 0.0, %v5627
        %v5629 = vpop.f32.mrb[0].mxu0
        %v5630 = vpop.f32.mrb[0].mxu0
        %v5631 = vadd.f32 0.0, %v5630
        %v5632 = vpop.f32.mrb[0].mxu0
        %5633 = vmatprep.mubr.bf16.mxu0 0
        %5634 = vmatmul.mubr.bf16.gmra.mrb[0].mxu0 %v3994
        %v5635 = vpop.f32.mrb[0].mxu0
        %v5636 = vadd.f32 0.0, %v5635
        %v5637 = vpop.f32.mrb[0].mxu0
        %v5638 = vpop.f32.mrb[0].mxu0
        %v5639 = vadd.f32 0.0, %v5638
        %v5640 = vpop.f32.mrb[0].mxu0
        %5641 = vmatprep.mubr.bf16.mxu0 0
        %5642 = vmatmul.mubr.bf16.gmra.mrb[0].mxu0 %v3995
        %v5643 = vpop.f32.mrb[0].mxu0
        %v5644 = vadd.f32 0.0, %v5643
        %v5645 = vpop.f32.mrb[0].mxu0
        %v5646 = vpop.f32.mrb[0].mxu0
        %v5647 = vadd.f32 0.0, %v5646
        %v5648 = vpop.f32.mrb[0].mxu0
        %5649 = vmatprep.mubr.bf16.mxu0 0
        %5650 = vmatmul.mubr.bf16.gmra.mrb[0].mxu0 %v3996
        %v5651 = vpop.f32.mrb[0].mxu0
        %v5652 = vadd.f32 0.0, %v5651
        %v5653 = vpop.f32.mrb[0].mxu0
        %v5654 = vpop.f32.mrb[0].mxu0
        %v5655 = vadd.f32 0.0, %v5654
        %v5656 = vpop.f32.mrb[0].mxu0
        %5657 = vdwg.mxu0
        %v5658 = vadd.f32 %v5417, %v5532
        %v5659 = vadd.f32 %v5418, %v5535
        %v5660 = vadd.f32 %v5419, %v5540
        %v5661 = vadd.f32 %v5420, %v5543
        %v5662 = vadd.f32 %v5421, %v5548
        %v5663 = vadd.f32 %v5422, %v5551
        %v5664 = vadd.f32 %v5423, %v5556
        %v5665 = vadd.f32 %v5424, %v5559
        %v5666 = vadd.f32 %v5425, %v5564
        %v5667 = vadd.f32 %v5426, %v5567
        %v5668 = vadd.f32 %v5427, %v5572
        %v5669 = vadd.f32 %v5428, %v5575
        %v5670 = vadd.f32 %v5429, %v5580
        %v5671 = vadd.f32 %v5430, %v5583
        %v5672 = vadd.f32 %v5431, %v5588
        %v5673 = vadd.f32 %v5432, %v5591
        %v5674 = vadd.f32 %v5433, %v5596
        %v5675 = vadd.f32 %v5434, %v5599
        %v5676 = vadd.f32 %v5435, %v5604
        %v5677 = vadd.f32 %v5436, %v5607
        %v5678 = vadd.f32 %v5437, %v5612
        %v5679 = vadd.f32 %v5438, %v5615
        %v5680 = vadd.f32 %v5439, %v5620
        %v5681 = vadd.f32 %v5440, %v5623
        %v5682 = vadd.f32 %v5441, %v5628
        %v5683 = vadd.f32 %v5442, %v5631
        %v5684 = vadd.f32 %v5443, %v5636
        %v5685 = vadd.f32 %v5444, %v5639
        %v5686 = vadd.f32 %v5445, %v5644
        %v5687 = vadd.f32 %v5446, %v5647
        %v5688 = vadd.f32 %v5447, %v5652
        %v5689 = vadd.f32 %v5448, %v5655
        %v5706 = vunpack.c.l.b16 %v610
        %v5707 = vunpack.c.l.b16 %v611
        %v5708 = vunpack.c.l.b16 %v612
        %v5709 = vunpack.c.l.b16 %v613
        %v5710 = vunpack.c.l.b16 %v614
        %v5711 = vunpack.c.l.b16 %v615
        %v5712 = vunpack.c.l.b16 %v616
        %v5713 = vunpack.c.l.b16 %v617
        %v5714 = vunpack.c.l.b16 %v618
        %v5715 = vunpack.c.l.b16 %v619
        %v5716 = vunpack.c.l.b16 %v620
        %v5717 = vunpack.c.l.b16 %v621
        %v5718 = vunpack.c.l.b16 %v622
        %v5719 = vunpack.c.l.b16 %v623
        %v5720 = vunpack.c.l.b16 %v624
        %v5721 = vunpack.c.l.b16 %v625
        %v5722 = vpack.c.b16 %v5707, %v5706
        %v5723 = vpack.c.b16 %v5709, %v5708
        %v5724 = vpack.c.b16 %v5711, %v5710
        %v5725 = vpack.c.b16 %v5713, %v5712
        %v5726 = vpack.c.b16 %v5715, %v5714
        %v5727 = vpack.c.b16 %v5717, %v5716
        %v5728 = vpack.c.b16 %v5719, %v5718
        %v5729 = vpack.c.b16 %v5721, %v5720
        %5738 = vmatprep.subr.bf16.mxu0 0
        %5739 = vmatpush1.bf16.msra.mxu0 %v5722
        %5740 = vmatprep.subr.bf16.mxu0 0
        %5741 = vmatpush1.bf16.msra.mxu0 %v5723
        %5742 = vmatprep.subr.bf16.mxu0 0
        %5743 = vmatpush1.bf16.msra.mxu0 %v5724
        %5744 = vmatprep.subr.bf16.mxu0 0
        %5745 = vmatpush1.bf16.msra.mxu0 %v5725
        %5746 = vmatprep.subr.bf16.mxu0 0
        %5747 = vmatpush1.bf16.msra.mxu0 %v5726
        %5748 = vmatprep.subr.bf16.mxu0 0
        %5749 = vmatpush1.bf16.msra.mxu0 %v5727
        %5750 = vmatprep.subr.bf16.mxu0 0
        %5751 = vmatpush1.bf16.msra.mxu0 %v5728
        %5752 = vmatprep.subr.bf16.mxu0 0
        %5753 = vmatpush1.bf16.msra.mxu0 %v5729
        %5754 = vmatprep.subr.bf16.mxu0 0
        %5755 = vmatpush1.bf16.msra.mxu0 0
        %5756 = vmatprep.subr.bf16.mxu0 0
        %5757 = vmatpush1.bf16.msra.mxu0 0
        %5758 = vmatprep.subr.bf16.mxu0 0
        %5759 = vmatpush1.bf16.msra.mxu0 0
        %5760 = vmatprep.subr.bf16.mxu0 0
        %5761 = vmatpush1.bf16.msra.mxu0 0
        %5762 = vmatprep.subr.bf16.mxu0 0
        %5763 = vmatpush1.bf16.msra.mxu0 0
        %5764 = vmatprep.subr.bf16.mxu0 0
        %5765 = vmatpush1.bf16.msra.mxu0 0
        %5766 = vmatprep.subr.bf16.mxu0 0
        %5767 = vmatpush1.bf16.msra.mxu0 0
        %5768 = vmatprep.subr.bf16.mxu0 0
        %5769 = vmatpush1.bf16.msra.mxu0 0
        %5770 = vmatprep.mubr.bf16.mxu0 0
        %5771 = vmatmul.mubr.bf16.gmra.mrb[0].mxu0 %v3997
        %v5772 = vpop.f32.mrb[0].mxu0
        %v5773 = vadd.f32 0.0, %v5772
        %v5774 = vpop.f32.mrb[0].mxu0
        %v5775 = vpop.f32.mrb[0].mxu0
        %v5776 = vadd.f32 0.0, %v5775
        %v5777 = vpop.f32.mrb[0].mxu0
        %5778 = vmatprep.mubr.bf16.mxu0 0
        %5779 = vmatmul.mubr.bf16.gmra.mrb[0].mxu0 %v3999
        %v5780 = vpop.f32.mrb[0].mxu0
        %v5781 = vadd.f32 0.0, %v5780
        %v5782 = vpop.f32.mrb[0].mxu0
        %v5783 = vpop.f32.mrb[0].mxu0
        %v5784 = vadd.f32 0.0, %v5783
        %v5785 = vpop.f32.mrb[0].mxu0
        %5786 = vmatprep.mubr.bf16.mxu0 0
        %5787 = vmatmul.mubr.bf16.gmra.mrb[0].mxu0 %v4000
        %v5788 = vpop.f32.mrb[0].mxu0
        %v5789 = vadd.f32 0.0, %v5788
        %v5790 = vpop.f32.mrb[0].mxu0
        %v5791 = vpop.f32.mrb[0].mxu0
        %v5792 = vadd.f32 0.0, %v5791
        %v5793 = vpop.f32.mrb[0].mxu0
        %5794 = vmatprep.mubr.bf16.mxu0 0
        %5795 = vmatmul.mubr.bf16.gmra.mrb[0].mxu0 %v4001
        %v5796 = vpop.f32.mrb[0].mxu0
        %v5797 = vadd.f32 0.0, %v5796
        %v5798 = vpop.f32.mrb[0].mxu0
        %v5799 = vpop.f32.mrb[0].mxu0
        %v5800 = vadd.f32 0.0, %v5799
        %v5801 = vpop.f32.mrb[0].mxu0
        %5802 = vmatprep.mubr.bf16.mxu0 0
        %5803 = vmatmul.mubr.bf16.gmra.mrb[0].mxu0 %v4002
        %v5804 = vpop.f32.mrb[0].mxu0
        %v5805 = vadd.f32 0.0, %v5804
        %v5806 = vpop.f32.mrb[0].mxu0
        %v5807 = vpop.f32.mrb[0].mxu0
        %v5808 = vadd.f32 0.0, %v5807
        %v5809 = vpop.f32.mrb[0].mxu0
        %5810 = vmatprep.mubr.bf16.mxu0 0
        %5811 = vmatmul.mubr.bf16.gmra.mrb[0].mxu0 %v4003
        %v5812 = vpop.f32.mrb[0].mxu0
        %v5813 = vadd.f32 0.0, %v5812
        %v5814 = vpop.f32.mrb[0].mxu0
        %v5815 = vpop.f32.mrb[0].mxu0
        %v5816 = vadd.f32 0.0, %v5815
        %v5817 = vpop.f32.mrb[0].mxu0
        %5818 = vmatprep.mubr.bf16.mxu0 0
        %5819 = vmatmul.mubr.bf16.gmra.mrb[0].mxu0 %v4004
        %v5820 = vpop.f32.mrb[0].mxu0
        %v5821 = vadd.f32 0.0, %v5820
        %v5822 = vpop.f32.mrb[0].mxu0
        %v5823 = vpop.f32.mrb[0].mxu0
        %v5824 = vadd.f32 0.0, %v5823
        %v5825 = vpop.f32.mrb[0].mxu0
        %5826 = vmatprep.mubr.bf16.mxu0 0
        %5827 = vmatmul.mubr.bf16.gmra.mrb[0].mxu0 %v4005
        %v5828 = vpop.f32.mrb[0].mxu0
        %v5829 = vadd.f32 0.0, %v5828
        %v5830 = vpop.f32.mrb[0].mxu0
        %v5831 = vpop.f32.mrb[0].mxu0
        %v5832 = vadd.f32 0.0, %v5831
        %v5833 = vpop.f32.mrb[0].mxu0
        %5834 = vmatprep.mubr.bf16.mxu0 0
        %5835 = vmatmul.mubr.bf16.gmra.mrb[0].mxu0 %v4006
        %v5836 = vpop.f32.mrb[0].mxu0
        %v5837 = vadd.f32 0.0, %v5836
        %v5838 = vpop.f32.mrb[0].mxu0
        %v5839 = vpop.f32.mrb[0].mxu0
        %v5840 = vadd.f32 0.0, %v5839
        %v5841 = vpop.f32.mrb[0].mxu0
        %5842 = vmatprep.mubr.bf16.mxu0 0
        %5843 = vmatmul.mubr.bf16.gmra.mrb[0].mxu0 %v4007
        %v5844 = vpop.f32.mrb[0].mxu0
        %v5845 = vadd.f32 0.0, %v5844
        %v5846 = vpop.f32.mrb[0].mxu0
        %v5847 = vpop.f32.mrb[0].mxu0
        %v5848 = vadd.f32 0.0, %v5847
        %v5849 = vpop.f32.mrb[0].mxu0
        %5850 = vmatprep.mubr.bf16.mxu0 0
        %5851 = vmatmul.mubr.bf16.gmra.mrb[0].mxu0 %v4008
        %v5852 = vpop.f32.mrb[0].mxu0
        %v5853 = vadd.f32 0.0, %v5852
        %v5854 = vpop.f32.mrb[0].mxu0
        %v5855 = vpop.f32.mrb[0].mxu0
        %v5856 = vadd.f32 0.0, %v5855
        %v5857 = vpop.f32.mrb[0].mxu0
        %5858 = vmatprep.mubr.bf16.mxu0 0
        %5859 = vmatmul.mubr.bf16.gmra.mrb[0].mxu0 %v4009
        %v5860 = vpop.f32.mrb[0].mxu0
        %v5861 = vadd.f32 0.0, %v5860
        %v5862 = vpop.f32.mrb[0].mxu0
        %v5863 = vpop.f32.mrb[0].mxu0
        %v5864 = vadd.f32 0.0, %v5863
        %v5865 = vpop.f32.mrb[0].mxu0
        %5866 = vmatprep.mubr.bf16.mxu0 0
        %5867 = vmatmul.mubr.bf16.gmra.mrb[0].mxu0 %v4010
        %v5868 = vpop.f32.mrb[0].mxu0
        %v5869 = vadd.f32 0.0, %v5868
        %v5870 = vpop.f32.mrb[0].mxu0
        %v5871 = vpop.f32.mrb[0].mxu0
        %v5872 = vadd.f32 0.0, %v5871
        %v5873 = vpop.f32.mrb[0].mxu0
        %5874 = vmatprep.mubr.bf16.mxu0 0
        %5875 = vmatmul.mubr.bf16.gmra.mrb[0].mxu0 %v4011
        %v5876 = vpop.f32.mrb[0].mxu0
        %v5877 = vadd.f32 0.0, %v5876
        %v5878 = vpop.f32.mrb[0].mxu0
        %v5879 = vpop.f32.mrb[0].mxu0
        %v5880 = vadd.f32 0.0, %v5879
        %v5881 = vpop.f32.mrb[0].mxu0
        %5882 = vmatprep.mubr.bf16.mxu0 0
        %5883 = vmatmul.mubr.bf16.gmra.mrb[0].mxu0 %v4012
        %v5884 = vpop.f32.mrb[0].mxu0
        %v5885 = vadd.f32 0.0, %v5884
        %v5886 = vpop.f32.mrb[0].mxu0
        %v5887 = vpop.f32.mrb[0].mxu0
        %v5888 = vadd.f32 0.0, %v5887
        %v5889 = vpop.f32.mrb[0].mxu0
        %5890 = vmatprep.mubr.bf16.mxu0 0
        %5891 = vmatmul.mubr.bf16.gmra.mrb[0].mxu0 %v4011
        %v5892 = vpop.f32.mrb[0].mxu0
        %v5893 = vadd.f32 0.0, %v5892
        %v5894 = vpop.f32.mrb[0].mxu0
        %v5895 = vpop.f32.mrb[0].mxu0
        %v5896 = vadd.f32 0.0, %v5895
        %v5897 = vpop.f32.mrb[0].mxu0
        %5898 = vdwg.mxu0
        %v5899 = vadd.f32 %v5658, %v5773
        %v5900 = vadd.f32 %v5659, %v5776
        %v5901 = vadd.f32 %v5660, %v5781
        %v5902 = vadd.f32 %v5661, %v5784
        %v5903 = vadd.f32 %v5662, %v5789
        %v5904 = vadd.f32 %v5663, %v5792
        %v5905 = vadd.f32 %v5664, %v5797
        %v5906 = vadd.f32 %v5665, %v5800
        %v5907 = vadd.f32 %v5666, %v5805
        %v5908 = vadd.f32 %v5667, %v5808
        %v5909 = vadd.f32 %v5668, %v5813
        %v5910 = vadd.f32 %v5669, %v5816
        %v5911 = vadd.f32 %v5670, %v5821
        %v5912 = vadd.f32 %v5671, %v5824
        %v5913 = vadd.f32 %v5672, %v5829
        %v5914 = vadd.f32 %v5673, %v5832
        %v5915 = vadd.f32 %v5674, %v5837
        %v5916 = vadd.f32 %v5675, %v5840
        %v5917 = vadd.f32 %v5676, %v5845
        %v5918 = vadd.f32 %v5677, %v5848
        %v5919 = vadd.f32 %v5678, %v5853
        %v5920 = vadd.f32 %v5679, %v5856
        %v5921 = vadd.f32 %v5680, %v5861
        %v5922 = vadd.f32 %v5681, %v5864
        %v5923 = vadd.f32 %v5682, %v5869
        %v5924 = vadd.f32 %v5683, %v5872
        %v5925 = vadd.f32 %v5684, %v5877
        %v5926 = vadd.f32 %v5685, %v5880
        %v5927 = vadd.f32 %v5686, %v5885
        %v5928 = vadd.f32 %v5687, %v5888
        %v5929 = vadd.f32 %v5688, %v5893
        %v5930 = vadd.f32 %v5689, %v5896
        %v5947 = vunpack.c.l.b16 %v626
        %v5948 = vunpack.c.l.b16 %v627
        %v5949 = vunpack.c.l.b16 %v628
        %v5950 = vunpack.c.l.b16 %v629
        %v5951 = vunpack.c.l.b16 %v630
        %v5952 = vunpack.c.l.b16 %v631
        %v5953 = vunpack.c.l.b16 %v632
        %v5954 = vunpack.c.l.b16 %v633
        %v5955 = vunpack.c.l.b16 %v634
        %v5956 = vunpack.c.l.b16 %v635
        %v5957 = vunpack.c.l.b16 %v636
        %v5958 = vunpack.c.l.b16 %v637
        %v5959 = vunpack.c.l.b16 %v638
        %v5960 = vunpack.c.l.b16 %v639
        %v5961 = vunpack.c.l.b16 %v640
        %v5962 = vunpack.c.l.b16 %v641
        %v5963 = vpack.c.b16 %v5948, %v5947
        %v5964 = vpack.c.b16 %v5950, %v5949
        %v5965 = vpack.c.b16 %v5952, %v5951
        %v5966 = vpack.c.b16 %v5954, %v5953
        %v5967 = vpack.c.b16 %v5956, %v5955
        %v5968 = vpack.c.b16 %v5958, %v5957
        %v5969 = vpack.c.b16 %v5960, %v5959
        %v5970 = vpack.c.b16 %v5962, %v5961
        %5979 = vmatprep.subr.bf16.mxu0 0
        %5980 = vmatpush1.bf16.msra.mxu0 %v5963
        %5981 = vmatprep.subr.bf16.mxu0 0
        %5982 = vmatpush1.bf16.msra.mxu0 %v5964
        %5983 = vmatprep.subr.bf16.mxu0 0
        %5984 = vmatpush1.bf16.msra.mxu0 %v5965
        %5985 = vmatprep.subr.bf16.mxu0 0
        %5986 = vmatpush1.bf16.msra.mxu0 %v5966
        %5987 = vmatprep.subr.bf16.mxu0 0
        %5988 = vmatpush1.bf16.msra.mxu0 %v5967
        %5989 = vmatprep.subr.bf16.mxu0 0
        %5990 = vmatpush1.bf16.msra.mxu0 %v5968
        %5991 = vmatprep.subr.bf16.mxu0 0
        %5992 = vmatpush1.bf16.msra.mxu0 %v5969
        %5993 = vmatprep.subr.bf16.mxu0 0
        %5994 = vmatpush1.bf16.msra.mxu0 %v5970
        %5995 = vmatprep.subr.bf16.mxu0 0
        %5996 = vmatpush1.bf16.msra.mxu0 0
        %5997 = vmatprep.subr.bf16.mxu0 0
        %5998 = vmatpush1.bf16.msra.mxu0 0
        %5999 = vmatprep.subr.bf16.mxu0 0
        %6000 = vmatpush1.bf16.msra.mxu0 0
        %6001 = vmatprep.subr.bf16.mxu0 0
        %6002 = vmatpush1.bf16.msra.mxu0 0
        %6003 = vmatprep.subr.bf16.mxu0 0
        %6004 = vmatpush1.bf16.msra.mxu0 0
        %6005 = vmatprep.subr.bf16.mxu0 0
        %6006 = vmatpush1.bf16.msra.mxu0 0
        %6007 = vmatprep.subr.bf16.mxu0 0
        %6008 = vmatpush1.bf16.msra.mxu0 0
        %6009 = vmatprep.subr.bf16.mxu0 0
        %6010 = vmatpush1.bf16.msra.mxu0 0
        %6011 = vmatprep.mubr.bf16.mxu0 0
        %6012 = vmatmul.mubr.bf16.gmra.mrb[0].mxu0 %v4051
        %v6013 = vpop.f32.mrb[0].mxu0
        %v6014 = vadd.f32 0.0, %v6013
        %v6015 = vpop.f32.mrb[0].mxu0
        %v6016 = vpop.f32.mrb[0].mxu0
        %v6017 = vadd.f32 0.0, %v6016
        %v6018 = vpop.f32.mrb[0].mxu0
        %6019 = vmatprep.mubr.bf16.mxu0 0
        %6020 = vmatmul.mubr.bf16.gmra.mrb[0].mxu0 %v4052
        %v6021 = vpop.f32.mrb[0].mxu0
        %v6022 = vadd.f32 0.0, %v6021
        %v6023 = vpop.f32.mrb[0].mxu0
        %v6024 = vpop.f32.mrb[0].mxu0
        %v6025 = vadd.f32 0.0, %v6024
        %v6026 = vpop.f32.mrb[0].mxu0
        %6027 = vmatprep.mubr.bf16.mxu0 0
        %6028 = vmatmul.mubr.bf16.gmra.mrb[0].mxu0 %v4053
        %v6029 = vpop.f32.mrb[0].mxu0
        %v6030 = vadd.f32 0.0, %v6029
        %v6031 = vpop.f32.mrb[0].mxu0
        %v6032 = vpop.f32.mrb[0].mxu0
        %v6033 = vadd.f32 0.0, %v6032
        %v6034 = vpop.f32.mrb[0].mxu0
        %6035 = vmatprep.mubr.bf16.mxu0 0
        %6036 = vmatmul.mubr.bf16.gmra.mrb[0].mxu0 %v4054
        %v6037 = vpop.f32.mrb[0].mxu0
        %v6038 = vadd.f32 0.0, %v6037
        %v6039 = vpop.f32.mrb[0].mxu0
        %v6040 = vpop.f32.mrb[0].mxu0
        %v6041 = vadd.f32 0.0, %v6040
        %v6042 = vpop.f32.mrb[0].mxu0
        %6043 = vmatprep.mubr.bf16.mxu0 0
        %6044 = vmatmul.mubr.bf16.gmra.mrb[0].mxu0 %v4055
        %v6045 = vpop.f32.mrb[0].mxu0
        %v6046 = vadd.f32 0.0, %v6045
        %v6047 = vpop.f32.mrb[0].mxu0
        %v6048 = vpop.f32.mrb[0].mxu0
        %v6049 = vadd.f32 0.0, %v6048
        %v6050 = vpop.f32.mrb[0].mxu0
        %6051 = vmatprep.mubr.bf16.mxu0 0
        %6052 = vmatmul.mubr.bf16.gmra.mrb[0].mxu0 %v4056
        %v6053 = vpop.f32.mrb[0].mxu0
        %v6054 = vadd.f32 0.0, %v6053
        %v6055 = vpop.f32.mrb[0].mxu0
        %v6056 = vpop.f32.mrb[0].mxu0
        %v6057 = vadd.f32 0.0, %v6056
        %v6058 = vpop.f32.mrb[0].mxu0
        %6059 = vmatprep.mubr.bf16.mxu0 0
        %6060 = vmatmul.mubr.bf16.gmra.mrb[0].mxu0 %v4057
        %v6061 = vpop.f32.mrb[0].mxu0
        %v6062 = vadd.f32 0.0, %v6061
        %v6063 = vpop.f32.mrb[0].mxu0
        %v6064 = vpop.f32.mrb[0].mxu0
        %v6065 = vadd.f32 0.0, %v6064
        %v6066 = vpop.f32.mrb[0].mxu0
        %6067 = vmatprep.mubr.bf16.mxu0 0
        %6068 = vmatmul.mubr.bf16.gmra.mrb[0].mxu0 %v4058
        %v6069 = vpop.f32.mrb[0].mxu0
        %v6070 = vadd.f32 0.0, %v6069
        %v6071 = vpop.f32.mrb[0].mxu0
        %v6072 = vpop.f32.mrb[0].mxu0
        %v6073 = vadd.f32 0.0, %v6072
        %v6074 = vpop.f32.mrb[0].mxu0
        %6075 = vmatprep.mubr.bf16.mxu0 0
        %6076 = vmatmul.mubr.bf16.gmra.mrb[0].mxu0 %v4059
        %v6077 = vpop.f32.mrb[0].mxu0
        %v6078 = vadd.f32 0.0, %v6077
        %v6079 = vpop.f32.mrb[0].mxu0
        %v6080 = vpop.f32.mrb[0].mxu0
        %v6081 = vadd.f32 0.0, %v6080
        %v6082 = vpop.f32.mrb[0].mxu0
        %6083 = vmatprep.mubr.bf16.mxu0 0
        %6084 = vmatmul.mubr.bf16.gmra.mrb[0].mxu0 %v4060
        %v6085 = vpop.f32.mrb[0].mxu0
        %v6086 = vadd.f32 0.0, %v6085
        %v6087 = vpop.f32.mrb[0].mxu0
        %v6088 = vpop.f32.mrb[0].mxu0
        %v6089 = vadd.f32 0.0, %v6088
        %v6090 = vpop.f32.mrb[0].mxu0
        %6091 = vmatprep.mubr.bf16.mxu0 0
        %6092 = vmatmul.mubr.bf16.gmra.mrb[0].mxu0 %v4061
        %v6093 = vpop.f32.mrb[0].mxu0
        %v6094 = vadd.f32 0.0, %v6093
        %v6095 = vpop.f32.mrb[0].mxu0
        %v6096 = vpop.f32.mrb[0].mxu0
        %v6097 = vadd.f32 0.0, %v6096
        %v6098 = vpop.f32.mrb[0].mxu0
        %6099 = vmatprep.mubr.bf16.mxu0 0
        %6100 = vmatmul.mubr.bf16.gmra.mrb[0].mxu0 %v4062
        %v6101 = vpop.f32.mrb[0].mxu0
        %v6102 = vadd.f32 0.0, %v6101
        %v6103 = vpop.f32.mrb[0].mxu0
        %v6104 = vpop.f32.mrb[0].mxu0
        %v6105 = vadd.f32 0.0, %v6104
        %v6106 = vpop.f32.mrb[0].mxu0
        %6107 = vmatprep.mubr.bf16.mxu0 0
        %6108 = vmatmul.mubr.bf16.gmra.mrb[0].mxu0 %v4063
        %v6109 = vpop.f32.mrb[0].mxu0
        %v6110 = vadd.f32 0.0, %v6109
        %v6111 = vpop.f32.mrb[0].mxu0
        %v6112 = vpop.f32.mrb[0].mxu0
        %v6113 = vadd.f32 0.0, %v6112
        %v6114 = vpop.f32.mrb[0].mxu0
        %6115 = vmatprep.mubr.bf16.mxu0 0
        %6116 = vmatmul.mubr.bf16.gmra.mrb[0].mxu0 %v4064
        %v6117 = vpop.f32.mrb[0].mxu0
        %v6118 = vadd.f32 0.0, %v6117
        %v6119 = vpop.f32.mrb[0].mxu0
        %v6120 = vpop.f32.mrb[0].mxu0
        %v6121 = vadd.f32 0.0, %v6120
        %v6122 = vpop.f32.mrb[0].mxu0
        %6123 = vmatprep.mubr.bf16.mxu0 0
        %6124 = vmatmul.mubr.bf16.gmra.mrb[0].mxu0 %v4065
        %v6125 = vpop.f32.mrb[0].mxu0
        %v6126 = vadd.f32 0.0, %v6125
        %v6127 = vpop.f32.mrb[0].mxu0
        %v6128 = vpop.f32.mrb[0].mxu0
        %v6129 = vadd.f32 0.0, %v6128
        %v6130 = vpop.f32.mrb[0].mxu0
        %6131 = vmatprep.mubr.bf16.mxu0 0
        %6132 = vmatmul.mubr.bf16.gmra.mrb[0].mxu0 %v4066
        %v6133 = vpop.f32.mrb[0].mxu0
        %v6134 = vadd.f32 0.0, %v6133
        %v6135 = vpop.f32.mrb[0].mxu0
        %v6136 = vpop.f32.mrb[0].mxu0
        %v6137 = vadd.f32 0.0, %v6136
        %v6138 = vpop.f32.mrb[0].mxu0
        %6139 = vdwg.mxu0
        %v6140 = vadd.f32 %v5899, %v6014
        %v6141 = vadd.f32 %v5900, %v6017
        %v6142 = vadd.f32 %v5901, %v6022
        %v6143 = vadd.f32 %v5902, %v6025
        %v6144 = vadd.f32 %v5903, %v6030
        %v6145 = vadd.f32 %v5904, %v6033
        %v6146 = vadd.f32 %v5905, %v6038
        %v6147 = vadd.f32 %v5906, %v6041
        %v6148 = vadd.f32 %v5907, %v6046
        %v6149 = vadd.f32 %v5908, %v6049
        %v6150 = vadd.f32 %v5909, %v6054
        %v6151 = vadd.f32 %v5910, %v6057
        %v6152 = vadd.f32 %v5911, %v6062
        %v6153 = vadd.f32 %v5912, %v6065
        %v6154 = vadd.f32 %v5913, %v6070
        %v6155 = vadd.f32 %v5914, %v6073
        %v6156 = vadd.f32 %v5915, %v6078
        %v6157 = vadd.f32 %v5916, %v6081
        %v6158 = vadd.f32 %v5917, %v6086
        %v6159 = vadd.f32 %v5918, %v6089
        %v6160 = vadd.f32 %v5919, %v6094
        %v6161 = vadd.f32 %v5920, %v6097
        %v6162 = vadd.f32 %v5921, %v6102
        %v6163 = vadd.f32 %v5922, %v6105
        %v6164 = vadd.f32 %v5923, %v6110
        %v6165 = vadd.f32 %v5924, %v6113
        %v6166 = vadd.f32 %v5925, %v6118
        %v6167 = vadd.f32 %v5926, %v6121
        %v6168 = vadd.f32 %v5927, %v6126
        %v6169 = vadd.f32 %v5928, %v6129
        %v6170 = vadd.f32 %v5929, %v6134
        %v6171 = vadd.f32 %v5930, %v6137
        %v6172 = vadd.f32 %v6140, %v6141
        %v6173 = vadd.f32 %v6172, %v6142
        %v6174 = vadd.f32 %v6173, %v6143
        %v6175 = vadd.f32 %v6174, %v6144
        %v6176 = vadd.f32 %v6175, %v6145
        %v6177 = vadd.f32 %v6176, %v6146
        %v6178 = vadd.f32 %v6177, %v6147
        %v6179 = vadd.f32 %v6178, %v6148
        %v6180 = vadd.f32 %v6179, %v6149
        %v6181 = vadd.f32 %v6180, %v6150
        %v6182 = vadd.f32 %v6181, %v6151
        %v6183 = vadd.f32 %v6182, %v6152
        %v6184 = vadd.f32 %v6183, %v6153
        %v6185 = vadd.f32 %v6184, %v6154
        %v6186 = vadd.f32 %v6185, %v6155
        %v6187 = vadd.f32 %v6186, %v6156
        %v6188 = vadd.f32 %v6187, %v6157
        %v6189 = vadd.f32 %v6188, %v6158
        %v6190 = vadd.f32 %v6189, %v6159
        %v6191 = vadd.f32 %v6190, %v6160
        %v6192 = vadd.f32 %v6191, %v6161
        %v6193 = vadd.f32 %v6192, %v6162
        %v6194 = vadd.f32 %v6193, %v6163
        %v6195 = vadd.f32 %v6194, %v6164
        %v6196 = vadd.f32 %v6195, %v6165
        %v6197 = vadd.f32 %v6196, %v6166
        %v6198 = vadd.f32 %v6197, %v6167
        %v6199 = vadd.f32 %v6198, %v6168
        %v6200 = vadd.f32 %v6199, %v6169
        %v6201 = vadd.f32 %v6200, %v6170
        %v6202 = vadd.f32 %v6201, %v6171
        %v6203 = vrot.slane %v6202, 4
        %v6204 = vadd.f32 %v6202, %v6203
        %v6205 = vrot.slane %v6204, 2
        %v6206 = vadd.f32 %v6204, %v6205
        %v6207 = vrot.slane %v6206, 1
        %v6208 = vadd.f32 %v6206, %v6207
        %v6209 = vmul.f32 %v6208, %v3536
        %v6210 = vmul.f32 %v6140, %v6140
        %v6211 = vmul.f32 %v6141, %v6141
        %v6212 = vmul.f32 %v6142, %v6142
        %v6213 = vmul.f32 %v6143, %v6143
        %v6214 = vmul.f32 %v6144, %v6144
        %v6215 = vmul.f32 %v6145, %v6145
        %v6216 = vmul.f32 %v6146, %v6146
        %v6217 = vmul.f32 %v6147, %v6147
        %v6218 = vmul.f32 %v6148, %v6148
        %v6219 = vmul.f32 %v6149, %v6149
        %v6220 = vmul.f32 %v6150, %v6150
        %v6221 = vmul.f32 %v6151, %v6151
        %v6222 = vmul.f32 %v6152, %v6152
        %v6223 = vmul.f32 %v6153, %v6153
        %v6224 = vmul.f32 %v6154, %v6154
        %v6225 = vmul.f32 %v6155, %v6155
        %v6226 = vmul.f32 %v6156, %v6156
        %v6227 = vmul.f32 %v6157, %v6157
        %v6228 = vmul.f32 %v6158, %v6158
        %v6229 = vmul.f32 %v6159, %v6159
        %v6230 = vmul.f32 %v6160, %v6160
        %v6231 = vmul.f32 %v6161, %v6161
        %v6232 = vmul.f32 %v6162, %v6162
        %v6233 = vmul.f32 %v6163, %v6163
        %v6234 = vmul.f32 %v6164, %v6164
        %v6235 = vmul.f32 %v6165, %v6165
        %v6236 = vmul.f32 %v6166, %v6166
        %v6237 = vmul.f32 %v6167, %v6167
        %v6238 = vmul.f32 %v6168, %v6168
        %v6239 = vmul.f32 %v6169, %v6169
        %v6240 = vmul.f32 %v6170, %v6170
        %v6241 = vmul.f32 %v6171, %v6171
        %v6242 = vadd.f32 %v6210, %v6211
        %v6243 = vadd.f32 %v6242, %v6212
        %v6244 = vadd.f32 %v6243, %v6213
        %v6245 = vadd.f32 %v6244, %v6214
        %v6246 = vadd.f32 %v6245, %v6215
        %v6247 = vadd.f32 %v6246, %v6216
        %v6248 = vadd.f32 %v6247, %v6217
        %v6249 = vadd.f32 %v6248, %v6218
        %v6250 = vadd.f32 %v6249, %v6219
        %v6251 = vadd.f32 %v6250, %v6220
        %v6252 = vadd.f32 %v6251, %v6221
        %v6253 = vadd.f32 %v6252, %v6222
        %v6254 = vadd.f32 %v6253, %v6223
        %v6255 = vadd.f32 %v6254, %v6224
        %v6256 = vadd.f32 %v6255, %v6225
        %v6257 = vadd.f32 %v6256, %v6226
        %v6258 = vadd.f32 %v6257, %v6227
        %v6259 = vadd.f32 %v6258, %v6228
        %v6260 = vadd.f32 %v6259, %v6229
        %v6261 = vadd.f32 %v6260, %v6230
        %v6262 = vadd.f32 %v6261, %v6231
        %v6263 = vadd.f32 %v6262, %v6232
        %v6264 = vadd.f32 %v6263, %v6233
        %v6265 = vadd.f32 %v6264, %v6234
        %v6266 = vadd.f32 %v6265, %v6235
        %v6267 = vadd.f32 %v6266, %v6236
        %v6268 = vadd.f32 %v6267, %v6237
        %v6269 = vadd.f32 %v6268, %v6238
        %v6270 = vadd.f32 %v6269, %v6239
        %v6271 = vadd.f32 %v6270, %v6240
        %v6272 = vadd.f32 %v6271, %v6241
        %v6273 = vrot.slane %v6272, 4
        %v6274 = vadd.f32 %v6272, %v6273
        %v6275 = vrot.slane %v6274, 2
        %v6276 = vadd.f32 %v6274, %v6275
        %v6277 = vrot.slane %v6276, 1
        %v6278 = vadd.f32 %v6276, %v6277
        %v6279 = vmul.f32 %v6278, %v3536
        %v6280 = vmul.f32 %v6209, %v6209
        %v6281 = vsub.f32 %v6279, %v6280
        %v6282 = vmax.f32 %v6281, 0.0
        %v6283 = vsub.f32 %v6140, %v6209
        %v6284 = vsub.f32 %v6141, %v6209
        %v6285 = vsub.f32 %v6142, %v6209
        %v6286 = vsub.f32 %v6143, %v6209
        %v6287 = vsub.f32 %v6144, %v6209
        %v6288 = vsub.f32 %v6145, %v6209
        %v6289 = vsub.f32 %v6146, %v6209
        %v6290 = vsub.f32 %v6147, %v6209
        %v6291 = vsub.f32 %v6148, %v6209
        %v6292 = vsub.f32 %v6149, %v6209
        %v6293 = vsub.f32 %v6150, %v6209
        %v6294 = vsub.f32 %v6151, %v6209
        %v6295 = vsub.f32 %v6152, %v6209
        %v6296 = vsub.f32 %v6153, %v6209
        %v6297 = vsub.f32 %v6154, %v6209
        %v6298 = vsub.f32 %v6155, %v6209
        %v6299 = vsub.f32 %v6156, %v6209
        %v6300 = vsub.f32 %v6157, %v6209
        %v6301 = vsub.f32 %v6158, %v6209
        %v6302 = vsub.f32 %v6159, %v6209
        %v6303 = vsub.f32 %v6160, %v6209
        %v6304 = vsub.f32 %v6161, %v6209
        %v6305 = vsub.f32 %v6162, %v6209
        %v6306 = vsub.f32 %v6163, %v6209
        %v6307 = vsub.f32 %v6164, %v6209
        %v6308 = vsub.f32 %v6165, %v6209
        %v6309 = vsub.f32 %v6166, %v6209
        %v6310 = vsub.f32 %v6167, %v6209
        %v6311 = vsub.f32 %v6168, %v6209
        %v6312 = vsub.f32 %v6169, %v6209
        %v6313 = vsub.f32 %v6170, %v6209
        %v6314 = vsub.f32 %v6171, %v6209
        %v6315 = vadd.f32 %v6282, 1e-05
        %v6316 = vrsqrt.pop %v6315
        %v6317 = vmul.f32 %v6283, %v6316
        %v6318 = vmul.f32 %v6284, %v6316
        %v6319 = vmul.f32 %v6285, %v6316
        %v6320 = vmul.f32 %v6286, %v6316
        %v6321 = vmul.f32 %v6287, %v6316
        %v6322 = vmul.f32 %v6288, %v6316
        %v6323 = vmul.f32 %v6289, %v6316
        %v6324 = vmul.f32 %v6290, %v6316
        %v6325 = vmul.f32 %v6291, %v6316
        %v6326 = vmul.f32 %v6292, %v6316
        %v6327 = vmul.f32 %v6293, %v6316
        %v6328 = vmul.f32 %v6294, %v6316
        %v6329 = vmul.f32 %v6295, %v6316
        %v6330 = vmul.f32 %v6296, %v6316
        %v6331 = vmul.f32 %v6297, %v6316
        %v6332 = vmul.f32 %v6298, %v6316
        %v6333 = vmul.f32 %v6299, %v6316
        %v6334 = vmul.f32 %v6300, %v6316
        %v6335 = vmul.f32 %v6301, %v6316
        %v6336 = vmul.f32 %v6302, %v6316
        %v6337 = vmul.f32 %v6303, %v6316
        %v6338 = vmul.f32 %v6304, %v6316
        %v6339 = vmul.f32 %v6305, %v6316
        %v6340 = vmul.f32 %v6306, %v6316
        %v6341 = vmul.f32 %v6307, %v6316
        %v6342 = vmul.f32 %v6308, %v6316
        %v6343 = vmul.f32 %v6309, %v6316
        %v6344 = vmul.f32 %v6310, %v6316
        %v6345 = vmul.f32 %v6311, %v6316
        %v6346 = vmul.f32 %v6312, %v6316
        %v6347 = vmul.f32 %v6313, %v6316
        %v6348 = vmul.f32 %v6314, %v6316
        %v6349 = vadd.f32 %v642, %v6317
        %v6350 = vadd.f32 %v643, %v6318
        %v6351 = vadd.f32 %v644, %v6319
        %v6352 = vadd.f32 %v645, %v6320
        %v6353 = vadd.f32 %v646, %v6321
        %v6354 = vadd.f32 %v647, %v6322
        %v6355 = vadd.f32 %v648, %v6323
        %v6356 = vadd.f32 %v649, %v6324
        %v6357 = vadd.f32 %v650, %v6325
        %v6358 = vadd.f32 %v651, %v6326
        %v6359 = vadd.f32 %v652, %v6327
        %v6360 = vadd.f32 %v653, %v6328
        %v6361 = vadd.f32 %v654, %v6329
        %v6362 = vadd.f32 %v655, %v6330
        %v6363 = vadd.f32 %v656, %v6331
        %v6364 = vadd.f32 %v657, %v6332
        %v6365 = vadd.f32 %v658, %v6333
        %v6366 = vadd.f32 %v659, %v6334
        %v6367 = vadd.f32 %v660, %v6335
        %v6368 = vadd.f32 %v661, %v6336
        %v6369 = vadd.f32 %v662, %v6337
        %v6370 = vadd.f32 %v663, %v6338
        %v6371 = vadd.f32 %v664, %v6339
        %v6372 = vadd.f32 %v665, %v6340
        %v6373 = vadd.f32 %v666, %v6341
        %v6374 = vadd.f32 %v667, %v6342
        %v6375 = vadd.f32 %v668, %v6343
        %v6376 = vadd.f32 %v669, %v6344
        %v6377 = vadd.f32 %v670, %v6345
        %v6378 = vadd.f32 %v671, %v6346
        %v6379 = vadd.f32 %v672, %v6347
        %v6380 = vadd.f32 %v673, %v6348
        %6381 = vst [vmem:[%s244] sm:$0xff] %v6349
        %6382 = vst [vmem:[%s244 + $0x8] sm:$0xff] %v6350
        %6383 = vst [vmem:[%s244 + $0x10] sm:$0xff] %v6351
        %6384 = vst [vmem:[%s244 + $0x18] sm:$0xff] %v6352
        %6385 = vst [vmem:[%s244 + $0x20] sm:$0xff] %v6353
        %6386 = vst [vmem:[%s244 + $0x28] sm:$0xff] %v6354
        %6387 = vst [vmem:[%s244 + $0x30] sm:$0xff] %v6355
        %6388 = vst [vmem:[%s244 + $0x38] sm:$0xff] %v6356
        %6389 = vst [vmem:[%s244 + $0x40] sm:$0xff] %v6357
        %6390 = vst [vmem:[%s244 + $0x48] sm:$0xff] %v6358
        %6391 = vst [vmem:[%s244 + $0x50] sm:$0xff] %v6359
        %6392 = vst [vmem:[%s244 + $0x58] sm:$0xff] %v6360
        %6393 = vst [vmem:[%s244 + $0x60] sm:$0xff] %v6361
        %6394 = vst [vmem:[%s244 + $0x68] sm:$0xff] %v6362
        %6395 = vst [vmem:[%s244 + $0x70] sm:$0xff] %v6363
        %6396 = vst [vmem:[%s244 + $0x78] sm:$0xff] %v6364
        %6397 = vst [vmem:[%s244 + $0x80] sm:$0xff] %v6365
        %6398 = vst [vmem:[%s244 + $0x88] sm:$0xff] %v6366
        %6399 = vst [vmem:[%s244 + $0x90] sm:$0xff] %v6367
        %6400 = vst [vmem:[%s244 + $0x98] sm:$0xff] %v6368
        %6401 = vst [vmem:[%s244 + $0xa0] sm:$0xff] %v6369
        %6402 = vst [vmem:[%s244 + $0xa8] sm:$0xff] %v6370
        %6403 = vst [vmem:[%s244 + $0xb0] sm:$0xff] %v6371
        %6404 = vst [vmem:[%s244 + $0xb8] sm:$0xff] %v6372
        %6405 = vst [vmem:[%s244 + $0xc0] sm:$0xff] %v6373
        %6406 = vst [vmem:[%s244 + $0xc8] sm:$0xff] %v6374
        %6407 = vst [vmem:[%s244 + $0xd0] sm:$0xff] %v6375
        %6408 = vst [vmem:[%s244 + $0xd8] sm:$0xff] %v6376
        %6409 = vst [vmem:[%s244 + $0xe0] sm:$0xff] %v6377
        %6410 = vst [vmem:[%s244 + $0xe8] sm:$0xff] %v6378
        %6411 = vst [vmem:[%s244 + $0xf0] sm:$0xff] %v6379
        %6412 = vst [vmem:[%s244 + $0xf8] sm:$0xff] %v6380
        %s6413 = sand.u32 %s119, 1
        %s6414 = scalar_lea.sflag [#allocation4], %s6413
        %s6415 = sand.u32 %s119, 1
        %s6416 = smul.addr %s6415, 256
        %s6417 = scalar_lea.vmem [#allocation8], %s6416
        // Predicated region
        $region49: #{tpu_custom_call.1} parent=35 // pred_check
          %p6418 = pneg %p129
        $region50: #{tpu_custom_call.1} parent=35 // pred_check_branch
          %6420 = sbr.rel (%p6418) target = $region52
        $region51: #{tpu_custom_call.1} parent=35 // pred_region
          %s6422 = ssub.s32 4096, 4096
          %6423 = vsyncadd %s6414, %s6422
          %s6424 = smul.addr %s22, 32
          %s6425 = smul.addr %s6424, 128
          %s6426 = scalar_lea.hbm %s4, %s6425
          %s6427 = sshll.u32 %s6417, 4
          %s6428 = int_to_ptr.vmem [resolvable:$true] %s6427
          %6433 = dma.vmem_to_hbm [thread:$0]  %s6428, 4096, %s6426, %s6414, 128, 128, 8
        $region52: #{tpu_custom_call.1} parent=35 // pred_fallthru
          _
      $region36: #{tpu_custom_call.1} parent=5 // pred_fallthru
        _
      %p6434 = scmp.le.s32.totalorder 2, %s17
      // Predicated region
      $region53: #{tpu_custom_call.1} parent=5 // pred_check
        %p6435 = pneg %p6434
      $region54: #{tpu_custom_call.1} parent=5 // pred_check_branch
        %6437 = sbr.rel (%p6435) target = $region56
      $region55: #{tpu_custom_call.1} parent=5 // pred_region
        %s6438 = ssub.s32 %s17, 2
        // Predicated region
        $region57: #{tpu_custom_call.1} parent=55 // pred_check
          %p6439 = pneg %p135
        $region58: #{tpu_custom_call.1} parent=55 // pred_check_branch
          %6441 = sbr.rel (%p6439) target = $region60
        $region59: #{tpu_custom_call.1} parent=55 // pred_region
          %s6442 = sand.u32 %s120, 1
          %s6443 = scalar_lea.sflag [#allocation4], %s6442
          %s6444 = sand.u32 %s120, 1
          %s6445 = smul.addr %s6444, 256
          %s6446 = scalar_lea.vmem [#allocation8], %s6445
          %6447 = dma.done %s6443, 4096
        $region60: #{tpu_custom_call.1} parent=55 // pred_fallthru
          _
      $region56: #{tpu_custom_call.1} parent=5 // pred_fallthru
        _
    $region6: #{tpu_custom_call.1} parent=1 // loop_footer
      %s21 = sadd.s32 1, %s17
    $region7: #{tpu_custom_call.1} parent=1 // loop_footer_branch
      %16 = sbr.rel target = $region3
    $region8: #{tpu_custom_call.1} parent=1 // loop_exit
      _
    %6448 = vsyncpa [#allocation3], 1
    %s6449 = scalar_lea.sflag [#allocation3], 1
    %6450 = vsyncpa %s6449, 1
    %6451 = vsyncpa [#allocation6], 1
    %6452 = vsyncpa [#allocation4], 1
    %s6453 = scalar_lea.sflag [#allocation4], 1
    %6454 = vsyncpa %s6453, 1

</llo_original>
